<compile_context>
chip_gen: v5e
topology: v5e:2x2
jax: 0.10.0
libtpu: 0.0.40
codegen_flags: <defaults>
</compile_context>

<pallas_src>
import jax
import jax.numpy as jnp
from jax.experimental import pallas as pl
from jax.experimental.pallas import tpu as pltpu

# ---- problem sizes implied by the module ------------------------------------
# fc1 expects 3840 = 128 * Lp  ->  Lp = 30  ->  L = 3*(30-1) + 5 = 92
N = 2                      # batch
C_IN = 4                   # in_channels
L = 92                     # input length
LP = (L - 5) // 3 + 1      # = 30, AvgPool1d(kernel=5, stride=3) output length
C_CONV = 128               # conv output channels
F_FLAT = C_CONV * LP       # = 3840
H1 = 1024
NUM_CLASSES = 10


def _h1_shards():
    """Number of H1 output shards (grid size).

    v7x has two TensorCores per chip, so a "parallel" grid axis of 2 lets each
    TC stream half of the fc1 weight concurrently (the kernel is HBM-bound on
    that stream).  v5e / v6e have one TC, where the split is pure per-step
    overhead -> use a single shard there.  NJ=1 is always correct.
    """
    try:
        kind = jax.devices()[0].device_kind.lower()
    except Exception:
        return 1
    return 2 if ("v7" in kind or "7x" in kind) else 1


def inception_aux_kernel(pooled_ref, wct_ref, bc_ref, w1_ref, b1_ref,
                         w2_ref, b2_ref, out_ref):
    # 1x1 conv (C_IN -> 128) applied to the pre-pooled sequence, + bias + ReLU.
    z = jnp.dot(pooled_ref[...], wct_ref[...],
                preferred_element_type=jnp.float32)                  # (N*LP, 128)
    y = jnp.maximum(z + bc_ref[...], 0.0)

    # torch.flatten(x, 1): rows are ordered (n, l), so a row-major collapse
    # gives the lane-dense length-major order (l*128 + c); the wrapper's w1
    # permutation matches this exactly.
    flat = y.reshape(N, F_FLAT).astype(jnp.bfloat16)                 # (N, 3840)

    # Dropout(0.5) is identity in eval mode.
    # TODO(synk): training-mode dropout (random mask) not reproduced.

    # fc1 + ReLU: bf16 operands on the MXU, f32 accumulation.
    h = jnp.maximum(
        jnp.dot(flat, w1_ref[...], preferred_element_type=jnp.float32)
        + b1_ref[...], 0.0)                                          # (N, HJ)

    # fc2 shard.  b2 was pre-scaled by 1/NJ in the wrapper; the wrapper sums
    # the NJ partial logit blocks.
    logits = jnp.dot(h, w2_ref[...],
                     preferred_element_type=jnp.float32) + b2_ref[...]
    out_ref[...] = logits[None].astype(out_ref.dtype)                # (1, N, NC)


def inception_aux(x, params):
    wc, bc, w1, b1, w2, b2 = params

    nj = _h1_shards()          # 2 on v7x, else 1
    hj = H1 // nj

    # --- wrapper-side layout plumbing (plain JAX, tiny) -----------------------
    # AvgPool1d(k=5, s=3) precomputed here (off the kernel's serial prologue
    # path): pooled[n*LP + l, c_in] = mean_{w<5} x[n, c_in, 3l + w].
    x_f = x.astype(jnp.float32)
    lp_idx = jnp.arange(LP)[:, None]
    l_idx = jnp.arange(L)[None, :]
    pmat = ((l_idx >= 3 * lp_idx) & (l_idx < 3 * lp_idx + 5)).astype(jnp.float32) / 5.0
    pooled = jnp.einsum('ncl,pl->npc', x_f, pmat).reshape(N * LP, C_IN)  # (60, 4)

    wct = wc.astype(jnp.float32).T                        # (C_IN, 128)
    bc_row = bc.reshape(1, C_CONV).astype(jnp.float32)    # (1, 128)

    # Permute fc1 weight from torch's channel-major flatten (c*LP + l) to the
    # kernel's lane-dense length-major order (l*C + c); stream it in bf16.
    w1t = (w1.astype(jnp.float32)
             .reshape(H1, C_CONV, LP)
             .transpose(0, 2, 1)
             .reshape(H1, F_FLAT)
             .T).astype(jnp.bfloat16)                     # (3840, 1024)
    b1_row = b1.reshape(1, H1).astype(jnp.float32)        # (1, 1024)
    w2t = w2.astype(jnp.float32).T                        # (1024, NUM_CLASSES)
    # Each H1 shard contributes 1/nj of the fc2 bias; the wrapper sums shards.
    b2_row = b2.reshape(1, NUM_CLASSES).astype(jnp.float32) / nj

    args = (pooled, wct, bc_row, w1t, b1_row, w2t, b2_row)

    grid_spec = pltpu.PrefetchScalarGridSpec(
        num_scalar_prefetch=0,
        grid=(nj,),                                        # one step per H1 shard
        in_specs=[
            pl.BlockSpec((N * LP, C_IN), lambda j: (0, 0)),          # pooled
            pl.BlockSpec((C_IN, C_CONV), lambda j: (0, 0)),          # conv weight
            pl.BlockSpec((1, C_CONV), lambda j: (0, 0)),             # conv bias
            pl.BlockSpec((F_FLAT, hj), lambda j: (0, j)),            # w1 (bf16)
            pl.BlockSpec((1, hj), lambda j: (0, j)),                 # b1 shard
            pl.BlockSpec((hj, NUM_CLASSES), lambda j: (j, 0)),       # w2 shard
            pl.BlockSpec((1, NUM_CLASSES), lambda j: (0, 0)),        # b2 (scaled)
        ],
        out_specs=pl.BlockSpec((1, N, NUM_CLASSES), lambda j: (j, 0, 0)),
    )

    cost = pl.CostEstimate(
        flops=(2 * (N * LP) * C_IN * C_CONV
               + 2 * N * F_FLAT * H1
               + 2 * N * H1 * NUM_CLASSES),
        transcendentals=0,
        bytes_accessed=sum(a.nbytes for a in args) + nj * N * NUM_CLASSES * 4,
    )

    out_parts = pl.pallas_call(
        inception_aux_kernel,
        out_shape=jax.ShapeDtypeStruct((nj, N, NUM_CLASSES), jnp.float32),
        grid_spec=grid_spec,
        compiler_params=pltpu.CompilerParams(
            dimension_semantics=("parallel",),
            vmem_limit_bytes=32 * 1024 * 1024,
        ),
        cost_estimate=cost,
    )(*args)

    # Sum the nj partial logit shards (tiny: (nj, N, NUM_CLASSES)).
    return out_parts.sum(axis=0)


def reference(x, params):
    """Pure-JAX f32 reference mirroring the PyTorch forward (eval mode)."""
    wc, bc, w1, b1, w2, b2 = params
    pooled = jnp.stack([x[:, :, 3 * k:3 * k + 5].mean(-1) for k in range(LP)], axis=-1)
    y = jnp.maximum(jnp.einsum('oc,ncl->nol', wc, pooled) + bc[None, :, None], 0.0)
    flat = y.reshape(N, -1)
    h = jnp.maximum(flat @ w1.T + b1[None, :], 0.0)
    return h @ w2.T + b2[None, :]


if __name__ == "__main__":
    key = jax.random.PRNGKey(0)
    kx, k1, k2, k3, k4, k5, k6 = jax.random.split(key, 7)

    x = jax.random.normal(kx, (N, C_IN, L), dtype=jnp.float32)

    # Deterministic synthetic parameters (shapes from the module's __init__).
    wc = jax.random.normal(k1, (C_CONV, C_IN), dtype=jnp.float32) * 0.1      # Conv1d(C_IN,128,1) weight (k dim squeezed)
    bc = jax.random.normal(k2, (C_CONV,), dtype=jnp.float32) * 0.1
    w1 = jax.random.normal(k3, (H1, F_FLAT), dtype=jnp.float32) * 0.02       # fc1: Linear(3840, 1024)
    b1 = jax.random.normal(k4, (H1,), dtype=jnp.float32) * 0.02
    w2 = jax.random.normal(k5, (NUM_CLASSES, H1), dtype=jnp.float32) * 0.02  # fc2: Linear(1024, num_classes)
    b2 = jax.random.normal(k6, (NUM_CLASSES,), dtype=jnp.float32) * 0.02
    params = (wc, bc, w1, b1, w2, b2)

    out = jax.block_until_ready(inception_aux(x, params))
    ref = reference(x, params)

    assert out.shape == (N, NUM_CLASSES)
    # Tolerance loosened vs the pure-f32 reference because w1 is streamed in bf16.
    assert jnp.allclose(out, ref, rtol=2e-2, atol=2e-2), "mismatch vs reference"

    print("KERNEL_OK")
</pallas_src>

<mosaic_0001>
module attributes {stable_mosaic.version = 11 : i64} {
  func.func @inception_aux_kernel(%arg0: i32, %arg1: memref<60x4xf32, #tpu.memory_space<vmem>>, %arg2: memref<4x128xf32, #tpu.memory_space<vmem>>, %arg3: memref<1x128xf32, #tpu.memory_space<vmem>>, %arg4: memref<3840x1024xbf16, #tpu.memory_space<vmem>>, %arg5: memref<1x1024xf32, #tpu.memory_space<vmem>>, %arg6: memref<1024x10xf32, #tpu.memory_space<vmem>>, %arg7: memref<1x10xf32, #tpu.memory_space<vmem>>, %arg8: memref<1x2x10xf32, #tpu.memory_space<vmem>>) attributes {dimension_semantics = [#tpu.dimension_semantics<parallel>], iteration_bounds = array<i64: 1>, scalar_prefetch = 0 : i64, scratch_operands = 0 : i64, tpu.core_type = #tpu.core_type<tc>, window_params = [{pipeline_mode = #tpu.pipeline_mode<synchronous>, transform_indices = @transform_0, window_bounds = array<i64: 60, 4>}, {pipeline_mode = #tpu.pipeline_mode<synchronous>, transform_indices = @transform_1, window_bounds = array<i64: 4, 128>}, {pipeline_mode = #tpu.pipeline_mode<synchronous>, transform_indices = @transform_2, window_bounds = array<i64: 1, 128>}, {transform_indices = @transform_3, window_bounds = array<i64: 3840, 1024>}, {transform_indices = @transform_4, window_bounds = array<i64: 1, 1024>}, {transform_indices = @transform_5, window_bounds = array<i64: 1024, 10>}, {pipeline_mode = #tpu.pipeline_mode<synchronous>, transform_indices = @transform_6, window_bounds = array<i64: 1, 10>}, {transform_indices = @transform_7, window_bounds = array<i64: 1, 2, 10>}]} {
    %c0 = arith.constant 0 : index
    %c0_0 = arith.constant 0 : index
    %0 = vector.load %arg1[%c0, %c0_0] : memref<60x4xf32, #tpu.memory_space<vmem>>, vector<60x4xf32>
    %c0_1 = arith.constant 0 : index
    %c0_2 = arith.constant 0 : index
    %1 = vector.load %arg2[%c0_1, %c0_2] : memref<4x128xf32, #tpu.memory_space<vmem>>, vector<4x128xf32>
    %cst = arith.constant dense<0.000000e+00> : vector<60x128xf32>
    %2 = tpu.matmul %0, %1, %cst {dimension_numbers = #tpu.dot_dimension_numbers<[1], [0], [0], [1], [0, 0, 1, 1], [], []>} : vector<60x4xf32>, vector<4x128xf32>, vector<60x128xf32> -> vector<60x128xf32>
    %c0_3 = arith.constant 0 : index
    %c0_4 = arith.constant 0 : index
    %3 = vector.load %arg3[%c0_3, %c0_4] : memref<1x128xf32, #tpu.memory_space<vmem>>, vector<1x128xf32>
    %4 = vector.broadcast %3 : vector<1x128xf32> to vector<60x128xf32>
    %5 = arith.addf %2, %4 : vector<60x128xf32>
    %cst_5 = arith.constant 0.000000e+00 : f32
    %6 = vector.broadcast %cst_5 : f32 to vector<60x128xf32>
    %7 = arith.maximumf %5, %6 : vector<60x128xf32>
    %8 = vector.shape_cast %7 : vector<60x128xf32> to vector<2x3840xf32>
    %9 = arith.truncf %8 : vector<2x3840xf32> to vector<2x3840xbf16>
    %c0_6 = arith.constant 0 : index
    %c0_7 = arith.constant 0 : index
    %10 = vector.load %arg4[%c0_6, %c0_7] : memref<3840x1024xbf16, #tpu.memory_space<vmem>>, vector<3840x1024xbf16>
    %cst_8 = arith.constant dense<0.000000e+00> : vector<2x1024xf32>
    %11 = tpu.matmul %9, %10, %cst_8 {dimension_numbers = #tpu.dot_dimension_numbers<[1], [0], [0], [1], [0, 0, 1, 1], [], []>} : vector<2x3840xbf16>, vector<3840x1024xbf16>, vector<2x1024xf32> -> vector<2x1024xf32>
    %c0_9 = arith.constant 0 : index
    %c0_10 = arith.constant 0 : index
    %12 = vector.load %arg5[%c0_9, %c0_10] : memref<1x1024xf32, #tpu.memory_space<vmem>>, vector<1x1024xf32>
    %13 = vector.broadcast %12 : vector<1x1024xf32> to vector<2x1024xf32>
    %14 = arith.addf %11, %13 : vector<2x1024xf32>
    %cst_11 = arith.constant 0.000000e+00 : f32
    %15 = vector.broadcast %cst_11 : f32 to vector<2x1024xf32>
    %16 = arith.maximumf %14, %15 : vector<2x1024xf32>
    %c0_12 = arith.constant 0 : index
    %c0_13 = arith.constant 0 : index
    %17 = vector.load %arg6[%c0_12, %c0_13] : memref<1024x10xf32, #tpu.memory_space<vmem>>, vector<1024x10xf32>
    %cst_14 = arith.constant dense<0.000000e+00> : vector<2x10xf32>
    %18 = tpu.matmul %16, %17, %cst_14 {dimension_numbers = #tpu.dot_dimension_numbers<[1], [0], [0], [1], [0, 0, 1, 1], [], []>} : vector<2x1024xf32>, vector<1024x10xf32>, vector<2x10xf32> -> vector<2x10xf32>
    %c0_15 = arith.constant 0 : index
    %c0_16 = arith.constant 0 : index
    %19 = vector.load %arg7[%c0_15, %c0_16] : memref<1x10xf32, #tpu.memory_space<vmem>>, vector<1x10xf32>
    %20 = vector.broadcast %19 : vector<1x10xf32> to vector<2x10xf32>
    %21 = arith.addf %18, %20 : vector<2x10xf32>
    %22 = vector.shape_cast %21 : vector<2x10xf32> to vector<1x2x10xf32>
    %c0_17 = arith.constant 0 : index
    %c0_18 = arith.constant 0 : index
    %c0_19 = arith.constant 0 : index
    %23 = vector.load %arg8[%c0_17, %c0_18, %c0_19] : memref<1x2x10xf32, #tpu.memory_space<vmem>>, vector<1x2x10xf32>
    tpu.vector_store %arg8[%c0_17, %c0_18, %c0_19], %22 {strides = array<i32>} : memref<1x2x10xf32, #tpu.memory_space<vmem>>, vector<1x2x10xf32>,
    return
  }
  func.func @transform_0(%arg0: i32) -> (i32, i32) {
    %c0_i32 = arith.constant 0 : i32
    %c0_i32_0 = arith.constant 0 : i32
    %c0_i32_1 = arith.constant 0 : i32
    return %c0_i32, %c0_i32_0 : i32, i32
  }
  func.func @transform_1(%arg0: i32) -> (i32, i32) {
    %c0_i32 = arith.constant 0 : i32
    %c0_i32_0 = arith.constant 0 : i32
    %c0_i32_1 = arith.constant 0 : i32
    return %c0_i32, %c0_i32_0 : i32, i32
  }
  func.func @transform_2(%arg0: i32) -> (i32, i32) {
    %c0_i32 = arith.constant 0 : i32
    %c0_i32_0 = arith.constant 0 : i32
    %c0_i32_1 = arith.constant 0 : i32
    return %c0_i32, %c0_i32_0 : i32, i32
  }
  func.func @transform_3(%arg0: i32) -> (i32, i32) {
    %c0_i32 = arith.constant 0 : i32
    %c0_i32_0 = arith.constant 0 : i32
    return %c0_i32, %arg0 : i32, i32
  }
  func.func @transform_4(%arg0: i32) -> (i32, i32) {
    %c0_i32 = arith.constant 0 : i32
    %c0_i32_0 = arith.constant 0 : i32
    return %c0_i32, %arg0 : i32, i32
  }
  func.func @transform_5(%arg0: i32) -> (i32, i32) {
    %c0_i32 = arith.constant 0 : i32
    %c0_i32_0 = arith.constant 0 : i32
    return %arg0, %c0_i32 : i32, i32
  }
  func.func @transform_6(%arg0: i32) -> (i32, i32) {
    %c0_i32 = arith.constant 0 : i32
    %c0_i32_0 = arith.constant 0 : i32
    %c0_i32_1 = arith.constant 0 : i32
    return %c0_i32, %c0_i32_0 : i32, i32
  }
  func.func @transform_7(%arg0: i32) -> (i32, i32, i32) {
    %c0_i32 = arith.constant 0 : i32
    %c0_i32_0 = arith.constant 0 : i32
    %c0_i32_1 = arith.constant 0 : i32
    return %arg0, %c0_i32, %c0_i32_0 : i32, i32, i32
  }
}

</mosaic_0001>

<llo_original>
// kernel: tpu_custom_call.1
$region0: #{tpu_custom_call.1}
  #allocation0 [shape = 'u32[]', space=smem, size = 0x4, offset = 0x4, fixed_abs, tag = 'smem constant byte address 0x4 - core index']
  #allocation1 [shape = 'u32[72,128]{1,0:T(1,128)}', space=vmem, size = 0x9000, scoped, tag = 'internal scratch']
  %s0 = inlined_call_operand.vmem [shape: f32[60,4], index: 0, kind: input, shape index: {}]
  %s1 = inlined_call_operand.hbm [shape: f32[4,128], index: 1, kind: input, shape index: {}]
  %s2 = inlined_call_operand.hbm [shape: f32[1,128], index: 2, kind: input, shape index: {}]
  %s3 = inlined_call_operand.hbm [shape: bf16[3840,1024], index: 3, kind: input, shape index: {}]
  %s4 = inlined_call_operand.hbm [shape: f32[1,1024], index: 4, kind: input, shape index: {}]
  %s5 = inlined_call_operand.vmem [shape: f32[1024,10], index: 5, kind: input, shape index: {}]
  %s6 = inlined_call_operand.hbm [shape: f32[1,10], index: 6, kind: input, shape index: {}]
  %s7 = inlined_call_operand.hbm [shape: f32[1,2,10], index: 7, kind: output, shape index: {}]
  %s8 = sld [smem:[#allocation0]]
  $region58: #{tpu_custom_call.1} parent=0
    _
  %s10 = ssub.s32 1, %s8
  %s11 = scalar_select 0, %s10, %s8
  $region1: #{tpu_custom_call.1} parent=0
    #allocation2 [shape = 'u8[2048]{0}', space=vmem, size = 0x800, scoped, tag = 'input window, operand 1, single buffered']
    #allocation3 [shape = 's32[1]{0}', space=sflag, size = 0x4, scoped, tag = 'scoped memory for tpu_custom_call.1']
    #allocation4 [shape = 's32[1]{0}', space=sflag, size = 0x4, scoped, tag = 'scoped memory for tpu_custom_call.1']
    #allocation5 [shape = 'u8[512]{0}', space=vmem, size = 0x400, scoped, tag = 'input window, operand 2, single buffered']
    #allocation6 [shape = 's32[1]{0}', space=sflag, size = 0x4, scoped, tag = 'scoped memory for tpu_custom_call.1']
    #allocation7 [shape = 'u8[7864320]{0}', space=vmem, size = 0x780000, scoped, tag = 'input window, operand 3, single buffered']
    #allocation8 [shape = 'u8[4096]{0}', space=vmem, size = 0x1000, scoped, tag = 'input window, operand 4, single buffered']
    #allocation9 [shape = 's32[1]{0}', space=sflag, size = 0x4, scoped, tag = 'scoped memory for tpu_custom_call.1']
    #allocation10 [shape = 'u8[512]{0}', space=vmem, size = 0x400, scoped, tag = 'input window, operand 6, single buffered']
    #allocation11 [shape = 'u8[1024]{0}', space=vmem, size = 0x400, scoped, tag = 'output window, operand 0, single buffered']
    %12 = vsyncpa [#allocation3], 0
    %13 = vsyncpa [#allocation6], 0
    %14 = vsyncpa [#allocation9], 0
    %15 = vsyncpa [#allocation4], 0
    // Predicated region
    $region2: #{tpu_custom_call.1} parent=1 // pred_check
      _
    $region3: #{tpu_custom_call.1} parent=1 // pred_check_branch
      %17 = sbr.rel (0) target = $region5
    $region4: #{tpu_custom_call.1} parent=1 // pred_region
      _
    $region5: #{tpu_custom_call.1} parent=1 // pred_fallthru
      _
    // Predicated region
    $region6: #{tpu_custom_call.1} parent=1 // pred_check
      _
    $region7: #{tpu_custom_call.1} parent=1 // pred_check_branch
      %19 = sbr.rel (0) target = $region9
    $region8: #{tpu_custom_call.1} parent=1 // pred_region
      %21 = vsyncadd [#allocation3], 0
      %s23 = sshll.u32 %s1, 4
      %s24 = int_to_ptr.hbm [resolvable:$true] %s23
      %s25 = sshll.u32 [#allocation2], 4
      %s26 = int_to_ptr.vmem [resolvable:$true] %s25
      %28 = dma.hbm_to_vmem [thread:$0]  %s24, 64, %s26, [#allocation3]
    $region9: #{tpu_custom_call.1} parent=1 // pred_fallthru
      _
    // Predicated region
    $region10: #{tpu_custom_call.1} parent=1 // pred_check
      _
    $region11: #{tpu_custom_call.1} parent=1 // pred_check_branch
      %30 = sbr.rel (0) target = $region13
    $region12: #{tpu_custom_call.1} parent=1 // pred_region
      %32 = vsyncadd [#allocation6], 0
      %s34 = sshll.u32 %s2, 4
      %s35 = int_to_ptr.hbm [resolvable:$true] %s34
      %s36 = sshll.u32 [#allocation5], 4
      %s37 = int_to_ptr.vmem [resolvable:$true] %s36
      %39 = dma.hbm_to_vmem [thread:$0]  %s35, 16, %s37, [#allocation6]
    $region13: #{tpu_custom_call.1} parent=1 // pred_fallthru
      _
    // Predicated region
    $region14: #{tpu_custom_call.1} parent=1 // pred_check
      _
    $region15: #{tpu_custom_call.1} parent=1 // pred_check_branch
      %41 = sbr.rel (0) target = $region17
    $region16: #{tpu_custom_call.1} parent=1 // pred_region
      %43 = vsyncadd [#allocation6], 0
      %s44 = sshll.u32 %s3, 4
      %s45 = int_to_ptr.hbm [resolvable:$true] %s44
      %s46 = sshll.u32 [#allocation7], 4
      %s47 = int_to_ptr.vmem [resolvable:$true] %s46
      %52 = dma.hbm_to_vmem [thread:$0]  %s45, 245760, %s47, [#allocation6], 512, 512, 32
    $region17: #{tpu_custom_call.1} parent=1 // pred_fallthru
      _
    // Predicated region
    $region18: #{tpu_custom_call.1} parent=1 // pred_check
      _
    $region19: #{tpu_custom_call.1} parent=1 // pred_check_branch
      %54 = sbr.rel (0) target = $region21
    $region20: #{tpu_custom_call.1} parent=1 // pred_region
      %56 = vsyncadd [#allocation9], 0
      %s58 = sshll.u32 %s4, 4
      %s59 = int_to_ptr.hbm [resolvable:$true] %s58
      %s60 = sshll.u32 [#allocation8], 4
      %s61 = int_to_ptr.vmem [resolvable:$true] %s60
      %63 = dma.hbm_to_vmem [thread:$0]  %s59, 128, %s61, [#allocation9]
    $region21: #{tpu_custom_call.1} parent=1 // pred_fallthru
      _
    // Predicated region
    $region22: #{tpu_custom_call.1} parent=1 // pred_check
      _
    $region23: #{tpu_custom_call.1} parent=1 // pred_check_branch
      %65 = sbr.rel (0) target = $region25
    $region24: #{tpu_custom_call.1} parent=1 // pred_region
      _
    $region25: #{tpu_custom_call.1} parent=1 // pred_fallthru
      _
    // Predicated region
    $region26: #{tpu_custom_call.1} parent=1 // pred_check
      _
    $region27: #{tpu_custom_call.1} parent=1 // pred_check_branch
      %67 = sbr.rel (0) target = $region29
    $region28: #{tpu_custom_call.1} parent=1 // pred_region
      %69 = vsyncadd [#allocation9], 0
      %s71 = sshll.u32 %s6, 4
      %s72 = int_to_ptr.hbm [resolvable:$true] %s71
      %s73 = sshll.u32 [#allocation10], 4
      %s74 = int_to_ptr.vmem [resolvable:$true] %s73
      %76 = dma.hbm_to_vmem [thread:$0]  %s72, 16, %s74, [#allocation9]
    $region29: #{tpu_custom_call.1} parent=1 // pred_fallthru
      _
    // Predicated region
    $region30: #{tpu_custom_call.1} parent=1 // pred_check
      _
    $region31: #{tpu_custom_call.1} parent=1 // pred_check_branch
      %78 = sbr.rel (0) target = $region33
    $region32: #{tpu_custom_call.1} parent=1 // pred_region
      %80 = dma.done [#allocation3], 64
    $region33: #{tpu_custom_call.1} parent=1 // pred_fallthru
      _
    // Predicated region
    $region34: #{tpu_custom_call.1} parent=1 // pred_check
      _
    $region35: #{tpu_custom_call.1} parent=1 // pred_check_branch
      %82 = sbr.rel (0) target = $region37
    $region36: #{tpu_custom_call.1} parent=1 // pred_region
      %84 = dma.done [#allocation6], 16
    $region37: #{tpu_custom_call.1} parent=1 // pred_fallthru
      _
    // Predicated region
    $region38: #{tpu_custom_call.1} parent=1 // pred_check
      _
    $region39: #{tpu_custom_call.1} parent=1 // pred_check_branch
      %86 = sbr.rel (0) target = $region41
    $region40: #{tpu_custom_call.1} parent=1 // pred_region
      %88 = dma.done [#allocation6], 245760
    $region41: #{tpu_custom_call.1} parent=1 // pred_fallthru
      _
    // Predicated region
    $region42: #{tpu_custom_call.1} parent=1 // pred_check
      _
    $region43: #{tpu_custom_call.1} parent=1 // pred_check_branch
      %90 = sbr.rel (0) target = $region45
    $region44: #{tpu_custom_call.1} parent=1 // pred_region
      %92 = dma.done [#allocation9], 128
    $region45: #{tpu_custom_call.1} parent=1 // pred_fallthru
      _
    // Predicated region
    $region46: #{tpu_custom_call.1} parent=1 // pred_check
      _
    $region47: #{tpu_custom_call.1} parent=1 // pred_check_branch
      %94 = sbr.rel (0) target = $region49
    $region48: #{tpu_custom_call.1} parent=1 // pred_region
      %96 = dma.done [#allocation9], 16
    $region49: #{tpu_custom_call.1} parent=1 // pred_fallthru
      _
    %v97 = vld [vmem:[%s0] sm:$0xff]
    %v98 = vld [vmem:[%s0 + $0x8] sm:$0xff]
    %v99 = vld [vmem:[%s0 + $0x10] sm:$0xff]
    %v100 = vld [vmem:[%s0 + $0x18] sm:$0xff]
    %v101 = vld [vmem:[%s0 + $0x20] sm:$0xff]
    %v102 = vld [vmem:[%s0 + $0x28] sm:$0xff]
    %v103 = vld [vmem:[%s0 + $0x30] sm:$0xff]
    %v104 = vld [vmem:[%s0 + $0x38] sm:$0xf]
    %v105 = vld [vmem:[#allocation2] sm:$0xf]
    %v106 = vld [vmem:[#allocation5] sm:$0x1]
    %v108 = vperm.slane %v106, 0
    %vm110 = vcmask 31744
    %v112 = vsel %vm110, %v97, 0
    %v115 = vsel %vm110, %v98, 0
    %v118 = vsel %vm110, %v99, 0
    %v121 = vsel %vm110, %v100, 0
    %v124 = vsel %vm110, %v101, 0
    %v127 = vsel %vm110, %v102, 0
    %v130 = vsel %vm110, %v103, 0
    %v133 = vsel %vm110, %v104, 0
    %vm135 = vcmask 1043456
    %v137 = vsel %vm135, %v105, 0
    %139 = vmatpush.msra.mxu0 0.0
    %140 = vmatpush.msra.mxu0 0.0
    %141 = vmatpush.msra.mxu0 0.0
    %142 = vmatpush.msra.mxu0 0.0
    %143 = vmatpush.msra.mxu0 0.0
    %144 = vmatpush.msra.mxu0 0.0
    %145 = vmatpush.msra.mxu0 0.0
    %146 = vmatpush.msra.mxu0 0.0
    %147 = vmatpush.msra.mxu0 0.0
    %148 = vmatpush.msra.mxu0 0.0
    %149 = vmatpush.msra.mxu0 0.0
    %150 = vmatpush.msra.mxu0 0.0
    %151 = vmatpush.msra.mxu0 0.0
    %152 = vmatpush.msra.mxu0 0.0
    %153 = vmatpush.msra.mxu0 0.0
    %154 = vmatpush.msra.mxu0 %v137
    %155 = vmatmul.f32.gmra.mxu0 %v112
    %v156 = vpop.f32.mrf.mxu0
    %v157 = vadd.f32 %v108, %v156
    %158 = vmatmul.f32.gmra.mxu0 %v115
    %v159 = vpop.f32.mrf.mxu0
    %v160 = vadd.f32 %v108, %v159
    %161 = vmatmul.f32.gmra.mxu0 %v118
    %v162 = vpop.f32.mrf.mxu0
    %v163 = vadd.f32 %v108, %v162
    %164 = vmatmul.f32.gmra.mxu0 %v121
    %v165 = vpop.f32.mrf.mxu0
    %v166 = vadd.f32 %v108, %v165
    %167 = vmatmul.f32.gmra.mxu0 %v124
    %v168 = vpop.f32.mrf.mxu0
    %v169 = vadd.f32 %v108, %v168
    %170 = vmatmul.f32.gmra.mxu0 %v127
    %v171 = vpop.f32.mrf.mxu0
    %v172 = vadd.f32 %v108, %v171
    %173 = vmatmul.f32.gmra.mxu0 %v130
    %v174 = vpop.f32.mrf.mxu0
    %v175 = vadd.f32 %v108, %v174
    %176 = vmatmul.f32.gmra.mxu0 %v133
    %v177 = vpop.f32.mrf.mxu0
    %v178 = vadd.f32 %v108, %v177
    %179 = vdwg.mxu0
    %v180 = vmax.f32 %v157, 0.0
    %v181 = vmax.f32 %v160, 0.0
    %v182 = vmax.f32 %v163, 0.0
    %v183 = vmax.f32 %v166, 0.0
    %v184 = vmax.f32 %v169, 0.0
    %v185 = vmax.f32 %v172, 0.0
    %v186 = vmax.f32 %v175, 0.0
    %v187 = vmax.f32 %v178, 0.0
    %vm188 = vcmask 1040384
    %v189 = vsel %vm188, %v180, 0.0
    %v190 = vrot.slane %v183, 5
    %vm191 = vcmask 1041409
    %v192 = vsel %vm191, %v190, %v189
    %v193 = vrot.slane %v180, 1
    %v194 = vsel %vm188, %v193, 0.0
    %v195 = vrot.slane %v183, 6
    %v196 = vsel %vm191, %v195, %v194
    %v197 = vrot.slane %v180, 2
    %v198 = vsel %vm188, %v197, 0.0
    %v199 = vrot.slane %v184, 7
    %v200 = vsel %vm191, %v199, %v198
    %v201 = vrot.slane %v180, 3
    %v202 = vsel %vm188, %v201, 0.0
    %v203 = vsel %vm191, %v184, %v202
    %v204 = vrot.slane %v180, 4
    %v205 = vsel %vm188, %v204, 0.0
    %v206 = vrot.slane %v184, 1
    %v207 = vsel %vm191, %v206, %v205
    %v208 = vrot.slane %v180, 5
    %v209 = vsel %vm188, %v208, 0.0
    %v210 = vrot.slane %v184, 2
    %v211 = vsel %vm191, %v210, %v209
    %v212 = vrot.slane %v180, 6
    %v213 = vsel %vm188, %v212, 0.0
    %v214 = vrot.slane %v184, 3
    %v215 = vsel %vm191, %v214, %v213
    %v216 = vrot.slane %v180, 7
    %v217 = vsel %vm188, %v216, 0.0
    %v218 = vrot.slane %v184, 4
    %v219 = vsel %vm191, %v218, %v217
    %v220 = vsel %vm188, %v181, 0.0
    %v221 = vrot.slane %v184, 5
    %v222 = vsel %vm191, %v221, %v220
    %v223 = vrot.slane %v181, 1
    %v224 = vsel %vm188, %v223, 0.0
    %v225 = vrot.slane %v184, 6
    %v226 = vsel %vm191, %v225, %v224
    %v227 = vrot.slane %v181, 2
    %v228 = vsel %vm188, %v227, 0.0
    %v229 = vrot.slane %v185, 7
    %v230 = vsel %vm191, %v229, %v228
    %v231 = vrot.slane %v181, 3
    %v232 = vsel %vm188, %v231, 0.0
    %v233 = vsel %vm191, %v185, %v232
    %v234 = vrot.slane %v181, 4
    %v235 = vsel %vm188, %v234, 0.0
    %v236 = vrot.slane %v185, 1
    %v237 = vsel %vm191, %v236, %v235
    %v238 = vrot.slane %v181, 5
    %v239 = vsel %vm188, %v238, 0.0
    %v240 = vrot.slane %v185, 2
    %v241 = vsel %vm191, %v240, %v239
    %v242 = vrot.slane %v181, 6
    %v243 = vsel %vm188, %v242, 0.0
    %v244 = vrot.slane %v185, 3
    %v245 = vsel %vm191, %v244, %v243
    %v246 = vrot.slane %v181, 7
    %v247 = vsel %vm188, %v246, 0.0
    %v248 = vrot.slane %v185, 4
    %v249 = vsel %vm191, %v248, %v247
    %v250 = vsel %vm188, %v182, 0.0
    %v251 = vrot.slane %v185, 5
    %v252 = vsel %vm191, %v251, %v250
    %v253 = vrot.slane %v182, 1
    %v254 = vsel %vm188, %v253, 0.0
    %v255 = vrot.slane %v185, 6
    %v256 = vsel %vm191, %v255, %v254
    %v257 = vrot.slane %v182, 2
    %v258 = vsel %vm188, %v257, 0.0
    %v259 = vrot.slane %v186, 7
    %v260 = vsel %vm191, %v259, %v258
    %v261 = vrot.slane %v182, 3
    %v262 = vsel %vm188, %v261, 0.0
    %v263 = vsel %vm191, %v186, %v262
    %v264 = vrot.slane %v182, 4
    %v265 = vsel %vm188, %v264, 0.0
    %v266 = vrot.slane %v186, 1
    %v267 = vsel %vm191, %v266, %v265
    %v268 = vrot.slane %v182, 5
    %v269 = vsel %vm188, %v268, 0.0
    %v270 = vrot.slane %v186, 2
    %v271 = vsel %vm191, %v270, %v269
    %v272 = vrot.slane %v182, 6
    %v273 = vsel %vm188, %v272, 0.0
    %v274 = vrot.slane %v186, 3
    %v275 = vsel %vm191, %v274, %v273
    %v276 = vrot.slane %v182, 7
    %v277 = vsel %vm188, %v276, 0.0
    %v278 = vrot.slane %v186, 4
    %v279 = vsel %vm191, %v278, %v277
    %v280 = vsel %vm188, %v183, 0.0
    %v281 = vrot.slane %v186, 5
    %v282 = vsel %vm191, %v281, %v280
    %v283 = vrot.slane %v183, 1
    %v284 = vsel %vm188, %v283, 0.0
    %v285 = vrot.slane %v186, 6
    %v286 = vsel %vm191, %v285, %v284
    %v287 = vrot.slane %v183, 2
    %v288 = vsel %vm188, %v287, 0.0
    %v289 = vrot.slane %v187, 7
    %v290 = vsel %vm191, %v289, %v288
    %v291 = vrot.slane %v183, 3
    %v292 = vsel %vm188, %v291, 0.0
    %v293 = vsel %vm191, %v187, %v292
    %v294 = vrot.slane %v183, 4
    %v295 = vsel %vm188, %v294, 0.0
    %v296 = vrot.slane %v187, 1
    %v297 = vsel %vm191, %v296, %v295
    %v298 = vsel %vm188, %v190, 0.0
    %v299 = vrot.slane %v187, 2
    %v300 = vsel %vm191, %v299, %v298
    %v301 = vpack.c.bf16 %v192, %v192
    %v302 = vpack.c.bf16 %v196, %v196
    %v303 = vpack.c.bf16 %v200, %v200
    %v304 = vpack.c.bf16 %v203, %v203
    %v305 = vpack.c.bf16 %v207, %v207
    %v306 = vpack.c.bf16 %v211, %v211
    %v307 = vpack.c.bf16 %v215, %v215
    %v308 = vpack.c.bf16 %v219, %v219
    %v309 = vpack.c.bf16 %v222, %v222
    %v310 = vpack.c.bf16 %v226, %v226
    %v311 = vpack.c.bf16 %v230, %v230
    %v312 = vpack.c.bf16 %v233, %v233
    %v313 = vpack.c.bf16 %v237, %v237
    %v314 = vpack.c.bf16 %v241, %v241
    %v315 = vpack.c.bf16 %v245, %v245
    %v316 = vpack.c.bf16 %v249, %v249
    %v317 = vpack.c.bf16 %v252, %v252
    %v318 = vpack.c.bf16 %v256, %v256
    %v319 = vpack.c.bf16 %v260, %v260
    %v320 = vpack.c.bf16 %v263, %v263
    %v321 = vpack.c.bf16 %v267, %v267
    %v322 = vpack.c.bf16 %v271, %v271
    %v323 = vpack.c.bf16 %v275, %v275
    %v324 = vpack.c.bf16 %v279, %v279
    %v325 = vpack.c.bf16 %v282, %v282
    %v326 = vpack.c.bf16 %v286, %v286
    %v327 = vpack.c.bf16 %v290, %v290
    %v328 = vpack.c.bf16 %v293, %v293
    %v329 = vpack.c.bf16 %v297, %v297
    %v330 = vpack.c.bf16 %v300, %v300
    %v331 = vld [vmem:[#allocation7] sm:$0xff]
    %v332 = vld [vmem:[#allocation7 + $0x8] sm:$0xff]
    %v333 = vld [vmem:[#allocation7 + $0x10] sm:$0xff]
    %v334 = vld [vmem:[#allocation7 + $0x18] sm:$0xff]
    %v335 = vld [vmem:[#allocation7 + $0x20] sm:$0xff]
    %v336 = vld [vmem:[#allocation7 + $0x28] sm:$0xff]
    %v337 = vld [vmem:[#allocation7 + $0x30] sm:$0xff]
    %v338 = vld [vmem:[#allocation7 + $0x38] sm:$0xff]
    %v339 = vld [vmem:[#allocation7 + $0x40] sm:$0xff]
    %v340 = vld [vmem:[#allocation7 + $0x48] sm:$0xff]
    %v341 = vld [vmem:[#allocation7 + $0x50] sm:$0xff]
    %v342 = vld [vmem:[#allocation7 + $0x58] sm:$0xff]
    %v343 = vld [vmem:[#allocation7 + $0x60] sm:$0xff]
    %v344 = vld [vmem:[#allocation7 + $0x68] sm:$0xff]
    %v345 = vld [vmem:[#allocation7 + $0x70] sm:$0xff]
    %v346 = vld [vmem:[#allocation7 + $0x78] sm:$0xff]
    %v347 = vld [vmem:[#allocation7 + $0x80] sm:$0xff]
    %v348 = vld [vmem:[#allocation7 + $0x88] sm:$0xff]
    %v349 = vld [vmem:[#allocation7 + $0x90] sm:$0xff]
    %v350 = vld [vmem:[#allocation7 + $0x98] sm:$0xff]
    %v351 = vld [vmem:[#allocation7 + $0xa0] sm:$0xff]
    %v352 = vld [vmem:[#allocation7 + $0xa8] sm:$0xff]
    %v353 = vld [vmem:[#allocation7 + $0xb0] sm:$0xff]
    %v354 = vld [vmem:[#allocation7 + $0xb8] sm:$0xff]
    %v355 = vld [vmem:[#allocation7 + $0xc0] sm:$0xff]
    %v356 = vld [vmem:[#allocation7 + $0xc8] sm:$0xff]
    %v357 = vld [vmem:[#allocation7 + $0xd0] sm:$0xff]
    %v358 = vld [vmem:[#allocation7 + $0xd8] sm:$0xff]
    %v359 = vld [vmem:[#allocation7 + $0xe0] sm:$0xff]
    %v360 = vld [vmem:[#allocation7 + $0xe8] sm:$0xff]
    %v361 = vld [vmem:[#allocation7 + $0xf0] sm:$0xff]
    %v362 = vld [vmem:[#allocation7 + $0xf8] sm:$0xff]
    %v363 = vld [vmem:[#allocation7 + $0x100] sm:$0xff]
    %v364 = vld [vmem:[#allocation7 + $0x108] sm:$0xff]
    %v365 = vld [vmem:[#allocation7 + $0x110] sm:$0xff]
    %v366 = vld [vmem:[#allocation7 + $0x118] sm:$0xff]
    %v367 = vld [vmem:[#allocation7 + $0x120] sm:$0xff]
    %v368 = vld [vmem:[#allocation7 + $0x128] sm:$0xff]
    %v369 = vld [vmem:[#allocation7 + $0x130] sm:$0xff]
    %v370 = vld [vmem:[#allocation7 + $0x138] sm:$0xff]
    %v371 = vld [vmem:[#allocation7 + $0x140] sm:$0xff]
    %v372 = vld [vmem:[#allocation7 + $0x148] sm:$0xff]
    %v373 = vld [vmem:[#allocation7 + $0x150] sm:$0xff]
    %v374 = vld [vmem:[#allocation7 + $0x158] sm:$0xff]
    %v375 = vld [vmem:[#allocation7 + $0x160] sm:$0xff]
    %v376 = vld [vmem:[#allocation7 + $0x168] sm:$0xff]
    %v377 = vld [vmem:[#allocation7 + $0x170] sm:$0xff]
    %v378 = vld [vmem:[#allocation7 + $0x178] sm:$0xff]
    %v379 = vld [vmem:[#allocation7 + $0x180] sm:$0xff]
    %v380 = vld [vmem:[#allocation7 + $0x188] sm:$0xff]
    %v381 = vld [vmem:[#allocation7 + $0x190] sm:$0xff]
    %v382 = vld [vmem:[#allocation7 + $0x198] sm:$0xff]
    %v383 = vld [vmem:[#allocation7 + $0x1a0] sm:$0xff]
    %v384 = vld [vmem:[#allocation7 + $0x1a8] sm:$0xff]
    %v385 = vld [vmem:[#allocation7 + $0x1b0] sm:$0xff]
    %v386 = vld [vmem:[#allocation7 + $0x1b8] sm:$0xff]
    %v387 = vld [vmem:[#allocation7 + $0x1c0] sm:$0xff]
    %v388 = vld [vmem:[#allocation7 + $0x1c8] sm:$0xff]
    %v389 = vld [vmem:[#allocation7 + $0x1d0] sm:$0xff]
    %v390 = vld [vmem:[#allocation7 + $0x1d8] sm:$0xff]
    %v391 = vld [vmem:[#allocation7 + $0x1e0] sm:$0xff]
    %v392 = vld [vmem:[#allocation7 + $0x1e8] sm:$0xff]
    %v393 = vld [vmem:[#allocation7 + $0x1f0] sm:$0xff]
    %v394 = vld [vmem:[#allocation7 + $0x1f8] sm:$0xff]
    %v395 = vld [vmem:[#allocation7 + $0x200] sm:$0xff]
    %v396 = vld [vmem:[#allocation7 + $0x208] sm:$0xff]
    %v397 = vld [vmem:[#allocation7 + $0x210] sm:$0xff]
    %v398 = vld [vmem:[#allocation7 + $0x218] sm:$0xff]
    %v399 = vld [vmem:[#allocation7 + $0x220] sm:$0xff]
    %v400 = vld [vmem:[#allocation7 + $0x228] sm:$0xff]
    %v401 = vld [vmem:[#allocation7 + $0x230] sm:$0xff]
    %v402 = vld [vmem:[#allocation7 + $0x238] sm:$0xff]
    %v403 = vld [vmem:[#allocation7 + $0x240] sm:$0xff]
    %v404 = vld [vmem:[#allocation7 + $0x248] sm:$0xff]
    %v405 = vld [vmem:[#allocation7 + $0x250] sm:$0xff]
    %v406 = vld [vmem:[#allocation7 + $0x258] sm:$0xff]
    %v407 = vld [vmem:[#allocation7 + $0x260] sm:$0xff]
    %v408 = vld [vmem:[#allocation7 + $0x268] sm:$0xff]
    %v409 = vld [vmem:[#allocation7 + $0x270] sm:$0xff]
    %v410 = vld [vmem:[#allocation7 + $0x278] sm:$0xff]
    %v411 = vld [vmem:[#allocation7 + $0x280] sm:$0xff]
    %v412 = vld [vmem:[#allocation7 + $0x288] sm:$0xff]
    %v413 = vld [vmem:[#allocation7 + $0x290] sm:$0xff]
    %v414 = vld [vmem:[#allocation7 + $0x298] sm:$0xff]
    %v415 = vld [vmem:[#allocation7 + $0x2a0] sm:$0xff]
    %v416 = vld [vmem:[#allocation7 + $0x2a8] sm:$0xff]
    %v417 = vld [vmem:[#allocation7 + $0x2b0] sm:$0xff]
    %v418 = vld [vmem:[#allocation7 + $0x2b8] sm:$0xff]
    %v419 = vld [vmem:[#allocation7 + $0x2c0] sm:$0xff]
    %v420 = vld [vmem:[#allocation7 + $0x2c8] sm:$0xff]
    %v421 = vld [vmem:[#allocation7 + $0x2d0] sm:$0xff]
    %v422 = vld [vmem:[#allocation7 + $0x2d8] sm:$0xff]
    %v423 = vld [vmem:[#allocation7 + $0x2e0] sm:$0xff]
    %v424 = vld [vmem:[#allocation7 + $0x2e8] sm:$0xff]
    %v425 = vld [vmem:[#allocation7 + $0x2f0] sm:$0xff]
    %v426 = vld [vmem:[#allocation7 + $0x2f8] sm:$0xff]
    %v427 = vld [vmem:[#allocation7 + $0x300] sm:$0xff]
    %v428 = vld [vmem:[#allocation7 + $0x308] sm:$0xff]
    %v429 = vld [vmem:[#allocation7 + $0x310] sm:$0xff]
    %v430 = vld [vmem:[#allocation7 + $0x318] sm:$0xff]
    %v431 = vld [vmem:[#allocation7 + $0x320] sm:$0xff]
    %v432 = vld [vmem:[#allocation7 + $0x328] sm:$0xff]
    %v433 = vld [vmem:[#allocation7 + $0x330] sm:$0xff]
    %v434 = vld [vmem:[#allocation7 + $0x338] sm:$0xff]
    %v435 = vld [vmem:[#allocation7 + $0x340] sm:$0xff]
    %v436 = vld [vmem:[#allocation7 + $0x348] sm:$0xff]
    %v437 = vld [vmem:[#allocation7 + $0x350] sm:$0xff]
    %v438 = vld [vmem:[#allocation7 + $0x358] sm:$0xff]
    %v439 = vld [vmem:[#allocation7 + $0x360] sm:$0xff]
    %v440 = vld [vmem:[#allocation7 + $0x368] sm:$0xff]
    %v441 = vld [vmem:[#allocation7 + $0x370] sm:$0xff]
    %v442 = vld [vmem:[#allocation7 + $0x378] sm:$0xff]
    %v443 = vld [vmem:[#allocation7 + $0x380] sm:$0xff]
    %v444 = vld [vmem:[#allocation7 + $0x388] sm:$0xff]
    %v445 = vld [vmem:[#allocation7 + $0x390] sm:$0xff]
    %v446 = vld [vmem:[#allocation7 + $0x398] sm:$0xff]
    %v447 = vld [vmem:[#allocation7 + $0x3a0] sm:$0xff]
    %v448 = vld [vmem:[#allocation7 + $0x3a8] sm:$0xff]
    %v449 = vld [vmem:[#allocation7 + $0x3b0] sm:$0xff]
    %v450 = vld [vmem:[#allocation7 + $0x3b8] sm:$0xff]
    %v451 = vld [vmem:[#allocation7 + $0x3c0] sm:$0xff]
    %v452 = vld [vmem:[#allocation7 + $0x3c8] sm:$0xff]
    %v453 = vld [vmem:[#allocation7 + $0x3d0] sm:$0xff]
    %v454 = vld [vmem:[#allocation7 + $0x3d8] sm:$0xff]
    %v455 = vld [vmem:[#allocation7 + $0x3e0] sm:$0xff]
    %v456 = vld [vmem:[#allocation7 + $0x3e8] sm:$0xff]
    %v457 = vld [vmem:[#allocation7 + $0x3f0] sm:$0xff]
    %v458 = vld [vmem:[#allocation7 + $0x3f8] sm:$0xff]
    %v459 = vld [vmem:[#allocation7 + $0x400] sm:$0xff]
    %v460 = vld [vmem:[#allocation7 + $0x408] sm:$0xff]
    %v461 = vld [vmem:[#allocation7 + $0x410] sm:$0xff]
    %v462 = vld [vmem:[#allocation7 + $0x418] sm:$0xff]
    %v463 = vld [vmem:[#allocation7 + $0x420] sm:$0xff]
    %v464 = vld [vmem:[#allocation7 + $0x428] sm:$0xff]
    %v465 = vld [vmem:[#allocation7 + $0x430] sm:$0xff]
    %v466 = vld [vmem:[#allocation7 + $0x438] sm:$0xff]
    %v467 = vld [vmem:[#allocation7 + $0x440] sm:$0xff]
    %v468 = vld [vmem:[#allocation7 + $0x448] sm:$0xff]
    %v469 = vld [vmem:[#allocation7 + $0x450] sm:$0xff]
    %v470 = vld [vmem:[#allocation7 + $0x458] sm:$0xff]
    %v471 = vld [vmem:[#allocation7 + $0x460] sm:$0xff]
    %v472 = vld [vmem:[#allocation7 + $0x468] sm:$0xff]
    %v473 = vld [vmem:[#allocation7 + $0x470] sm:$0xff]
    %v474 = vld [vmem:[#allocation7 + $0x478] sm:$0xff]
    %v475 = vld [vmem:[#allocation7 + $0x480] sm:$0xff]
    %v476 = vld [vmem:[#allocation7 + $0x488] sm:$0xff]
    %v477 = vld [vmem:[#allocation7 + $0x490] sm:$0xff]
    %v478 = vld [vmem:[#allocation7 + $0x498] sm:$0xff]
    %v479 = vld [vmem:[#allocation7 + $0x4a0] sm:$0xff]
    %v480 = vld [vmem:[#allocation7 + $0x4a8] sm:$0xff]
    %v481 = vld [vmem:[#allocation7 + $0x4b0] sm:$0xff]
    %v482 = vld [vmem:[#allocation7 + $0x4b8] sm:$0xff]
    %v483 = vld [vmem:[#allocation7 + $0x4c0] sm:$0xff]
    %v484 = vld [vmem:[#allocation7 + $0x4c8] sm:$0xff]
    %v485 = vld [vmem:[#allocation7 + $0x4d0] sm:$0xff]
    %v486 = vld [vmem:[#allocation7 + $0x4d8] sm:$0xff]
    %v487 = vld [vmem:[#allocation7 + $0x4e0] sm:$0xff]
    %v488 = vld [vmem:[#allocation7 + $0x4e8] sm:$0xff]
    %v489 = vld [vmem:[#allocation7 + $0x4f0] sm:$0xff]
    %v490 = vld [vmem:[#allocation7 + $0x4f8] sm:$0xff]
    %v491 = vld [vmem:[#allocation7 + $0x500] sm:$0xff]
    %v492 = vld [vmem:[#allocation7 + $0x508] sm:$0xff]
    %v493 = vld [vmem:[#allocation7 + $0x510] sm:$0xff]
    %v494 = vld [vmem:[#allocation7 + $0x518] sm:$0xff]
    %v495 = vld [vmem:[#allocation7 + $0x520] sm:$0xff]
    %v496 = vld [vmem:[#allocation7 + $0x528] sm:$0xff]
    %v497 = vld [vmem:[#allocation7 + $0x530] sm:$0xff]
    %v498 = vld [vmem:[#allocation7 + $0x538] sm:$0xff]
    %v499 = vld [vmem:[#allocation7 + $0x540] sm:$0xff]
    %v500 = vld [vmem:[#allocation7 + $0x548] sm:$0xff]
    %v501 = vld [vmem:[#allocation7 + $0x550] sm:$0xff]
    %v502 = vld [vmem:[#allocation7 + $0x558] sm:$0xff]
    %v503 = vld [vmem:[#allocation7 + $0x560] sm:$0xff]
    %v504 = vld [vmem:[#allocation7 + $0x568] sm:$0xff]
    %v505 = vld [vmem:[#allocation7 + $0x570] sm:$0xff]
    %v506 = vld [vmem:[#allocation7 + $0x578] sm:$0xff]
    %v507 = vld [vmem:[#allocation7 + $0x580] sm:$0xff]
    %v508 = vld [vmem:[#allocation7 + $0x588] sm:$0xff]
    %v509 = vld [vmem:[#allocation7 + $0x590] sm:$0xff]
    %v510 = vld [vmem:[#allocation7 + $0x598] sm:$0xff]
    %v511 = vld [vmem:[#allocation7 + $0x5a0] sm:$0xff]
    %v512 = vld [vmem:[#allocation7 + $0x5a8] sm:$0xff]
    %v513 = vld [vmem:[#allocation7 + $0x5b0] sm:$0xff]
    %v514 = vld [vmem:[#allocation7 + $0x5b8] sm:$0xff]
    %v515 = vld [vmem:[#allocation7 + $0x5c0] sm:$0xff]
    %v516 = vld [vmem:[#allocation7 + $0x5c8] sm:$0xff]
    %v517 = vld [vmem:[#allocation7 + $0x5d0] sm:$0xff]
    %v518 = vld [vmem:[#allocation7 + $0x5d8] sm:$0xff]
    %v519 = vld [vmem:[#allocation7 + $0x5e0] sm:$0xff]
    %v520 = vld [vmem:[#allocation7 + $0x5e8] sm:$0xff]
    %v521 = vld [vmem:[#allocation7 + $0x5f0] sm:$0xff]
    %v522 = vld [vmem:[#allocation7 + $0x5f8] sm:$0xff]
    %v523 = vld [vmem:[#allocation7 + $0x600] sm:$0xff]
    %v524 = vld [vmem:[#allocation7 + $0x608] sm:$0xff]
    %v525 = vld [vmem:[#allocation7 + $0x610] sm:$0xff]
    %v526 = vld [vmem:[#allocation7 + $0x618] sm:$0xff]
    %v527 = vld [vmem:[#allocation7 + $0x620] sm:$0xff]
    %v528 = vld [vmem:[#allocation7 + $0x628] sm:$0xff]
    %v529 = vld [vmem:[#allocation7 + $0x630] sm:$0xff]
    %v530 = vld [vmem:[#allocation7 + $0x638] sm:$0xff]
    %v531 = vld [vmem:[#allocation7 + $0x640] sm:$0xff]
    %v532 = vld [vmem:[#allocation7 + $0x648] sm:$0xff]
    %v533 = vld [vmem:[#allocation7 + $0x650] sm:$0xff]
    %v534 = vld [vmem:[#allocation7 + $0x658] sm:$0xff]
    %v535 = vld [vmem:[#allocation7 + $0x660] sm:$0xff]
    %v536 = vld [vmem:[#allocation7 + $0x668] sm:$0xff]
    %v537 = vld [vmem:[#allocation7 + $0x670] sm:$0xff]
    %v538 = vld [vmem:[#allocation7 + $0x678] sm:$0xff]
    %v539 = vld [vmem:[#allocation7 + $0x680] sm:$0xff]
    %v540 = vld [vmem:[#allocation7 + $0x688] sm:$0xff]
    %v541 = vld [vmem:[#allocation7 + $0x690] sm:$0xff]
    %v542 = vld [vmem:[#allocation7 + $0x698] sm:$0xff]
    %v543 = vld [vmem:[#allocation7 + $0x6a0] sm:$0xff]
    %v544 = vld [vmem:[#allocation7 + $0x6a8] sm:$0xff]
    %v545 = vld [vmem:[#allocation7 + $0x6b0] sm:$0xff]
    %v546 = vld [vmem:[#allocation7 + $0x6b8] sm:$0xff]
    %v547 = vld [vmem:[#allocation7 + $0x6c0] sm:$0xff]
    %v548 = vld [vmem:[#allocation7 + $0x6c8] sm:$0xff]
    %v549 = vld [vmem:[#allocation7 + $0x6d0] sm:$0xff]
    %v550 = vld [vmem:[#allocation7 + $0x6d8] sm:$0xff]
    %v551 = vld [vmem:[#allocation7 + $0x6e0] sm:$0xff]
    %v552 = vld [vmem:[#allocation7 + $0x6e8] sm:$0xff]
    %v553 = vld [vmem:[#allocation7 + $0x6f0] sm:$0xff]
    %v554 = vld [vmem:[#allocation7 + $0x6f8] sm:$0xff]
    %v555 = vld [vmem:[#allocation7 + $0x700] sm:$0xff]
    %v556 = vld [vmem:[#allocation7 + $0x708] sm:$0xff]
    %v557 = vld [vmem:[#allocation7 + $0x710] sm:$0xff]
    %v558 = vld [vmem:[#allocation7 + $0x718] sm:$0xff]
    %v559 = vld [vmem:[#allocation7 + $0x720] sm:$0xff]
    %v560 = vld [vmem:[#allocation7 + $0x728] sm:$0xff]
    %v561 = vld [vmem:[#allocation7 + $0x730] sm:$0xff]
    %v562 = vld [vmem:[#allocation7 + $0x738] sm:$0xff]
    %v563 = vld [vmem:[#allocation7 + $0x740] sm:$0xff]
    %v564 = vld [vmem:[#allocation7 + $0x748] sm:$0xff]
    %v565 = vld [vmem:[#allocation7 + $0x750] sm:$0xff]
    %v566 = vld [vmem:[#allocation7 + $0x758] sm:$0xff]
    %v567 = vld [vmem:[#allocation7 + $0x760] sm:$0xff]
    %v568 = vld [vmem:[#allocation7 + $0x768] sm:$0xff]
    %v569 = vld [vmem:[#allocation7 + $0x770] sm:$0xff]
    %v570 = vld [vmem:[#allocation7 + $0x778] sm:$0xff]
    %v571 = vld [vmem:[#allocation7 + $0x780] sm:$0xff]
    %v572 = vld [vmem:[#allocation7 + $0x788] sm:$0xff]
    %v573 = vld [vmem:[#allocation7 + $0x790] sm:$0xff]
    %v574 = vld [vmem:[#allocation7 + $0x798] sm:$0xff]
    %v575 = vld [vmem:[#allocation7 + $0x7a0] sm:$0xff]
    %v576 = vld [vmem:[#allocation7 + $0x7a8] sm:$0xff]
    %v577 = vld [vmem:[#allocation7 + $0x7b0] sm:$0xff]
    %v578 = vld [vmem:[#allocation7 + $0x7b8] sm:$0xff]
    %v579 = vld [vmem:[#allocation7 + $0x7c0] sm:$0xff]
    %v580 = vld [vmem:[#allocation7 + $0x7c8] sm:$0xff]
    %v581 = vld [vmem:[#allocation7 + $0x7d0] sm:$0xff]
    %v582 = vld [vmem:[#allocation7 + $0x7d8] sm:$0xff]
    %v583 = vld [vmem:[#allocation7 + $0x7e0] sm:$0xff]
    %v584 = vld [vmem:[#allocation7 + $0x7e8] sm:$0xff]
    %v585 = vld [vmem:[#allocation7 + $0x7f0] sm:$0xff]
    %v586 = vld [vmem:[#allocation7 + $0x7f8] sm:$0xff]
    %v587 = vld [vmem:[#allocation7 + $0x800] sm:$0xff]
    %v588 = vld [vmem:[#allocation7 + $0x808] sm:$0xff]
    %v589 = vld [vmem:[#allocation7 + $0x810] sm:$0xff]
    %v590 = vld [vmem:[#allocation7 + $0x818] sm:$0xff]
    %v591 = vld [vmem:[#allocation7 + $0x820] sm:$0xff]
    %v592 = vld [vmem:[#allocation7 + $0x828] sm:$0xff]
    %v593 = vld [vmem:[#allocation7 + $0x830] sm:$0xff]
    %v594 = vld [vmem:[#allocation7 + $0x838] sm:$0xff]
    %v595 = vld [vmem:[#allocation7 + $0x840] sm:$0xff]
    %v596 = vld [vmem:[#allocation7 + $0x848] sm:$0xff]
    %v597 = vld [vmem:[#allocation7 + $0x850] sm:$0xff]
    %v598 = vld [vmem:[#allocation7 + $0x858] sm:$0xff]
    %v599 = vld [vmem:[#allocation7 + $0x860] sm:$0xff]
    %v600 = vld [vmem:[#allocation7 + $0x868] sm:$0xff]
    %v601 = vld [vmem:[#allocation7 + $0x870] sm:$0xff]
    %v602 = vld [vmem:[#allocation7 + $0x878] sm:$0xff]
    %v603 = vld [vmem:[#allocation7 + $0x880] sm:$0xff]
    %v604 = vld [vmem:[#allocation7 + $0x888] sm:$0xff]
    %v605 = vld [vmem:[#allocation7 + $0x890] sm:$0xff]
    %v606 = vld [vmem:[#allocation7 + $0x898] sm:$0xff]
    %v607 = vld [vmem:[#allocation7 + $0x8a0] sm:$0xff]
    %v608 = vld [vmem:[#allocation7 + $0x8a8] sm:$0xff]
    %v609 = vld [vmem:[#allocation7 + $0x8b0] sm:$0xff]
    %v610 = vld [vmem:[#allocation7 + $0x8b8] sm:$0xff]
    %v611 = vld [vmem:[#allocation7 + $0x8c0] sm:$0xff]
    %v612 = vld [vmem:[#allocation7 + $0x8c8] sm:$0xff]
    %v613 = vld [vmem:[#allocation7 + $0x8d0] sm:$0xff]
    %v614 = vld [vmem:[#allocation7 + $0x8d8] sm:$0xff]
    %v615 = vld [vmem:[#allocation7 + $0x8e0] sm:$0xff]
    %v616 = vld [vmem:[#allocation7 + $0x8e8] sm:$0xff]
    %v617 = vld [vmem:[#allocation7 + $0x8f0] sm:$0xff]
    %v618 = vld [vmem:[#allocation7 + $0x8f8] sm:$0xff]
    %v619 = vld [vmem:[#allocation7 + $0x900] sm:$0xff]
    %v620 = vld [vmem:[#allocation7 + $0x908] sm:$0xff]
    %v621 = vld [vmem:[#allocation7 + $0x910] sm:$0xff]
    %v622 = vld [vmem:[#allocation7 + $0x918] sm:$0xff]
    %v623 = vld [vmem:[#allocation7 + $0x920] sm:$0xff]
    %v624 = vld [vmem:[#allocation7 + $0x928] sm:$0xff]
    %v625 = vld [vmem:[#allocation7 + $0x930] sm:$0xff]
    %v626 = vld [vmem:[#allocation7 + $0x938] sm:$0xff]
    %v627 = vld [vmem:[#allocation7 + $0x940] sm:$0xff]
    %v628 = vld [vmem:[#allocation7 + $0x948] sm:$0xff]
    %v629 = vld [vmem:[#allocation7 + $0x950] sm:$0xff]
    %v630 = vld [vmem:[#allocation7 + $0x958] sm:$0xff]
    %v631 = vld [vmem:[#allocation7 + $0x960] sm:$0xff]
    %v632 = vld [vmem:[#allocation7 + $0x968] sm:$0xff]
    %v633 = vld [vmem:[#allocation7 + $0x970] sm:$0xff]
    %v634 = vld [vmem:[#allocation7 + $0x978] sm:$0xff]
    %v635 = vld [vmem:[#allocation7 + $0x980] sm:$0xff]
    %v636 = vld [vmem:[#allocation7 + $0x988] sm:$0xff]
    %v637 = vld [vmem:[#allocation7 + $0x990] sm:$0xff]
    %v638 = vld [vmem:[#allocation7 + $0x998] sm:$0xff]
    %v639 = vld [vmem:[#allocation7 + $0x9a0] sm:$0xff]
    %v640 = vld [vmem:[#allocation7 + $0x9a8] sm:$0xff]
    %v641 = vld [vmem:[#allocation7 + $0x9b0] sm:$0xff]
    %v642 = vld [vmem:[#allocation7 + $0x9b8] sm:$0xff]
    %v643 = vld [vmem:[#allocation7 + $0x9c0] sm:$0xff]
    %v644 = vld [vmem:[#allocation7 + $0x9c8] sm:$0xff]
    %v645 = vld [vmem:[#allocation7 + $0x9d0] sm:$0xff]
    %v646 = vld [vmem:[#allocation7 + $0x9d8] sm:$0xff]
    %v647 = vld [vmem:[#allocation7 + $0x9e0] sm:$0xff]
    %v648 = vld [vmem:[#allocation7 + $0x9e8] sm:$0xff]
    %v649 = vld [vmem:[#allocation7 + $0x9f0] sm:$0xff]
    %v650 = vld [vmem:[#allocation7 + $0x9f8] sm:$0xff]
    %v651 = vld [vmem:[#allocation7 + $0xa00] sm:$0xff]
    %v652 = vld [vmem:[#allocation7 + $0xa08] sm:$0xff]
    %v653 = vld [vmem:[#allocation7 + $0xa10] sm:$0xff]
    %v654 = vld [vmem:[#allocation7 + $0xa18] sm:$0xff]
    %v655 = vld [vmem:[#allocation7 + $0xa20] sm:$0xff]
    %v656 = vld [vmem:[#allocation7 + $0xa28] sm:$0xff]
    %v657 = vld [vmem:[#allocation7 + $0xa30] sm:$0xff]
    %v658 = vld [vmem:[#allocation7 + $0xa38] sm:$0xff]
    %v659 = vld [vmem:[#allocation7 + $0xa40] sm:$0xff]
    %v660 = vld [vmem:[#allocation7 + $0xa48] sm:$0xff]
    %v661 = vld [vmem:[#allocation7 + $0xa50] sm:$0xff]
    %v662 = vld [vmem:[#allocation7 + $0xa58] sm:$0xff]
    %v663 = vld [vmem:[#allocation7 + $0xa60] sm:$0xff]
    %v664 = vld [vmem:[#allocation7 + $0xa68] sm:$0xff]
    %v665 = vld [vmem:[#allocation7 + $0xa70] sm:$0xff]
    %v666 = vld [vmem:[#allocation7 + $0xa78] sm:$0xff]
    %v667 = vld [vmem:[#allocation7 + $0xa80] sm:$0xff]
    %v668 = vld [vmem:[#allocation7 + $0xa88] sm:$0xff]
    %v669 = vld [vmem:[#allocation7 + $0xa90] sm:$0xff]
    %v670 = vld [vmem:[#allocation7 + $0xa98] sm:$0xff]
    %v671 = vld [vmem:[#allocation7 + $0xaa0] sm:$0xff]
    %v672 = vld [vmem:[#allocation7 + $0xaa8] sm:$0xff]
    %v673 = vld [vmem:[#allocation7 + $0xab0] sm:$0xff]
    %v674 = vld [vmem:[#allocation7 + $0xab8] sm:$0xff]
    %v675 = vld [vmem:[#allocation7 + $0xac0] sm:$0xff]
    %v676 = vld [vmem:[#allocation7 + $0xac8] sm:$0xff]
    %v677 = vld [vmem:[#allocation7 + $0xad0] sm:$0xff]
    %v678 = vld [vmem:[#allocation7 + $0xad8] sm:$0xff]
    %v679 = vld [vmem:[#allocation7 + $0xae0] sm:$0xff]
    %v680 = vld [vmem:[#allocation7 + $0xae8] sm:$0xff]
    %v681 = vld [vmem:[#allocation7 + $0xaf0] sm:$0xff]
    %v682 = vld [vmem:[#allocation7 + $0xaf8] sm:$0xff]
    %v683 = vld [vmem:[#allocation7 + $0xb00] sm:$0xff]
    %v684 = vld [vmem:[#allocation7 + $0xb08] sm:$0xff]
    %v685 = vld [vmem:[#allocation7 + $0xb10] sm:$0xff]
    %v686 = vld [vmem:[#allocation7 + $0xb18] sm:$0xff]
    %v687 = vld [vmem:[#allocation7 + $0xb20] sm:$0xff]
    %v688 = vld [vmem:[#allocation7 + $0xb28] sm:$0xff]
    %v689 = vld [vmem:[#allocation7 + $0xb30] sm:$0xff]
    %v690 = vld [vmem:[#allocation7 + $0xb38] sm:$0xff]
    %v691 = vld [vmem:[#allocation7 + $0xb40] sm:$0xff]
    %v692 = vld [vmem:[#allocation7 + $0xb48] sm:$0xff]
    %v693 = vld [vmem:[#allocation7 + $0xb50] sm:$0xff]
    %v694 = vld [vmem:[#allocation7 + $0xb58] sm:$0xff]
    %v695 = vld [vmem:[#allocation7 + $0xb60] sm:$0xff]
    %v696 = vld [vmem:[#allocation7 + $0xb68] sm:$0xff]
    %v697 = vld [vmem:[#allocation7 + $0xb70] sm:$0xff]
    %v698 = vld [vmem:[#allocation7 + $0xb78] sm:$0xff]
    %v699 = vld [vmem:[#allocation7 + $0xb80] sm:$0xff]
    %v700 = vld [vmem:[#allocation7 + $0xb88] sm:$0xff]
    %v701 = vld [vmem:[#allocation7 + $0xb90] sm:$0xff]
    %v702 = vld [vmem:[#allocation7 + $0xb98] sm:$0xff]
    %v703 = vld [vmem:[#allocation7 + $0xba0] sm:$0xff]
    %v704 = vld [vmem:[#allocation7 + $0xba8] sm:$0xff]
    %v705 = vld [vmem:[#allocation7 + $0xbb0] sm:$0xff]
    %v706 = vld [vmem:[#allocation7 + $0xbb8] sm:$0xff]
    %v707 = vld [vmem:[#allocation7 + $0xbc0] sm:$0xff]
    %v708 = vld [vmem:[#allocation7 + $0xbc8] sm:$0xff]
    %v709 = vld [vmem:[#allocation7 + $0xbd0] sm:$0xff]
    %v710 = vld [vmem:[#allocation7 + $0xbd8] sm:$0xff]
    %v711 = vld [vmem:[#allocation7 + $0xbe0] sm:$0xff]
    %v712 = vld [vmem:[#allocation7 + $0xbe8] sm:$0xff]
    %v713 = vld [vmem:[#allocation7 + $0xbf0] sm:$0xff]
    %v714 = vld [vmem:[#allocation7 + $0xbf8] sm:$0xff]
    %v715 = vld [vmem:[#allocation7 + $0xc00] sm:$0xff]
    %v716 = vld [vmem:[#allocation7 + $0xc08] sm:$0xff]
    %v717 = vld [vmem:[#allocation7 + $0xc10] sm:$0xff]
    %v718 = vld [vmem:[#allocation7 + $0xc18] sm:$0xff]
    %v719 = vld [vmem:[#allocation7 + $0xc20] sm:$0xff]
    %v720 = vld [vmem:[#allocation7 + $0xc28] sm:$0xff]
    %v721 = vld [vmem:[#allocation7 + $0xc30] sm:$0xff]
    %v722 = vld [vmem:[#allocation7 + $0xc38] sm:$0xff]
    %v723 = vld [vmem:[#allocation7 + $0xc40] sm:$0xff]
    %v724 = vld [vmem:[#allocation7 + $0xc48] sm:$0xff]
    %v725 = vld [vmem:[#allocation7 + $0xc50] sm:$0xff]
    %v726 = vld [vmem:[#allocation7 + $0xc58] sm:$0xff]
    %v727 = vld [vmem:[#allocation7 + $0xc60] sm:$0xff]
    %v728 = vld [vmem:[#allocation7 + $0xc68] sm:$0xff]
    %v729 = vld [vmem:[#allocation7 + $0xc70] sm:$0xff]
    %v730 = vld [vmem:[#allocation7 + $0xc78] sm:$0xff]
    %v731 = vld [vmem:[#allocation7 + $0xc80] sm:$0xff]
    %v732 = vld [vmem:[#allocation7 + $0xc88] sm:$0xff]
    %v733 = vld [vmem:[#allocation7 + $0xc90] sm:$0xff]
    %v734 = vld [vmem:[#allocation7 + $0xc98] sm:$0xff]
    %v735 = vld [vmem:[#allocation7 + $0xca0] sm:$0xff]
    %v736 = vld [vmem:[#allocation7 + $0xca8] sm:$0xff]
    %v737 = vld [vmem:[#allocation7 + $0xcb0] sm:$0xff]
    %v738 = vld [vmem:[#allocation7 + $0xcb8] sm:$0xff]
    %v739 = vld [vmem:[#allocation7 + $0xcc0] sm:$0xff]
    %v740 = vld [vmem:[#allocation7 + $0xcc8] sm:$0xff]
    %v741 = vld [vmem:[#allocation7 + $0xcd0] sm:$0xff]
    %v742 = vld [vmem:[#allocation7 + $0xcd8] sm:$0xff]
    %v743 = vld [vmem:[#allocation7 + $0xce0] sm:$0xff]
    %v744 = vld [vmem:[#allocation7 + $0xce8] sm:$0xff]
    %v745 = vld [vmem:[#allocation7 + $0xcf0] sm:$0xff]
    %v746 = vld [vmem:[#allocation7 + $0xcf8] sm:$0xff]
    %v747 = vld [vmem:[#allocation7 + $0xd00] sm:$0xff]
    %v748 = vld [vmem:[#allocation7 + $0xd08] sm:$0xff]
    %v749 = vld [vmem:[#allocation7 + $0xd10] sm:$0xff]
    %v750 = vld [vmem:[#allocation7 + $0xd18] sm:$0xff]
    %v751 = vld [vmem:[#allocation7 + $0xd20] sm:$0xff]
    %v752 = vld [vmem:[#allocation7 + $0xd28] sm:$0xff]
    %v753 = vld [vmem:[#allocation7 + $0xd30] sm:$0xff]
    %v754 = vld [vmem:[#allocation7 + $0xd38] sm:$0xff]
    %v755 = vld [vmem:[#allocation7 + $0xd40] sm:$0xff]
    %v756 = vld [vmem:[#allocation7 + $0xd48] sm:$0xff]
    %v757 = vld [vmem:[#allocation7 + $0xd50] sm:$0xff]
    %v758 = vld [vmem:[#allocation7 + $0xd58] sm:$0xff]
    %v759 = vld [vmem:[#allocation7 + $0xd60] sm:$0xff]
    %v760 = vld [vmem:[#allocation7 + $0xd68] sm:$0xff]
    %v761 = vld [vmem:[#allocation7 + $0xd70] sm:$0xff]
    %v762 = vld [vmem:[#allocation7 + $0xd78] sm:$0xff]
    %v763 = vld [vmem:[#allocation7 + $0xd80] sm:$0xff]
    %v764 = vld [vmem:[#allocation7 + $0xd88] sm:$0xff]
    %v765 = vld [vmem:[#allocation7 + $0xd90] sm:$0xff]
    %v766 = vld [vmem:[#allocation7 + $0xd98] sm:$0xff]
    %v767 = vld [vmem:[#allocation7 + $0xda0] sm:$0xff]
    %v768 = vld [vmem:[#allocation7 + $0xda8] sm:$0xff]
    %v769 = vld [vmem:[#allocation7 + $0xdb0] sm:$0xff]
    %v770 = vld [vmem:[#allocation7 + $0xdb8] sm:$0xff]
    %v771 = vld [vmem:[#allocation7 + $0xdc0] sm:$0xff]
    %v772 = vld [vmem:[#allocation7 + $0xdc8] sm:$0xff]
    %v773 = vld [vmem:[#allocation7 + $0xdd0] sm:$0xff]
    %v774 = vld [vmem:[#allocation7 + $0xdd8] sm:$0xff]
    %v775 = vld [vmem:[#allocation7 + $0xde0] sm:$0xff]
    %v776 = vld [vmem:[#allocation7 + $0xde8] sm:$0xff]
    %v777 = vld [vmem:[#allocation7 + $0xdf0] sm:$0xff]
    %v778 = vld [vmem:[#allocation7 + $0xdf8] sm:$0xff]
    %v779 = vld [vmem:[#allocation7 + $0xe00] sm:$0xff]
    %v780 = vld [vmem:[#allocation7 + $0xe08] sm:$0xff]
    %v781 = vld [vmem:[#allocation7 + $0xe10] sm:$0xff]
    %v782 = vld [vmem:[#allocation7 + $0xe18] sm:$0xff]
    %v783 = vld [vmem:[#allocation7 + $0xe20] sm:$0xff]
    %v784 = vld [vmem:[#allocation7 + $0xe28] sm:$0xff]
    %v785 = vld [vmem:[#allocation7 + $0xe30] sm:$0xff]
    %v786 = vld [vmem:[#allocation7 + $0xe38] sm:$0xff]
    %v787 = vld [vmem:[#allocation7 + $0xe40] sm:$0xff]
    %v788 = vld [vmem:[#allocation7 + $0xe48] sm:$0xff]
    %v789 = vld [vmem:[#allocation7 + $0xe50] sm:$0xff]
    %v790 = vld [vmem:[#allocation7 + $0xe58] sm:$0xff]
    %v791 = vld [vmem:[#allocation7 + $0xe60] sm:$0xff]
    %v792 = vld [vmem:[#allocation7 + $0xe68] sm:$0xff]
    %v793 = vld [vmem:[#allocation7 + $0xe70] sm:$0xff]
    %v794 = vld [vmem:[#allocation7 + $0xe78] sm:$0xff]
    %v795 = vld [vmem:[#allocation7 + $0xe80] sm:$0xff]
    %v796 = vld [vmem:[#allocation7 + $0xe88] sm:$0xff]
    %v797 = vld [vmem:[#allocation7 + $0xe90] sm:$0xff]
    %v798 = vld [vmem:[#allocation7 + $0xe98] sm:$0xff]
    %v799 = vld [vmem:[#allocation7 + $0xea0] sm:$0xff]
    %v800 = vld [vmem:[#allocation7 + $0xea8] sm:$0xff]
    %v801 = vld [vmem:[#allocation7 + $0xeb0] sm:$0xff]
    %v802 = vld [vmem:[#allocation7 + $0xeb8] sm:$0xff]
    %v803 = vld [vmem:[#allocation7 + $0xec0] sm:$0xff]
    %v804 = vld [vmem:[#allocation7 + $0xec8] sm:$0xff]
    %v805 = vld [vmem:[#allocation7 + $0xed0] sm:$0xff]
    %v806 = vld [vmem:[#allocation7 + $0xed8] sm:$0xff]
    %v807 = vld [vmem:[#allocation7 + $0xee0] sm:$0xff]
    %v808 = vld [vmem:[#allocation7 + $0xee8] sm:$0xff]
    %v809 = vld [vmem:[#allocation7 + $0xef0] sm:$0xff]
    %v810 = vld [vmem:[#allocation7 + $0xef8] sm:$0xff]
    %v811 = vld [vmem:[#allocation7 + $0xf00] sm:$0xff]
    %v812 = vld [vmem:[#allocation7 + $0xf08] sm:$0xff]
    %v813 = vld [vmem:[#allocation7 + $0xf10] sm:$0xff]
    %v814 = vld [vmem:[#allocation7 + $0xf18] sm:$0xff]
    %v815 = vld [vmem:[#allocation7 + $0xf20] sm:$0xff]
    %v816 = vld [vmem:[#allocation7 + $0xf28] sm:$0xff]
    %v817 = vld [vmem:[#allocation7 + $0xf30] sm:$0xff]
    %v818 = vld [vmem:[#allocation7 + $0xf38] sm:$0xff]
    %v819 = vld [vmem:[#allocation7 + $0xf40] sm:$0xff]
    %v820 = vld [vmem:[#allocation7 + $0xf48] sm:$0xff]
    %v821 = vld [vmem:[#allocation7 + $0xf50] sm:$0xff]
    %v822 = vld [vmem:[#allocation7 + $0xf58] sm:$0xff]
    %v823 = vld [vmem:[#allocation7 + $0xf60] sm:$0xff]
    %v824 = vld [vmem:[#allocation7 + $0xf68] sm:$0xff]
    %v825 = vld [vmem:[#allocation7 + $0xf70] sm:$0xff]
    %v826 = vld [vmem:[#allocation7 + $0xf78] sm:$0xff]
    %v827 = vld [vmem:[#allocation7 + $0xf80] sm:$0xff]
    %v828 = vld [vmem:[#allocation7 + $0xf88] sm:$0xff]
    %v829 = vld [vmem:[#allocation7 + $0xf90] sm:$0xff]
    %v830 = vld [vmem:[#allocation7 + $0xf98] sm:$0xff]
    %v831 = vld [vmem:[#allocation7 + $0xfa0] sm:$0xff]
    %v832 = vld [vmem:[#allocation7 + $0xfa8] sm:$0xff]
    %v833 = vld [vmem:[#allocation7 + $0xfb0] sm:$0xff]
    %v834 = vld [vmem:[#allocation7 + $0xfb8] sm:$0xff]
    %v835 = vld [vmem:[#allocation7 + $0xfc0] sm:$0xff]
    %v836 = vld [vmem:[#allocation7 + $0xfc8] sm:$0xff]
    %v837 = vld [vmem:[#allocation7 + $0xfd0] sm:$0xff]
    %v838 = vld [vmem:[#allocation7 + $0xfd8] sm:$0xff]
    %v839 = vld [vmem:[#allocation7 + $0xfe0] sm:$0xff]
    %v840 = vld [vmem:[#allocation7 + $0xfe8] sm:$0xff]
    %v841 = vld [vmem:[#allocation7 + $0xff0] sm:$0xff]
    %v842 = vld [vmem:[#allocation7 + $0xff8] sm:$0xff]
    %v843 = vld [vmem:[#allocation7 + $0x1000] sm:$0xff]
    %v844 = vld [vmem:[#allocation7 + $0x1008] sm:$0xff]
    %v845 = vld [vmem:[#allocation7 + $0x1010] sm:$0xff]
    %v846 = vld [vmem:[#allocation7 + $0x1018] sm:$0xff]
    %v847 = vld [vmem:[#allocation7 + $0x1020] sm:$0xff]
    %v848 = vld [vmem:[#allocation7 + $0x1028] sm:$0xff]
    %v849 = vld [vmem:[#allocation7 + $0x1030] sm:$0xff]
    %v850 = vld [vmem:[#allocation7 + $0x1038] sm:$0xff]
    %v851 = vld [vmem:[#allocation7 + $0x1040] sm:$0xff]
    %v852 = vld [vmem:[#allocation7 + $0x1048] sm:$0xff]
    %v853 = vld [vmem:[#allocation7 + $0x1050] sm:$0xff]
    %v854 = vld [vmem:[#allocation7 + $0x1058] sm:$0xff]
    %v855 = vld [vmem:[#allocation7 + $0x1060] sm:$0xff]
    %v856 = vld [vmem:[#allocation7 + $0x1068] sm:$0xff]
    %v857 = vld [vmem:[#allocation7 + $0x1070] sm:$0xff]
    %v858 = vld [vmem:[#allocation7 + $0x1078] sm:$0xff]
    %v859 = vld [vmem:[#allocation7 + $0x1080] sm:$0xff]
    %v860 = vld [vmem:[#allocation7 + $0x1088] sm:$0xff]
    %v861 = vld [vmem:[#allocation7 + $0x1090] sm:$0xff]
    %v862 = vld [vmem:[#allocation7 + $0x1098] sm:$0xff]
    %v863 = vld [vmem:[#allocation7 + $0x10a0] sm:$0xff]
    %v864 = vld [vmem:[#allocation7 + $0x10a8] sm:$0xff]
    %v865 = vld [vmem:[#allocation7 + $0x10b0] sm:$0xff]
    %v866 = vld [vmem:[#allocation7 + $0x10b8] sm:$0xff]
    %v867 = vld [vmem:[#allocation7 + $0x10c0] sm:$0xff]
    %v868 = vld [vmem:[#allocation7 + $0x10c8] sm:$0xff]
    %v869 = vld [vmem:[#allocation7 + $0x10d0] sm:$0xff]
    %v870 = vld [vmem:[#allocation7 + $0x10d8] sm:$0xff]
    %v871 = vld [vmem:[#allocation7 + $0x10e0] sm:$0xff]
    %v872 = vld [vmem:[#allocation7 + $0x10e8] sm:$0xff]
    %v873 = vld [vmem:[#allocation7 + $0x10f0] sm:$0xff]
    %v874 = vld [vmem:[#allocation7 + $0x10f8] sm:$0xff]
    %v875 = vld [vmem:[#allocation7 + $0x1100] sm:$0xff]
    %v876 = vld [vmem:[#allocation7 + $0x1108] sm:$0xff]
    %v877 = vld [vmem:[#allocation7 + $0x1110] sm:$0xff]
    %v878 = vld [vmem:[#allocation7 + $0x1118] sm:$0xff]
    %v879 = vld [vmem:[#allocation7 + $0x1120] sm:$0xff]
    %v880 = vld [vmem:[#allocation7 + $0x1128] sm:$0xff]
    %v881 = vld [vmem:[#allocation7 + $0x1130] sm:$0xff]
    %v882 = vld [vmem:[#allocation7 + $0x1138] sm:$0xff]
    %v883 = vld [vmem:[#allocation7 + $0x1140] sm:$0xff]
    %v884 = vld [vmem:[#allocation7 + $0x1148] sm:$0xff]
    %v885 = vld [vmem:[#allocation7 + $0x1150] sm:$0xff]
    %v886 = vld [vmem:[#allocation7 + $0x1158] sm:$0xff]
    %v887 = vld [vmem:[#allocation7 + $0x1160] sm:$0xff]
    %v888 = vld [vmem:[#allocation7 + $0x1168] sm:$0xff]
    %v889 = vld [vmem:[#allocation7 + $0x1170] sm:$0xff]
    %v890 = vld [vmem:[#allocation7 + $0x1178] sm:$0xff]
    %v891 = vld [vmem:[#allocation7 + $0x1180] sm:$0xff]
    %v892 = vld [vmem:[#allocation7 + $0x1188] sm:$0xff]
    %v893 = vld [vmem:[#allocation7 + $0x1190] sm:$0xff]
    %v894 = vld [vmem:[#allocation7 + $0x1198] sm:$0xff]
    %v895 = vld [vmem:[#allocation7 + $0x11a0] sm:$0xff]
    %v896 = vld [vmem:[#allocation7 + $0x11a8] sm:$0xff]
    %v897 = vld [vmem:[#allocation7 + $0x11b0] sm:$0xff]
    %v898 = vld [vmem:[#allocation7 + $0x11b8] sm:$0xff]
    %v899 = vld [vmem:[#allocation7 + $0x11c0] sm:$0xff]
    %v900 = vld [vmem:[#allocation7 + $0x11c8] sm:$0xff]
    %v901 = vld [vmem:[#allocation7 + $0x11d0] sm:$0xff]
    %v902 = vld [vmem:[#allocation7 + $0x11d8] sm:$0xff]
    %v903 = vld [vmem:[#allocation7 + $0x11e0] sm:$0xff]
    %v904 = vld [vmem:[#allocation7 + $0x11e8] sm:$0xff]
    %v905 = vld [vmem:[#allocation7 + $0x11f0] sm:$0xff]
    %v906 = vld [vmem:[#allocation7 + $0x11f8] sm:$0xff]
    %v907 = vld [vmem:[#allocation7 + $0x1200] sm:$0xff]
    %v908 = vld [vmem:[#allocation7 + $0x1208] sm:$0xff]
    %v909 = vld [vmem:[#allocation7 + $0x1210] sm:$0xff]
    %v910 = vld [vmem:[#allocation7 + $0x1218] sm:$0xff]
    %v911 = vld [vmem:[#allocation7 + $0x1220] sm:$0xff]
    %v912 = vld [vmem:[#allocation7 + $0x1228] sm:$0xff]
    %v913 = vld [vmem:[#allocation7 + $0x1230] sm:$0xff]
    %v914 = vld [vmem:[#allocation7 + $0x1238] sm:$0xff]
    %v915 = vld [vmem:[#allocation7 + $0x1240] sm:$0xff]
    %v916 = vld [vmem:[#allocation7 + $0x1248] sm:$0xff]
    %v917 = vld [vmem:[#allocation7 + $0x1250] sm:$0xff]
    %v918 = vld [vmem:[#allocation7 + $0x1258] sm:$0xff]
    %v919 = vld [vmem:[#allocation7 + $0x1260] sm:$0xff]
    %v920 = vld [vmem:[#allocation7 + $0x1268] sm:$0xff]
    %v921 = vld [vmem:[#allocation7 + $0x1270] sm:$0xff]
    %v922 = vld [vmem:[#allocation7 + $0x1278] sm:$0xff]
    %v923 = vld [vmem:[#allocation7 + $0x1280] sm:$0xff]
    %v924 = vld [vmem:[#allocation7 + $0x1288] sm:$0xff]
    %v925 = vld [vmem:[#allocation7 + $0x1290] sm:$0xff]
    %v926 = vld [vmem:[#allocation7 + $0x1298] sm:$0xff]
    %v927 = vld [vmem:[#allocation7 + $0x12a0] sm:$0xff]
    %v928 = vld [vmem:[#allocation7 + $0x12a8] sm:$0xff]
    %v929 = vld [vmem:[#allocation7 + $0x12b0] sm:$0xff]
    %v930 = vld [vmem:[#allocation7 + $0x12b8] sm:$0xff]
    %v931 = vld [vmem:[#allocation7 + $0x12c0] sm:$0xff]
    %v932 = vld [vmem:[#allocation7 + $0x12c8] sm:$0xff]
    %v933 = vld [vmem:[#allocation7 + $0x12d0] sm:$0xff]
    %v934 = vld [vmem:[#allocation7 + $0x12d8] sm:$0xff]
    %v935 = vld [vmem:[#allocation7 + $0x12e0] sm:$0xff]
    %v936 = vld [vmem:[#allocation7 + $0x12e8] sm:$0xff]
    %v937 = vld [vmem:[#allocation7 + $0x12f0] sm:$0xff]
    %v938 = vld [vmem:[#allocation7 + $0x12f8] sm:$0xff]
    %v939 = vld [vmem:[#allocation7 + $0x1300] sm:$0xff]
    %v940 = vld [vmem:[#allocation7 + $0x1308] sm:$0xff]
    %v941 = vld [vmem:[#allocation7 + $0x1310] sm:$0xff]
    %v942 = vld [vmem:[#allocation7 + $0x1318] sm:$0xff]
    %v943 = vld [vmem:[#allocation7 + $0x1320] sm:$0xff]
    %v944 = vld [vmem:[#allocation7 + $0x1328] sm:$0xff]
    %v945 = vld [vmem:[#allocation7 + $0x1330] sm:$0xff]
    %v946 = vld [vmem:[#allocation7 + $0x1338] sm:$0xff]
    %v947 = vld [vmem:[#allocation7 + $0x1340] sm:$0xff]
    %v948 = vld [vmem:[#allocation7 + $0x1348] sm:$0xff]
    %v949 = vld [vmem:[#allocation7 + $0x1350] sm:$0xff]
    %v950 = vld [vmem:[#allocation7 + $0x1358] sm:$0xff]
    %v951 = vld [vmem:[#allocation7 + $0x1360] sm:$0xff]
    %v952 = vld [vmem:[#allocation7 + $0x1368] sm:$0xff]
    %v953 = vld [vmem:[#allocation7 + $0x1370] sm:$0xff]
    %v954 = vld [vmem:[#allocation7 + $0x1378] sm:$0xff]
    %v955 = vld [vmem:[#allocation7 + $0x1380] sm:$0xff]
    %v956 = vld [vmem:[#allocation7 + $0x1388] sm:$0xff]
    %v957 = vld [vmem:[#allocation7 + $0x1390] sm:$0xff]
    %v958 = vld [vmem:[#allocation7 + $0x1398] sm:$0xff]
    %v959 = vld [vmem:[#allocation7 + $0x13a0] sm:$0xff]
    %v960 = vld [vmem:[#allocation7 + $0x13a8] sm:$0xff]
    %v961 = vld [vmem:[#allocation7 + $0x13b0] sm:$0xff]
    %v962 = vld [vmem:[#allocation7 + $0x13b8] sm:$0xff]
    %v963 = vld [vmem:[#allocation7 + $0x13c0] sm:$0xff]
    %v964 = vld [vmem:[#allocation7 + $0x13c8] sm:$0xff]
    %v965 = vld [vmem:[#allocation7 + $0x13d0] sm:$0xff]
    %v966 = vld [vmem:[#allocation7 + $0x13d8] sm:$0xff]
    %v967 = vld [vmem:[#allocation7 + $0x13e0] sm:$0xff]
    %v968 = vld [vmem:[#allocation7 + $0x13e8] sm:$0xff]
    %v969 = vld [vmem:[#allocation7 + $0x13f0] sm:$0xff]
    %v970 = vld [vmem:[#allocation7 + $0x13f8] sm:$0xff]
    %v971 = vld [vmem:[#allocation7 + $0x1400] sm:$0xff]
    %v972 = vld [vmem:[#allocation7 + $0x1408] sm:$0xff]
    %v973 = vld [vmem:[#allocation7 + $0x1410] sm:$0xff]
    %v974 = vld [vmem:[#allocation7 + $0x1418] sm:$0xff]
    %v975 = vld [vmem:[#allocation7 + $0x1420] sm:$0xff]
    %v976 = vld [vmem:[#allocation7 + $0x1428] sm:$0xff]
    %v977 = vld [vmem:[#allocation7 + $0x1430] sm:$0xff]
    %v978 = vld [vmem:[#allocation7 + $0x1438] sm:$0xff]
    %v979 = vld [vmem:[#allocation7 + $0x1440] sm:$0xff]
    %v980 = vld [vmem:[#allocation7 + $0x1448] sm:$0xff]
    %v981 = vld [vmem:[#allocation7 + $0x1450] sm:$0xff]
    %v982 = vld [vmem:[#allocation7 + $0x1458] sm:$0xff]
    %v983 = vld [vmem:[#allocation7 + $0x1460] sm:$0xff]
    %v984 = vld [vmem:[#allocation7 + $0x1468] sm:$0xff]
    %v985 = vld [vmem:[#allocation7 + $0x1470] sm:$0xff]
    %v986 = vld [vmem:[#allocation7 + $0x1478] sm:$0xff]
    %v987 = vld [vmem:[#allocation7 + $0x1480] sm:$0xff]
    %v988 = vld [vmem:[#allocation7 + $0x1488] sm:$0xff]
    %v989 = vld [vmem:[#allocation7 + $0x1490] sm:$0xff]
    %v990 = vld [vmem:[#allocation7 + $0x1498] sm:$0xff]
    %v991 = vld [vmem:[#allocation7 + $0x14a0] sm:$0xff]
    %v992 = vld [vmem:[#allocation7 + $0x14a8] sm:$0xff]
    %v993 = vld [vmem:[#allocation7 + $0x14b0] sm:$0xff]
    %v994 = vld [vmem:[#allocation7 + $0x14b8] sm:$0xff]
    %v995 = vld [vmem:[#allocation7 + $0x14c0] sm:$0xff]
    %v996 = vld [vmem:[#allocation7 + $0x14c8] sm:$0xff]
    %v997 = vld [vmem:[#allocation7 + $0x14d0] sm:$0xff]
    %v998 = vld [vmem:[#allocation7 + $0x14d8] sm:$0xff]
    %v999 = vld [vmem:[#allocation7 + $0x14e0] sm:$0xff]
    %v1000 = vld [vmem:[#allocation7 + $0x14e8] sm:$0xff]
    %v1001 = vld [vmem:[#allocation7 + $0x14f0] sm:$0xff]
    %v1002 = vld [vmem:[#allocation7 + $0x14f8] sm:$0xff]
    %v1003 = vld [vmem:[#allocation7 + $0x1500] sm:$0xff]
    %v1004 = vld [vmem:[#allocation7 + $0x1508] sm:$0xff]
    %v1005 = vld [vmem:[#allocation7 + $0x1510] sm:$0xff]
    %v1006 = vld [vmem:[#allocation7 + $0x1518] sm:$0xff]
    %v1007 = vld [vmem:[#allocation7 + $0x1520] sm:$0xff]
    %v1008 = vld [vmem:[#allocation7 + $0x1528] sm:$0xff]
    %v1009 = vld [vmem:[#allocation7 + $0x1530] sm:$0xff]
    %v1010 = vld [vmem:[#allocation7 + $0x1538] sm:$0xff]
    %v1011 = vld [vmem:[#allocation7 + $0x1540] sm:$0xff]
    %v1012 = vld [vmem:[#allocation7 + $0x1548] sm:$0xff]
    %v1013 = vld [vmem:[#allocation7 + $0x1550] sm:$0xff]
    %v1014 = vld [vmem:[#allocation7 + $0x1558] sm:$0xff]
    %v1015 = vld [vmem:[#allocation7 + $0x1560] sm:$0xff]
    %v1016 = vld [vmem:[#allocation7 + $0x1568] sm:$0xff]
    %v1017 = vld [vmem:[#allocation7 + $0x1570] sm:$0xff]
    %v1018 = vld [vmem:[#allocation7 + $0x1578] sm:$0xff]
    %v1019 = vld [vmem:[#allocation7 + $0x1580] sm:$0xff]
    %v1020 = vld [vmem:[#allocation7 + $0x1588] sm:$0xff]
    %v1021 = vld [vmem:[#allocation7 + $0x1590] sm:$0xff]
    %v1022 = vld [vmem:[#allocation7 + $0x1598] sm:$0xff]
    %v1023 = vld [vmem:[#allocation7 + $0x15a0] sm:$0xff]
    %v1024 = vld [vmem:[#allocation7 + $0x15a8] sm:$0xff]
    %v1025 = vld [vmem:[#allocation7 + $0x15b0] sm:$0xff]
    %v1026 = vld [vmem:[#allocation7 + $0x15b8] sm:$0xff]
    %v1027 = vld [vmem:[#allocation7 + $0x15c0] sm:$0xff]
    %v1028 = vld [vmem:[#allocation7 + $0x15c8] sm:$0xff]
    %v1029 = vld [vmem:[#allocation7 + $0x15d0] sm:$0xff]
    %v1030 = vld [vmem:[#allocation7 + $0x15d8] sm:$0xff]
    %v1031 = vld [vmem:[#allocation7 + $0x15e0] sm:$0xff]
    %v1032 = vld [vmem:[#allocation7 + $0x15e8] sm:$0xff]
    %v1033 = vld [vmem:[#allocation7 + $0x15f0] sm:$0xff]
    %v1034 = vld [vmem:[#allocation7 + $0x15f8] sm:$0xff]
    %v1035 = vld [vmem:[#allocation7 + $0x1600] sm:$0xff]
    %v1036 = vld [vmem:[#allocation7 + $0x1608] sm:$0xff]
    %v1037 = vld [vmem:[#allocation7 + $0x1610] sm:$0xff]
    %v1038 = vld [vmem:[#allocation7 + $0x1618] sm:$0xff]
    %v1039 = vld [vmem:[#allocation7 + $0x1620] sm:$0xff]
    %v1040 = vld [vmem:[#allocation7 + $0x1628] sm:$0xff]
    %v1041 = vld [vmem:[#allocation7 + $0x1630] sm:$0xff]
    %v1042 = vld [vmem:[#allocation7 + $0x1638] sm:$0xff]
    %v1043 = vld [vmem:[#allocation7 + $0x1640] sm:$0xff]
    %v1044 = vld [vmem:[#allocation7 + $0x1648] sm:$0xff]
    %v1045 = vld [vmem:[#allocation7 + $0x1650] sm:$0xff]
    %v1046 = vld [vmem:[#allocation7 + $0x1658] sm:$0xff]
    %v1047 = vld [vmem:[#allocation7 + $0x1660] sm:$0xff]
    %v1048 = vld [vmem:[#allocation7 + $0x1668] sm:$0xff]
    %v1049 = vld [vmem:[#allocation7 + $0x1670] sm:$0xff]
    %v1050 = vld [vmem:[#allocation7 + $0x1678] sm:$0xff]
    %v1051 = vld [vmem:[#allocation7 + $0x1680] sm:$0xff]
    %v1052 = vld [vmem:[#allocation7 + $0x1688] sm:$0xff]
    %v1053 = vld [vmem:[#allocation7 + $0x1690] sm:$0xff]
    %v1054 = vld [vmem:[#allocation7 + $0x1698] sm:$0xff]
    %v1055 = vld [vmem:[#allocation7 + $0x16a0] sm:$0xff]
    %v1056 = vld [vmem:[#allocation7 + $0x16a8] sm:$0xff]
    %v1057 = vld [vmem:[#allocation7 + $0x16b0] sm:$0xff]
    %v1058 = vld [vmem:[#allocation7 + $0x16b8] sm:$0xff]
    %v1059 = vld [vmem:[#allocation7 + $0x16c0] sm:$0xff]
    %v1060 = vld [vmem:[#allocation7 + $0x16c8] sm:$0xff]
    %v1061 = vld [vmem:[#allocation7 + $0x16d0] sm:$0xff]
    %v1062 = vld [vmem:[#allocation7 + $0x16d8] sm:$0xff]
    %v1063 = vld [vmem:[#allocation7 + $0x16e0] sm:$0xff]
    %v1064 = vld [vmem:[#allocation7 + $0x16e8] sm:$0xff]
    %v1065 = vld [vmem:[#allocation7 + $0x16f0] sm:$0xff]
    %v1066 = vld [vmem:[#allocation7 + $0x16f8] sm:$0xff]
    %v1067 = vld [vmem:[#allocation7 + $0x1700] sm:$0xff]
    %v1068 = vld [vmem:[#allocation7 + $0x1708] sm:$0xff]
    %v1069 = vld [vmem:[#allocation7 + $0x1710] sm:$0xff]
    %v1070 = vld [vmem:[#allocation7 + $0x1718] sm:$0xff]
    %v1071 = vld [vmem:[#allocation7 + $0x1720] sm:$0xff]
    %v1072 = vld [vmem:[#allocation7 + $0x1728] sm:$0xff]
    %v1073 = vld [vmem:[#allocation7 + $0x1730] sm:$0xff]
    %v1074 = vld [vmem:[#allocation7 + $0x1738] sm:$0xff]
    %v1075 = vld [vmem:[#allocation7 + $0x1740] sm:$0xff]
    %v1076 = vld [vmem:[#allocation7 + $0x1748] sm:$0xff]
    %v1077 = vld [vmem:[#allocation7 + $0x1750] sm:$0xff]
    %v1078 = vld [vmem:[#allocation7 + $0x1758] sm:$0xff]
    %v1079 = vld [vmem:[#allocation7 + $0x1760] sm:$0xff]
    %v1080 = vld [vmem:[#allocation7 + $0x1768] sm:$0xff]
    %v1081 = vld [vmem:[#allocation7 + $0x1770] sm:$0xff]
    %v1082 = vld [vmem:[#allocation7 + $0x1778] sm:$0xff]
    %v1083 = vld [vmem:[#allocation7 + $0x1780] sm:$0xff]
    %v1084 = vld [vmem:[#allocation7 + $0x1788] sm:$0xff]
    %v1085 = vld [vmem:[#allocation7 + $0x1790] sm:$0xff]
    %v1086 = vld [vmem:[#allocation7 + $0x1798] sm:$0xff]
    %v1087 = vld [vmem:[#allocation7 + $0x17a0] sm:$0xff]
    %v1088 = vld [vmem:[#allocation7 + $0x17a8] sm:$0xff]
    %v1089 = vld [vmem:[#allocation7 + $0x17b0] sm:$0xff]
    %v1090 = vld [vmem:[#allocation7 + $0x17b8] sm:$0xff]
    %v1091 = vld [vmem:[#allocation7 + $0x17c0] sm:$0xff]
    %v1092 = vld [vmem:[#allocation7 + $0x17c8] sm:$0xff]
    %v1093 = vld [vmem:[#allocation7 + $0x17d0] sm:$0xff]
    %v1094 = vld [vmem:[#allocation7 + $0x17d8] sm:$0xff]
    %v1095 = vld [vmem:[#allocation7 + $0x17e0] sm:$0xff]
    %v1096 = vld [vmem:[#allocation7 + $0x17e8] sm:$0xff]
    %v1097 = vld [vmem:[#allocation7 + $0x17f0] sm:$0xff]
    %v1098 = vld [vmem:[#allocation7 + $0x17f8] sm:$0xff]
    %v1099 = vld [vmem:[#allocation7 + $0x1800] sm:$0xff]
    %v1100 = vld [vmem:[#allocation7 + $0x1808] sm:$0xff]
    %v1101 = vld [vmem:[#allocation7 + $0x1810] sm:$0xff]
    %v1102 = vld [vmem:[#allocation7 + $0x1818] sm:$0xff]
    %v1103 = vld [vmem:[#allocation7 + $0x1820] sm:$0xff]
    %v1104 = vld [vmem:[#allocation7 + $0x1828] sm:$0xff]
    %v1105 = vld [vmem:[#allocation7 + $0x1830] sm:$0xff]
    %v1106 = vld [vmem:[#allocation7 + $0x1838] sm:$0xff]
    %v1107 = vld [vmem:[#allocation7 + $0x1840] sm:$0xff]
    %v1108 = vld [vmem:[#allocation7 + $0x1848] sm:$0xff]
    %v1109 = vld [vmem:[#allocation7 + $0x1850] sm:$0xff]
    %v1110 = vld [vmem:[#allocation7 + $0x1858] sm:$0xff]
    %v1111 = vld [vmem:[#allocation7 + $0x1860] sm:$0xff]
    %v1112 = vld [vmem:[#allocation7 + $0x1868] sm:$0xff]
    %v1113 = vld [vmem:[#allocation7 + $0x1870] sm:$0xff]
    %v1114 = vld [vmem:[#allocation7 + $0x1878] sm:$0xff]
    %v1115 = vld [vmem:[#allocation7 + $0x1880] sm:$0xff]
    %v1116 = vld [vmem:[#allocation7 + $0x1888] sm:$0xff]
    %v1117 = vld [vmem:[#allocation7 + $0x1890] sm:$0xff]
    %v1118 = vld [vmem:[#allocation7 + $0x1898] sm:$0xff]
    %v1119 = vld [vmem:[#allocation7 + $0x18a0] sm:$0xff]
    %v1120 = vld [vmem:[#allocation7 + $0x18a8] sm:$0xff]
    %v1121 = vld [vmem:[#allocation7 + $0x18b0] sm:$0xff]
    %v1122 = vld [vmem:[#allocation7 + $0x18b8] sm:$0xff]
    %v1123 = vld [vmem:[#allocation7 + $0x18c0] sm:$0xff]
    %v1124 = vld [vmem:[#allocation7 + $0x18c8] sm:$0xff]
    %v1125 = vld [vmem:[#allocation7 + $0x18d0] sm:$0xff]
    %v1126 = vld [vmem:[#allocation7 + $0x18d8] sm:$0xff]
    %v1127 = vld [vmem:[#allocation7 + $0x18e0] sm:$0xff]
    %v1128 = vld [vmem:[#allocation7 + $0x18e8] sm:$0xff]
    %v1129 = vld [vmem:[#allocation7 + $0x18f0] sm:$0xff]
    %v1130 = vld [vmem:[#allocation7 + $0x18f8] sm:$0xff]
    %v1131 = vld [vmem:[#allocation7 + $0x1900] sm:$0xff]
    %v1132 = vld [vmem:[#allocation7 + $0x1908] sm:$0xff]
    %v1133 = vld [vmem:[#allocation7 + $0x1910] sm:$0xff]
    %v1134 = vld [vmem:[#allocation7 + $0x1918] sm:$0xff]
    %v1135 = vld [vmem:[#allocation7 + $0x1920] sm:$0xff]
    %v1136 = vld [vmem:[#allocation7 + $0x1928] sm:$0xff]
    %v1137 = vld [vmem:[#allocation7 + $0x1930] sm:$0xff]
    %v1138 = vld [vmem:[#allocation7 + $0x1938] sm:$0xff]
    %v1139 = vld [vmem:[#allocation7 + $0x1940] sm:$0xff]
    %v1140 = vld [vmem:[#allocation7 + $0x1948] sm:$0xff]
    %v1141 = vld [vmem:[#allocation7 + $0x1950] sm:$0xff]
    %v1142 = vld [vmem:[#allocation7 + $0x1958] sm:$0xff]
    %v1143 = vld [vmem:[#allocation7 + $0x1960] sm:$0xff]
    %v1144 = vld [vmem:[#allocation7 + $0x1968] sm:$0xff]
    %v1145 = vld [vmem:[#allocation7 + $0x1970] sm:$0xff]
    %v1146 = vld [vmem:[#allocation7 + $0x1978] sm:$0xff]
    %v1147 = vld [vmem:[#allocation7 + $0x1980] sm:$0xff]
    %v1148 = vld [vmem:[#allocation7 + $0x1988] sm:$0xff]
    %v1149 = vld [vmem:[#allocation7 + $0x1990] sm:$0xff]
    %v1150 = vld [vmem:[#allocation7 + $0x1998] sm:$0xff]
    %v1151 = vld [vmem:[#allocation7 + $0x19a0] sm:$0xff]
    %v1152 = vld [vmem:[#allocation7 + $0x19a8] sm:$0xff]
    %v1153 = vld [vmem:[#allocation7 + $0x19b0] sm:$0xff]
    %v1154 = vld [vmem:[#allocation7 + $0x19b8] sm:$0xff]
    %v1155 = vld [vmem:[#allocation7 + $0x19c0] sm:$0xff]
    %v1156 = vld [vmem:[#allocation7 + $0x19c8] sm:$0xff]
    %v1157 = vld [vmem:[#allocation7 + $0x19d0] sm:$0xff]
    %v1158 = vld [vmem:[#allocation7 + $0x19d8] sm:$0xff]
    %v1159 = vld [vmem:[#allocation7 + $0x19e0] sm:$0xff]
    %v1160 = vld [vmem:[#allocation7 + $0x19e8] sm:$0xff]
    %v1161 = vld [vmem:[#allocation7 + $0x19f0] sm:$0xff]
    %v1162 = vld [vmem:[#allocation7 + $0x19f8] sm:$0xff]
    %v1163 = vld [vmem:[#allocation7 + $0x1a00] sm:$0xff]
    %v1164 = vld [vmem:[#allocation7 + $0x1a08] sm:$0xff]
    %v1165 = vld [vmem:[#allocation7 + $0x1a10] sm:$0xff]
    %v1166 = vld [vmem:[#allocation7 + $0x1a18] sm:$0xff]
    %v1167 = vld [vmem:[#allocation7 + $0x1a20] sm:$0xff]
    %v1168 = vld [vmem:[#allocation7 + $0x1a28] sm:$0xff]
    %v1169 = vld [vmem:[#allocation7 + $0x1a30] sm:$0xff]
    %v1170 = vld [vmem:[#allocation7 + $0x1a38] sm:$0xff]
    %v1171 = vld [vmem:[#allocation7 + $0x1a40] sm:$0xff]
    %v1172 = vld [vmem:[#allocation7 + $0x1a48] sm:$0xff]
    %v1173 = vld [vmem:[#allocation7 + $0x1a50] sm:$0xff]
    %v1174 = vld [vmem:[#allocation7 + $0x1a58] sm:$0xff]
    %v1175 = vld [vmem:[#allocation7 + $0x1a60] sm:$0xff]
    %v1176 = vld [vmem:[#allocation7 + $0x1a68] sm:$0xff]
    %v1177 = vld [vmem:[#allocation7 + $0x1a70] sm:$0xff]
    %v1178 = vld [vmem:[#allocation7 + $0x1a78] sm:$0xff]
    %v1179 = vld [vmem:[#allocation7 + $0x1a80] sm:$0xff]
    %v1180 = vld [vmem:[#allocation7 + $0x1a88] sm:$0xff]
    %v1181 = vld [vmem:[#allocation7 + $0x1a90] sm:$0xff]
    %v1182 = vld [vmem:[#allocation7 + $0x1a98] sm:$0xff]
    %v1183 = vld [vmem:[#allocation7 + $0x1aa0] sm:$0xff]
    %v1184 = vld [vmem:[#allocation7 + $0x1aa8] sm:$0xff]
    %v1185 = vld [vmem:[#allocation7 + $0x1ab0] sm:$0xff]
    %v1186 = vld [vmem:[#allocation7 + $0x1ab8] sm:$0xff]
    %v1187 = vld [vmem:[#allocation7 + $0x1ac0] sm:$0xff]
    %v1188 = vld [vmem:[#allocation7 + $0x1ac8] sm:$0xff]
    %v1189 = vld [vmem:[#allocation7 + $0x1ad0] sm:$0xff]
    %v1190 = vld [vmem:[#allocation7 + $0x1ad8] sm:$0xff]
    %v1191 = vld [vmem:[#allocation7 + $0x1ae0] sm:$0xff]
    %v1192 = vld [vmem:[#allocation7 + $0x1ae8] sm:$0xff]
    %v1193 = vld [vmem:[#allocation7 + $0x1af0] sm:$0xff]
    %v1194 = vld [vmem:[#allocation7 + $0x1af8] sm:$0xff]
    %v1195 = vld [vmem:[#allocation7 + $0x1b00] sm:$0xff]
    %v1196 = vld [vmem:[#allocation7 + $0x1b08] sm:$0xff]
    %v1197 = vld [vmem:[#allocation7 + $0x1b10] sm:$0xff]
    %v1198 = vld [vmem:[#allocation7 + $0x1b18] sm:$0xff]
    %v1199 = vld [vmem:[#allocation7 + $0x1b20] sm:$0xff]
    %v1200 = vld [vmem:[#allocation7 + $0x1b28] sm:$0xff]
    %v1201 = vld [vmem:[#allocation7 + $0x1b30] sm:$0xff]
    %v1202 = vld [vmem:[#allocation7 + $0x1b38] sm:$0xff]
    %v1203 = vld [vmem:[#allocation7 + $0x1b40] sm:$0xff]
    %v1204 = vld [vmem:[#allocation7 + $0x1b48] sm:$0xff]
    %v1205 = vld [vmem:[#allocation7 + $0x1b50] sm:$0xff]
    %v1206 = vld [vmem:[#allocation7 + $0x1b58] sm:$0xff]
    %v1207 = vld [vmem:[#allocation7 + $0x1b60] sm:$0xff]
    %v1208 = vld [vmem:[#allocation7 + $0x1b68] sm:$0xff]
    %v1209 = vld [vmem:[#allocation7 + $0x1b70] sm:$0xff]
    %v1210 = vld [vmem:[#allocation7 + $0x1b78] sm:$0xff]
    %v1211 = vld [vmem:[#allocation7 + $0x1b80] sm:$0xff]
    %v1212 = vld [vmem:[#allocation7 + $0x1b88] sm:$0xff]
    %v1213 = vld [vmem:[#allocation7 + $0x1b90] sm:$0xff]
    %v1214 = vld [vmem:[#allocation7 + $0x1b98] sm:$0xff]
    %v1215 = vld [vmem:[#allocation7 + $0x1ba0] sm:$0xff]
    %v1216 = vld [vmem:[#allocation7 + $0x1ba8] sm:$0xff]
    %v1217 = vld [vmem:[#allocation7 + $0x1bb0] sm:$0xff]
    %v1218 = vld [vmem:[#allocation7 + $0x1bb8] sm:$0xff]
    %v1219 = vld [vmem:[#allocation7 + $0x1bc0] sm:$0xff]
    %v1220 = vld [vmem:[#allocation7 + $0x1bc8] sm:$0xff]
    %v1221 = vld [vmem:[#allocation7 + $0x1bd0] sm:$0xff]
    %v1222 = vld [vmem:[#allocation7 + $0x1bd8] sm:$0xff]
    %v1223 = vld [vmem:[#allocation7 + $0x1be0] sm:$0xff]
    %v1224 = vld [vmem:[#allocation7 + $0x1be8] sm:$0xff]
    %v1225 = vld [vmem:[#allocation7 + $0x1bf0] sm:$0xff]
    %v1226 = vld [vmem:[#allocation7 + $0x1bf8] sm:$0xff]
    %v1227 = vld [vmem:[#allocation7 + $0x1c00] sm:$0xff]
    %v1228 = vld [vmem:[#allocation7 + $0x1c08] sm:$0xff]
    %v1229 = vld [vmem:[#allocation7 + $0x1c10] sm:$0xff]
    %v1230 = vld [vmem:[#allocation7 + $0x1c18] sm:$0xff]
    %v1231 = vld [vmem:[#allocation7 + $0x1c20] sm:$0xff]
    %v1232 = vld [vmem:[#allocation7 + $0x1c28] sm:$0xff]
    %v1233 = vld [vmem:[#allocation7 + $0x1c30] sm:$0xff]
    %v1234 = vld [vmem:[#allocation7 + $0x1c38] sm:$0xff]
    %v1235 = vld [vmem:[#allocation7 + $0x1c40] sm:$0xff]
    %v1236 = vld [vmem:[#allocation7 + $0x1c48] sm:$0xff]
    %v1237 = vld [vmem:[#allocation7 + $0x1c50] sm:$0xff]
    %v1238 = vld [vmem:[#allocation7 + $0x1c58] sm:$0xff]
    %v1239 = vld [vmem:[#allocation7 + $0x1c60] sm:$0xff]
    %v1240 = vld [vmem:[#allocation7 + $0x1c68] sm:$0xff]
    %v1241 = vld [vmem:[#allocation7 + $0x1c70] sm:$0xff]
    %v1242 = vld [vmem:[#allocation7 + $0x1c78] sm:$0xff]
    %v1243 = vld [vmem:[#allocation7 + $0x1c80] sm:$0xff]
    %v1244 = vld [vmem:[#allocation7 + $0x1c88] sm:$0xff]
    %v1245 = vld [vmem:[#allocation7 + $0x1c90] sm:$0xff]
    %v1246 = vld [vmem:[#allocation7 + $0x1c98] sm:$0xff]
    %v1247 = vld [vmem:[#allocation7 + $0x1ca0] sm:$0xff]
    %v1248 = vld [vmem:[#allocation7 + $0x1ca8] sm:$0xff]
    %v1249 = vld [vmem:[#allocation7 + $0x1cb0] sm:$0xff]
    %v1250 = vld [vmem:[#allocation7 + $0x1cb8] sm:$0xff]
    %v1251 = vld [vmem:[#allocation7 + $0x1cc0] sm:$0xff]
    %v1252 = vld [vmem:[#allocation7 + $0x1cc8] sm:$0xff]
    %v1253 = vld [vmem:[#allocation7 + $0x1cd0] sm:$0xff]
    %v1254 = vld [vmem:[#allocation7 + $0x1cd8] sm:$0xff]
    %v1255 = vld [vmem:[#allocation7 + $0x1ce0] sm:$0xff]
    %v1256 = vld [vmem:[#allocation7 + $0x1ce8] sm:$0xff]
    %v1257 = vld [vmem:[#allocation7 + $0x1cf0] sm:$0xff]
    %v1258 = vld [vmem:[#allocation7 + $0x1cf8] sm:$0xff]
    %v1259 = vld [vmem:[#allocation7 + $0x1d00] sm:$0xff]
    %v1260 = vld [vmem:[#allocation7 + $0x1d08] sm:$0xff]
    %v1261 = vld [vmem:[#allocation7 + $0x1d10] sm:$0xff]
    %v1262 = vld [vmem:[#allocation7 + $0x1d18] sm:$0xff]
    %v1263 = vld [vmem:[#allocation7 + $0x1d20] sm:$0xff]
    %v1264 = vld [vmem:[#allocation7 + $0x1d28] sm:$0xff]
    %v1265 = vld [vmem:[#allocation7 + $0x1d30] sm:$0xff]
    %v1266 = vld [vmem:[#allocation7 + $0x1d38] sm:$0xff]
    %v1267 = vld [vmem:[#allocation7 + $0x1d40] sm:$0xff]
    %v1268 = vld [vmem:[#allocation7 + $0x1d48] sm:$0xff]
    %v1269 = vld [vmem:[#allocation7 + $0x1d50] sm:$0xff]
    %v1270 = vld [vmem:[#allocation7 + $0x1d58] sm:$0xff]
    %v1271 = vld [vmem:[#allocation7 + $0x1d60] sm:$0xff]
    %v1272 = vld [vmem:[#allocation7 + $0x1d68] sm:$0xff]
    %v1273 = vld [vmem:[#allocation7 + $0x1d70] sm:$0xff]
    %v1274 = vld [vmem:[#allocation7 + $0x1d78] sm:$0xff]
    %v1275 = vld [vmem:[#allocation7 + $0x1d80] sm:$0xff]
    %v1276 = vld [vmem:[#allocation7 + $0x1d88] sm:$0xff]
    %v1277 = vld [vmem:[#allocation7 + $0x1d90] sm:$0xff]
    %v1278 = vld [vmem:[#allocation7 + $0x1d98] sm:$0xff]
    %v1279 = vld [vmem:[#allocation7 + $0x1da0] sm:$0xff]
    %v1280 = vld [vmem:[#allocation7 + $0x1da8] sm:$0xff]
    %v1281 = vld [vmem:[#allocation7 + $0x1db0] sm:$0xff]
    %v1282 = vld [vmem:[#allocation7 + $0x1db8] sm:$0xff]
    %v1283 = vld [vmem:[#allocation7 + $0x1dc0] sm:$0xff]
    %v1284 = vld [vmem:[#allocation7 + $0x1dc8] sm:$0xff]
    %v1285 = vld [vmem:[#allocation7 + $0x1dd0] sm:$0xff]
    %v1286 = vld [vmem:[#allocation7 + $0x1dd8] sm:$0xff]
    %v1287 = vld [vmem:[#allocation7 + $0x1de0] sm:$0xff]
    %v1288 = vld [vmem:[#allocation7 + $0x1de8] sm:$0xff]
    %v1289 = vld [vmem:[#allocation7 + $0x1df0] sm:$0xff]
    %v1290 = vld [vmem:[#allocation7 + $0x1df8] sm:$0xff]
    %v1291 = vld [vmem:[#allocation7 + $0x1e00] sm:$0xff]
    %v1292 = vld [vmem:[#allocation7 + $0x1e08] sm:$0xff]
    %v1293 = vld [vmem:[#allocation7 + $0x1e10] sm:$0xff]
    %v1294 = vld [vmem:[#allocation7 + $0x1e18] sm:$0xff]
    %v1295 = vld [vmem:[#allocation7 + $0x1e20] sm:$0xff]
    %v1296 = vld [vmem:[#allocation7 + $0x1e28] sm:$0xff]
    %v1297 = vld [vmem:[#allocation7 + $0x1e30] sm:$0xff]
    %v1298 = vld [vmem:[#allocation7 + $0x1e38] sm:$0xff]
    %v1299 = vld [vmem:[#allocation7 + $0x1e40] sm:$0xff]
    %v1300 = vld [vmem:[#allocation7 + $0x1e48] sm:$0xff]
    %v1301 = vld [vmem:[#allocation7 + $0x1e50] sm:$0xff]
    %v1302 = vld [vmem:[#allocation7 + $0x1e58] sm:$0xff]
    %v1303 = vld [vmem:[#allocation7 + $0x1e60] sm:$0xff]
    %v1304 = vld [vmem:[#allocation7 + $0x1e68] sm:$0xff]
    %v1305 = vld [vmem:[#allocation7 + $0x1e70] sm:$0xff]
    %v1306 = vld [vmem:[#allocation7 + $0x1e78] sm:$0xff]
    %v1307 = vld [vmem:[#allocation7 + $0x1e80] sm:$0xff]
    %v1308 = vld [vmem:[#allocation7 + $0x1e88] sm:$0xff]
    %v1309 = vld [vmem:[#allocation7 + $0x1e90] sm:$0xff]
    %v1310 = vld [vmem:[#allocation7 + $0x1e98] sm:$0xff]
    %v1311 = vld [vmem:[#allocation7 + $0x1ea0] sm:$0xff]
    %v1312 = vld [vmem:[#allocation7 + $0x1ea8] sm:$0xff]
    %v1313 = vld [vmem:[#allocation7 + $0x1eb0] sm:$0xff]
    %v1314 = vld [vmem:[#allocation7 + $0x1eb8] sm:$0xff]
    %v1315 = vld [vmem:[#allocation7 + $0x1ec0] sm:$0xff]
    %v1316 = vld [vmem:[#allocation7 + $0x1ec8] sm:$0xff]
    %v1317 = vld [vmem:[#allocation7 + $0x1ed0] sm:$0xff]
    %v1318 = vld [vmem:[#allocation7 + $0x1ed8] sm:$0xff]
    %v1319 = vld [vmem:[#allocation7 + $0x1ee0] sm:$0xff]
    %v1320 = vld [vmem:[#allocation7 + $0x1ee8] sm:$0xff]
    %v1321 = vld [vmem:[#allocation7 + $0x1ef0] sm:$0xff]
    %v1322 = vld [vmem:[#allocation7 + $0x1ef8] sm:$0xff]
    %v1323 = vld [vmem:[#allocation7 + $0x1f00] sm:$0xff]
    %v1324 = vld [vmem:[#allocation7 + $0x1f08] sm:$0xff]
    %v1325 = vld [vmem:[#allocation7 + $0x1f10] sm:$0xff]
    %v1326 = vld [vmem:[#allocation7 + $0x1f18] sm:$0xff]
    %v1327 = vld [vmem:[#allocation7 + $0x1f20] sm:$0xff]
    %v1328 = vld [vmem:[#allocation7 + $0x1f28] sm:$0xff]
    %v1329 = vld [vmem:[#allocation7 + $0x1f30] sm:$0xff]
    %v1330 = vld [vmem:[#allocation7 + $0x1f38] sm:$0xff]
    %v1331 = vld [vmem:[#allocation7 + $0x1f40] sm:$0xff]
    %v1332 = vld [vmem:[#allocation7 + $0x1f48] sm:$0xff]
    %v1333 = vld [vmem:[#allocation7 + $0x1f50] sm:$0xff]
    %v1334 = vld [vmem:[#allocation7 + $0x1f58] sm:$0xff]
    %v1335 = vld [vmem:[#allocation7 + $0x1f60] sm:$0xff]
    %v1336 = vld [vmem:[#allocation7 + $0x1f68] sm:$0xff]
    %v1337 = vld [vmem:[#allocation7 + $0x1f70] sm:$0xff]
    %v1338 = vld [vmem:[#allocation7 + $0x1f78] sm:$0xff]
    %v1339 = vld [vmem:[#allocation7 + $0x1f80] sm:$0xff]
    %v1340 = vld [vmem:[#allocation7 + $0x1f88] sm:$0xff]
    %v1341 = vld [vmem:[#allocation7 + $0x1f90] sm:$0xff]
    %v1342 = vld [vmem:[#allocation7 + $0x1f98] sm:$0xff]
    %v1343 = vld [vmem:[#allocation7 + $0x1fa0] sm:$0xff]
    %v1344 = vld [vmem:[#allocation7 + $0x1fa8] sm:$0xff]
    %v1345 = vld [vmem:[#allocation7 + $0x1fb0] sm:$0xff]
    %v1346 = vld [vmem:[#allocation7 + $0x1fb8] sm:$0xff]
    %v1347 = vld [vmem:[#allocation7 + $0x1fc0] sm:$0xff]
    %v1348 = vld [vmem:[#allocation7 + $0x1fc8] sm:$0xff]
    %v1349 = vld [vmem:[#allocation7 + $0x1fd0] sm:$0xff]
    %v1350 = vld [vmem:[#allocation7 + $0x1fd8] sm:$0xff]
    %v1351 = vld [vmem:[#allocation7 + $0x1fe0] sm:$0xff]
    %v1352 = vld [vmem:[#allocation7 + $0x1fe8] sm:$0xff]
    %v1353 = vld [vmem:[#allocation7 + $0x1ff0] sm:$0xff]
    %v1354 = vld [vmem:[#allocation7 + $0x1ff8] sm:$0xff]
    %v1355 = vld [vmem:[#allocation7 + $0x2000] sm:$0xff]
    %v1356 = vld [vmem:[#allocation7 + $0x2008] sm:$0xff]
    %v1357 = vld [vmem:[#allocation7 + $0x2010] sm:$0xff]
    %v1358 = vld [vmem:[#allocation7 + $0x2018] sm:$0xff]
    %v1359 = vld [vmem:[#allocation7 + $0x2020] sm:$0xff]
    %v1360 = vld [vmem:[#allocation7 + $0x2028] sm:$0xff]
    %v1361 = vld [vmem:[#allocation7 + $0x2030] sm:$0xff]
    %v1362 = vld [vmem:[#allocation7 + $0x2038] sm:$0xff]
    %v1363 = vld [vmem:[#allocation7 + $0x2040] sm:$0xff]
    %v1364 = vld [vmem:[#allocation7 + $0x2048] sm:$0xff]
    %v1365 = vld [vmem:[#allocation7 + $0x2050] sm:$0xff]
    %v1366 = vld [vmem:[#allocation7 + $0x2058] sm:$0xff]
    %v1367 = vld [vmem:[#allocation7 + $0x2060] sm:$0xff]
    %v1368 = vld [vmem:[#allocation7 + $0x2068] sm:$0xff]
    %v1369 = vld [vmem:[#allocation7 + $0x2070] sm:$0xff]
    %v1370 = vld [vmem:[#allocation7 + $0x2078] sm:$0xff]
    %v1371 = vld [vmem:[#allocation7 + $0x2080] sm:$0xff]
    %v1372 = vld [vmem:[#allocation7 + $0x2088] sm:$0xff]
    %v1373 = vld [vmem:[#allocation7 + $0x2090] sm:$0xff]
    %v1374 = vld [vmem:[#allocation7 + $0x2098] sm:$0xff]
    %v1375 = vld [vmem:[#allocation7 + $0x20a0] sm:$0xff]
    %v1376 = vld [vmem:[#allocation7 + $0x20a8] sm:$0xff]
    %v1377 = vld [vmem:[#allocation7 + $0x20b0] sm:$0xff]
    %v1378 = vld [vmem:[#allocation7 + $0x20b8] sm:$0xff]
    %v1379 = vld [vmem:[#allocation7 + $0x20c0] sm:$0xff]
    %v1380 = vld [vmem:[#allocation7 + $0x20c8] sm:$0xff]
    %v1381 = vld [vmem:[#allocation7 + $0x20d0] sm:$0xff]
    %v1382 = vld [vmem:[#allocation7 + $0x20d8] sm:$0xff]
    %v1383 = vld [vmem:[#allocation7 + $0x20e0] sm:$0xff]
    %v1384 = vld [vmem:[#allocation7 + $0x20e8] sm:$0xff]
    %v1385 = vld [vmem:[#allocation7 + $0x20f0] sm:$0xff]
    %v1386 = vld [vmem:[#allocation7 + $0x20f8] sm:$0xff]
    %v1387 = vld [vmem:[#allocation7 + $0x2100] sm:$0xff]
    %v1388 = vld [vmem:[#allocation7 + $0x2108] sm:$0xff]
    %v1389 = vld [vmem:[#allocation7 + $0x2110] sm:$0xff]
    %v1390 = vld [vmem:[#allocation7 + $0x2118] sm:$0xff]
    %v1391 = vld [vmem:[#allocation7 + $0x2120] sm:$0xff]
    %v1392 = vld [vmem:[#allocation7 + $0x2128] sm:$0xff]
    %v1393 = vld [vmem:[#allocation7 + $0x2130] sm:$0xff]
    %v1394 = vld [vmem:[#allocation7 + $0x2138] sm:$0xff]
    %v1395 = vld [vmem:[#allocation7 + $0x2140] sm:$0xff]
    %v1396 = vld [vmem:[#allocation7 + $0x2148] sm:$0xff]
    %v1397 = vld [vmem:[#allocation7 + $0x2150] sm:$0xff]
    %v1398 = vld [vmem:[#allocation7 + $0x2158] sm:$0xff]
    %v1399 = vld [vmem:[#allocation7 + $0x2160] sm:$0xff]
    %v1400 = vld [vmem:[#allocation7 + $0x2168] sm:$0xff]
    %v1401 = vld [vmem:[#allocation7 + $0x2170] sm:$0xff]
    %v1402 = vld [vmem:[#allocation7 + $0x2178] sm:$0xff]
    %v1403 = vld [vmem:[#allocation7 + $0x2180] sm:$0xff]
    %v1404 = vld [vmem:[#allocation7 + $0x2188] sm:$0xff]
    %v1405 = vld [vmem:[#allocation7 + $0x2190] sm:$0xff]
    %v1406 = vld [vmem:[#allocation7 + $0x2198] sm:$0xff]
    %v1407 = vld [vmem:[#allocation7 + $0x21a0] sm:$0xff]
    %v1408 = vld [vmem:[#allocation7 + $0x21a8] sm:$0xff]
    %v1409 = vld [vmem:[#allocation7 + $0x21b0] sm:$0xff]
    %v1410 = vld [vmem:[#allocation7 + $0x21b8] sm:$0xff]
    %v1411 = vld [vmem:[#allocation7 + $0x21c0] sm:$0xff]
    %v1412 = vld [vmem:[#allocation7 + $0x21c8] sm:$0xff]
    %v1413 = vld [vmem:[#allocation7 + $0x21d0] sm:$0xff]
    %v1414 = vld [vmem:[#allocation7 + $0x21d8] sm:$0xff]
    %v1415 = vld [vmem:[#allocation7 + $0x21e0] sm:$0xff]
    %v1416 = vld [vmem:[#allocation7 + $0x21e8] sm:$0xff]
    %v1417 = vld [vmem:[#allocation7 + $0x21f0] sm:$0xff]
    %v1418 = vld [vmem:[#allocation7 + $0x21f8] sm:$0xff]
    %v1419 = vld [vmem:[#allocation7 + $0x2200] sm:$0xff]
    %v1420 = vld [vmem:[#allocation7 + $0x2208] sm:$0xff]
    %v1421 = vld [vmem:[#allocation7 + $0x2210] sm:$0xff]
    %v1422 = vld [vmem:[#allocation7 + $0x2218] sm:$0xff]
    %v1423 = vld [vmem:[#allocation7 + $0x2220] sm:$0xff]
    %v1424 = vld [vmem:[#allocation7 + $0x2228] sm:$0xff]
    %v1425 = vld [vmem:[#allocation7 + $0x2230] sm:$0xff]
    %v1426 = vld [vmem:[#allocation7 + $0x2238] sm:$0xff]
    %v1427 = vld [vmem:[#allocation7 + $0x2240] sm:$0xff]
    %v1428 = vld [vmem:[#allocation7 + $0x2248] sm:$0xff]
    %v1429 = vld [vmem:[#allocation7 + $0x2250] sm:$0xff]
    %v1430 = vld [vmem:[#allocation7 + $0x2258] sm:$0xff]
    %v1431 = vld [vmem:[#allocation7 + $0x2260] sm:$0xff]
    %v1432 = vld [vmem:[#allocation7 + $0x2268] sm:$0xff]
    %v1433 = vld [vmem:[#allocation7 + $0x2270] sm:$0xff]
    %v1434 = vld [vmem:[#allocation7 + $0x2278] sm:$0xff]
    %v1435 = vld [vmem:[#allocation7 + $0x2280] sm:$0xff]
    %v1436 = vld [vmem:[#allocation7 + $0x2288] sm:$0xff]
    %v1437 = vld [vmem:[#allocation7 + $0x2290] sm:$0xff]
    %v1438 = vld [vmem:[#allocation7 + $0x2298] sm:$0xff]
    %v1439 = vld [vmem:[#allocation7 + $0x22a0] sm:$0xff]
    %v1440 = vld [vmem:[#allocation7 + $0x22a8] sm:$0xff]
    %v1441 = vld [vmem:[#allocation7 + $0x22b0] sm:$0xff]
    %v1442 = vld [vmem:[#allocation7 + $0x22b8] sm:$0xff]
    %v1443 = vld [vmem:[#allocation7 + $0x22c0] sm:$0xff]
    %v1444 = vld [vmem:[#allocation7 + $0x22c8] sm:$0xff]
    %v1445 = vld [vmem:[#allocation7 + $0x22d0] sm:$0xff]
    %v1446 = vld [vmem:[#allocation7 + $0x22d8] sm:$0xff]
    %v1447 = vld [vmem:[#allocation7 + $0x22e0] sm:$0xff]
    %v1448 = vld [vmem:[#allocation7 + $0x22e8] sm:$0xff]
    %v1449 = vld [vmem:[#allocation7 + $0x22f0] sm:$0xff]
    %v1450 = vld [vmem:[#allocation7 + $0x22f8] sm:$0xff]
    %v1451 = vld [vmem:[#allocation7 + $0x2300] sm:$0xff]
    %v1452 = vld [vmem:[#allocation7 + $0x2308] sm:$0xff]
    %v1453 = vld [vmem:[#allocation7 + $0x2310] sm:$0xff]
    %v1454 = vld [vmem:[#allocation7 + $0x2318] sm:$0xff]
    %v1455 = vld [vmem:[#allocation7 + $0x2320] sm:$0xff]
    %v1456 = vld [vmem:[#allocation7 + $0x2328] sm:$0xff]
    %v1457 = vld [vmem:[#allocation7 + $0x2330] sm:$0xff]
    %v1458 = vld [vmem:[#allocation7 + $0x2338] sm:$0xff]
    %v1459 = vld [vmem:[#allocation7 + $0x2340] sm:$0xff]
    %v1460 = vld [vmem:[#allocation7 + $0x2348] sm:$0xff]
    %v1461 = vld [vmem:[#allocation7 + $0x2350] sm:$0xff]
    %v1462 = vld [vmem:[#allocation7 + $0x2358] sm:$0xff]
    %v1463 = vld [vmem:[#allocation7 + $0x2360] sm:$0xff]
    %v1464 = vld [vmem:[#allocation7 + $0x2368] sm:$0xff]
    %v1465 = vld [vmem:[#allocation7 + $0x2370] sm:$0xff]
    %v1466 = vld [vmem:[#allocation7 + $0x2378] sm:$0xff]
    %v1467 = vld [vmem:[#allocation7 + $0x2380] sm:$0xff]
    %v1468 = vld [vmem:[#allocation7 + $0x2388] sm:$0xff]
    %v1469 = vld [vmem:[#allocation7 + $0x2390] sm:$0xff]
    %v1470 = vld [vmem:[#allocation7 + $0x2398] sm:$0xff]
    %v1471 = vld [vmem:[#allocation7 + $0x23a0] sm:$0xff]
    %v1472 = vld [vmem:[#allocation7 + $0x23a8] sm:$0xff]
    %v1473 = vld [vmem:[#allocation7 + $0x23b0] sm:$0xff]
    %v1474 = vld [vmem:[#allocation7 + $0x23b8] sm:$0xff]
    %v1475 = vld [vmem:[#allocation7 + $0x23c0] sm:$0xff]
    %v1476 = vld [vmem:[#allocation7 + $0x23c8] sm:$0xff]
    %v1477 = vld [vmem:[#allocation7 + $0x23d0] sm:$0xff]
    %v1478 = vld [vmem:[#allocation7 + $0x23d8] sm:$0xff]
    %v1479 = vld [vmem:[#allocation7 + $0x23e0] sm:$0xff]
    %v1480 = vld [vmem:[#allocation7 + $0x23e8] sm:$0xff]
    %v1481 = vld [vmem:[#allocation7 + $0x23f0] sm:$0xff]
    %v1482 = vld [vmem:[#allocation7 + $0x23f8] sm:$0xff]
    %v1483 = vld [vmem:[#allocation7 + $0x2400] sm:$0xff]
    %v1484 = vld [vmem:[#allocation7 + $0x2408] sm:$0xff]
    %v1485 = vld [vmem:[#allocation7 + $0x2410] sm:$0xff]
    %v1486 = vld [vmem:[#allocation7 + $0x2418] sm:$0xff]
    %v1487 = vld [vmem:[#allocation7 + $0x2420] sm:$0xff]
    %v1488 = vld [vmem:[#allocation7 + $0x2428] sm:$0xff]
    %v1489 = vld [vmem:[#allocation7 + $0x2430] sm:$0xff]
    %v1490 = vld [vmem:[#allocation7 + $0x2438] sm:$0xff]
    %v1491 = vld [vmem:[#allocation7 + $0x2440] sm:$0xff]
    %v1492 = vld [vmem:[#allocation7 + $0x2448] sm:$0xff]
    %v1493 = vld [vmem:[#allocation7 + $0x2450] sm:$0xff]
    %v1494 = vld [vmem:[#allocation7 + $0x2458] sm:$0xff]
    %v1495 = vld [vmem:[#allocation7 + $0x2460] sm:$0xff]
    %v1496 = vld [vmem:[#allocation7 + $0x2468] sm:$0xff]
    %v1497 = vld [vmem:[#allocation7 + $0x2470] sm:$0xff]
    %v1498 = vld [vmem:[#allocation7 + $0x2478] sm:$0xff]
    %v1499 = vld [vmem:[#allocation7 + $0x2480] sm:$0xff]
    %v1500 = vld [vmem:[#allocation7 + $0x2488] sm:$0xff]
    %v1501 = vld [vmem:[#allocation7 + $0x2490] sm:$0xff]
    %v1502 = vld [vmem:[#allocation7 + $0x2498] sm:$0xff]
    %v1503 = vld [vmem:[#allocation7 + $0x24a0] sm:$0xff]
    %v1504 = vld [vmem:[#allocation7 + $0x24a8] sm:$0xff]
    %v1505 = vld [vmem:[#allocation7 + $0x24b0] sm:$0xff]
    %v1506 = vld [vmem:[#allocation7 + $0x24b8] sm:$0xff]
    %v1507 = vld [vmem:[#allocation7 + $0x24c0] sm:$0xff]
    %v1508 = vld [vmem:[#allocation7 + $0x24c8] sm:$0xff]
    %v1509 = vld [vmem:[#allocation7 + $0x24d0] sm:$0xff]
    %v1510 = vld [vmem:[#allocation7 + $0x24d8] sm:$0xff]
    %v1511 = vld [vmem:[#allocation7 + $0x24e0] sm:$0xff]
    %v1512 = vld [vmem:[#allocation7 + $0x24e8] sm:$0xff]
    %v1513 = vld [vmem:[#allocation7 + $0x24f0] sm:$0xff]
    %v1514 = vld [vmem:[#allocation7 + $0x24f8] sm:$0xff]
    %v1515 = vld [vmem:[#allocation7 + $0x2500] sm:$0xff]
    %v1516 = vld [vmem:[#allocation7 + $0x2508] sm:$0xff]
    %v1517 = vld [vmem:[#allocation7 + $0x2510] sm:$0xff]
    %v1518 = vld [vmem:[#allocation7 + $0x2518] sm:$0xff]
    %v1519 = vld [vmem:[#allocation7 + $0x2520] sm:$0xff]
    %v1520 = vld [vmem:[#allocation7 + $0x2528] sm:$0xff]
    %v1521 = vld [vmem:[#allocation7 + $0x2530] sm:$0xff]
    %v1522 = vld [vmem:[#allocation7 + $0x2538] sm:$0xff]
    %v1523 = vld [vmem:[#allocation7 + $0x2540] sm:$0xff]
    %v1524 = vld [vmem:[#allocation7 + $0x2548] sm:$0xff]
    %v1525 = vld [vmem:[#allocation7 + $0x2550] sm:$0xff]
    %v1526 = vld [vmem:[#allocation7 + $0x2558] sm:$0xff]
    %v1527 = vld [vmem:[#allocation7 + $0x2560] sm:$0xff]
    %v1528 = vld [vmem:[#allocation7 + $0x2568] sm:$0xff]
    %v1529 = vld [vmem:[#allocation7 + $0x2570] sm:$0xff]
    %v1530 = vld [vmem:[#allocation7 + $0x2578] sm:$0xff]
    %v1531 = vld [vmem:[#allocation7 + $0x2580] sm:$0xff]
    %v1532 = vld [vmem:[#allocation7 + $0x2588] sm:$0xff]
    %v1533 = vld [vmem:[#allocation7 + $0x2590] sm:$0xff]
    %v1534 = vld [vmem:[#allocation7 + $0x2598] sm:$0xff]
    %v1535 = vld [vmem:[#allocation7 + $0x25a0] sm:$0xff]
    %v1536 = vld [vmem:[#allocation7 + $0x25a8] sm:$0xff]
    %v1537 = vld [vmem:[#allocation7 + $0x25b0] sm:$0xff]
    %v1538 = vld [vmem:[#allocation7 + $0x25b8] sm:$0xff]
    %v1539 = vld [vmem:[#allocation7 + $0x25c0] sm:$0xff]
    %v1540 = vld [vmem:[#allocation7 + $0x25c8] sm:$0xff]
    %v1541 = vld [vmem:[#allocation7 + $0x25d0] sm:$0xff]
    %v1542 = vld [vmem:[#allocation7 + $0x25d8] sm:$0xff]
    %v1543 = vld [vmem:[#allocation7 + $0x25e0] sm:$0xff]
    %v1544 = vld [vmem:[#allocation7 + $0x25e8] sm:$0xff]
    %v1545 = vld [vmem:[#allocation7 + $0x25f0] sm:$0xff]
    %v1546 = vld [vmem:[#allocation7 + $0x25f8] sm:$0xff]
    %v1547 = vld [vmem:[#allocation7 + $0x2600] sm:$0xff]
    %v1548 = vld [vmem:[#allocation7 + $0x2608] sm:$0xff]
    %v1549 = vld [vmem:[#allocation7 + $0x2610] sm:$0xff]
    %v1550 = vld [vmem:[#allocation7 + $0x2618] sm:$0xff]
    %v1551 = vld [vmem:[#allocation7 + $0x2620] sm:$0xff]
    %v1552 = vld [vmem:[#allocation7 + $0x2628] sm:$0xff]
    %v1553 = vld [vmem:[#allocation7 + $0x2630] sm:$0xff]
    %v1554 = vld [vmem:[#allocation7 + $0x2638] sm:$0xff]
    %v1555 = vld [vmem:[#allocation7 + $0x2640] sm:$0xff]
    %v1556 = vld [vmem:[#allocation7 + $0x2648] sm:$0xff]
    %v1557 = vld [vmem:[#allocation7 + $0x2650] sm:$0xff]
    %v1558 = vld [vmem:[#allocation7 + $0x2658] sm:$0xff]
    %v1559 = vld [vmem:[#allocation7 + $0x2660] sm:$0xff]
    %v1560 = vld [vmem:[#allocation7 + $0x2668] sm:$0xff]
    %v1561 = vld [vmem:[#allocation7 + $0x2670] sm:$0xff]
    %v1562 = vld [vmem:[#allocation7 + $0x2678] sm:$0xff]
    %v1563 = vld [vmem:[#allocation7 + $0x2680] sm:$0xff]
    %v1564 = vld [vmem:[#allocation7 + $0x2688] sm:$0xff]
    %v1565 = vld [vmem:[#allocation7 + $0x2690] sm:$0xff]
    %v1566 = vld [vmem:[#allocation7 + $0x2698] sm:$0xff]
    %v1567 = vld [vmem:[#allocation7 + $0x26a0] sm:$0xff]
    %v1568 = vld [vmem:[#allocation7 + $0x26a8] sm:$0xff]
    %v1569 = vld [vmem:[#allocation7 + $0x26b0] sm:$0xff]
    %v1570 = vld [vmem:[#allocation7 + $0x26b8] sm:$0xff]
    %v1571 = vld [vmem:[#allocation7 + $0x26c0] sm:$0xff]
    %v1572 = vld [vmem:[#allocation7 + $0x26c8] sm:$0xff]
    %v1573 = vld [vmem:[#allocation7 + $0x26d0] sm:$0xff]
    %v1574 = vld [vmem:[#allocation7 + $0x26d8] sm:$0xff]
    %v1575 = vld [vmem:[#allocation7 + $0x26e0] sm:$0xff]
    %v1576 = vld [vmem:[#allocation7 + $0x26e8] sm:$0xff]
    %v1577 = vld [vmem:[#allocation7 + $0x26f0] sm:$0xff]
    %v1578 = vld [vmem:[#allocation7 + $0x26f8] sm:$0xff]
    %v1579 = vld [vmem:[#allocation7 + $0x2700] sm:$0xff]
    %v1580 = vld [vmem:[#allocation7 + $0x2708] sm:$0xff]
    %v1581 = vld [vmem:[#allocation7 + $0x2710] sm:$0xff]
    %v1582 = vld [vmem:[#allocation7 + $0x2718] sm:$0xff]
    %v1583 = vld [vmem:[#allocation7 + $0x2720] sm:$0xff]
    %v1584 = vld [vmem:[#allocation7 + $0x2728] sm:$0xff]
    %v1585 = vld [vmem:[#allocation7 + $0x2730] sm:$0xff]
    %v1586 = vld [vmem:[#allocation7 + $0x2738] sm:$0xff]
    %v1587 = vld [vmem:[#allocation7 + $0x2740] sm:$0xff]
    %v1588 = vld [vmem:[#allocation7 + $0x2748] sm:$0xff]
    %v1589 = vld [vmem:[#allocation7 + $0x2750] sm:$0xff]
    %v1590 = vld [vmem:[#allocation7 + $0x2758] sm:$0xff]
    %v1591 = vld [vmem:[#allocation7 + $0x2760] sm:$0xff]
    %v1592 = vld [vmem:[#allocation7 + $0x2768] sm:$0xff]
    %v1593 = vld [vmem:[#allocation7 + $0x2770] sm:$0xff]
    %v1594 = vld [vmem:[#allocation7 + $0x2778] sm:$0xff]
    %v1595 = vld [vmem:[#allocation7 + $0x2780] sm:$0xff]
    %v1596 = vld [vmem:[#allocation7 + $0x2788] sm:$0xff]
    %v1597 = vld [vmem:[#allocation7 + $0x2790] sm:$0xff]
    %v1598 = vld [vmem:[#allocation7 + $0x2798] sm:$0xff]
    %v1599 = vld [vmem:[#allocation7 + $0x27a0] sm:$0xff]
    %v1600 = vld [vmem:[#allocation7 + $0x27a8] sm:$0xff]
    %v1601 = vld [vmem:[#allocation7 + $0x27b0] sm:$0xff]
    %v1602 = vld [vmem:[#allocation7 + $0x27b8] sm:$0xff]
    %v1603 = vld [vmem:[#allocation7 + $0x27c0] sm:$0xff]
    %v1604 = vld [vmem:[#allocation7 + $0x27c8] sm:$0xff]
    %v1605 = vld [vmem:[#allocation7 + $0x27d0] sm:$0xff]
    %v1606 = vld [vmem:[#allocation7 + $0x27d8] sm:$0xff]
    %v1607 = vld [vmem:[#allocation7 + $0x27e0] sm:$0xff]
    %v1608 = vld [vmem:[#allocation7 + $0x27e8] sm:$0xff]
    %v1609 = vld [vmem:[#allocation7 + $0x27f0] sm:$0xff]
    %v1610 = vld [vmem:[#allocation7 + $0x27f8] sm:$0xff]
    %v1611 = vld [vmem:[#allocation7 + $0x2800] sm:$0xff]
    %v1612 = vld [vmem:[#allocation7 + $0x2808] sm:$0xff]
    %v1613 = vld [vmem:[#allocation7 + $0x2810] sm:$0xff]
    %v1614 = vld [vmem:[#allocation7 + $0x2818] sm:$0xff]
    %v1615 = vld [vmem:[#allocation7 + $0x2820] sm:$0xff]
    %v1616 = vld [vmem:[#allocation7 + $0x2828] sm:$0xff]
    %v1617 = vld [vmem:[#allocation7 + $0x2830] sm:$0xff]
    %v1618 = vld [vmem:[#allocation7 + $0x2838] sm:$0xff]
    %v1619 = vld [vmem:[#allocation7 + $0x2840] sm:$0xff]
    %v1620 = vld [vmem:[#allocation7 + $0x2848] sm:$0xff]
    %v1621 = vld [vmem:[#allocation7 + $0x2850] sm:$0xff]
    %v1622 = vld [vmem:[#allocation7 + $0x2858] sm:$0xff]
    %v1623 = vld [vmem:[#allocation7 + $0x2860] sm:$0xff]
    %v1624 = vld [vmem:[#allocation7 + $0x2868] sm:$0xff]
    %v1625 = vld [vmem:[#allocation7 + $0x2870] sm:$0xff]
    %v1626 = vld [vmem:[#allocation7 + $0x2878] sm:$0xff]
    %v1627 = vld [vmem:[#allocation7 + $0x2880] sm:$0xff]
    %v1628 = vld [vmem:[#allocation7 + $0x2888] sm:$0xff]
    %v1629 = vld [vmem:[#allocation7 + $0x2890] sm:$0xff]
    %v1630 = vld [vmem:[#allocation7 + $0x2898] sm:$0xff]
    %v1631 = vld [vmem:[#allocation7 + $0x28a0] sm:$0xff]
    %v1632 = vld [vmem:[#allocation7 + $0x28a8] sm:$0xff]
    %v1633 = vld [vmem:[#allocation7 + $0x28b0] sm:$0xff]
    %v1634 = vld [vmem:[#allocation7 + $0x28b8] sm:$0xff]
    %v1635 = vld [vmem:[#allocation7 + $0x28c0] sm:$0xff]
    %v1636 = vld [vmem:[#allocation7 + $0x28c8] sm:$0xff]
    %v1637 = vld [vmem:[#allocation7 + $0x28d0] sm:$0xff]
    %v1638 = vld [vmem:[#allocation7 + $0x28d8] sm:$0xff]
    %v1639 = vld [vmem:[#allocation7 + $0x28e0] sm:$0xff]
    %v1640 = vld [vmem:[#allocation7 + $0x28e8] sm:$0xff]
    %v1641 = vld [vmem:[#allocation7 + $0x28f0] sm:$0xff]
    %v1642 = vld [vmem:[#allocation7 + $0x28f8] sm:$0xff]
    %v1643 = vld [vmem:[#allocation7 + $0x2900] sm:$0xff]
    %v1644 = vld [vmem:[#allocation7 + $0x2908] sm:$0xff]
    %v1645 = vld [vmem:[#allocation7 + $0x2910] sm:$0xff]
    %v1646 = vld [vmem:[#allocation7 + $0x2918] sm:$0xff]
    %v1647 = vld [vmem:[#allocation7 + $0x2920] sm:$0xff]
    %v1648 = vld [vmem:[#allocation7 + $0x2928] sm:$0xff]
    %v1649 = vld [vmem:[#allocation7 + $0x2930] sm:$0xff]
    %v1650 = vld [vmem:[#allocation7 + $0x2938] sm:$0xff]
    %v1651 = vld [vmem:[#allocation7 + $0x2940] sm:$0xff]
    %v1652 = vld [vmem:[#allocation7 + $0x2948] sm:$0xff]
    %v1653 = vld [vmem:[#allocation7 + $0x2950] sm:$0xff]
    %v1654 = vld [vmem:[#allocation7 + $0x2958] sm:$0xff]
    %v1655 = vld [vmem:[#allocation7 + $0x2960] sm:$0xff]
    %v1656 = vld [vmem:[#allocation7 + $0x2968] sm:$0xff]
    %v1657 = vld [vmem:[#allocation7 + $0x2970] sm:$0xff]
    %v1658 = vld [vmem:[#allocation7 + $0x2978] sm:$0xff]
    %v1659 = vld [vmem:[#allocation7 + $0x2980] sm:$0xff]
    %v1660 = vld [vmem:[#allocation7 + $0x2988] sm:$0xff]
    %v1661 = vld [vmem:[#allocation7 + $0x2990] sm:$0xff]
    %v1662 = vld [vmem:[#allocation7 + $0x2998] sm:$0xff]
    %v1663 = vld [vmem:[#allocation7 + $0x29a0] sm:$0xff]
    %v1664 = vld [vmem:[#allocation7 + $0x29a8] sm:$0xff]
    %v1665 = vld [vmem:[#allocation7 + $0x29b0] sm:$0xff]
    %v1666 = vld [vmem:[#allocation7 + $0x29b8] sm:$0xff]
    %v1667 = vld [vmem:[#allocation7 + $0x29c0] sm:$0xff]
    %v1668 = vld [vmem:[#allocation7 + $0x29c8] sm:$0xff]
    %v1669 = vld [vmem:[#allocation7 + $0x29d0] sm:$0xff]
    %v1670 = vld [vmem:[#allocation7 + $0x29d8] sm:$0xff]
    %v1671 = vld [vmem:[#allocation7 + $0x29e0] sm:$0xff]
    %v1672 = vld [vmem:[#allocation7 + $0x29e8] sm:$0xff]
    %v1673 = vld [vmem:[#allocation7 + $0x29f0] sm:$0xff]
    %v1674 = vld [vmem:[#allocation7 + $0x29f8] sm:$0xff]
    %v1675 = vld [vmem:[#allocation7 + $0x2a00] sm:$0xff]
    %v1676 = vld [vmem:[#allocation7 + $0x2a08] sm:$0xff]
    %v1677 = vld [vmem:[#allocation7 + $0x2a10] sm:$0xff]
    %v1678 = vld [vmem:[#allocation7 + $0x2a18] sm:$0xff]
    %v1679 = vld [vmem:[#allocation7 + $0x2a20] sm:$0xff]
    %v1680 = vld [vmem:[#allocation7 + $0x2a28] sm:$0xff]
    %v1681 = vld [vmem:[#allocation7 + $0x2a30] sm:$0xff]
    %v1682 = vld [vmem:[#allocation7 + $0x2a38] sm:$0xff]
    %v1683 = vld [vmem:[#allocation7 + $0x2a40] sm:$0xff]
    %v1684 = vld [vmem:[#allocation7 + $0x2a48] sm:$0xff]
    %v1685 = vld [vmem:[#allocation7 + $0x2a50] sm:$0xff]
    %v1686 = vld [vmem:[#allocation7 + $0x2a58] sm:$0xff]
    %v1687 = vld [vmem:[#allocation7 + $0x2a60] sm:$0xff]
    %v1688 = vld [vmem:[#allocation7 + $0x2a68] sm:$0xff]
    %v1689 = vld [vmem:[#allocation7 + $0x2a70] sm:$0xff]
    %v1690 = vld [vmem:[#allocation7 + $0x2a78] sm:$0xff]
    %v1691 = vld [vmem:[#allocation7 + $0x2a80] sm:$0xff]
    %v1692 = vld [vmem:[#allocation7 + $0x2a88] sm:$0xff]
    %v1693 = vld [vmem:[#allocation7 + $0x2a90] sm:$0xff]
    %v1694 = vld [vmem:[#allocation7 + $0x2a98] sm:$0xff]
    %v1695 = vld [vmem:[#allocation7 + $0x2aa0] sm:$0xff]
    %v1696 = vld [vmem:[#allocation7 + $0x2aa8] sm:$0xff]
    %v1697 = vld [vmem:[#allocation7 + $0x2ab0] sm:$0xff]
    %v1698 = vld [vmem:[#allocation7 + $0x2ab8] sm:$0xff]
    %v1699 = vld [vmem:[#allocation7 + $0x2ac0] sm:$0xff]
    %v1700 = vld [vmem:[#allocation7 + $0x2ac8] sm:$0xff]
    %v1701 = vld [vmem:[#allocation7 + $0x2ad0] sm:$0xff]
    %v1702 = vld [vmem:[#allocation7 + $0x2ad8] sm:$0xff]
    %v1703 = vld [vmem:[#allocation7 + $0x2ae0] sm:$0xff]
    %v1704 = vld [vmem:[#allocation7 + $0x2ae8] sm:$0xff]
    %v1705 = vld [vmem:[#allocation7 + $0x2af0] sm:$0xff]
    %v1706 = vld [vmem:[#allocation7 + $0x2af8] sm:$0xff]
    %v1707 = vld [vmem:[#allocation7 + $0x2b00] sm:$0xff]
    %v1708 = vld [vmem:[#allocation7 + $0x2b08] sm:$0xff]
    %v1709 = vld [vmem:[#allocation7 + $0x2b10] sm:$0xff]
    %v1710 = vld [vmem:[#allocation7 + $0x2b18] sm:$0xff]
    %v1711 = vld [vmem:[#allocation7 + $0x2b20] sm:$0xff]
    %v1712 = vld [vmem:[#allocation7 + $0x2b28] sm:$0xff]
    %v1713 = vld [vmem:[#allocation7 + $0x2b30] sm:$0xff]
    %v1714 = vld [vmem:[#allocation7 + $0x2b38] sm:$0xff]
    %v1715 = vld [vmem:[#allocation7 + $0x2b40] sm:$0xff]
    %v1716 = vld [vmem:[#allocation7 + $0x2b48] sm:$0xff]
    %v1717 = vld [vmem:[#allocation7 + $0x2b50] sm:$0xff]
    %v1718 = vld [vmem:[#allocation7 + $0x2b58] sm:$0xff]
    %v1719 = vld [vmem:[#allocation7 + $0x2b60] sm:$0xff]
    %v1720 = vld [vmem:[#allocation7 + $0x2b68] sm:$0xff]
    %v1721 = vld [vmem:[#allocation7 + $0x2b70] sm:$0xff]
    %v1722 = vld [vmem:[#allocation7 + $0x2b78] sm:$0xff]
    %v1723 = vld [vmem:[#allocation7 + $0x2b80] sm:$0xff]
    %v1724 = vld [vmem:[#allocation7 + $0x2b88] sm:$0xff]
    %v1725 = vld [vmem:[#allocation7 + $0x2b90] sm:$0xff]
    %v1726 = vld [vmem:[#allocation7 + $0x2b98] sm:$0xff]
    %v1727 = vld [vmem:[#allocation7 + $0x2ba0] sm:$0xff]
    %v1728 = vld [vmem:[#allocation7 + $0x2ba8] sm:$0xff]
    %v1729 = vld [vmem:[#allocation7 + $0x2bb0] sm:$0xff]
    %v1730 = vld [vmem:[#allocation7 + $0x2bb8] sm:$0xff]
    %v1731 = vld [vmem:[#allocation7 + $0x2bc0] sm:$0xff]
    %v1732 = vld [vmem:[#allocation7 + $0x2bc8] sm:$0xff]
    %v1733 = vld [vmem:[#allocation7 + $0x2bd0] sm:$0xff]
    %v1734 = vld [vmem:[#allocation7 + $0x2bd8] sm:$0xff]
    %v1735 = vld [vmem:[#allocation7 + $0x2be0] sm:$0xff]
    %v1736 = vld [vmem:[#allocation7 + $0x2be8] sm:$0xff]
    %v1737 = vld [vmem:[#allocation7 + $0x2bf0] sm:$0xff]
    %v1738 = vld [vmem:[#allocation7 + $0x2bf8] sm:$0xff]
    %v1739 = vld [vmem:[#allocation7 + $0x2c00] sm:$0xff]
    %v1740 = vld [vmem:[#allocation7 + $0x2c08] sm:$0xff]
    %v1741 = vld [vmem:[#allocation7 + $0x2c10] sm:$0xff]
    %v1742 = vld [vmem:[#allocation7 + $0x2c18] sm:$0xff]
    %v1743 = vld [vmem:[#allocation7 + $0x2c20] sm:$0xff]
    %v1744 = vld [vmem:[#allocation7 + $0x2c28] sm:$0xff]
    %v1745 = vld [vmem:[#allocation7 + $0x2c30] sm:$0xff]
    %v1746 = vld [vmem:[#allocation7 + $0x2c38] sm:$0xff]
    %v1747 = vld [vmem:[#allocation7 + $0x2c40] sm:$0xff]
    %v1748 = vld [vmem:[#allocation7 + $0x2c48] sm:$0xff]
    %v1749 = vld [vmem:[#allocation7 + $0x2c50] sm:$0xff]
    %v1750 = vld [vmem:[#allocation7 + $0x2c58] sm:$0xff]
    %v1751 = vld [vmem:[#allocation7 + $0x2c60] sm:$0xff]
    %v1752 = vld [vmem:[#allocation7 + $0x2c68] sm:$0xff]
    %v1753 = vld [vmem:[#allocation7 + $0x2c70] sm:$0xff]
    %v1754 = vld [vmem:[#allocation7 + $0x2c78] sm:$0xff]
    %v1755 = vld [vmem:[#allocation7 + $0x2c80] sm:$0xff]
    %v1756 = vld [vmem:[#allocation7 + $0x2c88] sm:$0xff]
    %v1757 = vld [vmem:[#allocation7 + $0x2c90] sm:$0xff]
    %v1758 = vld [vmem:[#allocation7 + $0x2c98] sm:$0xff]
    %v1759 = vld [vmem:[#allocation7 + $0x2ca0] sm:$0xff]
    %v1760 = vld [vmem:[#allocation7 + $0x2ca8] sm:$0xff]
    %v1761 = vld [vmem:[#allocation7 + $0x2cb0] sm:$0xff]
    %v1762 = vld [vmem:[#allocation7 + $0x2cb8] sm:$0xff]
    %v1763 = vld [vmem:[#allocation7 + $0x2cc0] sm:$0xff]
    %v1764 = vld [vmem:[#allocation7 + $0x2cc8] sm:$0xff]
    %v1765 = vld [vmem:[#allocation7 + $0x2cd0] sm:$0xff]
    %v1766 = vld [vmem:[#allocation7 + $0x2cd8] sm:$0xff]
    %v1767 = vld [vmem:[#allocation7 + $0x2ce0] sm:$0xff]
    %v1768 = vld [vmem:[#allocation7 + $0x2ce8] sm:$0xff]
    %v1769 = vld [vmem:[#allocation7 + $0x2cf0] sm:$0xff]
    %v1770 = vld [vmem:[#allocation7 + $0x2cf8] sm:$0xff]
    %v1771 = vld [vmem:[#allocation7 + $0x2d00] sm:$0xff]
    %v1772 = vld [vmem:[#allocation7 + $0x2d08] sm:$0xff]
    %v1773 = vld [vmem:[#allocation7 + $0x2d10] sm:$0xff]
    %v1774 = vld [vmem:[#allocation7 + $0x2d18] sm:$0xff]
    %v1775 = vld [vmem:[#allocation7 + $0x2d20] sm:$0xff]
    %v1776 = vld [vmem:[#allocation7 + $0x2d28] sm:$0xff]
    %v1777 = vld [vmem:[#allocation7 + $0x2d30] sm:$0xff]
    %v1778 = vld [vmem:[#allocation7 + $0x2d38] sm:$0xff]
    %v1779 = vld [vmem:[#allocation7 + $0x2d40] sm:$0xff]
    %v1780 = vld [vmem:[#allocation7 + $0x2d48] sm:$0xff]
    %v1781 = vld [vmem:[#allocation7 + $0x2d50] sm:$0xff]
    %v1782 = vld [vmem:[#allocation7 + $0x2d58] sm:$0xff]
    %v1783 = vld [vmem:[#allocation7 + $0x2d60] sm:$0xff]
    %v1784 = vld [vmem:[#allocation7 + $0x2d68] sm:$0xff]
    %v1785 = vld [vmem:[#allocation7 + $0x2d70] sm:$0xff]
    %v1786 = vld [vmem:[#allocation7 + $0x2d78] sm:$0xff]
    %v1787 = vld [vmem:[#allocation7 + $0x2d80] sm:$0xff]
    %v1788 = vld [vmem:[#allocation7 + $0x2d88] sm:$0xff]
    %v1789 = vld [vmem:[#allocation7 + $0x2d90] sm:$0xff]
    %v1790 = vld [vmem:[#allocation7 + $0x2d98] sm:$0xff]
    %v1791 = vld [vmem:[#allocation7 + $0x2da0] sm:$0xff]
    %v1792 = vld [vmem:[#allocation7 + $0x2da8] sm:$0xff]
    %v1793 = vld [vmem:[#allocation7 + $0x2db0] sm:$0xff]
    %v1794 = vld [vmem:[#allocation7 + $0x2db8] sm:$0xff]
    %v1795 = vld [vmem:[#allocation7 + $0x2dc0] sm:$0xff]
    %v1796 = vld [vmem:[#allocation7 + $0x2dc8] sm:$0xff]
    %v1797 = vld [vmem:[#allocation7 + $0x2dd0] sm:$0xff]
    %v1798 = vld [vmem:[#allocation7 + $0x2dd8] sm:$0xff]
    %v1799 = vld [vmem:[#allocation7 + $0x2de0] sm:$0xff]
    %v1800 = vld [vmem:[#allocation7 + $0x2de8] sm:$0xff]
    %v1801 = vld [vmem:[#allocation7 + $0x2df0] sm:$0xff]
    %v1802 = vld [vmem:[#allocation7 + $0x2df8] sm:$0xff]
    %v1803 = vld [vmem:[#allocation7 + $0x2e00] sm:$0xff]
    %v1804 = vld [vmem:[#allocation7 + $0x2e08] sm:$0xff]
    %v1805 = vld [vmem:[#allocation7 + $0x2e10] sm:$0xff]
    %v1806 = vld [vmem:[#allocation7 + $0x2e18] sm:$0xff]
    %v1807 = vld [vmem:[#allocation7 + $0x2e20] sm:$0xff]
    %v1808 = vld [vmem:[#allocation7 + $0x2e28] sm:$0xff]
    %v1809 = vld [vmem:[#allocation7 + $0x2e30] sm:$0xff]
    %v1810 = vld [vmem:[#allocation7 + $0x2e38] sm:$0xff]
    %v1811 = vld [vmem:[#allocation7 + $0x2e40] sm:$0xff]
    %v1812 = vld [vmem:[#allocation7 + $0x2e48] sm:$0xff]
    %v1813 = vld [vmem:[#allocation7 + $0x2e50] sm:$0xff]
    %v1814 = vld [vmem:[#allocation7 + $0x2e58] sm:$0xff]
    %v1815 = vld [vmem:[#allocation7 + $0x2e60] sm:$0xff]
    %v1816 = vld [vmem:[#allocation7 + $0x2e68] sm:$0xff]
    %v1817 = vld [vmem:[#allocation7 + $0x2e70] sm:$0xff]
    %v1818 = vld [vmem:[#allocation7 + $0x2e78] sm:$0xff]
    %v1819 = vld [vmem:[#allocation7 + $0x2e80] sm:$0xff]
    %v1820 = vld [vmem:[#allocation7 + $0x2e88] sm:$0xff]
    %v1821 = vld [vmem:[#allocation7 + $0x2e90] sm:$0xff]
    %v1822 = vld [vmem:[#allocation7 + $0x2e98] sm:$0xff]
    %v1823 = vld [vmem:[#allocation7 + $0x2ea0] sm:$0xff]
    %v1824 = vld [vmem:[#allocation7 + $0x2ea8] sm:$0xff]
    %v1825 = vld [vmem:[#allocation7 + $0x2eb0] sm:$0xff]
    %v1826 = vld [vmem:[#allocation7 + $0x2eb8] sm:$0xff]
    %v1827 = vld [vmem:[#allocation7 + $0x2ec0] sm:$0xff]
    %v1828 = vld [vmem:[#allocation7 + $0x2ec8] sm:$0xff]
    %v1829 = vld [vmem:[#allocation7 + $0x2ed0] sm:$0xff]
    %v1830 = vld [vmem:[#allocation7 + $0x2ed8] sm:$0xff]
    %v1831 = vld [vmem:[#allocation7 + $0x2ee0] sm:$0xff]
    %v1832 = vld [vmem:[#allocation7 + $0x2ee8] sm:$0xff]
    %v1833 = vld [vmem:[#allocation7 + $0x2ef0] sm:$0xff]
    %v1834 = vld [vmem:[#allocation7 + $0x2ef8] sm:$0xff]
    %v1835 = vld [vmem:[#allocation7 + $0x2f00] sm:$0xff]
    %v1836 = vld [vmem:[#allocation7 + $0x2f08] sm:$0xff]
    %v1837 = vld [vmem:[#allocation7 + $0x2f10] sm:$0xff]
    %v1838 = vld [vmem:[#allocation7 + $0x2f18] sm:$0xff]
    %v1839 = vld [vmem:[#allocation7 + $0x2f20] sm:$0xff]
    %v1840 = vld [vmem:[#allocation7 + $0x2f28] sm:$0xff]
    %v1841 = vld [vmem:[#allocation7 + $0x2f30] sm:$0xff]
    %v1842 = vld [vmem:[#allocation7 + $0x2f38] sm:$0xff]
    %v1843 = vld [vmem:[#allocation7 + $0x2f40] sm:$0xff]
    %v1844 = vld [vmem:[#allocation7 + $0x2f48] sm:$0xff]
    %v1845 = vld [vmem:[#allocation7 + $0x2f50] sm:$0xff]
    %v1846 = vld [vmem:[#allocation7 + $0x2f58] sm:$0xff]
    %v1847 = vld [vmem:[#allocation7 + $0x2f60] sm:$0xff]
    %v1848 = vld [vmem:[#allocation7 + $0x2f68] sm:$0xff]
    %v1849 = vld [vmem:[#allocation7 + $0x2f70] sm:$0xff]
    %v1850 = vld [vmem:[#allocation7 + $0x2f78] sm:$0xff]
    %v1851 = vld [vmem:[#allocation7 + $0x2f80] sm:$0xff]
    %v1852 = vld [vmem:[#allocation7 + $0x2f88] sm:$0xff]
    %v1853 = vld [vmem:[#allocation7 + $0x2f90] sm:$0xff]
    %v1854 = vld [vmem:[#allocation7 + $0x2f98] sm:$0xff]
    %v1855 = vld [vmem:[#allocation7 + $0x2fa0] sm:$0xff]
    %v1856 = vld [vmem:[#allocation7 + $0x2fa8] sm:$0xff]
    %v1857 = vld [vmem:[#allocation7 + $0x2fb0] sm:$0xff]
    %v1858 = vld [vmem:[#allocation7 + $0x2fb8] sm:$0xff]
    %v1859 = vld [vmem:[#allocation7 + $0x2fc0] sm:$0xff]
    %v1860 = vld [vmem:[#allocation7 + $0x2fc8] sm:$0xff]
    %v1861 = vld [vmem:[#allocation7 + $0x2fd0] sm:$0xff]
    %v1862 = vld [vmem:[#allocation7 + $0x2fd8] sm:$0xff]
    %v1863 = vld [vmem:[#allocation7 + $0x2fe0] sm:$0xff]
    %v1864 = vld [vmem:[#allocation7 + $0x2fe8] sm:$0xff]
    %v1865 = vld [vmem:[#allocation7 + $0x2ff0] sm:$0xff]
    %v1866 = vld [vmem:[#allocation7 + $0x2ff8] sm:$0xff]
    %v1867 = vld [vmem:[#allocation7 + $0x3000] sm:$0xff]
    %v1868 = vld [vmem:[#allocation7 + $0x3008] sm:$0xff]
    %v1869 = vld [vmem:[#allocation7 + $0x3010] sm:$0xff]
    %v1870 = vld [vmem:[#allocation7 + $0x3018] sm:$0xff]
    %v1871 = vld [vmem:[#allocation7 + $0x3020] sm:$0xff]
    %v1872 = vld [vmem:[#allocation7 + $0x3028] sm:$0xff]
    %v1873 = vld [vmem:[#allocation7 + $0x3030] sm:$0xff]
    %v1874 = vld [vmem:[#allocation7 + $0x3038] sm:$0xff]
    %v1875 = vld [vmem:[#allocation7 + $0x3040] sm:$0xff]
    %v1876 = vld [vmem:[#allocation7 + $0x3048] sm:$0xff]
    %v1877 = vld [vmem:[#allocation7 + $0x3050] sm:$0xff]
    %v1878 = vld [vmem:[#allocation7 + $0x3058] sm:$0xff]
    %v1879 = vld [vmem:[#allocation7 + $0x3060] sm:$0xff]
    %v1880 = vld [vmem:[#allocation7 + $0x3068] sm:$0xff]
    %v1881 = vld [vmem:[#allocation7 + $0x3070] sm:$0xff]
    %v1882 = vld [vmem:[#allocation7 + $0x3078] sm:$0xff]
    %v1883 = vld [vmem:[#allocation7 + $0x3080] sm:$0xff]
    %v1884 = vld [vmem:[#allocation7 + $0x3088] sm:$0xff]
    %v1885 = vld [vmem:[#allocation7 + $0x3090] sm:$0xff]
    %v1886 = vld [vmem:[#allocation7 + $0x3098] sm:$0xff]
    %v1887 = vld [vmem:[#allocation7 + $0x30a0] sm:$0xff]
    %v1888 = vld [vmem:[#allocation7 + $0x30a8] sm:$0xff]
    %v1889 = vld [vmem:[#allocation7 + $0x30b0] sm:$0xff]
    %v1890 = vld [vmem:[#allocation7 + $0x30b8] sm:$0xff]
    %v1891 = vld [vmem:[#allocation7 + $0x30c0] sm:$0xff]
    %v1892 = vld [vmem:[#allocation7 + $0x30c8] sm:$0xff]
    %v1893 = vld [vmem:[#allocation7 + $0x30d0] sm:$0xff]
    %v1894 = vld [vmem:[#allocation7 + $0x30d8] sm:$0xff]
    %v1895 = vld [vmem:[#allocation7 + $0x30e0] sm:$0xff]
    %v1896 = vld [vmem:[#allocation7 + $0x30e8] sm:$0xff]
    %v1897 = vld [vmem:[#allocation7 + $0x30f0] sm:$0xff]
    %v1898 = vld [vmem:[#allocation7 + $0x30f8] sm:$0xff]
    %v1899 = vld [vmem:[#allocation7 + $0x3100] sm:$0xff]
    %v1900 = vld [vmem:[#allocation7 + $0x3108] sm:$0xff]
    %v1901 = vld [vmem:[#allocation7 + $0x3110] sm:$0xff]
    %v1902 = vld [vmem:[#allocation7 + $0x3118] sm:$0xff]
    %v1903 = vld [vmem:[#allocation7 + $0x3120] sm:$0xff]
    %v1904 = vld [vmem:[#allocation7 + $0x3128] sm:$0xff]
    %v1905 = vld [vmem:[#allocation7 + $0x3130] sm:$0xff]
    %v1906 = vld [vmem:[#allocation7 + $0x3138] sm:$0xff]
    %v1907 = vld [vmem:[#allocation7 + $0x3140] sm:$0xff]
    %v1908 = vld [vmem:[#allocation7 + $0x3148] sm:$0xff]
    %v1909 = vld [vmem:[#allocation7 + $0x3150] sm:$0xff]
    %v1910 = vld [vmem:[#allocation7 + $0x3158] sm:$0xff]
    %v1911 = vld [vmem:[#allocation7 + $0x3160] sm:$0xff]
    %v1912 = vld [vmem:[#allocation7 + $0x3168] sm:$0xff]
    %v1913 = vld [vmem:[#allocation7 + $0x3170] sm:$0xff]
    %v1914 = vld [vmem:[#allocation7 + $0x3178] sm:$0xff]
    %v1915 = vld [vmem:[#allocation7 + $0x3180] sm:$0xff]
    %v1916 = vld [vmem:[#allocation7 + $0x3188] sm:$0xff]
    %v1917 = vld [vmem:[#allocation7 + $0x3190] sm:$0xff]
    %v1918 = vld [vmem:[#allocation7 + $0x3198] sm:$0xff]
    %v1919 = vld [vmem:[#allocation7 + $0x31a0] sm:$0xff]
    %v1920 = vld [vmem:[#allocation7 + $0x31a8] sm:$0xff]
    %v1921 = vld [vmem:[#allocation7 + $0x31b0] sm:$0xff]
    %v1922 = vld [vmem:[#allocation7 + $0x31b8] sm:$0xff]
    %v1923 = vld [vmem:[#allocation7 + $0x31c0] sm:$0xff]
    %v1924 = vld [vmem:[#allocation7 + $0x31c8] sm:$0xff]
    %v1925 = vld [vmem:[#allocation7 + $0x31d0] sm:$0xff]
    %v1926 = vld [vmem:[#allocation7 + $0x31d8] sm:$0xff]
    %v1927 = vld [vmem:[#allocation7 + $0x31e0] sm:$0xff]
    %v1928 = vld [vmem:[#allocation7 + $0x31e8] sm:$0xff]
    %v1929 = vld [vmem:[#allocation7 + $0x31f0] sm:$0xff]
    %v1930 = vld [vmem:[#allocation7 + $0x31f8] sm:$0xff]
    %v1931 = vld [vmem:[#allocation7 + $0x3200] sm:$0xff]
    %v1932 = vld [vmem:[#allocation7 + $0x3208] sm:$0xff]
    %v1933 = vld [vmem:[#allocation7 + $0x3210] sm:$0xff]
    %v1934 = vld [vmem:[#allocation7 + $0x3218] sm:$0xff]
    %v1935 = vld [vmem:[#allocation7 + $0x3220] sm:$0xff]
    %v1936 = vld [vmem:[#allocation7 + $0x3228] sm:$0xff]
    %v1937 = vld [vmem:[#allocation7 + $0x3230] sm:$0xff]
    %v1938 = vld [vmem:[#allocation7 + $0x3238] sm:$0xff]
    %v1939 = vld [vmem:[#allocation7 + $0x3240] sm:$0xff]
    %v1940 = vld [vmem:[#allocation7 + $0x3248] sm:$0xff]
    %v1941 = vld [vmem:[#allocation7 + $0x3250] sm:$0xff]
    %v1942 = vld [vmem:[#allocation7 + $0x3258] sm:$0xff]
    %v1943 = vld [vmem:[#allocation7 + $0x3260] sm:$0xff]
    %v1944 = vld [vmem:[#allocation7 + $0x3268] sm:$0xff]
    %v1945 = vld [vmem:[#allocation7 + $0x3270] sm:$0xff]
    %v1946 = vld [vmem:[#allocation7 + $0x3278] sm:$0xff]
    %v1947 = vld [vmem:[#allocation7 + $0x3280] sm:$0xff]
    %v1948 = vld [vmem:[#allocation7 + $0x3288] sm:$0xff]
    %v1949 = vld [vmem:[#allocation7 + $0x3290] sm:$0xff]
    %v1950 = vld [vmem:[#allocation7 + $0x3298] sm:$0xff]
    %v1951 = vld [vmem:[#allocation7 + $0x32a0] sm:$0xff]
    %v1952 = vld [vmem:[#allocation7 + $0x32a8] sm:$0xff]
    %v1953 = vld [vmem:[#allocation7 + $0x32b0] sm:$0xff]
    %v1954 = vld [vmem:[#allocation7 + $0x32b8] sm:$0xff]
    %v1955 = vld [vmem:[#allocation7 + $0x32c0] sm:$0xff]
    %v1956 = vld [vmem:[#allocation7 + $0x32c8] sm:$0xff]
    %v1957 = vld [vmem:[#allocation7 + $0x32d0] sm:$0xff]
    %v1958 = vld [vmem:[#allocation7 + $0x32d8] sm:$0xff]
    %v1959 = vld [vmem:[#allocation7 + $0x32e0] sm:$0xff]
    %v1960 = vld [vmem:[#allocation7 + $0x32e8] sm:$0xff]
    %v1961 = vld [vmem:[#allocation7 + $0x32f0] sm:$0xff]
    %v1962 = vld [vmem:[#allocation7 + $0x32f8] sm:$0xff]
    %v1963 = vld [vmem:[#allocation7 + $0x3300] sm:$0xff]
    %v1964 = vld [vmem:[#allocation7 + $0x3308] sm:$0xff]
    %v1965 = vld [vmem:[#allocation7 + $0x3310] sm:$0xff]
    %v1966 = vld [vmem:[#allocation7 + $0x3318] sm:$0xff]
    %v1967 = vld [vmem:[#allocation7 + $0x3320] sm:$0xff]
    %v1968 = vld [vmem:[#allocation7 + $0x3328] sm:$0xff]
    %v1969 = vld [vmem:[#allocation7 + $0x3330] sm:$0xff]
    %v1970 = vld [vmem:[#allocation7 + $0x3338] sm:$0xff]
    %v1971 = vld [vmem:[#allocation7 + $0x3340] sm:$0xff]
    %v1972 = vld [vmem:[#allocation7 + $0x3348] sm:$0xff]
    %v1973 = vld [vmem:[#allocation7 + $0x3350] sm:$0xff]
    %v1974 = vld [vmem:[#allocation7 + $0x3358] sm:$0xff]
    %v1975 = vld [vmem:[#allocation7 + $0x3360] sm:$0xff]
    %v1976 = vld [vmem:[#allocation7 + $0x3368] sm:$0xff]
    %v1977 = vld [vmem:[#allocation7 + $0x3370] sm:$0xff]
    %v1978 = vld [vmem:[#allocation7 + $0x3378] sm:$0xff]
    %v1979 = vld [vmem:[#allocation7 + $0x3380] sm:$0xff]
    %v1980 = vld [vmem:[#allocation7 + $0x3388] sm:$0xff]
    %v1981 = vld [vmem:[#allocation7 + $0x3390] sm:$0xff]
    %v1982 = vld [vmem:[#allocation7 + $0x3398] sm:$0xff]
    %v1983 = vld [vmem:[#allocation7 + $0x33a0] sm:$0xff]
    %v1984 = vld [vmem:[#allocation7 + $0x33a8] sm:$0xff]
    %v1985 = vld [vmem:[#allocation7 + $0x33b0] sm:$0xff]
    %v1986 = vld [vmem:[#allocation7 + $0x33b8] sm:$0xff]
    %v1987 = vld [vmem:[#allocation7 + $0x33c0] sm:$0xff]
    %v1988 = vld [vmem:[#allocation7 + $0x33c8] sm:$0xff]
    %v1989 = vld [vmem:[#allocation7 + $0x33d0] sm:$0xff]
    %v1990 = vld [vmem:[#allocation7 + $0x33d8] sm:$0xff]
    %v1991 = vld [vmem:[#allocation7 + $0x33e0] sm:$0xff]
    %v1992 = vld [vmem:[#allocation7 + $0x33e8] sm:$0xff]
    %v1993 = vld [vmem:[#allocation7 + $0x33f0] sm:$0xff]
    %v1994 = vld [vmem:[#allocation7 + $0x33f8] sm:$0xff]
    %v1995 = vld [vmem:[#allocation7 + $0x3400] sm:$0xff]
    %v1996 = vld [vmem:[#allocation7 + $0x3408] sm:$0xff]
    %v1997 = vld [vmem:[#allocation7 + $0x3410] sm:$0xff]
    %v1998 = vld [vmem:[#allocation7 + $0x3418] sm:$0xff]
    %v1999 = vld [vmem:[#allocation7 + $0x3420] sm:$0xff]
    %v2000 = vld [vmem:[#allocation7 + $0x3428] sm:$0xff]
    %v2001 = vld [vmem:[#allocation7 + $0x3430] sm:$0xff]
    %v2002 = vld [vmem:[#allocation7 + $0x3438] sm:$0xff]
    %v2003 = vld [vmem:[#allocation7 + $0x3440] sm:$0xff]
    %v2004 = vld [vmem:[#allocation7 + $0x3448] sm:$0xff]
    %v2005 = vld [vmem:[#allocation7 + $0x3450] sm:$0xff]
    %v2006 = vld [vmem:[#allocation7 + $0x3458] sm:$0xff]
    %v2007 = vld [vmem:[#allocation7 + $0x3460] sm:$0xff]
    %v2008 = vld [vmem:[#allocation7 + $0x3468] sm:$0xff]
    %v2009 = vld [vmem:[#allocation7 + $0x3470] sm:$0xff]
    %v2010 = vld [vmem:[#allocation7 + $0x3478] sm:$0xff]
    %v2011 = vld [vmem:[#allocation7 + $0x3480] sm:$0xff]
    %v2012 = vld [vmem:[#allocation7 + $0x3488] sm:$0xff]
    %v2013 = vld [vmem:[#allocation7 + $0x3490] sm:$0xff]
    %v2014 = vld [vmem:[#allocation7 + $0x3498] sm:$0xff]
    %v2015 = vld [vmem:[#allocation7 + $0x34a0] sm:$0xff]
    %v2016 = vld [vmem:[#allocation7 + $0x34a8] sm:$0xff]
    %v2017 = vld [vmem:[#allocation7 + $0x34b0] sm:$0xff]
    %v2018 = vld [vmem:[#allocation7 + $0x34b8] sm:$0xff]
    %v2019 = vld [vmem:[#allocation7 + $0x34c0] sm:$0xff]
    %v2020 = vld [vmem:[#allocation7 + $0x34c8] sm:$0xff]
    %v2021 = vld [vmem:[#allocation7 + $0x34d0] sm:$0xff]
    %v2022 = vld [vmem:[#allocation7 + $0x34d8] sm:$0xff]
    %v2023 = vld [vmem:[#allocation7 + $0x34e0] sm:$0xff]
    %v2024 = vld [vmem:[#allocation7 + $0x34e8] sm:$0xff]
    %v2025 = vld [vmem:[#allocation7 + $0x34f0] sm:$0xff]
    %v2026 = vld [vmem:[#allocation7 + $0x34f8] sm:$0xff]
    %v2027 = vld [vmem:[#allocation7 + $0x3500] sm:$0xff]
    %v2028 = vld [vmem:[#allocation7 + $0x3508] sm:$0xff]
    %v2029 = vld [vmem:[#allocation7 + $0x3510] sm:$0xff]
    %v2030 = vld [vmem:[#allocation7 + $0x3518] sm:$0xff]
    %v2031 = vld [vmem:[#allocation7 + $0x3520] sm:$0xff]
    %v2032 = vld [vmem:[#allocation7 + $0x3528] sm:$0xff]
    %v2033 = vld [vmem:[#allocation7 + $0x3530] sm:$0xff]
    %v2034 = vld [vmem:[#allocation7 + $0x3538] sm:$0xff]
    %v2035 = vld [vmem:[#allocation7 + $0x3540] sm:$0xff]
    %v2036 = vld [vmem:[#allocation7 + $0x3548] sm:$0xff]
    %v2037 = vld [vmem:[#allocation7 + $0x3550] sm:$0xff]
    %v2038 = vld [vmem:[#allocation7 + $0x3558] sm:$0xff]
    %v2039 = vld [vmem:[#allocation7 + $0x3560] sm:$0xff]
    %v2040 = vld [vmem:[#allocation7 + $0x3568] sm:$0xff]
    %v2041 = vld [vmem:[#allocation7 + $0x3570] sm:$0xff]
    %v2042 = vld [vmem:[#allocation7 + $0x3578] sm:$0xff]
    %v2043 = vld [vmem:[#allocation7 + $0x3580] sm:$0xff]
    %v2044 = vld [vmem:[#allocation7 + $0x3588] sm:$0xff]
    %v2045 = vld [vmem:[#allocation7 + $0x3590] sm:$0xff]
    %v2046 = vld [vmem:[#allocation7 + $0x3598] sm:$0xff]
    %v2047 = vld [vmem:[#allocation7 + $0x35a0] sm:$0xff]
    %v2048 = vld [vmem:[#allocation7 + $0x35a8] sm:$0xff]
    %v2049 = vld [vmem:[#allocation7 + $0x35b0] sm:$0xff]
    %v2050 = vld [vmem:[#allocation7 + $0x35b8] sm:$0xff]
    %v2051 = vld [vmem:[#allocation7 + $0x35c0] sm:$0xff]
    %v2052 = vld [vmem:[#allocation7 + $0x35c8] sm:$0xff]
    %v2053 = vld [vmem:[#allocation7 + $0x35d0] sm:$0xff]
    %v2054 = vld [vmem:[#allocation7 + $0x35d8] sm:$0xff]
    %v2055 = vld [vmem:[#allocation7 + $0x35e0] sm:$0xff]
    %v2056 = vld [vmem:[#allocation7 + $0x35e8] sm:$0xff]
    %v2057 = vld [vmem:[#allocation7 + $0x35f0] sm:$0xff]
    %v2058 = vld [vmem:[#allocation7 + $0x35f8] sm:$0xff]
    %v2059 = vld [vmem:[#allocation7 + $0x3600] sm:$0xff]
    %v2060 = vld [vmem:[#allocation7 + $0x3608] sm:$0xff]
    %v2061 = vld [vmem:[#allocation7 + $0x3610] sm:$0xff]
    %v2062 = vld [vmem:[#allocation7 + $0x3618] sm:$0xff]
    %v2063 = vld [vmem:[#allocation7 + $0x3620] sm:$0xff]
    %v2064 = vld [vmem:[#allocation7 + $0x3628] sm:$0xff]
    %v2065 = vld [vmem:[#allocation7 + $0x3630] sm:$0xff]
    %v2066 = vld [vmem:[#allocation7 + $0x3638] sm:$0xff]
    %v2067 = vld [vmem:[#allocation7 + $0x3640] sm:$0xff]
    %v2068 = vld [vmem:[#allocation7 + $0x3648] sm:$0xff]
    %v2069 = vld [vmem:[#allocation7 + $0x3650] sm:$0xff]
    %v2070 = vld [vmem:[#allocation7 + $0x3658] sm:$0xff]
    %v2071 = vld [vmem:[#allocation7 + $0x3660] sm:$0xff]
    %v2072 = vld [vmem:[#allocation7 + $0x3668] sm:$0xff]
    %v2073 = vld [vmem:[#allocation7 + $0x3670] sm:$0xff]
    %v2074 = vld [vmem:[#allocation7 + $0x3678] sm:$0xff]
    %v2075 = vld [vmem:[#allocation7 + $0x3680] sm:$0xff]
    %v2076 = vld [vmem:[#allocation7 + $0x3688] sm:$0xff]
    %v2077 = vld [vmem:[#allocation7 + $0x3690] sm:$0xff]
    %v2078 = vld [vmem:[#allocation7 + $0x3698] sm:$0xff]
    %v2079 = vld [vmem:[#allocation7 + $0x36a0] sm:$0xff]
    %v2080 = vld [vmem:[#allocation7 + $0x36a8] sm:$0xff]
    %v2081 = vld [vmem:[#allocation7 + $0x36b0] sm:$0xff]
    %v2082 = vld [vmem:[#allocation7 + $0x36b8] sm:$0xff]
    %v2083 = vld [vmem:[#allocation7 + $0x36c0] sm:$0xff]
    %v2084 = vld [vmem:[#allocation7 + $0x36c8] sm:$0xff]
    %v2085 = vld [vmem:[#allocation7 + $0x36d0] sm:$0xff]
    %v2086 = vld [vmem:[#allocation7 + $0x36d8] sm:$0xff]
    %v2087 = vld [vmem:[#allocation7 + $0x36e0] sm:$0xff]
    %v2088 = vld [vmem:[#allocation7 + $0x36e8] sm:$0xff]
    %v2089 = vld [vmem:[#allocation7 + $0x36f0] sm:$0xff]
    %v2090 = vld [vmem:[#allocation7 + $0x36f8] sm:$0xff]
    %v2091 = vld [vmem:[#allocation7 + $0x3700] sm:$0xff]
    %v2092 = vld [vmem:[#allocation7 + $0x3708] sm:$0xff]
    %v2093 = vld [vmem:[#allocation7 + $0x3710] sm:$0xff]
    %v2094 = vld [vmem:[#allocation7 + $0x3718] sm:$0xff]
    %v2095 = vld [vmem:[#allocation7 + $0x3720] sm:$0xff]
    %v2096 = vld [vmem:[#allocation7 + $0x3728] sm:$0xff]
    %v2097 = vld [vmem:[#allocation7 + $0x3730] sm:$0xff]
    %v2098 = vld [vmem:[#allocation7 + $0x3738] sm:$0xff]
    %v2099 = vld [vmem:[#allocation7 + $0x3740] sm:$0xff]
    %v2100 = vld [vmem:[#allocation7 + $0x3748] sm:$0xff]
    %v2101 = vld [vmem:[#allocation7 + $0x3750] sm:$0xff]
    %v2102 = vld [vmem:[#allocation7 + $0x3758] sm:$0xff]
    %v2103 = vld [vmem:[#allocation7 + $0x3760] sm:$0xff]
    %v2104 = vld [vmem:[#allocation7 + $0x3768] sm:$0xff]
    %v2105 = vld [vmem:[#allocation7 + $0x3770] sm:$0xff]
    %v2106 = vld [vmem:[#allocation7 + $0x3778] sm:$0xff]
    %v2107 = vld [vmem:[#allocation7 + $0x3780] sm:$0xff]
    %v2108 = vld [vmem:[#allocation7 + $0x3788] sm:$0xff]
    %v2109 = vld [vmem:[#allocation7 + $0x3790] sm:$0xff]
    %v2110 = vld [vmem:[#allocation7 + $0x3798] sm:$0xff]
    %v2111 = vld [vmem:[#allocation7 + $0x37a0] sm:$0xff]
    %v2112 = vld [vmem:[#allocation7 + $0x37a8] sm:$0xff]
    %v2113 = vld [vmem:[#allocation7 + $0x37b0] sm:$0xff]
    %v2114 = vld [vmem:[#allocation7 + $0x37b8] sm:$0xff]
    %v2115 = vld [vmem:[#allocation7 + $0x37c0] sm:$0xff]
    %v2116 = vld [vmem:[#allocation7 + $0x37c8] sm:$0xff]
    %v2117 = vld [vmem:[#allocation7 + $0x37d0] sm:$0xff]
    %v2118 = vld [vmem:[#allocation7 + $0x37d8] sm:$0xff]
    %v2119 = vld [vmem:[#allocation7 + $0x37e0] sm:$0xff]
    %v2120 = vld [vmem:[#allocation7 + $0x37e8] sm:$0xff]
    %v2121 = vld [vmem:[#allocation7 + $0x37f0] sm:$0xff]
    %v2122 = vld [vmem:[#allocation7 + $0x37f8] sm:$0xff]
    %v2123 = vld [vmem:[#allocation7 + $0x3800] sm:$0xff]
    %v2124 = vld [vmem:[#allocation7 + $0x3808] sm:$0xff]
    %v2125 = vld [vmem:[#allocation7 + $0x3810] sm:$0xff]
    %v2126 = vld [vmem:[#allocation7 + $0x3818] sm:$0xff]
    %v2127 = vld [vmem:[#allocation7 + $0x3820] sm:$0xff]
    %v2128 = vld [vmem:[#allocation7 + $0x3828] sm:$0xff]
    %v2129 = vld [vmem:[#allocation7 + $0x3830] sm:$0xff]
    %v2130 = vld [vmem:[#allocation7 + $0x3838] sm:$0xff]
    %v2131 = vld [vmem:[#allocation7 + $0x3840] sm:$0xff]
    %v2132 = vld [vmem:[#allocation7 + $0x3848] sm:$0xff]
    %v2133 = vld [vmem:[#allocation7 + $0x3850] sm:$0xff]
    %v2134 = vld [vmem:[#allocation7 + $0x3858] sm:$0xff]
    %v2135 = vld [vmem:[#allocation7 + $0x3860] sm:$0xff]
    %v2136 = vld [vmem:[#allocation7 + $0x3868] sm:$0xff]
    %v2137 = vld [vmem:[#allocation7 + $0x3870] sm:$0xff]
    %v2138 = vld [vmem:[#allocation7 + $0x3878] sm:$0xff]
    %v2139 = vld [vmem:[#allocation7 + $0x3880] sm:$0xff]
    %v2140 = vld [vmem:[#allocation7 + $0x3888] sm:$0xff]
    %v2141 = vld [vmem:[#allocation7 + $0x3890] sm:$0xff]
    %v2142 = vld [vmem:[#allocation7 + $0x3898] sm:$0xff]
    %v2143 = vld [vmem:[#allocation7 + $0x38a0] sm:$0xff]
    %v2144 = vld [vmem:[#allocation7 + $0x38a8] sm:$0xff]
    %v2145 = vld [vmem:[#allocation7 + $0x38b0] sm:$0xff]
    %v2146 = vld [vmem:[#allocation7 + $0x38b8] sm:$0xff]
    %v2147 = vld [vmem:[#allocation7 + $0x38c0] sm:$0xff]
    %v2148 = vld [vmem:[#allocation7 + $0x38c8] sm:$0xff]
    %v2149 = vld [vmem:[#allocation7 + $0x38d0] sm:$0xff]
    %v2150 = vld [vmem:[#allocation7 + $0x38d8] sm:$0xff]
    %v2151 = vld [vmem:[#allocation7 + $0x38e0] sm:$0xff]
    %v2152 = vld [vmem:[#allocation7 + $0x38e8] sm:$0xff]
    %v2153 = vld [vmem:[#allocation7 + $0x38f0] sm:$0xff]
    %v2154 = vld [vmem:[#allocation7 + $0x38f8] sm:$0xff]
    %v2155 = vld [vmem:[#allocation7 + $0x3900] sm:$0xff]
    %v2156 = vld [vmem:[#allocation7 + $0x3908] sm:$0xff]
    %v2157 = vld [vmem:[#allocation7 + $0x3910] sm:$0xff]
    %v2158 = vld [vmem:[#allocation7 + $0x3918] sm:$0xff]
    %v2159 = vld [vmem:[#allocation7 + $0x3920] sm:$0xff]
    %v2160 = vld [vmem:[#allocation7 + $0x3928] sm:$0xff]
    %v2161 = vld [vmem:[#allocation7 + $0x3930] sm:$0xff]
    %v2162 = vld [vmem:[#allocation7 + $0x3938] sm:$0xff]
    %v2163 = vld [vmem:[#allocation7 + $0x3940] sm:$0xff]
    %v2164 = vld [vmem:[#allocation7 + $0x3948] sm:$0xff]
    %v2165 = vld [vmem:[#allocation7 + $0x3950] sm:$0xff]
    %v2166 = vld [vmem:[#allocation7 + $0x3958] sm:$0xff]
    %v2167 = vld [vmem:[#allocation7 + $0x3960] sm:$0xff]
    %v2168 = vld [vmem:[#allocation7 + $0x3968] sm:$0xff]
    %v2169 = vld [vmem:[#allocation7 + $0x3970] sm:$0xff]
    %v2170 = vld [vmem:[#allocation7 + $0x3978] sm:$0xff]
    %v2171 = vld [vmem:[#allocation7 + $0x3980] sm:$0xff]
    %v2172 = vld [vmem:[#allocation7 + $0x3988] sm:$0xff]
    %v2173 = vld [vmem:[#allocation7 + $0x3990] sm:$0xff]
    %v2174 = vld [vmem:[#allocation7 + $0x3998] sm:$0xff]
    %v2175 = vld [vmem:[#allocation7 + $0x39a0] sm:$0xff]
    %v2176 = vld [vmem:[#allocation7 + $0x39a8] sm:$0xff]
    %v2177 = vld [vmem:[#allocation7 + $0x39b0] sm:$0xff]
    %v2178 = vld [vmem:[#allocation7 + $0x39b8] sm:$0xff]
    %v2179 = vld [vmem:[#allocation7 + $0x39c0] sm:$0xff]
    %v2180 = vld [vmem:[#allocation7 + $0x39c8] sm:$0xff]
    %v2181 = vld [vmem:[#allocation7 + $0x39d0] sm:$0xff]
    %v2182 = vld [vmem:[#allocation7 + $0x39d8] sm:$0xff]
    %v2183 = vld [vmem:[#allocation7 + $0x39e0] sm:$0xff]
    %v2184 = vld [vmem:[#allocation7 + $0x39e8] sm:$0xff]
    %v2185 = vld [vmem:[#allocation7 + $0x39f0] sm:$0xff]
    %v2186 = vld [vmem:[#allocation7 + $0x39f8] sm:$0xff]
    %v2187 = vld [vmem:[#allocation7 + $0x3a00] sm:$0xff]
    %v2188 = vld [vmem:[#allocation7 + $0x3a08] sm:$0xff]
    %v2189 = vld [vmem:[#allocation7 + $0x3a10] sm:$0xff]
    %v2190 = vld [vmem:[#allocation7 + $0x3a18] sm:$0xff]
    %v2191 = vld [vmem:[#allocation7 + $0x3a20] sm:$0xff]
    %v2192 = vld [vmem:[#allocation7 + $0x3a28] sm:$0xff]
    %v2193 = vld [vmem:[#allocation7 + $0x3a30] sm:$0xff]
    %v2194 = vld [vmem:[#allocation7 + $0x3a38] sm:$0xff]
    %v2195 = vld [vmem:[#allocation7 + $0x3a40] sm:$0xff]
    %v2196 = vld [vmem:[#allocation7 + $0x3a48] sm:$0xff]
    %v2197 = vld [vmem:[#allocation7 + $0x3a50] sm:$0xff]
    %v2198 = vld [vmem:[#allocation7 + $0x3a58] sm:$0xff]
    %v2199 = vld [vmem:[#allocation7 + $0x3a60] sm:$0xff]
    %v2200 = vld [vmem:[#allocation7 + $0x3a68] sm:$0xff]
    %v2201 = vld [vmem:[#allocation7 + $0x3a70] sm:$0xff]
    %v2202 = vld [vmem:[#allocation7 + $0x3a78] sm:$0xff]
    %v2203 = vld [vmem:[#allocation7 + $0x3a80] sm:$0xff]
    %v2204 = vld [vmem:[#allocation7 + $0x3a88] sm:$0xff]
    %v2205 = vld [vmem:[#allocation7 + $0x3a90] sm:$0xff]
    %v2206 = vld [vmem:[#allocation7 + $0x3a98] sm:$0xff]
    %v2207 = vld [vmem:[#allocation7 + $0x3aa0] sm:$0xff]
    %v2208 = vld [vmem:[#allocation7 + $0x3aa8] sm:$0xff]
    %v2209 = vld [vmem:[#allocation7 + $0x3ab0] sm:$0xff]
    %v2210 = vld [vmem:[#allocation7 + $0x3ab8] sm:$0xff]
    %v2211 = vld [vmem:[#allocation7 + $0x3ac0] sm:$0xff]
    %v2212 = vld [vmem:[#allocation7 + $0x3ac8] sm:$0xff]
    %v2213 = vld [vmem:[#allocation7 + $0x3ad0] sm:$0xff]
    %v2214 = vld [vmem:[#allocation7 + $0x3ad8] sm:$0xff]
    %v2215 = vld [vmem:[#allocation7 + $0x3ae0] sm:$0xff]
    %v2216 = vld [vmem:[#allocation7 + $0x3ae8] sm:$0xff]
    %v2217 = vld [vmem:[#allocation7 + $0x3af0] sm:$0xff]
    %v2218 = vld [vmem:[#allocation7 + $0x3af8] sm:$0xff]
    %v2219 = vld [vmem:[#allocation7 + $0x3b00] sm:$0xff]
    %v2220 = vld [vmem:[#allocation7 + $0x3b08] sm:$0xff]
    %v2221 = vld [vmem:[#allocation7 + $0x3b10] sm:$0xff]
    %v2222 = vld [vmem:[#allocation7 + $0x3b18] sm:$0xff]
    %v2223 = vld [vmem:[#allocation7 + $0x3b20] sm:$0xff]
    %v2224 = vld [vmem:[#allocation7 + $0x3b28] sm:$0xff]
    %v2225 = vld [vmem:[#allocation7 + $0x3b30] sm:$0xff]
    %v2226 = vld [vmem:[#allocation7 + $0x3b38] sm:$0xff]
    %v2227 = vld [vmem:[#allocation7 + $0x3b40] sm:$0xff]
    %v2228 = vld [vmem:[#allocation7 + $0x3b48] sm:$0xff]
    %v2229 = vld [vmem:[#allocation7 + $0x3b50] sm:$0xff]
    %v2230 = vld [vmem:[#allocation7 + $0x3b58] sm:$0xff]
    %v2231 = vld [vmem:[#allocation7 + $0x3b60] sm:$0xff]
    %v2232 = vld [vmem:[#allocation7 + $0x3b68] sm:$0xff]
    %v2233 = vld [vmem:[#allocation7 + $0x3b70] sm:$0xff]
    %v2234 = vld [vmem:[#allocation7 + $0x3b78] sm:$0xff]
    %v2235 = vld [vmem:[#allocation7 + $0x3b80] sm:$0xff]
    %v2236 = vld [vmem:[#allocation7 + $0x3b88] sm:$0xff]
    %v2237 = vld [vmem:[#allocation7 + $0x3b90] sm:$0xff]
    %v2238 = vld [vmem:[#allocation7 + $0x3b98] sm:$0xff]
    %v2239 = vld [vmem:[#allocation7 + $0x3ba0] sm:$0xff]
    %v2240 = vld [vmem:[#allocation7 + $0x3ba8] sm:$0xff]
    %v2241 = vld [vmem:[#allocation7 + $0x3bb0] sm:$0xff]
    %v2242 = vld [vmem:[#allocation7 + $0x3bb8] sm:$0xff]
    %v2243 = vld [vmem:[#allocation7 + $0x3bc0] sm:$0xff]
    %v2244 = vld [vmem:[#allocation7 + $0x3bc8] sm:$0xff]
    %v2245 = vld [vmem:[#allocation7 + $0x3bd0] sm:$0xff]
    %v2246 = vld [vmem:[#allocation7 + $0x3bd8] sm:$0xff]
    %v2247 = vld [vmem:[#allocation7 + $0x3be0] sm:$0xff]
    %v2248 = vld [vmem:[#allocation7 + $0x3be8] sm:$0xff]
    %v2249 = vld [vmem:[#allocation7 + $0x3bf0] sm:$0xff]
    %v2250 = vld [vmem:[#allocation7 + $0x3bf8] sm:$0xff]
    %v2251 = vld [vmem:[#allocation8] sm:$0xff]
    %v2253 = vperm.slane %v2251, 0
    %v2254 = vperm.slane %v2251, 1
    %v2255 = vperm.slane %v2251, 2
    %v2256 = vperm.slane %v2251, 3
    %v2257 = vperm.slane %v2251, 4
    %v2258 = vperm.slane %v2251, 5
    %v2259 = vperm.slane %v2251, 6
    %v2260 = vperm.slane %v2251, 7
    %v4189 = vunpack.c.l.b16 %v331
    %v4190 = vunpack.c.h.b16 %v331
    %v4191 = vunpack.c.l.b16 %v332
    %v4192 = vunpack.c.h.b16 %v332
    %v4193 = vunpack.c.l.b16 %v333
    %v4194 = vunpack.c.h.b16 %v333
    %v4195 = vunpack.c.l.b16 %v334
    %v4196 = vunpack.c.h.b16 %v334
    %v4197 = vunpack.c.l.b16 %v335
    %v4198 = vunpack.c.h.b16 %v335
    %v4199 = vunpack.c.l.b16 %v336
    %v4200 = vunpack.c.h.b16 %v336
    %v4201 = vunpack.c.l.b16 %v337
    %v4202 = vunpack.c.h.b16 %v337
    %v4203 = vunpack.c.l.b16 %v338
    %v4204 = vunpack.c.h.b16 %v338
    %v4205 = vunpack.c.l.b16 %v339
    %v4206 = vunpack.c.h.b16 %v339
    %v4207 = vunpack.c.l.b16 %v340
    %v4208 = vunpack.c.h.b16 %v340
    %v4209 = vunpack.c.l.b16 %v341
    %v4210 = vunpack.c.h.b16 %v341
    %v4211 = vunpack.c.l.b16 %v342
    %v4212 = vunpack.c.h.b16 %v342
    %v4213 = vunpack.c.l.b16 %v343
    %v4214 = vunpack.c.h.b16 %v343
    %v4215 = vunpack.c.l.b16 %v344
    %v4216 = vunpack.c.h.b16 %v344
    %v4217 = vunpack.c.l.b16 %v345
    %v4218 = vunpack.c.h.b16 %v345
    %v4219 = vunpack.c.l.b16 %v346
    %v4220 = vunpack.c.h.b16 %v346
    %v4221 = vunpack.c.l.b16 %v347
    %v4222 = vunpack.c.h.b16 %v347
    %v4223 = vunpack.c.l.b16 %v348
    %v4224 = vunpack.c.h.b16 %v348
    %v4225 = vunpack.c.l.b16 %v349
    %v4226 = vunpack.c.h.b16 %v349
    %v4227 = vunpack.c.l.b16 %v350
    %v4228 = vunpack.c.h.b16 %v350
    %v4229 = vunpack.c.l.b16 %v351
    %v4230 = vunpack.c.h.b16 %v351
    %v4231 = vunpack.c.l.b16 %v352
    %v4232 = vunpack.c.h.b16 %v352
    %v4233 = vunpack.c.l.b16 %v353
    %v4234 = vunpack.c.h.b16 %v353
    %v4235 = vunpack.c.l.b16 %v354
    %v4236 = vunpack.c.h.b16 %v354
    %v4237 = vunpack.c.l.b16 %v355
    %v4238 = vunpack.c.h.b16 %v355
    %v4239 = vunpack.c.l.b16 %v356
    %v4240 = vunpack.c.h.b16 %v356
    %v4241 = vunpack.c.l.b16 %v357
    %v4242 = vunpack.c.h.b16 %v357
    %v4243 = vunpack.c.l.b16 %v358
    %v4244 = vunpack.c.h.b16 %v358
    %v4245 = vunpack.c.l.b16 %v359
    %v4246 = vunpack.c.h.b16 %v359
    %v4247 = vunpack.c.l.b16 %v360
    %v4248 = vunpack.c.h.b16 %v360
    %v4249 = vunpack.c.l.b16 %v361
    %v4250 = vunpack.c.h.b16 %v361
    %v4251 = vunpack.c.l.b16 %v362
    %v4252 = vunpack.c.h.b16 %v362
    %v4253 = vunpack.c.l.b16 %v363
    %v4254 = vunpack.c.h.b16 %v363
    %v4255 = vunpack.c.l.b16 %v364
    %v4256 = vunpack.c.h.b16 %v364
    %v4257 = vunpack.c.l.b16 %v365
    %v4258 = vunpack.c.h.b16 %v365
    %v4259 = vunpack.c.l.b16 %v366
    %v4260 = vunpack.c.h.b16 %v366
    %v4261 = vunpack.c.l.b16 %v367
    %v4262 = vunpack.c.h.b16 %v367
    %v4263 = vunpack.c.l.b16 %v368
    %v4264 = vunpack.c.h.b16 %v368
    %v4265 = vunpack.c.l.b16 %v369
    %v4266 = vunpack.c.h.b16 %v369
    %v4267 = vunpack.c.l.b16 %v370
    %v4268 = vunpack.c.h.b16 %v370
    %v4269 = vunpack.c.l.b16 %v371
    %v4270 = vunpack.c.h.b16 %v371
    %v4271 = vunpack.c.l.b16 %v372
    %v4272 = vunpack.c.h.b16 %v372
    %v4273 = vunpack.c.l.b16 %v373
    %v4274 = vunpack.c.h.b16 %v373
    %v4275 = vunpack.c.l.b16 %v374
    %v4276 = vunpack.c.h.b16 %v374
    %v4277 = vunpack.c.l.b16 %v375
    %v4278 = vunpack.c.h.b16 %v375
    %v4279 = vunpack.c.l.b16 %v376
    %v4280 = vunpack.c.h.b16 %v376
    %v4281 = vunpack.c.l.b16 %v377
    %v4282 = vunpack.c.h.b16 %v377
    %v4283 = vunpack.c.l.b16 %v378
    %v4284 = vunpack.c.h.b16 %v378
    %v4285 = vunpack.c.l.b16 %v379
    %v4286 = vunpack.c.h.b16 %v379
    %v4287 = vunpack.c.l.b16 %v380
    %v4288 = vunpack.c.h.b16 %v380
    %v4289 = vunpack.c.l.b16 %v381
    %v4290 = vunpack.c.h.b16 %v381
    %v4291 = vunpack.c.l.b16 %v382
    %v4292 = vunpack.c.h.b16 %v382
    %v4293 = vunpack.c.l.b16 %v383
    %v4294 = vunpack.c.h.b16 %v383
    %v4295 = vunpack.c.l.b16 %v384
    %v4296 = vunpack.c.h.b16 %v384
    %v4297 = vunpack.c.l.b16 %v385
    %v4298 = vunpack.c.h.b16 %v385
    %v4299 = vunpack.c.l.b16 %v386
    %v4300 = vunpack.c.h.b16 %v386
    %v4301 = vunpack.c.l.b16 %v387
    %v4302 = vunpack.c.h.b16 %v387
    %v4303 = vunpack.c.l.b16 %v388
    %v4304 = vunpack.c.h.b16 %v388
    %v4305 = vunpack.c.l.b16 %v389
    %v4306 = vunpack.c.h.b16 %v389
    %v4307 = vunpack.c.l.b16 %v390
    %v4308 = vunpack.c.h.b16 %v390
    %v4309 = vunpack.c.l.b16 %v391
    %v4310 = vunpack.c.h.b16 %v391
    %v4311 = vunpack.c.l.b16 %v392
    %v4312 = vunpack.c.h.b16 %v392
    %v4313 = vunpack.c.l.b16 %v393
    %v4314 = vunpack.c.h.b16 %v393
    %v4315 = vunpack.c.l.b16 %v394
    %v4316 = vunpack.c.h.b16 %v394
    %v4317 = vunpack.c.l.b16 %v395
    %v4318 = vunpack.c.h.b16 %v395
    %v4319 = vunpack.c.l.b16 %v396
    %v4320 = vunpack.c.h.b16 %v396
    %v4321 = vunpack.c.l.b16 %v397
    %v4322 = vunpack.c.h.b16 %v397
    %v4323 = vunpack.c.l.b16 %v398
    %v4324 = vunpack.c.h.b16 %v398
    %v4325 = vunpack.c.l.b16 %v399
    %v4326 = vunpack.c.h.b16 %v399
    %v4327 = vunpack.c.l.b16 %v400
    %v4328 = vunpack.c.h.b16 %v400
    %v4329 = vunpack.c.l.b16 %v401
    %v4330 = vunpack.c.h.b16 %v401
    %v4331 = vunpack.c.l.b16 %v402
    %v4332 = vunpack.c.h.b16 %v402
    %v4333 = vunpack.c.l.b16 %v403
    %v4334 = vunpack.c.h.b16 %v403
    %v4335 = vunpack.c.l.b16 %v404
    %v4336 = vunpack.c.h.b16 %v404
    %v4337 = vunpack.c.l.b16 %v405
    %v4338 = vunpack.c.h.b16 %v405
    %v4339 = vunpack.c.l.b16 %v406
    %v4340 = vunpack.c.h.b16 %v406
    %v4341 = vunpack.c.l.b16 %v407
    %v4342 = vunpack.c.h.b16 %v407
    %v4343 = vunpack.c.l.b16 %v408
    %v4344 = vunpack.c.h.b16 %v408
    %v4345 = vunpack.c.l.b16 %v409
    %v4346 = vunpack.c.h.b16 %v409
    %v4347 = vunpack.c.l.b16 %v410
    %v4348 = vunpack.c.h.b16 %v410
    %v4349 = vunpack.c.l.b16 %v411
    %v4350 = vunpack.c.h.b16 %v411
    %v4351 = vunpack.c.l.b16 %v412
    %v4352 = vunpack.c.h.b16 %v412
    %v4353 = vunpack.c.l.b16 %v413
    %v4354 = vunpack.c.h.b16 %v413
    %v4355 = vunpack.c.l.b16 %v414
    %v4356 = vunpack.c.h.b16 %v414
    %v4357 = vunpack.c.l.b16 %v415
    %v4358 = vunpack.c.h.b16 %v415
    %v4359 = vunpack.c.l.b16 %v416
    %v4360 = vunpack.c.h.b16 %v416
    %v4361 = vunpack.c.l.b16 %v417
    %v4362 = vunpack.c.h.b16 %v417
    %v4363 = vunpack.c.l.b16 %v418
    %v4364 = vunpack.c.h.b16 %v418
    %v4365 = vunpack.c.l.b16 %v419
    %v4366 = vunpack.c.h.b16 %v419
    %v4367 = vunpack.c.l.b16 %v420
    %v4368 = vunpack.c.h.b16 %v420
    %v4369 = vunpack.c.l.b16 %v421
    %v4370 = vunpack.c.h.b16 %v421
    %v4371 = vunpack.c.l.b16 %v422
    %v4372 = vunpack.c.h.b16 %v422
    %v4373 = vunpack.c.l.b16 %v423
    %v4374 = vunpack.c.h.b16 %v423
    %v4375 = vunpack.c.l.b16 %v424
    %v4376 = vunpack.c.h.b16 %v424
    %v4377 = vunpack.c.l.b16 %v425
    %v4378 = vunpack.c.h.b16 %v425
    %v4379 = vunpack.c.l.b16 %v426
    %v4380 = vunpack.c.h.b16 %v426
    %v4381 = vunpack.c.l.b16 %v427
    %v4382 = vunpack.c.h.b16 %v427
    %v4383 = vunpack.c.l.b16 %v428
    %v4384 = vunpack.c.h.b16 %v428
    %v4385 = vunpack.c.l.b16 %v429
    %v4386 = vunpack.c.h.b16 %v429
    %v4387 = vunpack.c.l.b16 %v430
    %v4388 = vunpack.c.h.b16 %v430
    %v4389 = vunpack.c.l.b16 %v431
    %v4390 = vunpack.c.h.b16 %v431
    %v4391 = vunpack.c.l.b16 %v432
    %v4392 = vunpack.c.h.b16 %v432
    %v4393 = vunpack.c.l.b16 %v433
    %v4394 = vunpack.c.h.b16 %v433
    %v4395 = vunpack.c.l.b16 %v434
    %v4396 = vunpack.c.h.b16 %v434
    %v4397 = vunpack.c.l.b16 %v435
    %v4398 = vunpack.c.h.b16 %v435
    %v4399 = vunpack.c.l.b16 %v436
    %v4400 = vunpack.c.h.b16 %v436
    %v4401 = vunpack.c.l.b16 %v437
    %v4402 = vunpack.c.h.b16 %v437
    %v4403 = vunpack.c.l.b16 %v438
    %v4404 = vunpack.c.h.b16 %v438
    %v4405 = vunpack.c.l.b16 %v439
    %v4406 = vunpack.c.h.b16 %v439
    %v4407 = vunpack.c.l.b16 %v440
    %v4408 = vunpack.c.h.b16 %v440
    %v4409 = vunpack.c.l.b16 %v441
    %v4410 = vunpack.c.h.b16 %v441
    %v4411 = vunpack.c.l.b16 %v442
    %v4412 = vunpack.c.h.b16 %v442
    %v4413 = vunpack.c.l.b16 %v443
    %v4414 = vunpack.c.h.b16 %v443
    %v4415 = vunpack.c.l.b16 %v444
    %v4416 = vunpack.c.h.b16 %v444
    %v4417 = vunpack.c.l.b16 %v445
    %v4418 = vunpack.c.h.b16 %v445
    %v4419 = vunpack.c.l.b16 %v446
    %v4420 = vunpack.c.h.b16 %v446
    %v4421 = vunpack.c.l.b16 %v447
    %v4422 = vunpack.c.h.b16 %v447
    %v4423 = vunpack.c.l.b16 %v448
    %v4424 = vunpack.c.h.b16 %v448
    %v4425 = vunpack.c.l.b16 %v449
    %v4426 = vunpack.c.h.b16 %v449
    %v4427 = vunpack.c.l.b16 %v450
    %v4428 = vunpack.c.h.b16 %v450
    %v4429 = vunpack.c.l.b16 %v451
    %v4430 = vunpack.c.h.b16 %v451
    %v4431 = vunpack.c.l.b16 %v452
    %v4432 = vunpack.c.h.b16 %v452
    %v4433 = vunpack.c.l.b16 %v453
    %v4434 = vunpack.c.h.b16 %v453
    %v4435 = vunpack.c.l.b16 %v454
    %v4436 = vunpack.c.h.b16 %v454
    %v4437 = vunpack.c.l.b16 %v455
    %v4438 = vunpack.c.h.b16 %v455
    %v4439 = vunpack.c.l.b16 %v456
    %v4440 = vunpack.c.h.b16 %v456
    %v4441 = vunpack.c.l.b16 %v457
    %v4442 = vunpack.c.h.b16 %v457
    %v4443 = vunpack.c.l.b16 %v458
    %v4444 = vunpack.c.h.b16 %v458
    %v4445 = vunpack.c.l.b16 %v459
    %v4446 = vunpack.c.h.b16 %v459
    %v4447 = vunpack.c.l.b16 %v460
    %v4448 = vunpack.c.h.b16 %v460
    %v4449 = vunpack.c.l.b16 %v461
    %v4450 = vunpack.c.h.b16 %v461
    %v4451 = vunpack.c.l.b16 %v462
    %v4452 = vunpack.c.h.b16 %v462
    %v4453 = vunpack.c.l.b16 %v463
    %v4454 = vunpack.c.h.b16 %v463
    %v4455 = vunpack.c.l.b16 %v464
    %v4456 = vunpack.c.h.b16 %v464
    %v4457 = vunpack.c.l.b16 %v465
    %v4458 = vunpack.c.h.b16 %v465
    %v4459 = vunpack.c.l.b16 %v466
    %v4460 = vunpack.c.h.b16 %v466
    %v4461 = vunpack.c.l.b16 %v467
    %v4462 = vunpack.c.h.b16 %v467
    %v4463 = vunpack.c.l.b16 %v468
    %v4464 = vunpack.c.h.b16 %v468
    %v4465 = vunpack.c.l.b16 %v469
    %v4466 = vunpack.c.h.b16 %v469
    %v4467 = vunpack.c.l.b16 %v470
    %v4468 = vunpack.c.h.b16 %v470
    %v4469 = vunpack.c.l.b16 %v471
    %v4470 = vunpack.c.h.b16 %v471
    %v4471 = vunpack.c.l.b16 %v472
    %v4472 = vunpack.c.h.b16 %v472
    %v4473 = vunpack.c.l.b16 %v473
    %v4474 = vunpack.c.h.b16 %v473
    %v4475 = vunpack.c.l.b16 %v474
    %v4476 = vunpack.c.h.b16 %v474
    %v4477 = vunpack.c.l.b16 %v475
    %v4478 = vunpack.c.h.b16 %v475
    %v4479 = vunpack.c.l.b16 %v476
    %v4480 = vunpack.c.h.b16 %v476
    %v4481 = vunpack.c.l.b16 %v477
    %v4482 = vunpack.c.h.b16 %v477
    %v4483 = vunpack.c.l.b16 %v478
    %v4484 = vunpack.c.h.b16 %v478
    %v4485 = vunpack.c.l.b16 %v479
    %v4486 = vunpack.c.h.b16 %v479
    %v4487 = vunpack.c.l.b16 %v480
    %v4488 = vunpack.c.h.b16 %v480
    %v4489 = vunpack.c.l.b16 %v481
    %v4490 = vunpack.c.h.b16 %v481
    %v4491 = vunpack.c.l.b16 %v482
    %v4492 = vunpack.c.h.b16 %v482
    %v4493 = vunpack.c.l.b16 %v483
    %v4494 = vunpack.c.h.b16 %v483
    %v4495 = vunpack.c.l.b16 %v484
    %v4496 = vunpack.c.h.b16 %v484
    %v4497 = vunpack.c.l.b16 %v485
    %v4498 = vunpack.c.h.b16 %v485
    %v4499 = vunpack.c.l.b16 %v486
    %v4500 = vunpack.c.h.b16 %v486
    %v4501 = vunpack.c.l.b16 %v487
    %v4502 = vunpack.c.h.b16 %v487
    %v4503 = vunpack.c.l.b16 %v488
    %v4504 = vunpack.c.h.b16 %v488
    %v4505 = vunpack.c.l.b16 %v489
    %v4506 = vunpack.c.h.b16 %v489
    %v4507 = vunpack.c.l.b16 %v490
    %v4508 = vunpack.c.h.b16 %v490
    %v4509 = vunpack.c.l.b16 %v491
    %v4510 = vunpack.c.h.b16 %v491
    %v4511 = vunpack.c.l.b16 %v492
    %v4512 = vunpack.c.h.b16 %v492
    %v4513 = vunpack.c.l.b16 %v493
    %v4514 = vunpack.c.h.b16 %v493
    %v4515 = vunpack.c.l.b16 %v494
    %v4516 = vunpack.c.h.b16 %v494
    %v4517 = vunpack.c.l.b16 %v495
    %v4518 = vunpack.c.h.b16 %v495
    %v4519 = vunpack.c.l.b16 %v496
    %v4520 = vunpack.c.h.b16 %v496
    %v4521 = vunpack.c.l.b16 %v497
    %v4522 = vunpack.c.h.b16 %v497
    %v4523 = vunpack.c.l.b16 %v498
    %v4524 = vunpack.c.h.b16 %v498
    %v4525 = vunpack.c.l.b16 %v499
    %v4526 = vunpack.c.h.b16 %v499
    %v4527 = vunpack.c.l.b16 %v500
    %v4528 = vunpack.c.h.b16 %v500
    %v4529 = vunpack.c.l.b16 %v501
    %v4530 = vunpack.c.h.b16 %v501
    %v4531 = vunpack.c.l.b16 %v502
    %v4532 = vunpack.c.h.b16 %v502
    %v4533 = vunpack.c.l.b16 %v503
    %v4534 = vunpack.c.h.b16 %v503
    %v4535 = vunpack.c.l.b16 %v504
    %v4536 = vunpack.c.h.b16 %v504
    %v4537 = vunpack.c.l.b16 %v505
    %v4538 = vunpack.c.h.b16 %v505
    %v4539 = vunpack.c.l.b16 %v506
    %v4540 = vunpack.c.h.b16 %v506
    %v4541 = vunpack.c.l.b16 %v507
    %v4542 = vunpack.c.h.b16 %v507
    %v4543 = vunpack.c.l.b16 %v508
    %v4544 = vunpack.c.h.b16 %v508
    %v4545 = vunpack.c.l.b16 %v509
    %v4546 = vunpack.c.h.b16 %v509
    %v4547 = vunpack.c.l.b16 %v510
    %v4548 = vunpack.c.h.b16 %v510
    %v4549 = vunpack.c.l.b16 %v511
    %v4550 = vunpack.c.h.b16 %v511
    %v4551 = vunpack.c.l.b16 %v512
    %v4552 = vunpack.c.h.b16 %v512
    %v4553 = vunpack.c.l.b16 %v513
    %v4554 = vunpack.c.h.b16 %v513
    %v4555 = vunpack.c.l.b16 %v514
    %v4556 = vunpack.c.h.b16 %v514
    %v4557 = vunpack.c.l.b16 %v515
    %v4558 = vunpack.c.h.b16 %v515
    %v4559 = vunpack.c.l.b16 %v516
    %v4560 = vunpack.c.h.b16 %v516
    %v4561 = vunpack.c.l.b16 %v517
    %v4562 = vunpack.c.h.b16 %v517
    %v4563 = vunpack.c.l.b16 %v518
    %v4564 = vunpack.c.h.b16 %v518
    %v4565 = vunpack.c.l.b16 %v519
    %v4566 = vunpack.c.h.b16 %v519
    %v4567 = vunpack.c.l.b16 %v520
    %v4568 = vunpack.c.h.b16 %v520
    %v4569 = vunpack.c.l.b16 %v521
    %v4570 = vunpack.c.h.b16 %v521
    %v4571 = vunpack.c.l.b16 %v522
    %v4572 = vunpack.c.h.b16 %v522
    %v4573 = vunpack.c.l.b16 %v523
    %v4574 = vunpack.c.h.b16 %v523
    %v4575 = vunpack.c.l.b16 %v524
    %v4576 = vunpack.c.h.b16 %v524
    %v4577 = vunpack.c.l.b16 %v525
    %v4578 = vunpack.c.h.b16 %v525
    %v4579 = vunpack.c.l.b16 %v526
    %v4580 = vunpack.c.h.b16 %v526
    %v4581 = vunpack.c.l.b16 %v527
    %v4582 = vunpack.c.h.b16 %v527
    %v4583 = vunpack.c.l.b16 %v528
    %v4584 = vunpack.c.h.b16 %v528
    %v4585 = vunpack.c.l.b16 %v529
    %v4586 = vunpack.c.h.b16 %v529
    %v4587 = vunpack.c.l.b16 %v530
    %v4588 = vunpack.c.h.b16 %v530
    %v4589 = vunpack.c.l.b16 %v531
    %v4590 = vunpack.c.h.b16 %v531
    %v4591 = vunpack.c.l.b16 %v532
    %v4592 = vunpack.c.h.b16 %v532
    %v4593 = vunpack.c.l.b16 %v533
    %v4594 = vunpack.c.h.b16 %v533
    %v4595 = vunpack.c.l.b16 %v534
    %v4596 = vunpack.c.h.b16 %v534
    %v4597 = vunpack.c.l.b16 %v535
    %v4598 = vunpack.c.h.b16 %v535
    %v4599 = vunpack.c.l.b16 %v536
    %v4600 = vunpack.c.h.b16 %v536
    %v4601 = vunpack.c.l.b16 %v537
    %v4602 = vunpack.c.h.b16 %v537
    %v4603 = vunpack.c.l.b16 %v538
    %v4604 = vunpack.c.h.b16 %v538
    %v4605 = vunpack.c.l.b16 %v539
    %v4606 = vunpack.c.h.b16 %v539
    %v4607 = vunpack.c.l.b16 %v540
    %v4608 = vunpack.c.h.b16 %v540
    %v4609 = vunpack.c.l.b16 %v541
    %v4610 = vunpack.c.h.b16 %v541
    %v4611 = vunpack.c.l.b16 %v542
    %v4612 = vunpack.c.h.b16 %v542
    %v4613 = vunpack.c.l.b16 %v543
    %v4614 = vunpack.c.h.b16 %v543
    %v4615 = vunpack.c.l.b16 %v544
    %v4616 = vunpack.c.h.b16 %v544
    %v4617 = vunpack.c.l.b16 %v545
    %v4618 = vunpack.c.h.b16 %v545
    %v4619 = vunpack.c.l.b16 %v546
    %v4620 = vunpack.c.h.b16 %v546
    %v4621 = vunpack.c.l.b16 %v547
    %v4622 = vunpack.c.h.b16 %v547
    %v4623 = vunpack.c.l.b16 %v548
    %v4624 = vunpack.c.h.b16 %v548
    %v4625 = vunpack.c.l.b16 %v549
    %v4626 = vunpack.c.h.b16 %v549
    %v4627 = vunpack.c.l.b16 %v550
    %v4628 = vunpack.c.h.b16 %v550
    %v4629 = vunpack.c.l.b16 %v551
    %v4630 = vunpack.c.h.b16 %v551
    %v4631 = vunpack.c.l.b16 %v552
    %v4632 = vunpack.c.h.b16 %v552
    %v4633 = vunpack.c.l.b16 %v553
    %v4634 = vunpack.c.h.b16 %v553
    %v4635 = vunpack.c.l.b16 %v554
    %v4636 = vunpack.c.h.b16 %v554
    %v4637 = vunpack.c.l.b16 %v555
    %v4638 = vunpack.c.h.b16 %v555
    %v4639 = vunpack.c.l.b16 %v556
    %v4640 = vunpack.c.h.b16 %v556
    %v4641 = vunpack.c.l.b16 %v557
    %v4642 = vunpack.c.h.b16 %v557
    %v4643 = vunpack.c.l.b16 %v558
    %v4644 = vunpack.c.h.b16 %v558
    %v4645 = vunpack.c.l.b16 %v559
    %v4646 = vunpack.c.h.b16 %v559
    %v4647 = vunpack.c.l.b16 %v560
    %v4648 = vunpack.c.h.b16 %v560
    %v4649 = vunpack.c.l.b16 %v561
    %v4650 = vunpack.c.h.b16 %v561
    %v4651 = vunpack.c.l.b16 %v562
    %v4652 = vunpack.c.h.b16 %v562
    %v4653 = vunpack.c.l.b16 %v563
    %v4654 = vunpack.c.h.b16 %v563
    %v4655 = vunpack.c.l.b16 %v564
    %v4656 = vunpack.c.h.b16 %v564
    %v4657 = vunpack.c.l.b16 %v565
    %v4658 = vunpack.c.h.b16 %v565
    %v4659 = vunpack.c.l.b16 %v566
    %v4660 = vunpack.c.h.b16 %v566
    %v4661 = vunpack.c.l.b16 %v567
    %v4662 = vunpack.c.h.b16 %v567
    %v4663 = vunpack.c.l.b16 %v568
    %v4664 = vunpack.c.h.b16 %v568
    %v4665 = vunpack.c.l.b16 %v569
    %v4666 = vunpack.c.h.b16 %v569
    %v4667 = vunpack.c.l.b16 %v570
    %v4668 = vunpack.c.h.b16 %v570
    %v4669 = vunpack.c.l.b16 %v571
    %v4670 = vunpack.c.h.b16 %v571
    %v4671 = vunpack.c.l.b16 %v572
    %v4672 = vunpack.c.h.b16 %v572
    %v4673 = vunpack.c.l.b16 %v573
    %v4674 = vunpack.c.h.b16 %v573
    %v4675 = vunpack.c.l.b16 %v574
    %v4676 = vunpack.c.h.b16 %v574
    %v4677 = vunpack.c.l.b16 %v575
    %v4678 = vunpack.c.h.b16 %v575
    %v4679 = vunpack.c.l.b16 %v576
    %v4680 = vunpack.c.h.b16 %v576
    %v4681 = vunpack.c.l.b16 %v577
    %v4682 = vunpack.c.h.b16 %v577
    %v4683 = vunpack.c.l.b16 %v578
    %v4684 = vunpack.c.h.b16 %v578
    %v4685 = vunpack.c.l.b16 %v579
    %v4686 = vunpack.c.h.b16 %v579
    %v4687 = vunpack.c.l.b16 %v580
    %v4688 = vunpack.c.h.b16 %v580
    %v4689 = vunpack.c.l.b16 %v581
    %v4690 = vunpack.c.h.b16 %v581
    %v4691 = vunpack.c.l.b16 %v582
    %v4692 = vunpack.c.h.b16 %v582
    %v4693 = vunpack.c.l.b16 %v583
    %v4694 = vunpack.c.h.b16 %v583
    %v4695 = vunpack.c.l.b16 %v584
    %v4696 = vunpack.c.h.b16 %v584
    %v4697 = vunpack.c.l.b16 %v585
    %v4698 = vunpack.c.h.b16 %v585
    %v4699 = vunpack.c.l.b16 %v586
    %v4700 = vunpack.c.h.b16 %v586
    %v4701 = vunpack.c.l.b16 %v587
    %v4702 = vunpack.c.h.b16 %v587
    %v4703 = vunpack.c.l.b16 %v588
    %v4704 = vunpack.c.h.b16 %v588
    %v4705 = vunpack.c.l.b16 %v589
    %v4706 = vunpack.c.h.b16 %v589
    %v4707 = vunpack.c.l.b16 %v590
    %v4708 = vunpack.c.h.b16 %v590
    %v4709 = vunpack.c.l.b16 %v591
    %v4710 = vunpack.c.h.b16 %v591
    %v4711 = vunpack.c.l.b16 %v592
    %v4712 = vunpack.c.h.b16 %v592
    %v4713 = vunpack.c.l.b16 %v593
    %v4714 = vunpack.c.h.b16 %v593
    %v4715 = vunpack.c.l.b16 %v594
    %v4716 = vunpack.c.h.b16 %v594
    %v4717 = vunpack.c.l.b16 %v595
    %v4718 = vunpack.c.h.b16 %v595
    %v4719 = vunpack.c.l.b16 %v596
    %v4720 = vunpack.c.h.b16 %v596
    %v4721 = vunpack.c.l.b16 %v597
    %v4722 = vunpack.c.h.b16 %v597
    %v4723 = vunpack.c.l.b16 %v598
    %v4724 = vunpack.c.h.b16 %v598
    %v4725 = vunpack.c.l.b16 %v599
    %v4726 = vunpack.c.h.b16 %v599
    %v4727 = vunpack.c.l.b16 %v600
    %v4728 = vunpack.c.h.b16 %v600
    %v4729 = vunpack.c.l.b16 %v601
    %v4730 = vunpack.c.h.b16 %v601
    %v4731 = vunpack.c.l.b16 %v602
    %v4732 = vunpack.c.h.b16 %v602
    %v4733 = vunpack.c.l.b16 %v603
    %v4734 = vunpack.c.h.b16 %v603
    %v4735 = vunpack.c.l.b16 %v604
    %v4736 = vunpack.c.h.b16 %v604
    %v4737 = vunpack.c.l.b16 %v605
    %v4738 = vunpack.c.h.b16 %v605
    %v4739 = vunpack.c.l.b16 %v606
    %v4740 = vunpack.c.h.b16 %v606
    %v4741 = vunpack.c.l.b16 %v607
    %v4742 = vunpack.c.h.b16 %v607
    %v4743 = vunpack.c.l.b16 %v608
    %v4744 = vunpack.c.h.b16 %v608
    %v4745 = vunpack.c.l.b16 %v609
    %v4746 = vunpack.c.h.b16 %v609
    %v4747 = vunpack.c.l.b16 %v610
    %v4748 = vunpack.c.h.b16 %v610
    %v4749 = vunpack.c.l.b16 %v611
    %v4750 = vunpack.c.h.b16 %v611
    %v4751 = vunpack.c.l.b16 %v612
    %v4752 = vunpack.c.h.b16 %v612
    %v4753 = vunpack.c.l.b16 %v613
    %v4754 = vunpack.c.h.b16 %v613
    %v4755 = vunpack.c.l.b16 %v614
    %v4756 = vunpack.c.h.b16 %v614
    %v4757 = vunpack.c.l.b16 %v615
    %v4758 = vunpack.c.h.b16 %v615
    %v4759 = vunpack.c.l.b16 %v616
    %v4760 = vunpack.c.h.b16 %v616
    %v4761 = vunpack.c.l.b16 %v617
    %v4762 = vunpack.c.h.b16 %v617
    %v4763 = vunpack.c.l.b16 %v618
    %v4764 = vunpack.c.h.b16 %v618
    %v4765 = vunpack.c.l.b16 %v619
    %v4766 = vunpack.c.h.b16 %v619
    %v4767 = vunpack.c.l.b16 %v620
    %v4768 = vunpack.c.h.b16 %v620
    %v4769 = vunpack.c.l.b16 %v621
    %v4770 = vunpack.c.h.b16 %v621
    %v4771 = vunpack.c.l.b16 %v622
    %v4772 = vunpack.c.h.b16 %v622
    %v4773 = vunpack.c.l.b16 %v623
    %v4774 = vunpack.c.h.b16 %v623
    %v4775 = vunpack.c.l.b16 %v624
    %v4776 = vunpack.c.h.b16 %v624
    %v4777 = vunpack.c.l.b16 %v625
    %v4778 = vunpack.c.h.b16 %v625
    %v4779 = vunpack.c.l.b16 %v626
    %v4780 = vunpack.c.h.b16 %v626
    %v4781 = vunpack.c.l.b16 %v627
    %v4782 = vunpack.c.h.b16 %v627
    %v4783 = vunpack.c.l.b16 %v628
    %v4784 = vunpack.c.h.b16 %v628
    %v4785 = vunpack.c.l.b16 %v629
    %v4786 = vunpack.c.h.b16 %v629
    %v4787 = vunpack.c.l.b16 %v630
    %v4788 = vunpack.c.h.b16 %v630
    %v4789 = vunpack.c.l.b16 %v631
    %v4790 = vunpack.c.h.b16 %v631
    %v4791 = vunpack.c.l.b16 %v632
    %v4792 = vunpack.c.h.b16 %v632
    %v4793 = vunpack.c.l.b16 %v633
    %v4794 = vunpack.c.h.b16 %v633
    %v4795 = vunpack.c.l.b16 %v634
    %v4796 = vunpack.c.h.b16 %v634
    %v4797 = vunpack.c.l.b16 %v635
    %v4798 = vunpack.c.h.b16 %v635
    %v4799 = vunpack.c.l.b16 %v636
    %v4800 = vunpack.c.h.b16 %v636
    %v4801 = vunpack.c.l.b16 %v637
    %v4802 = vunpack.c.h.b16 %v637
    %v4803 = vunpack.c.l.b16 %v638
    %v4804 = vunpack.c.h.b16 %v638
    %v4805 = vunpack.c.l.b16 %v639
    %v4806 = vunpack.c.h.b16 %v639
    %v4807 = vunpack.c.l.b16 %v640
    %v4808 = vunpack.c.h.b16 %v640
    %v4809 = vunpack.c.l.b16 %v641
    %v4810 = vunpack.c.h.b16 %v641
    %v4811 = vunpack.c.l.b16 %v642
    %v4812 = vunpack.c.h.b16 %v642
    %v4813 = vunpack.c.l.b16 %v643
    %v4814 = vunpack.c.h.b16 %v643
    %v4815 = vunpack.c.l.b16 %v644
    %v4816 = vunpack.c.h.b16 %v644
    %v4817 = vunpack.c.l.b16 %v645
    %v4818 = vunpack.c.h.b16 %v645
    %v4819 = vunpack.c.l.b16 %v646
    %v4820 = vunpack.c.h.b16 %v646
    %v4821 = vunpack.c.l.b16 %v647
    %v4822 = vunpack.c.h.b16 %v647
    %v4823 = vunpack.c.l.b16 %v648
    %v4824 = vunpack.c.h.b16 %v648
    %v4825 = vunpack.c.l.b16 %v649
    %v4826 = vunpack.c.h.b16 %v649
    %v4827 = vunpack.c.l.b16 %v650
    %v4828 = vunpack.c.h.b16 %v650
    %v4829 = vunpack.c.l.b16 %v651
    %v4830 = vunpack.c.h.b16 %v651
    %v4831 = vunpack.c.l.b16 %v652
    %v4832 = vunpack.c.h.b16 %v652
    %v4833 = vunpack.c.l.b16 %v653
    %v4834 = vunpack.c.h.b16 %v653
    %v4835 = vunpack.c.l.b16 %v654
    %v4836 = vunpack.c.h.b16 %v654
    %v4837 = vunpack.c.l.b16 %v655
    %v4838 = vunpack.c.h.b16 %v655
    %v4839 = vunpack.c.l.b16 %v656
    %v4840 = vunpack.c.h.b16 %v656
    %v4841 = vunpack.c.l.b16 %v657
    %v4842 = vunpack.c.h.b16 %v657
    %v4843 = vunpack.c.l.b16 %v658
    %v4844 = vunpack.c.h.b16 %v658
    %v4845 = vunpack.c.l.b16 %v659
    %v4846 = vunpack.c.h.b16 %v659
    %v4847 = vunpack.c.l.b16 %v660
    %v4848 = vunpack.c.h.b16 %v660
    %v4849 = vunpack.c.l.b16 %v661
    %v4850 = vunpack.c.h.b16 %v661
    %v4851 = vunpack.c.l.b16 %v662
    %v4852 = vunpack.c.h.b16 %v662
    %v4853 = vunpack.c.l.b16 %v663
    %v4854 = vunpack.c.h.b16 %v663
    %v4855 = vunpack.c.l.b16 %v664
    %v4856 = vunpack.c.h.b16 %v664
    %v4857 = vunpack.c.l.b16 %v665
    %v4858 = vunpack.c.h.b16 %v665
    %v4859 = vunpack.c.l.b16 %v666
    %v4860 = vunpack.c.h.b16 %v666
    %v4861 = vunpack.c.l.b16 %v667
    %v4862 = vunpack.c.h.b16 %v667
    %v4863 = vunpack.c.l.b16 %v668
    %v4864 = vunpack.c.h.b16 %v668
    %v4865 = vunpack.c.l.b16 %v669
    %v4866 = vunpack.c.h.b16 %v669
    %v4867 = vunpack.c.l.b16 %v670
    %v4868 = vunpack.c.h.b16 %v670
    %v4869 = vunpack.c.l.b16 %v671
    %v4870 = vunpack.c.h.b16 %v671
    %v4871 = vunpack.c.l.b16 %v672
    %v4872 = vunpack.c.h.b16 %v672
    %v4873 = vunpack.c.l.b16 %v673
    %v4874 = vunpack.c.h.b16 %v673
    %v4875 = vunpack.c.l.b16 %v674
    %v4876 = vunpack.c.h.b16 %v674
    %v4877 = vunpack.c.l.b16 %v675
    %v4878 = vunpack.c.h.b16 %v675
    %v4879 = vunpack.c.l.b16 %v676
    %v4880 = vunpack.c.h.b16 %v676
    %v4881 = vunpack.c.l.b16 %v677
    %v4882 = vunpack.c.h.b16 %v677
    %v4883 = vunpack.c.l.b16 %v678
    %v4884 = vunpack.c.h.b16 %v678
    %v4885 = vunpack.c.l.b16 %v679
    %v4886 = vunpack.c.h.b16 %v679
    %v4887 = vunpack.c.l.b16 %v680
    %v4888 = vunpack.c.h.b16 %v680
    %v4889 = vunpack.c.l.b16 %v681
    %v4890 = vunpack.c.h.b16 %v681
    %v4891 = vunpack.c.l.b16 %v682
    %v4892 = vunpack.c.h.b16 %v682
    %v4893 = vunpack.c.l.b16 %v683
    %v4894 = vunpack.c.h.b16 %v683
    %v4895 = vunpack.c.l.b16 %v684
    %v4896 = vunpack.c.h.b16 %v684
    %v4897 = vunpack.c.l.b16 %v685
    %v4898 = vunpack.c.h.b16 %v685
    %v4899 = vunpack.c.l.b16 %v686
    %v4900 = vunpack.c.h.b16 %v686
    %v4901 = vunpack.c.l.b16 %v687
    %v4902 = vunpack.c.h.b16 %v687
    %v4903 = vunpack.c.l.b16 %v688
    %v4904 = vunpack.c.h.b16 %v688
    %v4905 = vunpack.c.l.b16 %v689
    %v4906 = vunpack.c.h.b16 %v689
    %v4907 = vunpack.c.l.b16 %v690
    %v4908 = vunpack.c.h.b16 %v690
    %v4909 = vunpack.c.l.b16 %v691
    %v4910 = vunpack.c.h.b16 %v691
    %v4911 = vunpack.c.l.b16 %v692
    %v4912 = vunpack.c.h.b16 %v692
    %v4913 = vunpack.c.l.b16 %v693
    %v4914 = vunpack.c.h.b16 %v693
    %v4915 = vunpack.c.l.b16 %v694
    %v4916 = vunpack.c.h.b16 %v694
    %v4917 = vunpack.c.l.b16 %v695
    %v4918 = vunpack.c.h.b16 %v695
    %v4919 = vunpack.c.l.b16 %v696
    %v4920 = vunpack.c.h.b16 %v696
    %v4921 = vunpack.c.l.b16 %v697
    %v4922 = vunpack.c.h.b16 %v697
    %v4923 = vunpack.c.l.b16 %v698
    %v4924 = vunpack.c.h.b16 %v698
    %v4925 = vunpack.c.l.b16 %v699
    %v4926 = vunpack.c.h.b16 %v699
    %v4927 = vunpack.c.l.b16 %v700
    %v4928 = vunpack.c.h.b16 %v700
    %v4929 = vunpack.c.l.b16 %v701
    %v4930 = vunpack.c.h.b16 %v701
    %v4931 = vunpack.c.l.b16 %v702
    %v4932 = vunpack.c.h.b16 %v702
    %v4933 = vunpack.c.l.b16 %v703
    %v4934 = vunpack.c.h.b16 %v703
    %v4935 = vunpack.c.l.b16 %v704
    %v4936 = vunpack.c.h.b16 %v704
    %v4937 = vunpack.c.l.b16 %v705
    %v4938 = vunpack.c.h.b16 %v705
    %v4939 = vunpack.c.l.b16 %v706
    %v4940 = vunpack.c.h.b16 %v706
    %v4941 = vunpack.c.l.b16 %v707
    %v4942 = vunpack.c.h.b16 %v707
    %v4943 = vunpack.c.l.b16 %v708
    %v4944 = vunpack.c.h.b16 %v708
    %v4945 = vunpack.c.l.b16 %v709
    %v4946 = vunpack.c.h.b16 %v709
    %v4947 = vunpack.c.l.b16 %v710
    %v4948 = vunpack.c.h.b16 %v710
    %v4949 = vunpack.c.l.b16 %v711
    %v4950 = vunpack.c.h.b16 %v711
    %v4951 = vunpack.c.l.b16 %v712
    %v4952 = vunpack.c.h.b16 %v712
    %v4953 = vunpack.c.l.b16 %v713
    %v4954 = vunpack.c.h.b16 %v713
    %v4955 = vunpack.c.l.b16 %v714
    %v4956 = vunpack.c.h.b16 %v714
    %v4957 = vunpack.c.l.b16 %v715
    %v4958 = vunpack.c.h.b16 %v715
    %v4959 = vunpack.c.l.b16 %v716
    %v4960 = vunpack.c.h.b16 %v716
    %v4961 = vunpack.c.l.b16 %v717
    %v4962 = vunpack.c.h.b16 %v717
    %v4963 = vunpack.c.l.b16 %v718
    %v4964 = vunpack.c.h.b16 %v718
    %v4965 = vunpack.c.l.b16 %v719
    %v4966 = vunpack.c.h.b16 %v719
    %v4967 = vunpack.c.l.b16 %v720
    %v4968 = vunpack.c.h.b16 %v720
    %v4969 = vunpack.c.l.b16 %v721
    %v4970 = vunpack.c.h.b16 %v721
    %v4971 = vunpack.c.l.b16 %v722
    %v4972 = vunpack.c.h.b16 %v722
    %v4973 = vunpack.c.l.b16 %v723
    %v4974 = vunpack.c.h.b16 %v723
    %v4975 = vunpack.c.l.b16 %v724
    %v4976 = vunpack.c.h.b16 %v724
    %v4977 = vunpack.c.l.b16 %v725
    %v4978 = vunpack.c.h.b16 %v725
    %v4979 = vunpack.c.l.b16 %v726
    %v4980 = vunpack.c.h.b16 %v726
    %v4981 = vunpack.c.l.b16 %v727
    %v4982 = vunpack.c.h.b16 %v727
    %v4983 = vunpack.c.l.b16 %v728
    %v4984 = vunpack.c.h.b16 %v728
    %v4985 = vunpack.c.l.b16 %v729
    %v4986 = vunpack.c.h.b16 %v729
    %v4987 = vunpack.c.l.b16 %v730
    %v4988 = vunpack.c.h.b16 %v730
    %v4989 = vunpack.c.l.b16 %v731
    %v4990 = vunpack.c.h.b16 %v731
    %v4991 = vunpack.c.l.b16 %v732
    %v4992 = vunpack.c.h.b16 %v732
    %v4993 = vunpack.c.l.b16 %v733
    %v4994 = vunpack.c.h.b16 %v733
    %v4995 = vunpack.c.l.b16 %v734
    %v4996 = vunpack.c.h.b16 %v734
    %v4997 = vunpack.c.l.b16 %v735
    %v4998 = vunpack.c.h.b16 %v735
    %v4999 = vunpack.c.l.b16 %v736
    %v5000 = vunpack.c.h.b16 %v736
    %v5001 = vunpack.c.l.b16 %v737
    %v5002 = vunpack.c.h.b16 %v737
    %v5003 = vunpack.c.l.b16 %v738
    %v5004 = vunpack.c.h.b16 %v738
    %v5005 = vunpack.c.l.b16 %v739
    %v5006 = vunpack.c.h.b16 %v739
    %v5007 = vunpack.c.l.b16 %v740
    %v5008 = vunpack.c.h.b16 %v740
    %v5009 = vunpack.c.l.b16 %v741
    %v5010 = vunpack.c.h.b16 %v741
    %v5011 = vunpack.c.l.b16 %v742
    %v5012 = vunpack.c.h.b16 %v742
    %v5013 = vunpack.c.l.b16 %v743
    %v5014 = vunpack.c.h.b16 %v743
    %v5015 = vunpack.c.l.b16 %v744
    %v5016 = vunpack.c.h.b16 %v744
    %v5017 = vunpack.c.l.b16 %v745
    %v5018 = vunpack.c.h.b16 %v745
    %v5019 = vunpack.c.l.b16 %v746
    %v5020 = vunpack.c.h.b16 %v746
    %v5021 = vunpack.c.l.b16 %v747
    %v5022 = vunpack.c.h.b16 %v747
    %v5023 = vunpack.c.l.b16 %v748
    %v5024 = vunpack.c.h.b16 %v748
    %v5025 = vunpack.c.l.b16 %v749
    %v5026 = vunpack.c.h.b16 %v749
    %v5027 = vunpack.c.l.b16 %v750
    %v5028 = vunpack.c.h.b16 %v750
    %v5029 = vunpack.c.l.b16 %v751
    %v5030 = vunpack.c.h.b16 %v751
    %v5031 = vunpack.c.l.b16 %v752
    %v5032 = vunpack.c.h.b16 %v752
    %v5033 = vunpack.c.l.b16 %v753
    %v5034 = vunpack.c.h.b16 %v753
    %v5035 = vunpack.c.l.b16 %v754
    %v5036 = vunpack.c.h.b16 %v754
    %v5037 = vunpack.c.l.b16 %v755
    %v5038 = vunpack.c.h.b16 %v755
    %v5039 = vunpack.c.l.b16 %v756
    %v5040 = vunpack.c.h.b16 %v756
    %v5041 = vunpack.c.l.b16 %v757
    %v5042 = vunpack.c.h.b16 %v757
    %v5043 = vunpack.c.l.b16 %v758
    %v5044 = vunpack.c.h.b16 %v758
    %v5045 = vunpack.c.l.b16 %v759
    %v5046 = vunpack.c.h.b16 %v759
    %v5047 = vunpack.c.l.b16 %v760
    %v5048 = vunpack.c.h.b16 %v760
    %v5049 = vunpack.c.l.b16 %v761
    %v5050 = vunpack.c.h.b16 %v761
    %v5051 = vunpack.c.l.b16 %v762
    %v5052 = vunpack.c.h.b16 %v762
    %v5053 = vunpack.c.l.b16 %v763
    %v5054 = vunpack.c.h.b16 %v763
    %v5055 = vunpack.c.l.b16 %v764
    %v5056 = vunpack.c.h.b16 %v764
    %v5057 = vunpack.c.l.b16 %v765
    %v5058 = vunpack.c.h.b16 %v765
    %v5059 = vunpack.c.l.b16 %v766
    %v5060 = vunpack.c.h.b16 %v766
    %v5061 = vunpack.c.l.b16 %v767
    %v5062 = vunpack.c.h.b16 %v767
    %v5063 = vunpack.c.l.b16 %v768
    %v5064 = vunpack.c.h.b16 %v768
    %v5065 = vunpack.c.l.b16 %v769
    %v5066 = vunpack.c.h.b16 %v769
    %v5067 = vunpack.c.l.b16 %v770
    %v5068 = vunpack.c.h.b16 %v770
    %v5069 = vunpack.c.l.b16 %v771
    %v5070 = vunpack.c.h.b16 %v771
    %v5071 = vunpack.c.l.b16 %v772
    %v5072 = vunpack.c.h.b16 %v772
    %v5073 = vunpack.c.l.b16 %v773
    %v5074 = vunpack.c.h.b16 %v773
    %v5075 = vunpack.c.l.b16 %v774
    %v5076 = vunpack.c.h.b16 %v774
    %v5077 = vunpack.c.l.b16 %v775
    %v5078 = vunpack.c.h.b16 %v775
    %v5079 = vunpack.c.l.b16 %v776
    %v5080 = vunpack.c.h.b16 %v776
    %v5081 = vunpack.c.l.b16 %v777
    %v5082 = vunpack.c.h.b16 %v777
    %v5083 = vunpack.c.l.b16 %v778
    %v5084 = vunpack.c.h.b16 %v778
    %v5085 = vunpack.c.l.b16 %v779
    %v5086 = vunpack.c.h.b16 %v779
    %v5087 = vunpack.c.l.b16 %v780
    %v5088 = vunpack.c.h.b16 %v780
    %v5089 = vunpack.c.l.b16 %v781
    %v5090 = vunpack.c.h.b16 %v781
    %v5091 = vunpack.c.l.b16 %v782
    %v5092 = vunpack.c.h.b16 %v782
    %v5093 = vunpack.c.l.b16 %v783
    %v5094 = vunpack.c.h.b16 %v783
    %v5095 = vunpack.c.l.b16 %v784
    %v5096 = vunpack.c.h.b16 %v784
    %v5097 = vunpack.c.l.b16 %v785
    %v5098 = vunpack.c.h.b16 %v785
    %v5099 = vunpack.c.l.b16 %v786
    %v5100 = vunpack.c.h.b16 %v786
    %v5101 = vunpack.c.l.b16 %v787
    %v5102 = vunpack.c.h.b16 %v787
    %v5103 = vunpack.c.l.b16 %v788
    %v5104 = vunpack.c.h.b16 %v788
    %v5105 = vunpack.c.l.b16 %v789
    %v5106 = vunpack.c.h.b16 %v789
    %v5107 = vunpack.c.l.b16 %v790
    %v5108 = vunpack.c.h.b16 %v790
    %v5109 = vunpack.c.l.b16 %v791
    %v5110 = vunpack.c.h.b16 %v791
    %v5111 = vunpack.c.l.b16 %v792
    %v5112 = vunpack.c.h.b16 %v792
    %v5113 = vunpack.c.l.b16 %v793
    %v5114 = vunpack.c.h.b16 %v793
    %v5115 = vunpack.c.l.b16 %v794
    %v5116 = vunpack.c.h.b16 %v794
    %v5117 = vunpack.c.l.b16 %v795
    %v5118 = vunpack.c.h.b16 %v795
    %v5119 = vunpack.c.l.b16 %v796
    %v5120 = vunpack.c.h.b16 %v796
    %v5121 = vunpack.c.l.b16 %v797
    %v5122 = vunpack.c.h.b16 %v797
    %v5123 = vunpack.c.l.b16 %v798
    %v5124 = vunpack.c.h.b16 %v798
    %v5125 = vunpack.c.l.b16 %v799
    %v5126 = vunpack.c.h.b16 %v799
    %v5127 = vunpack.c.l.b16 %v800
    %v5128 = vunpack.c.h.b16 %v800
    %v5129 = vunpack.c.l.b16 %v801
    %v5130 = vunpack.c.h.b16 %v801
    %v5131 = vunpack.c.l.b16 %v802
    %v5132 = vunpack.c.h.b16 %v802
    %v5133 = vunpack.c.l.b16 %v803
    %v5134 = vunpack.c.h.b16 %v803
    %v5135 = vunpack.c.l.b16 %v804
    %v5136 = vunpack.c.h.b16 %v804
    %v5137 = vunpack.c.l.b16 %v805
    %v5138 = vunpack.c.h.b16 %v805
    %v5139 = vunpack.c.l.b16 %v806
    %v5140 = vunpack.c.h.b16 %v806
    %v5141 = vunpack.c.l.b16 %v807
    %v5142 = vunpack.c.h.b16 %v807
    %v5143 = vunpack.c.l.b16 %v808
    %v5144 = vunpack.c.h.b16 %v808
    %v5145 = vunpack.c.l.b16 %v809
    %v5146 = vunpack.c.h.b16 %v809
    %v5147 = vunpack.c.l.b16 %v810
    %v5148 = vunpack.c.h.b16 %v810
    %v5149 = vunpack.c.l.b16 %v811
    %v5150 = vunpack.c.h.b16 %v811
    %v5151 = vunpack.c.l.b16 %v812
    %v5152 = vunpack.c.h.b16 %v812
    %v5153 = vunpack.c.l.b16 %v813
    %v5154 = vunpack.c.h.b16 %v813
    %v5155 = vunpack.c.l.b16 %v814
    %v5156 = vunpack.c.h.b16 %v814
    %v5157 = vunpack.c.l.b16 %v815
    %v5158 = vunpack.c.h.b16 %v815
    %v5159 = vunpack.c.l.b16 %v816
    %v5160 = vunpack.c.h.b16 %v816
    %v5161 = vunpack.c.l.b16 %v817
    %v5162 = vunpack.c.h.b16 %v817
    %v5163 = vunpack.c.l.b16 %v818
    %v5164 = vunpack.c.h.b16 %v818
    %v5165 = vunpack.c.l.b16 %v819
    %v5166 = vunpack.c.h.b16 %v819
    %v5167 = vunpack.c.l.b16 %v820
    %v5168 = vunpack.c.h.b16 %v820
    %v5169 = vunpack.c.l.b16 %v821
    %v5170 = vunpack.c.h.b16 %v821
    %v5171 = vunpack.c.l.b16 %v822
    %v5172 = vunpack.c.h.b16 %v822
    %v5173 = vunpack.c.l.b16 %v823
    %v5174 = vunpack.c.h.b16 %v823
    %v5175 = vunpack.c.l.b16 %v824
    %v5176 = vunpack.c.h.b16 %v824
    %v5177 = vunpack.c.l.b16 %v825
    %v5178 = vunpack.c.h.b16 %v825
    %v5179 = vunpack.c.l.b16 %v826
    %v5180 = vunpack.c.h.b16 %v826
    %v5181 = vunpack.c.l.b16 %v827
    %v5182 = vunpack.c.h.b16 %v827
    %v5183 = vunpack.c.l.b16 %v828
    %v5184 = vunpack.c.h.b16 %v828
    %v5185 = vunpack.c.l.b16 %v829
    %v5186 = vunpack.c.h.b16 %v829
    %v5187 = vunpack.c.l.b16 %v830
    %v5188 = vunpack.c.h.b16 %v830
    %v5189 = vunpack.c.l.b16 %v831
    %v5190 = vunpack.c.h.b16 %v831
    %v5191 = vunpack.c.l.b16 %v832
    %v5192 = vunpack.c.h.b16 %v832
    %v5193 = vunpack.c.l.b16 %v833
    %v5194 = vunpack.c.h.b16 %v833
    %v5195 = vunpack.c.l.b16 %v834
    %v5196 = vunpack.c.h.b16 %v834
    %v5197 = vunpack.c.l.b16 %v835
    %v5198 = vunpack.c.h.b16 %v835
    %v5199 = vunpack.c.l.b16 %v836
    %v5200 = vunpack.c.h.b16 %v836
    %v5201 = vunpack.c.l.b16 %v837
    %v5202 = vunpack.c.h.b16 %v837
    %v5203 = vunpack.c.l.b16 %v838
    %v5204 = vunpack.c.h.b16 %v838
    %v5205 = vunpack.c.l.b16 %v839
    %v5206 = vunpack.c.h.b16 %v839
    %v5207 = vunpack.c.l.b16 %v840
    %v5208 = vunpack.c.h.b16 %v840
    %v5209 = vunpack.c.l.b16 %v841
    %v5210 = vunpack.c.h.b16 %v841
    %v5211 = vunpack.c.l.b16 %v842
    %v5212 = vunpack.c.h.b16 %v842
    %v5213 = vunpack.c.l.b16 %v843
    %v5214 = vunpack.c.h.b16 %v843
    %v5215 = vunpack.c.l.b16 %v844
    %v5216 = vunpack.c.h.b16 %v844
    %v5217 = vunpack.c.l.b16 %v845
    %v5218 = vunpack.c.h.b16 %v845
    %v5219 = vunpack.c.l.b16 %v846
    %v5220 = vunpack.c.h.b16 %v846
    %v5221 = vunpack.c.l.b16 %v847
    %v5222 = vunpack.c.h.b16 %v847
    %v5223 = vunpack.c.l.b16 %v848
    %v5224 = vunpack.c.h.b16 %v848
    %v5225 = vunpack.c.l.b16 %v849
    %v5226 = vunpack.c.h.b16 %v849
    %v5227 = vunpack.c.l.b16 %v850
    %v5228 = vunpack.c.h.b16 %v850
    %v5229 = vunpack.c.l.b16 %v851
    %v5230 = vunpack.c.h.b16 %v851
    %v5231 = vunpack.c.l.b16 %v852
    %v5232 = vunpack.c.h.b16 %v852
    %v5233 = vunpack.c.l.b16 %v853
    %v5234 = vunpack.c.h.b16 %v853
    %v5235 = vunpack.c.l.b16 %v854
    %v5236 = vunpack.c.h.b16 %v854
    %v5237 = vunpack.c.l.b16 %v855
    %v5238 = vunpack.c.h.b16 %v855
    %v5239 = vunpack.c.l.b16 %v856
    %v5240 = vunpack.c.h.b16 %v856
    %v5241 = vunpack.c.l.b16 %v857
    %v5242 = vunpack.c.h.b16 %v857
    %v5243 = vunpack.c.l.b16 %v858
    %v5244 = vunpack.c.h.b16 %v858
    %v5245 = vunpack.c.l.b16 %v859
    %v5246 = vunpack.c.h.b16 %v859
    %v5247 = vunpack.c.l.b16 %v860
    %v5248 = vunpack.c.h.b16 %v860
    %v5249 = vunpack.c.l.b16 %v861
    %v5250 = vunpack.c.h.b16 %v861
    %v5251 = vunpack.c.l.b16 %v862
    %v5252 = vunpack.c.h.b16 %v862
    %v5253 = vunpack.c.l.b16 %v863
    %v5254 = vunpack.c.h.b16 %v863
    %v5255 = vunpack.c.l.b16 %v864
    %v5256 = vunpack.c.h.b16 %v864
    %v5257 = vunpack.c.l.b16 %v865
    %v5258 = vunpack.c.h.b16 %v865
    %v5259 = vunpack.c.l.b16 %v866
    %v5260 = vunpack.c.h.b16 %v866
    %v5261 = vunpack.c.l.b16 %v867
    %v5262 = vunpack.c.h.b16 %v867
    %v5263 = vunpack.c.l.b16 %v868
    %v5264 = vunpack.c.h.b16 %v868
    %v5265 = vunpack.c.l.b16 %v869
    %v5266 = vunpack.c.h.b16 %v869
    %v5267 = vunpack.c.l.b16 %v870
    %v5268 = vunpack.c.h.b16 %v870
    %v5269 = vunpack.c.l.b16 %v871
    %v5270 = vunpack.c.h.b16 %v871
    %v5271 = vunpack.c.l.b16 %v872
    %v5272 = vunpack.c.h.b16 %v872
    %v5273 = vunpack.c.l.b16 %v873
    %v5274 = vunpack.c.h.b16 %v873
    %v5275 = vunpack.c.l.b16 %v874
    %v5276 = vunpack.c.h.b16 %v874
    %v5277 = vunpack.c.l.b16 %v875
    %v5278 = vunpack.c.h.b16 %v875
    %v5279 = vunpack.c.l.b16 %v876
    %v5280 = vunpack.c.h.b16 %v876
    %v5281 = vunpack.c.l.b16 %v877
    %v5282 = vunpack.c.h.b16 %v877
    %v5283 = vunpack.c.l.b16 %v878
    %v5284 = vunpack.c.h.b16 %v878
    %v5285 = vunpack.c.l.b16 %v879
    %v5286 = vunpack.c.h.b16 %v879
    %v5287 = vunpack.c.l.b16 %v880
    %v5288 = vunpack.c.h.b16 %v880
    %v5289 = vunpack.c.l.b16 %v881
    %v5290 = vunpack.c.h.b16 %v881
    %v5291 = vunpack.c.l.b16 %v882
    %v5292 = vunpack.c.h.b16 %v882
    %v5293 = vunpack.c.l.b16 %v883
    %v5294 = vunpack.c.h.b16 %v883
    %v5295 = vunpack.c.l.b16 %v884
    %v5296 = vunpack.c.h.b16 %v884
    %v5297 = vunpack.c.l.b16 %v885
    %v5298 = vunpack.c.h.b16 %v885
    %v5299 = vunpack.c.l.b16 %v886
    %v5300 = vunpack.c.h.b16 %v886
    %v5301 = vunpack.c.l.b16 %v887
    %v5302 = vunpack.c.h.b16 %v887
    %v5303 = vunpack.c.l.b16 %v888
    %v5304 = vunpack.c.h.b16 %v888
    %v5305 = vunpack.c.l.b16 %v889
    %v5306 = vunpack.c.h.b16 %v889
    %v5307 = vunpack.c.l.b16 %v890
    %v5308 = vunpack.c.h.b16 %v890
    %v5309 = vunpack.c.l.b16 %v891
    %v5310 = vunpack.c.h.b16 %v891
    %v5311 = vunpack.c.l.b16 %v892
    %v5312 = vunpack.c.h.b16 %v892
    %v5313 = vunpack.c.l.b16 %v893
    %v5314 = vunpack.c.h.b16 %v893
    %v5315 = vunpack.c.l.b16 %v894
    %v5316 = vunpack.c.h.b16 %v894
    %v5317 = vunpack.c.l.b16 %v895
    %v5318 = vunpack.c.h.b16 %v895
    %v5319 = vunpack.c.l.b16 %v896
    %v5320 = vunpack.c.h.b16 %v896
    %v5321 = vunpack.c.l.b16 %v897
    %v5322 = vunpack.c.h.b16 %v897
    %v5323 = vunpack.c.l.b16 %v898
    %v5324 = vunpack.c.h.b16 %v898
    %v5325 = vunpack.c.l.b16 %v899
    %v5326 = vunpack.c.h.b16 %v899
    %v5327 = vunpack.c.l.b16 %v900
    %v5328 = vunpack.c.h.b16 %v900
    %v5329 = vunpack.c.l.b16 %v901
    %v5330 = vunpack.c.h.b16 %v901
    %v5331 = vunpack.c.l.b16 %v902
    %v5332 = vunpack.c.h.b16 %v902
    %v5333 = vunpack.c.l.b16 %v903
    %v5334 = vunpack.c.h.b16 %v903
    %v5335 = vunpack.c.l.b16 %v904
    %v5336 = vunpack.c.h.b16 %v904
    %v5337 = vunpack.c.l.b16 %v905
    %v5338 = vunpack.c.h.b16 %v905
    %v5339 = vunpack.c.l.b16 %v906
    %v5340 = vunpack.c.h.b16 %v906
    %v5341 = vunpack.c.l.b16 %v907
    %v5342 = vunpack.c.h.b16 %v907
    %v5343 = vunpack.c.l.b16 %v908
    %v5344 = vunpack.c.h.b16 %v908
    %v5345 = vunpack.c.l.b16 %v909
    %v5346 = vunpack.c.h.b16 %v909
    %v5347 = vunpack.c.l.b16 %v910
    %v5348 = vunpack.c.h.b16 %v910
    %v5349 = vunpack.c.l.b16 %v911
    %v5350 = vunpack.c.h.b16 %v911
    %v5351 = vunpack.c.l.b16 %v912
    %v5352 = vunpack.c.h.b16 %v912
    %v5353 = vunpack.c.l.b16 %v913
    %v5354 = vunpack.c.h.b16 %v913
    %v5355 = vunpack.c.l.b16 %v914
    %v5356 = vunpack.c.h.b16 %v914
    %v5357 = vunpack.c.l.b16 %v915
    %v5358 = vunpack.c.h.b16 %v915
    %v5359 = vunpack.c.l.b16 %v916
    %v5360 = vunpack.c.h.b16 %v916
    %v5361 = vunpack.c.l.b16 %v917
    %v5362 = vunpack.c.h.b16 %v917
    %v5363 = vunpack.c.l.b16 %v918
    %v5364 = vunpack.c.h.b16 %v918
    %v5365 = vunpack.c.l.b16 %v919
    %v5366 = vunpack.c.h.b16 %v919
    %v5367 = vunpack.c.l.b16 %v920
    %v5368 = vunpack.c.h.b16 %v920
    %v5369 = vunpack.c.l.b16 %v921
    %v5370 = vunpack.c.h.b16 %v921
    %v5371 = vunpack.c.l.b16 %v922
    %v5372 = vunpack.c.h.b16 %v922
    %v5373 = vunpack.c.l.b16 %v923
    %v5374 = vunpack.c.h.b16 %v923
    %v5375 = vunpack.c.l.b16 %v924
    %v5376 = vunpack.c.h.b16 %v924
    %v5377 = vunpack.c.l.b16 %v925
    %v5378 = vunpack.c.h.b16 %v925
    %v5379 = vunpack.c.l.b16 %v926
    %v5380 = vunpack.c.h.b16 %v926
    %v5381 = vunpack.c.l.b16 %v927
    %v5382 = vunpack.c.h.b16 %v927
    %v5383 = vunpack.c.l.b16 %v928
    %v5384 = vunpack.c.h.b16 %v928
    %v5385 = vunpack.c.l.b16 %v929
    %v5386 = vunpack.c.h.b16 %v929
    %v5387 = vunpack.c.l.b16 %v930
    %v5388 = vunpack.c.h.b16 %v930
    %v5389 = vunpack.c.l.b16 %v931
    %v5390 = vunpack.c.h.b16 %v931
    %v5391 = vunpack.c.l.b16 %v932
    %v5392 = vunpack.c.h.b16 %v932
    %v5393 = vunpack.c.l.b16 %v933
    %v5394 = vunpack.c.h.b16 %v933
    %v5395 = vunpack.c.l.b16 %v934
    %v5396 = vunpack.c.h.b16 %v934
    %v5397 = vunpack.c.l.b16 %v935
    %v5398 = vunpack.c.h.b16 %v935
    %v5399 = vunpack.c.l.b16 %v936
    %v5400 = vunpack.c.h.b16 %v936
    %v5401 = vunpack.c.l.b16 %v937
    %v5402 = vunpack.c.h.b16 %v937
    %v5403 = vunpack.c.l.b16 %v938
    %v5404 = vunpack.c.h.b16 %v938
    %v5405 = vunpack.c.l.b16 %v939
    %v5406 = vunpack.c.h.b16 %v939
    %v5407 = vunpack.c.l.b16 %v940
    %v5408 = vunpack.c.h.b16 %v940
    %v5409 = vunpack.c.l.b16 %v941
    %v5410 = vunpack.c.h.b16 %v941
    %v5411 = vunpack.c.l.b16 %v942
    %v5412 = vunpack.c.h.b16 %v942
    %v5413 = vunpack.c.l.b16 %v943
    %v5414 = vunpack.c.h.b16 %v943
    %v5415 = vunpack.c.l.b16 %v944
    %v5416 = vunpack.c.h.b16 %v944
    %v5417 = vunpack.c.l.b16 %v945
    %v5418 = vunpack.c.h.b16 %v945
    %v5419 = vunpack.c.l.b16 %v946
    %v5420 = vunpack.c.h.b16 %v946
    %v5421 = vunpack.c.l.b16 %v947
    %v5422 = vunpack.c.h.b16 %v947
    %v5423 = vunpack.c.l.b16 %v948
    %v5424 = vunpack.c.h.b16 %v948
    %v5425 = vunpack.c.l.b16 %v949
    %v5426 = vunpack.c.h.b16 %v949
    %v5427 = vunpack.c.l.b16 %v950
    %v5428 = vunpack.c.h.b16 %v950
    %v5429 = vunpack.c.l.b16 %v951
    %v5430 = vunpack.c.h.b16 %v951
    %v5431 = vunpack.c.l.b16 %v952
    %v5432 = vunpack.c.h.b16 %v952
    %v5433 = vunpack.c.l.b16 %v953
    %v5434 = vunpack.c.h.b16 %v953
    %v5435 = vunpack.c.l.b16 %v954
    %v5436 = vunpack.c.h.b16 %v954
    %v5437 = vunpack.c.l.b16 %v955
    %v5438 = vunpack.c.h.b16 %v955
    %v5439 = vunpack.c.l.b16 %v956
    %v5440 = vunpack.c.h.b16 %v956
    %v5441 = vunpack.c.l.b16 %v957
    %v5442 = vunpack.c.h.b16 %v957
    %v5443 = vunpack.c.l.b16 %v958
    %v5444 = vunpack.c.h.b16 %v958
    %v5445 = vunpack.c.l.b16 %v959
    %v5446 = vunpack.c.h.b16 %v959
    %v5447 = vunpack.c.l.b16 %v960
    %v5448 = vunpack.c.h.b16 %v960
    %v5449 = vunpack.c.l.b16 %v961
    %v5450 = vunpack.c.h.b16 %v961
    %v5451 = vunpack.c.l.b16 %v962
    %v5452 = vunpack.c.h.b16 %v962
    %v5453 = vunpack.c.l.b16 %v963
    %v5454 = vunpack.c.h.b16 %v963
    %v5455 = vunpack.c.l.b16 %v964
    %v5456 = vunpack.c.h.b16 %v964
    %v5457 = vunpack.c.l.b16 %v965
    %v5458 = vunpack.c.h.b16 %v965
    %v5459 = vunpack.c.l.b16 %v966
    %v5460 = vunpack.c.h.b16 %v966
    %v5461 = vunpack.c.l.b16 %v967
    %v5462 = vunpack.c.h.b16 %v967
    %v5463 = vunpack.c.l.b16 %v968
    %v5464 = vunpack.c.h.b16 %v968
    %v5465 = vunpack.c.l.b16 %v969
    %v5466 = vunpack.c.h.b16 %v969
    %v5467 = vunpack.c.l.b16 %v970
    %v5468 = vunpack.c.h.b16 %v970
    %v5469 = vunpack.c.l.b16 %v971
    %v5470 = vunpack.c.h.b16 %v971
    %v5471 = vunpack.c.l.b16 %v972
    %v5472 = vunpack.c.h.b16 %v972
    %v5473 = vunpack.c.l.b16 %v973
    %v5474 = vunpack.c.h.b16 %v973
    %v5475 = vunpack.c.l.b16 %v974
    %v5476 = vunpack.c.h.b16 %v974
    %v5477 = vunpack.c.l.b16 %v975
    %v5478 = vunpack.c.h.b16 %v975
    %v5479 = vunpack.c.l.b16 %v976
    %v5480 = vunpack.c.h.b16 %v976
    %v5481 = vunpack.c.l.b16 %v977
    %v5482 = vunpack.c.h.b16 %v977
    %v5483 = vunpack.c.l.b16 %v978
    %v5484 = vunpack.c.h.b16 %v978
    %v5485 = vunpack.c.l.b16 %v979
    %v5486 = vunpack.c.h.b16 %v979
    %v5487 = vunpack.c.l.b16 %v980
    %v5488 = vunpack.c.h.b16 %v980
    %v5489 = vunpack.c.l.b16 %v981
    %v5490 = vunpack.c.h.b16 %v981
    %v5491 = vunpack.c.l.b16 %v982
    %v5492 = vunpack.c.h.b16 %v982
    %v5493 = vunpack.c.l.b16 %v983
    %v5494 = vunpack.c.h.b16 %v983
    %v5495 = vunpack.c.l.b16 %v984
    %v5496 = vunpack.c.h.b16 %v984
    %v5497 = vunpack.c.l.b16 %v985
    %v5498 = vunpack.c.h.b16 %v985
    %v5499 = vunpack.c.l.b16 %v986
    %v5500 = vunpack.c.h.b16 %v986
    %v5501 = vunpack.c.l.b16 %v987
    %v5502 = vunpack.c.h.b16 %v987
    %v5503 = vunpack.c.l.b16 %v988
    %v5504 = vunpack.c.h.b16 %v988
    %v5505 = vunpack.c.l.b16 %v989
    %v5506 = vunpack.c.h.b16 %v989
    %v5507 = vunpack.c.l.b16 %v990
    %v5508 = vunpack.c.h.b16 %v990
    %v5509 = vunpack.c.l.b16 %v991
    %v5510 = vunpack.c.h.b16 %v991
    %v5511 = vunpack.c.l.b16 %v992
    %v5512 = vunpack.c.h.b16 %v992
    %v5513 = vunpack.c.l.b16 %v993
    %v5514 = vunpack.c.h.b16 %v993
    %v5515 = vunpack.c.l.b16 %v994
    %v5516 = vunpack.c.h.b16 %v994
    %v5517 = vunpack.c.l.b16 %v995
    %v5518 = vunpack.c.h.b16 %v995
    %v5519 = vunpack.c.l.b16 %v996
    %v5520 = vunpack.c.h.b16 %v996
    %v5521 = vunpack.c.l.b16 %v997
    %v5522 = vunpack.c.h.b16 %v997
    %v5523 = vunpack.c.l.b16 %v998
    %v5524 = vunpack.c.h.b16 %v998
    %v5525 = vunpack.c.l.b16 %v999
    %v5526 = vunpack.c.h.b16 %v999
    %v5527 = vunpack.c.l.b16 %v1000
    %v5528 = vunpack.c.h.b16 %v1000
    %v5529 = vunpack.c.l.b16 %v1001
    %v5530 = vunpack.c.h.b16 %v1001
    %v5531 = vunpack.c.l.b16 %v1002
    %v5532 = vunpack.c.h.b16 %v1002
    %v5533 = vunpack.c.l.b16 %v1003
    %v5534 = vunpack.c.h.b16 %v1003
    %v5535 = vunpack.c.l.b16 %v1004
    %v5536 = vunpack.c.h.b16 %v1004
    %v5537 = vunpack.c.l.b16 %v1005
    %v5538 = vunpack.c.h.b16 %v1005
    %v5539 = vunpack.c.l.b16 %v1006
    %v5540 = vunpack.c.h.b16 %v1006
    %v5541 = vunpack.c.l.b16 %v1007
    %v5542 = vunpack.c.h.b16 %v1007
    %v5543 = vunpack.c.l.b16 %v1008
    %v5544 = vunpack.c.h.b16 %v1008
    %v5545 = vunpack.c.l.b16 %v1009
    %v5546 = vunpack.c.h.b16 %v1009
    %v5547 = vunpack.c.l.b16 %v1010
    %v5548 = vunpack.c.h.b16 %v1010
    %v5549 = vunpack.c.l.b16 %v1011
    %v5550 = vunpack.c.h.b16 %v1011
    %v5551 = vunpack.c.l.b16 %v1012
    %v5552 = vunpack.c.h.b16 %v1012
    %v5553 = vunpack.c.l.b16 %v1013
    %v5554 = vunpack.c.h.b16 %v1013
    %v5555 = vunpack.c.l.b16 %v1014
    %v5556 = vunpack.c.h.b16 %v1014
    %v5557 = vunpack.c.l.b16 %v1015
    %v5558 = vunpack.c.h.b16 %v1015
    %v5559 = vunpack.c.l.b16 %v1016
    %v5560 = vunpack.c.h.b16 %v1016
    %v5561 = vunpack.c.l.b16 %v1017
    %v5562 = vunpack.c.h.b16 %v1017
    %v5563 = vunpack.c.l.b16 %v1018
    %v5564 = vunpack.c.h.b16 %v1018
    %v5565 = vunpack.c.l.b16 %v1019
    %v5566 = vunpack.c.h.b16 %v1019
    %v5567 = vunpack.c.l.b16 %v1020
    %v5568 = vunpack.c.h.b16 %v1020
    %v5569 = vunpack.c.l.b16 %v1021
    %v5570 = vunpack.c.h.b16 %v1021
    %v5571 = vunpack.c.l.b16 %v1022
    %v5572 = vunpack.c.h.b16 %v1022
    %v5573 = vunpack.c.l.b16 %v1023
    %v5574 = vunpack.c.h.b16 %v1023
    %v5575 = vunpack.c.l.b16 %v1024
    %v5576 = vunpack.c.h.b16 %v1024
    %v5577 = vunpack.c.l.b16 %v1025
    %v5578 = vunpack.c.h.b16 %v1025
    %v5579 = vunpack.c.l.b16 %v1026
    %v5580 = vunpack.c.h.b16 %v1026
    %v5581 = vunpack.c.l.b16 %v1027
    %v5582 = vunpack.c.h.b16 %v1027
    %v5583 = vunpack.c.l.b16 %v1028
    %v5584 = vunpack.c.h.b16 %v1028
    %v5585 = vunpack.c.l.b16 %v1029
    %v5586 = vunpack.c.h.b16 %v1029
    %v5587 = vunpack.c.l.b16 %v1030
    %v5588 = vunpack.c.h.b16 %v1030
    %v5589 = vunpack.c.l.b16 %v1031
    %v5590 = vunpack.c.h.b16 %v1031
    %v5591 = vunpack.c.l.b16 %v1032
    %v5592 = vunpack.c.h.b16 %v1032
    %v5593 = vunpack.c.l.b16 %v1033
    %v5594 = vunpack.c.h.b16 %v1033
    %v5595 = vunpack.c.l.b16 %v1034
    %v5596 = vunpack.c.h.b16 %v1034
    %v5597 = vunpack.c.l.b16 %v1035
    %v5598 = vunpack.c.h.b16 %v1035
    %v5599 = vunpack.c.l.b16 %v1036
    %v5600 = vunpack.c.h.b16 %v1036
    %v5601 = vunpack.c.l.b16 %v1037
    %v5602 = vunpack.c.h.b16 %v1037
    %v5603 = vunpack.c.l.b16 %v1038
    %v5604 = vunpack.c.h.b16 %v1038
    %v5605 = vunpack.c.l.b16 %v1039
    %v5606 = vunpack.c.h.b16 %v1039
    %v5607 = vunpack.c.l.b16 %v1040
    %v5608 = vunpack.c.h.b16 %v1040
    %v5609 = vunpack.c.l.b16 %v1041
    %v5610 = vunpack.c.h.b16 %v1041
    %v5611 = vunpack.c.l.b16 %v1042
    %v5612 = vunpack.c.h.b16 %v1042
    %v5613 = vunpack.c.l.b16 %v1043
    %v5614 = vunpack.c.h.b16 %v1043
    %v5615 = vunpack.c.l.b16 %v1044
    %v5616 = vunpack.c.h.b16 %v1044
    %v5617 = vunpack.c.l.b16 %v1045
    %v5618 = vunpack.c.h.b16 %v1045
    %v5619 = vunpack.c.l.b16 %v1046
    %v5620 = vunpack.c.h.b16 %v1046
    %v5621 = vunpack.c.l.b16 %v1047
    %v5622 = vunpack.c.h.b16 %v1047
    %v5623 = vunpack.c.l.b16 %v1048
    %v5624 = vunpack.c.h.b16 %v1048
    %v5625 = vunpack.c.l.b16 %v1049
    %v5626 = vunpack.c.h.b16 %v1049
    %v5627 = vunpack.c.l.b16 %v1050
    %v5628 = vunpack.c.h.b16 %v1050
    %v5629 = vunpack.c.l.b16 %v1051
    %v5630 = vunpack.c.h.b16 %v1051
    %v5631 = vunpack.c.l.b16 %v1052
    %v5632 = vunpack.c.h.b16 %v1052
    %v5633 = vunpack.c.l.b16 %v1053
    %v5634 = vunpack.c.h.b16 %v1053
    %v5635 = vunpack.c.l.b16 %v1054
    %v5636 = vunpack.c.h.b16 %v1054
    %v5637 = vunpack.c.l.b16 %v1055
    %v5638 = vunpack.c.h.b16 %v1055
    %v5639 = vunpack.c.l.b16 %v1056
    %v5640 = vunpack.c.h.b16 %v1056
    %v5641 = vunpack.c.l.b16 %v1057
    %v5642 = vunpack.c.h.b16 %v1057
    %v5643 = vunpack.c.l.b16 %v1058
    %v5644 = vunpack.c.h.b16 %v1058
    %v5645 = vunpack.c.l.b16 %v1059
    %v5646 = vunpack.c.h.b16 %v1059
    %v5647 = vunpack.c.l.b16 %v1060
    %v5648 = vunpack.c.h.b16 %v1060
    %v5649 = vunpack.c.l.b16 %v1061
    %v5650 = vunpack.c.h.b16 %v1061
    %v5651 = vunpack.c.l.b16 %v1062
    %v5652 = vunpack.c.h.b16 %v1062
    %v5653 = vunpack.c.l.b16 %v1063
    %v5654 = vunpack.c.h.b16 %v1063
    %v5655 = vunpack.c.l.b16 %v1064
    %v5656 = vunpack.c.h.b16 %v1064
    %v5657 = vunpack.c.l.b16 %v1065
    %v5658 = vunpack.c.h.b16 %v1065
    %v5659 = vunpack.c.l.b16 %v1066
    %v5660 = vunpack.c.h.b16 %v1066
    %v5661 = vunpack.c.l.b16 %v1067
    %v5662 = vunpack.c.h.b16 %v1067
    %v5663 = vunpack.c.l.b16 %v1068
    %v5664 = vunpack.c.h.b16 %v1068
    %v5665 = vunpack.c.l.b16 %v1069
    %v5666 = vunpack.c.h.b16 %v1069
    %v5667 = vunpack.c.l.b16 %v1070
    %v5668 = vunpack.c.h.b16 %v1070
    %v5669 = vunpack.c.l.b16 %v1071
    %v5670 = vunpack.c.h.b16 %v1071
    %v5671 = vunpack.c.l.b16 %v1072
    %v5672 = vunpack.c.h.b16 %v1072
    %v5673 = vunpack.c.l.b16 %v1073
    %v5674 = vunpack.c.h.b16 %v1073
    %v5675 = vunpack.c.l.b16 %v1074
    %v5676 = vunpack.c.h.b16 %v1074
    %v5677 = vunpack.c.l.b16 %v1075
    %v5678 = vunpack.c.h.b16 %v1075
    %v5679 = vunpack.c.l.b16 %v1076
    %v5680 = vunpack.c.h.b16 %v1076
    %v5681 = vunpack.c.l.b16 %v1077
    %v5682 = vunpack.c.h.b16 %v1077
    %v5683 = vunpack.c.l.b16 %v1078
    %v5684 = vunpack.c.h.b16 %v1078
    %v5685 = vunpack.c.l.b16 %v1079
    %v5686 = vunpack.c.h.b16 %v1079
    %v5687 = vunpack.c.l.b16 %v1080
    %v5688 = vunpack.c.h.b16 %v1080
    %v5689 = vunpack.c.l.b16 %v1081
    %v5690 = vunpack.c.h.b16 %v1081
    %v5691 = vunpack.c.l.b16 %v1082
    %v5692 = vunpack.c.h.b16 %v1082
    %v5693 = vunpack.c.l.b16 %v1083
    %v5694 = vunpack.c.h.b16 %v1083
    %v5695 = vunpack.c.l.b16 %v1084
    %v5696 = vunpack.c.h.b16 %v1084
    %v5697 = vunpack.c.l.b16 %v1085
    %v5698 = vunpack.c.h.b16 %v1085
    %v5699 = vunpack.c.l.b16 %v1086
    %v5700 = vunpack.c.h.b16 %v1086
    %v5701 = vunpack.c.l.b16 %v1087
    %v5702 = vunpack.c.h.b16 %v1087
    %v5703 = vunpack.c.l.b16 %v1088
    %v5704 = vunpack.c.h.b16 %v1088
    %v5705 = vunpack.c.l.b16 %v1089
    %v5706 = vunpack.c.h.b16 %v1089
    %v5707 = vunpack.c.l.b16 %v1090
    %v5708 = vunpack.c.h.b16 %v1090
    %v5709 = vunpack.c.l.b16 %v1091
    %v5710 = vunpack.c.h.b16 %v1091
    %v5711 = vunpack.c.l.b16 %v1092
    %v5712 = vunpack.c.h.b16 %v1092
    %v5713 = vunpack.c.l.b16 %v1093
    %v5714 = vunpack.c.h.b16 %v1093
    %v5715 = vunpack.c.l.b16 %v1094
    %v5716 = vunpack.c.h.b16 %v1094
    %v5717 = vunpack.c.l.b16 %v1095
    %v5718 = vunpack.c.h.b16 %v1095
    %v5719 = vunpack.c.l.b16 %v1096
    %v5720 = vunpack.c.h.b16 %v1096
    %v5721 = vunpack.c.l.b16 %v1097
    %v5722 = vunpack.c.h.b16 %v1097
    %v5723 = vunpack.c.l.b16 %v1098
    %v5724 = vunpack.c.h.b16 %v1098
    %v5725 = vunpack.c.l.b16 %v1099
    %v5726 = vunpack.c.h.b16 %v1099
    %v5727 = vunpack.c.l.b16 %v1100
    %v5728 = vunpack.c.h.b16 %v1100
    %v5729 = vunpack.c.l.b16 %v1101
    %v5730 = vunpack.c.h.b16 %v1101
    %v5731 = vunpack.c.l.b16 %v1102
    %v5732 = vunpack.c.h.b16 %v1102
    %v5733 = vunpack.c.l.b16 %v1103
    %v5734 = vunpack.c.h.b16 %v1103
    %v5735 = vunpack.c.l.b16 %v1104
    %v5736 = vunpack.c.h.b16 %v1104
    %v5737 = vunpack.c.l.b16 %v1105
    %v5738 = vunpack.c.h.b16 %v1105
    %v5739 = vunpack.c.l.b16 %v1106
    %v5740 = vunpack.c.h.b16 %v1106
    %v5741 = vunpack.c.l.b16 %v1107
    %v5742 = vunpack.c.h.b16 %v1107
    %v5743 = vunpack.c.l.b16 %v1108
    %v5744 = vunpack.c.h.b16 %v1108
    %v5745 = vunpack.c.l.b16 %v1109
    %v5746 = vunpack.c.h.b16 %v1109
    %v5747 = vunpack.c.l.b16 %v1110
    %v5748 = vunpack.c.h.b16 %v1110
    %v5749 = vunpack.c.l.b16 %v1111
    %v5750 = vunpack.c.h.b16 %v1111
    %v5751 = vunpack.c.l.b16 %v1112
    %v5752 = vunpack.c.h.b16 %v1112
    %v5753 = vunpack.c.l.b16 %v1113
    %v5754 = vunpack.c.h.b16 %v1113
    %v5755 = vunpack.c.l.b16 %v1114
    %v5756 = vunpack.c.h.b16 %v1114
    %v5757 = vunpack.c.l.b16 %v1115
    %v5758 = vunpack.c.h.b16 %v1115
    %v5759 = vunpack.c.l.b16 %v1116
    %v5760 = vunpack.c.h.b16 %v1116
    %v5761 = vunpack.c.l.b16 %v1117
    %v5762 = vunpack.c.h.b16 %v1117
    %v5763 = vunpack.c.l.b16 %v1118
    %v5764 = vunpack.c.h.b16 %v1118
    %v5765 = vunpack.c.l.b16 %v1119
    %v5766 = vunpack.c.h.b16 %v1119
    %v5767 = vunpack.c.l.b16 %v1120
    %v5768 = vunpack.c.h.b16 %v1120
    %v5769 = vunpack.c.l.b16 %v1121
    %v5770 = vunpack.c.h.b16 %v1121
    %v5771 = vunpack.c.l.b16 %v1122
    %v5772 = vunpack.c.h.b16 %v1122
    %v5773 = vunpack.c.l.b16 %v1123
    %v5774 = vunpack.c.h.b16 %v1123
    %v5775 = vunpack.c.l.b16 %v1124
    %v5776 = vunpack.c.h.b16 %v1124
    %v5777 = vunpack.c.l.b16 %v1125
    %v5778 = vunpack.c.h.b16 %v1125
    %v5779 = vunpack.c.l.b16 %v1126
    %v5780 = vunpack.c.h.b16 %v1126
    %v5781 = vunpack.c.l.b16 %v1127
    %v5782 = vunpack.c.h.b16 %v1127
    %v5783 = vunpack.c.l.b16 %v1128
    %v5784 = vunpack.c.h.b16 %v1128
    %v5785 = vunpack.c.l.b16 %v1129
    %v5786 = vunpack.c.h.b16 %v1129
    %v5787 = vunpack.c.l.b16 %v1130
    %v5788 = vunpack.c.h.b16 %v1130
    %v5789 = vunpack.c.l.b16 %v1131
    %v5790 = vunpack.c.h.b16 %v1131
    %v5791 = vunpack.c.l.b16 %v1132
    %v5792 = vunpack.c.h.b16 %v1132
    %v5793 = vunpack.c.l.b16 %v1133
    %v5794 = vunpack.c.h.b16 %v1133
    %v5795 = vunpack.c.l.b16 %v1134
    %v5796 = vunpack.c.h.b16 %v1134
    %v5797 = vunpack.c.l.b16 %v1135
    %v5798 = vunpack.c.h.b16 %v1135
    %v5799 = vunpack.c.l.b16 %v1136
    %v5800 = vunpack.c.h.b16 %v1136
    %v5801 = vunpack.c.l.b16 %v1137
    %v5802 = vunpack.c.h.b16 %v1137
    %v5803 = vunpack.c.l.b16 %v1138
    %v5804 = vunpack.c.h.b16 %v1138
    %v5805 = vunpack.c.l.b16 %v1139
    %v5806 = vunpack.c.h.b16 %v1139
    %v5807 = vunpack.c.l.b16 %v1140
    %v5808 = vunpack.c.h.b16 %v1140
    %v5809 = vunpack.c.l.b16 %v1141
    %v5810 = vunpack.c.h.b16 %v1141
    %v5811 = vunpack.c.l.b16 %v1142
    %v5812 = vunpack.c.h.b16 %v1142
    %v5813 = vunpack.c.l.b16 %v1143
    %v5814 = vunpack.c.h.b16 %v1143
    %v5815 = vunpack.c.l.b16 %v1144
    %v5816 = vunpack.c.h.b16 %v1144
    %v5817 = vunpack.c.l.b16 %v1145
    %v5818 = vunpack.c.h.b16 %v1145
    %v5819 = vunpack.c.l.b16 %v1146
    %v5820 = vunpack.c.h.b16 %v1146
    %v5821 = vunpack.c.l.b16 %v1147
    %v5822 = vunpack.c.h.b16 %v1147
    %v5823 = vunpack.c.l.b16 %v1148
    %v5824 = vunpack.c.h.b16 %v1148
    %v5825 = vunpack.c.l.b16 %v1149
    %v5826 = vunpack.c.h.b16 %v1149
    %v5827 = vunpack.c.l.b16 %v1150
    %v5828 = vunpack.c.h.b16 %v1150
    %v5829 = vunpack.c.l.b16 %v1151
    %v5830 = vunpack.c.h.b16 %v1151
    %v5831 = vunpack.c.l.b16 %v1152
    %v5832 = vunpack.c.h.b16 %v1152
    %v5833 = vunpack.c.l.b16 %v1153
    %v5834 = vunpack.c.h.b16 %v1153
    %v5835 = vunpack.c.l.b16 %v1154
    %v5836 = vunpack.c.h.b16 %v1154
    %v5837 = vunpack.c.l.b16 %v1155
    %v5838 = vunpack.c.h.b16 %v1155
    %v5839 = vunpack.c.l.b16 %v1156
    %v5840 = vunpack.c.h.b16 %v1156
    %v5841 = vunpack.c.l.b16 %v1157
    %v5842 = vunpack.c.h.b16 %v1157
    %v5843 = vunpack.c.l.b16 %v1158
    %v5844 = vunpack.c.h.b16 %v1158
    %v5845 = vunpack.c.l.b16 %v1159
    %v5846 = vunpack.c.h.b16 %v1159
    %v5847 = vunpack.c.l.b16 %v1160
    %v5848 = vunpack.c.h.b16 %v1160
    %v5849 = vunpack.c.l.b16 %v1161
    %v5850 = vunpack.c.h.b16 %v1161
    %v5851 = vunpack.c.l.b16 %v1162
    %v5852 = vunpack.c.h.b16 %v1162
    %v5853 = vunpack.c.l.b16 %v1163
    %v5854 = vunpack.c.h.b16 %v1163
    %v5855 = vunpack.c.l.b16 %v1164
    %v5856 = vunpack.c.h.b16 %v1164
    %v5857 = vunpack.c.l.b16 %v1165
    %v5858 = vunpack.c.h.b16 %v1165
    %v5859 = vunpack.c.l.b16 %v1166
    %v5860 = vunpack.c.h.b16 %v1166
    %v5861 = vunpack.c.l.b16 %v1167
    %v5862 = vunpack.c.h.b16 %v1167
    %v5863 = vunpack.c.l.b16 %v1168
    %v5864 = vunpack.c.h.b16 %v1168
    %v5865 = vunpack.c.l.b16 %v1169
    %v5866 = vunpack.c.h.b16 %v1169
    %v5867 = vunpack.c.l.b16 %v1170
    %v5868 = vunpack.c.h.b16 %v1170
    %v5869 = vunpack.c.l.b16 %v1171
    %v5870 = vunpack.c.h.b16 %v1171
    %v5871 = vunpack.c.l.b16 %v1172
    %v5872 = vunpack.c.h.b16 %v1172
    %v5873 = vunpack.c.l.b16 %v1173
    %v5874 = vunpack.c.h.b16 %v1173
    %v5875 = vunpack.c.l.b16 %v1174
    %v5876 = vunpack.c.h.b16 %v1174
    %v5877 = vunpack.c.l.b16 %v1175
    %v5878 = vunpack.c.h.b16 %v1175
    %v5879 = vunpack.c.l.b16 %v1176
    %v5880 = vunpack.c.h.b16 %v1176
    %v5881 = vunpack.c.l.b16 %v1177
    %v5882 = vunpack.c.h.b16 %v1177
    %v5883 = vunpack.c.l.b16 %v1178
    %v5884 = vunpack.c.h.b16 %v1178
    %v5885 = vunpack.c.l.b16 %v1179
    %v5886 = vunpack.c.h.b16 %v1179
    %v5887 = vunpack.c.l.b16 %v1180
    %v5888 = vunpack.c.h.b16 %v1180
    %v5889 = vunpack.c.l.b16 %v1181
    %v5890 = vunpack.c.h.b16 %v1181
    %v5891 = vunpack.c.l.b16 %v1182
    %v5892 = vunpack.c.h.b16 %v1182
    %v5893 = vunpack.c.l.b16 %v1183
    %v5894 = vunpack.c.h.b16 %v1183
    %v5895 = vunpack.c.l.b16 %v1184
    %v5896 = vunpack.c.h.b16 %v1184
    %v5897 = vunpack.c.l.b16 %v1185
    %v5898 = vunpack.c.h.b16 %v1185
    %v5899 = vunpack.c.l.b16 %v1186
    %v5900 = vunpack.c.h.b16 %v1186
    %v5901 = vunpack.c.l.b16 %v1187
    %v5902 = vunpack.c.h.b16 %v1187
    %v5903 = vunpack.c.l.b16 %v1188
    %v5904 = vunpack.c.h.b16 %v1188
    %v5905 = vunpack.c.l.b16 %v1189
    %v5906 = vunpack.c.h.b16 %v1189
    %v5907 = vunpack.c.l.b16 %v1190
    %v5908 = vunpack.c.h.b16 %v1190
    %v5909 = vunpack.c.l.b16 %v1191
    %v5910 = vunpack.c.h.b16 %v1191
    %v5911 = vunpack.c.l.b16 %v1192
    %v5912 = vunpack.c.h.b16 %v1192
    %v5913 = vunpack.c.l.b16 %v1193
    %v5914 = vunpack.c.h.b16 %v1193
    %v5915 = vunpack.c.l.b16 %v1194
    %v5916 = vunpack.c.h.b16 %v1194
    %v5917 = vunpack.c.l.b16 %v1195
    %v5918 = vunpack.c.h.b16 %v1195
    %v5919 = vunpack.c.l.b16 %v1196
    %v5920 = vunpack.c.h.b16 %v1196
    %v5921 = vunpack.c.l.b16 %v1197
    %v5922 = vunpack.c.h.b16 %v1197
    %v5923 = vunpack.c.l.b16 %v1198
    %v5924 = vunpack.c.h.b16 %v1198
    %v5925 = vunpack.c.l.b16 %v1199
    %v5926 = vunpack.c.h.b16 %v1199
    %v5927 = vunpack.c.l.b16 %v1200
    %v5928 = vunpack.c.h.b16 %v1200
    %v5929 = vunpack.c.l.b16 %v1201
    %v5930 = vunpack.c.h.b16 %v1201
    %v5931 = vunpack.c.l.b16 %v1202
    %v5932 = vunpack.c.h.b16 %v1202
    %v5933 = vunpack.c.l.b16 %v1203
    %v5934 = vunpack.c.h.b16 %v1203
    %v5935 = vunpack.c.l.b16 %v1204
    %v5936 = vunpack.c.h.b16 %v1204
    %v5937 = vunpack.c.l.b16 %v1205
    %v5938 = vunpack.c.h.b16 %v1205
    %v5939 = vunpack.c.l.b16 %v1206
    %v5940 = vunpack.c.h.b16 %v1206
    %v5941 = vunpack.c.l.b16 %v1207
    %v5942 = vunpack.c.h.b16 %v1207
    %v5943 = vunpack.c.l.b16 %v1208
    %v5944 = vunpack.c.h.b16 %v1208
    %v5945 = vunpack.c.l.b16 %v1209
    %v5946 = vunpack.c.h.b16 %v1209
    %v5947 = vunpack.c.l.b16 %v1210
    %v5948 = vunpack.c.h.b16 %v1210
    %v5949 = vunpack.c.l.b16 %v1211
    %v5950 = vunpack.c.h.b16 %v1211
    %v5951 = vunpack.c.l.b16 %v1212
    %v5952 = vunpack.c.h.b16 %v1212
    %v5953 = vunpack.c.l.b16 %v1213
    %v5954 = vunpack.c.h.b16 %v1213
    %v5955 = vunpack.c.l.b16 %v1214
    %v5956 = vunpack.c.h.b16 %v1214
    %v5957 = vunpack.c.l.b16 %v1215
    %v5958 = vunpack.c.h.b16 %v1215
    %v5959 = vunpack.c.l.b16 %v1216
    %v5960 = vunpack.c.h.b16 %v1216
    %v5961 = vunpack.c.l.b16 %v1217
    %v5962 = vunpack.c.h.b16 %v1217
    %v5963 = vunpack.c.l.b16 %v1218
    %v5964 = vunpack.c.h.b16 %v1218
    %v5965 = vunpack.c.l.b16 %v1219
    %v5966 = vunpack.c.h.b16 %v1219
    %v5967 = vunpack.c.l.b16 %v1220
    %v5968 = vunpack.c.h.b16 %v1220
    %v5969 = vunpack.c.l.b16 %v1221
    %v5970 = vunpack.c.h.b16 %v1221
    %v5971 = vunpack.c.l.b16 %v1222
    %v5972 = vunpack.c.h.b16 %v1222
    %v5973 = vunpack.c.l.b16 %v1223
    %v5974 = vunpack.c.h.b16 %v1223
    %v5975 = vunpack.c.l.b16 %v1224
    %v5976 = vunpack.c.h.b16 %v1224
    %v5977 = vunpack.c.l.b16 %v1225
    %v5978 = vunpack.c.h.b16 %v1225
    %v5979 = vunpack.c.l.b16 %v1226
    %v5980 = vunpack.c.h.b16 %v1226
    %v5981 = vunpack.c.l.b16 %v1227
    %v5982 = vunpack.c.h.b16 %v1227
    %v5983 = vunpack.c.l.b16 %v1228
    %v5984 = vunpack.c.h.b16 %v1228
    %v5985 = vunpack.c.l.b16 %v1229
    %v5986 = vunpack.c.h.b16 %v1229
    %v5987 = vunpack.c.l.b16 %v1230
    %v5988 = vunpack.c.h.b16 %v1230
    %v5989 = vunpack.c.l.b16 %v1231
    %v5990 = vunpack.c.h.b16 %v1231
    %v5991 = vunpack.c.l.b16 %v1232
    %v5992 = vunpack.c.h.b16 %v1232
    %v5993 = vunpack.c.l.b16 %v1233
    %v5994 = vunpack.c.h.b16 %v1233
    %v5995 = vunpack.c.l.b16 %v1234
    %v5996 = vunpack.c.h.b16 %v1234
    %v5997 = vunpack.c.l.b16 %v1235
    %v5998 = vunpack.c.h.b16 %v1235
    %v5999 = vunpack.c.l.b16 %v1236
    %v6000 = vunpack.c.h.b16 %v1236
    %v6001 = vunpack.c.l.b16 %v1237
    %v6002 = vunpack.c.h.b16 %v1237
    %v6003 = vunpack.c.l.b16 %v1238
    %v6004 = vunpack.c.h.b16 %v1238
    %v6005 = vunpack.c.l.b16 %v1239
    %v6006 = vunpack.c.h.b16 %v1239
    %v6007 = vunpack.c.l.b16 %v1240
    %v6008 = vunpack.c.h.b16 %v1240
    %v6009 = vunpack.c.l.b16 %v1241
    %v6010 = vunpack.c.h.b16 %v1241
    %v6011 = vunpack.c.l.b16 %v1242
    %v6012 = vunpack.c.h.b16 %v1242
    %v6013 = vunpack.c.l.b16 %v1243
    %v6014 = vunpack.c.h.b16 %v1243
    %v6015 = vunpack.c.l.b16 %v1244
    %v6016 = vunpack.c.h.b16 %v1244
    %v6017 = vunpack.c.l.b16 %v1245
    %v6018 = vunpack.c.h.b16 %v1245
    %v6019 = vunpack.c.l.b16 %v1246
    %v6020 = vunpack.c.h.b16 %v1246
    %v6021 = vunpack.c.l.b16 %v1247
    %v6022 = vunpack.c.h.b16 %v1247
    %v6023 = vunpack.c.l.b16 %v1248
    %v6024 = vunpack.c.h.b16 %v1248
    %v6025 = vunpack.c.l.b16 %v1249
    %v6026 = vunpack.c.h.b16 %v1249
    %v6027 = vunpack.c.l.b16 %v1250
    %v6028 = vunpack.c.h.b16 %v1250
    %v6029 = vunpack.c.l.b16 %v1251
    %v6030 = vunpack.c.h.b16 %v1251
    %v6031 = vunpack.c.l.b16 %v1252
    %v6032 = vunpack.c.h.b16 %v1252
    %v6033 = vunpack.c.l.b16 %v1253
    %v6034 = vunpack.c.h.b16 %v1253
    %v6035 = vunpack.c.l.b16 %v1254
    %v6036 = vunpack.c.h.b16 %v1254
    %v6037 = vunpack.c.l.b16 %v1255
    %v6038 = vunpack.c.h.b16 %v1255
    %v6039 = vunpack.c.l.b16 %v1256
    %v6040 = vunpack.c.h.b16 %v1256
    %v6041 = vunpack.c.l.b16 %v1257
    %v6042 = vunpack.c.h.b16 %v1257
    %v6043 = vunpack.c.l.b16 %v1258
    %v6044 = vunpack.c.h.b16 %v1258
    %v6045 = vunpack.c.l.b16 %v1259
    %v6046 = vunpack.c.h.b16 %v1259
    %v6047 = vunpack.c.l.b16 %v1260
    %v6048 = vunpack.c.h.b16 %v1260
    %v6049 = vunpack.c.l.b16 %v1261
    %v6050 = vunpack.c.h.b16 %v1261
    %v6051 = vunpack.c.l.b16 %v1262
    %v6052 = vunpack.c.h.b16 %v1262
    %v6053 = vunpack.c.l.b16 %v1263
    %v6054 = vunpack.c.h.b16 %v1263
    %v6055 = vunpack.c.l.b16 %v1264
    %v6056 = vunpack.c.h.b16 %v1264
    %v6057 = vunpack.c.l.b16 %v1265
    %v6058 = vunpack.c.h.b16 %v1265
    %v6059 = vunpack.c.l.b16 %v1266
    %v6060 = vunpack.c.h.b16 %v1266
    %v6061 = vunpack.c.l.b16 %v1267
    %v6062 = vunpack.c.h.b16 %v1267
    %v6063 = vunpack.c.l.b16 %v1268
    %v6064 = vunpack.c.h.b16 %v1268
    %v6065 = vunpack.c.l.b16 %v1269
    %v6066 = vunpack.c.h.b16 %v1269
    %v6067 = vunpack.c.l.b16 %v1270
    %v6068 = vunpack.c.h.b16 %v1270
    %v6069 = vunpack.c.l.b16 %v1271
    %v6070 = vunpack.c.h.b16 %v1271
    %v6071 = vunpack.c.l.b16 %v1272
    %v6072 = vunpack.c.h.b16 %v1272
    %v6073 = vunpack.c.l.b16 %v1273
    %v6074 = vunpack.c.h.b16 %v1273
    %v6075 = vunpack.c.l.b16 %v1274
    %v6076 = vunpack.c.h.b16 %v1274
    %v6077 = vunpack.c.l.b16 %v1275
    %v6078 = vunpack.c.h.b16 %v1275
    %v6079 = vunpack.c.l.b16 %v1276
    %v6080 = vunpack.c.h.b16 %v1276
    %v6081 = vunpack.c.l.b16 %v1277
    %v6082 = vunpack.c.h.b16 %v1277
    %v6083 = vunpack.c.l.b16 %v1278
    %v6084 = vunpack.c.h.b16 %v1278
    %v6085 = vunpack.c.l.b16 %v1279
    %v6086 = vunpack.c.h.b16 %v1279
    %v6087 = vunpack.c.l.b16 %v1280
    %v6088 = vunpack.c.h.b16 %v1280
    %v6089 = vunpack.c.l.b16 %v1281
    %v6090 = vunpack.c.h.b16 %v1281
    %v6091 = vunpack.c.l.b16 %v1282
    %v6092 = vunpack.c.h.b16 %v1282
    %v6093 = vunpack.c.l.b16 %v1283
    %v6094 = vunpack.c.h.b16 %v1283
    %v6095 = vunpack.c.l.b16 %v1284
    %v6096 = vunpack.c.h.b16 %v1284
    %v6097 = vunpack.c.l.b16 %v1285
    %v6098 = vunpack.c.h.b16 %v1285
    %v6099 = vunpack.c.l.b16 %v1286
    %v6100 = vunpack.c.h.b16 %v1286
    %v6101 = vunpack.c.l.b16 %v1287
    %v6102 = vunpack.c.h.b16 %v1287
    %v6103 = vunpack.c.l.b16 %v1288
    %v6104 = vunpack.c.h.b16 %v1288
    %v6105 = vunpack.c.l.b16 %v1289
    %v6106 = vunpack.c.h.b16 %v1289
    %v6107 = vunpack.c.l.b16 %v1290
    %v6108 = vunpack.c.h.b16 %v1290
    %v6109 = vunpack.c.l.b16 %v1291
    %v6110 = vunpack.c.h.b16 %v1291
    %v6111 = vunpack.c.l.b16 %v1292
    %v6112 = vunpack.c.h.b16 %v1292
    %v6113 = vunpack.c.l.b16 %v1293
    %v6114 = vunpack.c.h.b16 %v1293
    %v6115 = vunpack.c.l.b16 %v1294
    %v6116 = vunpack.c.h.b16 %v1294
    %v6117 = vunpack.c.l.b16 %v1295
    %v6118 = vunpack.c.h.b16 %v1295
    %v6119 = vunpack.c.l.b16 %v1296
    %v6120 = vunpack.c.h.b16 %v1296
    %v6121 = vunpack.c.l.b16 %v1297
    %v6122 = vunpack.c.h.b16 %v1297
    %v6123 = vunpack.c.l.b16 %v1298
    %v6124 = vunpack.c.h.b16 %v1298
    %v6125 = vunpack.c.l.b16 %v1299
    %v6126 = vunpack.c.h.b16 %v1299
    %v6127 = vunpack.c.l.b16 %v1300
    %v6128 = vunpack.c.h.b16 %v1300
    %v6129 = vunpack.c.l.b16 %v1301
    %v6130 = vunpack.c.h.b16 %v1301
    %v6131 = vunpack.c.l.b16 %v1302
    %v6132 = vunpack.c.h.b16 %v1302
    %v6133 = vunpack.c.l.b16 %v1303
    %v6134 = vunpack.c.h.b16 %v1303
    %v6135 = vunpack.c.l.b16 %v1304
    %v6136 = vunpack.c.h.b16 %v1304
    %v6137 = vunpack.c.l.b16 %v1305
    %v6138 = vunpack.c.h.b16 %v1305
    %v6139 = vunpack.c.l.b16 %v1306
    %v6140 = vunpack.c.h.b16 %v1306
    %v6141 = vunpack.c.l.b16 %v1307
    %v6142 = vunpack.c.h.b16 %v1307
    %v6143 = vunpack.c.l.b16 %v1308
    %v6144 = vunpack.c.h.b16 %v1308
    %v6145 = vunpack.c.l.b16 %v1309
    %v6146 = vunpack.c.h.b16 %v1309
    %v6147 = vunpack.c.l.b16 %v1310
    %v6148 = vunpack.c.h.b16 %v1310
    %v6149 = vunpack.c.l.b16 %v1311
    %v6150 = vunpack.c.h.b16 %v1311
    %v6151 = vunpack.c.l.b16 %v1312
    %v6152 = vunpack.c.h.b16 %v1312
    %v6153 = vunpack.c.l.b16 %v1313
    %v6154 = vunpack.c.h.b16 %v1313
    %v6155 = vunpack.c.l.b16 %v1314
    %v6156 = vunpack.c.h.b16 %v1314
    %v6157 = vunpack.c.l.b16 %v1315
    %v6158 = vunpack.c.h.b16 %v1315
    %v6159 = vunpack.c.l.b16 %v1316
    %v6160 = vunpack.c.h.b16 %v1316
    %v6161 = vunpack.c.l.b16 %v1317
    %v6162 = vunpack.c.h.b16 %v1317
    %v6163 = vunpack.c.l.b16 %v1318
    %v6164 = vunpack.c.h.b16 %v1318
    %v6165 = vunpack.c.l.b16 %v1319
    %v6166 = vunpack.c.h.b16 %v1319
    %v6167 = vunpack.c.l.b16 %v1320
    %v6168 = vunpack.c.h.b16 %v1320
    %v6169 = vunpack.c.l.b16 %v1321
    %v6170 = vunpack.c.h.b16 %v1321
    %v6171 = vunpack.c.l.b16 %v1322
    %v6172 = vunpack.c.h.b16 %v1322
    %v6173 = vunpack.c.l.b16 %v1323
    %v6174 = vunpack.c.h.b16 %v1323
    %v6175 = vunpack.c.l.b16 %v1324
    %v6176 = vunpack.c.h.b16 %v1324
    %v6177 = vunpack.c.l.b16 %v1325
    %v6178 = vunpack.c.h.b16 %v1325
    %v6179 = vunpack.c.l.b16 %v1326
    %v6180 = vunpack.c.h.b16 %v1326
    %v6181 = vunpack.c.l.b16 %v1327
    %v6182 = vunpack.c.h.b16 %v1327
    %v6183 = vunpack.c.l.b16 %v1328
    %v6184 = vunpack.c.h.b16 %v1328
    %v6185 = vunpack.c.l.b16 %v1329
    %v6186 = vunpack.c.h.b16 %v1329
    %v6187 = vunpack.c.l.b16 %v1330
    %v6188 = vunpack.c.h.b16 %v1330
    %v6189 = vunpack.c.l.b16 %v1331
    %v6190 = vunpack.c.h.b16 %v1331
    %v6191 = vunpack.c.l.b16 %v1332
    %v6192 = vunpack.c.h.b16 %v1332
    %v6193 = vunpack.c.l.b16 %v1333
    %v6194 = vunpack.c.h.b16 %v1333
    %v6195 = vunpack.c.l.b16 %v1334
    %v6196 = vunpack.c.h.b16 %v1334
    %v6197 = vunpack.c.l.b16 %v1335
    %v6198 = vunpack.c.h.b16 %v1335
    %v6199 = vunpack.c.l.b16 %v1336
    %v6200 = vunpack.c.h.b16 %v1336
    %v6201 = vunpack.c.l.b16 %v1337
    %v6202 = vunpack.c.h.b16 %v1337
    %v6203 = vunpack.c.l.b16 %v1338
    %v6204 = vunpack.c.h.b16 %v1338
    %v6205 = vunpack.c.l.b16 %v1339
    %v6206 = vunpack.c.h.b16 %v1339
    %v6207 = vunpack.c.l.b16 %v1340
    %v6208 = vunpack.c.h.b16 %v1340
    %v6209 = vunpack.c.l.b16 %v1341
    %v6210 = vunpack.c.h.b16 %v1341
    %v6211 = vunpack.c.l.b16 %v1342
    %v6212 = vunpack.c.h.b16 %v1342
    %v6213 = vunpack.c.l.b16 %v1343
    %v6214 = vunpack.c.h.b16 %v1343
    %v6215 = vunpack.c.l.b16 %v1344
    %v6216 = vunpack.c.h.b16 %v1344
    %v6217 = vunpack.c.l.b16 %v1345
    %v6218 = vunpack.c.h.b16 %v1345
    %v6219 = vunpack.c.l.b16 %v1346
    %v6220 = vunpack.c.h.b16 %v1346
    %v6221 = vunpack.c.l.b16 %v1347
    %v6222 = vunpack.c.h.b16 %v1347
    %v6223 = vunpack.c.l.b16 %v1348
    %v6224 = vunpack.c.h.b16 %v1348
    %v6225 = vunpack.c.l.b16 %v1349
    %v6226 = vunpack.c.h.b16 %v1349
    %v6227 = vunpack.c.l.b16 %v1350
    %v6228 = vunpack.c.h.b16 %v1350
    %v6229 = vunpack.c.l.b16 %v1351
    %v6230 = vunpack.c.h.b16 %v1351
    %v6231 = vunpack.c.l.b16 %v1352
    %v6232 = vunpack.c.h.b16 %v1352
    %v6233 = vunpack.c.l.b16 %v1353
    %v6234 = vunpack.c.h.b16 %v1353
    %v6235 = vunpack.c.l.b16 %v1354
    %v6236 = vunpack.c.h.b16 %v1354
    %v6237 = vunpack.c.l.b16 %v1355
    %v6238 = vunpack.c.h.b16 %v1355
    %v6239 = vunpack.c.l.b16 %v1356
    %v6240 = vunpack.c.h.b16 %v1356
    %v6241 = vunpack.c.l.b16 %v1357
    %v6242 = vunpack.c.h.b16 %v1357
    %v6243 = vunpack.c.l.b16 %v1358
    %v6244 = vunpack.c.h.b16 %v1358
    %v6245 = vunpack.c.l.b16 %v1359
    %v6246 = vunpack.c.h.b16 %v1359
    %v6247 = vunpack.c.l.b16 %v1360
    %v6248 = vunpack.c.h.b16 %v1360
    %v6249 = vunpack.c.l.b16 %v1361
    %v6250 = vunpack.c.h.b16 %v1361
    %v6251 = vunpack.c.l.b16 %v1362
    %v6252 = vunpack.c.h.b16 %v1362
    %v6253 = vunpack.c.l.b16 %v1363
    %v6254 = vunpack.c.h.b16 %v1363
    %v6255 = vunpack.c.l.b16 %v1364
    %v6256 = vunpack.c.h.b16 %v1364
    %v6257 = vunpack.c.l.b16 %v1365
    %v6258 = vunpack.c.h.b16 %v1365
    %v6259 = vunpack.c.l.b16 %v1366
    %v6260 = vunpack.c.h.b16 %v1366
    %v6261 = vunpack.c.l.b16 %v1367
    %v6262 = vunpack.c.h.b16 %v1367
    %v6263 = vunpack.c.l.b16 %v1368
    %v6264 = vunpack.c.h.b16 %v1368
    %v6265 = vunpack.c.l.b16 %v1369
    %v6266 = vunpack.c.h.b16 %v1369
    %v6267 = vunpack.c.l.b16 %v1370
    %v6268 = vunpack.c.h.b16 %v1370
    %v6269 = vunpack.c.l.b16 %v1371
    %v6270 = vunpack.c.h.b16 %v1371
    %v6271 = vunpack.c.l.b16 %v1372
    %v6272 = vunpack.c.h.b16 %v1372
    %v6273 = vunpack.c.l.b16 %v1373
    %v6274 = vunpack.c.h.b16 %v1373
    %v6275 = vunpack.c.l.b16 %v1374
    %v6276 = vunpack.c.h.b16 %v1374
    %v6277 = vunpack.c.l.b16 %v1375
    %v6278 = vunpack.c.h.b16 %v1375
    %v6279 = vunpack.c.l.b16 %v1376
    %v6280 = vunpack.c.h.b16 %v1376
    %v6281 = vunpack.c.l.b16 %v1377
    %v6282 = vunpack.c.h.b16 %v1377
    %v6283 = vunpack.c.l.b16 %v1378
    %v6284 = vunpack.c.h.b16 %v1378
    %v6285 = vunpack.c.l.b16 %v1379
    %v6286 = vunpack.c.h.b16 %v1379
    %v6287 = vunpack.c.l.b16 %v1380
    %v6288 = vunpack.c.h.b16 %v1380
    %v6289 = vunpack.c.l.b16 %v1381
    %v6290 = vunpack.c.h.b16 %v1381
    %v6291 = vunpack.c.l.b16 %v1382
    %v6292 = vunpack.c.h.b16 %v1382
    %v6293 = vunpack.c.l.b16 %v1383
    %v6294 = vunpack.c.h.b16 %v1383
    %v6295 = vunpack.c.l.b16 %v1384
    %v6296 = vunpack.c.h.b16 %v1384
    %v6297 = vunpack.c.l.b16 %v1385
    %v6298 = vunpack.c.h.b16 %v1385
    %v6299 = vunpack.c.l.b16 %v1386
    %v6300 = vunpack.c.h.b16 %v1386
    %v6301 = vunpack.c.l.b16 %v1387
    %v6302 = vunpack.c.h.b16 %v1387
    %v6303 = vunpack.c.l.b16 %v1388
    %v6304 = vunpack.c.h.b16 %v1388
    %v6305 = vunpack.c.l.b16 %v1389
    %v6306 = vunpack.c.h.b16 %v1389
    %v6307 = vunpack.c.l.b16 %v1390
    %v6308 = vunpack.c.h.b16 %v1390
    %v6309 = vunpack.c.l.b16 %v1391
    %v6310 = vunpack.c.h.b16 %v1391
    %v6311 = vunpack.c.l.b16 %v1392
    %v6312 = vunpack.c.h.b16 %v1392
    %v6313 = vunpack.c.l.b16 %v1393
    %v6314 = vunpack.c.h.b16 %v1393
    %v6315 = vunpack.c.l.b16 %v1394
    %v6316 = vunpack.c.h.b16 %v1394
    %v6317 = vunpack.c.l.b16 %v1395
    %v6318 = vunpack.c.h.b16 %v1395
    %v6319 = vunpack.c.l.b16 %v1396
    %v6320 = vunpack.c.h.b16 %v1396
    %v6321 = vunpack.c.l.b16 %v1397
    %v6322 = vunpack.c.h.b16 %v1397
    %v6323 = vunpack.c.l.b16 %v1398
    %v6324 = vunpack.c.h.b16 %v1398
    %v6325 = vunpack.c.l.b16 %v1399
    %v6326 = vunpack.c.h.b16 %v1399
    %v6327 = vunpack.c.l.b16 %v1400
    %v6328 = vunpack.c.h.b16 %v1400
    %v6329 = vunpack.c.l.b16 %v1401
    %v6330 = vunpack.c.h.b16 %v1401
    %v6331 = vunpack.c.l.b16 %v1402
    %v6332 = vunpack.c.h.b16 %v1402
    %v6333 = vunpack.c.l.b16 %v1403
    %v6334 = vunpack.c.h.b16 %v1403
    %v6335 = vunpack.c.l.b16 %v1404
    %v6336 = vunpack.c.h.b16 %v1404
    %v6337 = vunpack.c.l.b16 %v1405
    %v6338 = vunpack.c.h.b16 %v1405
    %v6339 = vunpack.c.l.b16 %v1406
    %v6340 = vunpack.c.h.b16 %v1406
    %v6341 = vunpack.c.l.b16 %v1407
    %v6342 = vunpack.c.h.b16 %v1407
    %v6343 = vunpack.c.l.b16 %v1408
    %v6344 = vunpack.c.h.b16 %v1408
    %v6345 = vunpack.c.l.b16 %v1409
    %v6346 = vunpack.c.h.b16 %v1409
    %v6347 = vunpack.c.l.b16 %v1410
    %v6348 = vunpack.c.h.b16 %v1410
    %v6349 = vunpack.c.l.b16 %v1411
    %v6350 = vunpack.c.h.b16 %v1411
    %v6351 = vunpack.c.l.b16 %v1412
    %v6352 = vunpack.c.h.b16 %v1412
    %v6353 = vunpack.c.l.b16 %v1413
    %v6354 = vunpack.c.h.b16 %v1413
    %v6355 = vunpack.c.l.b16 %v1414
    %v6356 = vunpack.c.h.b16 %v1414
    %v6357 = vunpack.c.l.b16 %v1415
    %v6358 = vunpack.c.h.b16 %v1415
    %v6359 = vunpack.c.l.b16 %v1416
    %v6360 = vunpack.c.h.b16 %v1416
    %v6361 = vunpack.c.l.b16 %v1417
    %v6362 = vunpack.c.h.b16 %v1417
    %v6363 = vunpack.c.l.b16 %v1418
    %v6364 = vunpack.c.h.b16 %v1418
    %v6365 = vunpack.c.l.b16 %v1419
    %v6366 = vunpack.c.h.b16 %v1419
    %v6367 = vunpack.c.l.b16 %v1420
    %v6368 = vunpack.c.h.b16 %v1420
    %v6369 = vunpack.c.l.b16 %v1421
    %v6370 = vunpack.c.h.b16 %v1421
    %v6371 = vunpack.c.l.b16 %v1422
    %v6372 = vunpack.c.h.b16 %v1422
    %v6373 = vunpack.c.l.b16 %v1423
    %v6374 = vunpack.c.h.b16 %v1423
    %v6375 = vunpack.c.l.b16 %v1424
    %v6376 = vunpack.c.h.b16 %v1424
    %v6377 = vunpack.c.l.b16 %v1425
    %v6378 = vunpack.c.h.b16 %v1425
    %v6379 = vunpack.c.l.b16 %v1426
    %v6380 = vunpack.c.h.b16 %v1426
    %v6381 = vunpack.c.l.b16 %v1427
    %v6382 = vunpack.c.h.b16 %v1427
    %v6383 = vunpack.c.l.b16 %v1428
    %v6384 = vunpack.c.h.b16 %v1428
    %v6385 = vunpack.c.l.b16 %v1429
    %v6386 = vunpack.c.h.b16 %v1429
    %v6387 = vunpack.c.l.b16 %v1430
    %v6388 = vunpack.c.h.b16 %v1430
    %v6389 = vunpack.c.l.b16 %v1431
    %v6390 = vunpack.c.h.b16 %v1431
    %v6391 = vunpack.c.l.b16 %v1432
    %v6392 = vunpack.c.h.b16 %v1432
    %v6393 = vunpack.c.l.b16 %v1433
    %v6394 = vunpack.c.h.b16 %v1433
    %v6395 = vunpack.c.l.b16 %v1434
    %v6396 = vunpack.c.h.b16 %v1434
    %v6397 = vunpack.c.l.b16 %v1435
    %v6398 = vunpack.c.h.b16 %v1435
    %v6399 = vunpack.c.l.b16 %v1436
    %v6400 = vunpack.c.h.b16 %v1436
    %v6401 = vunpack.c.l.b16 %v1437
    %v6402 = vunpack.c.h.b16 %v1437
    %v6403 = vunpack.c.l.b16 %v1438
    %v6404 = vunpack.c.h.b16 %v1438
    %v6405 = vunpack.c.l.b16 %v1439
    %v6406 = vunpack.c.h.b16 %v1439
    %v6407 = vunpack.c.l.b16 %v1440
    %v6408 = vunpack.c.h.b16 %v1440
    %v6409 = vunpack.c.l.b16 %v1441
    %v6410 = vunpack.c.h.b16 %v1441
    %v6411 = vunpack.c.l.b16 %v1442
    %v6412 = vunpack.c.h.b16 %v1442
    %v6413 = vunpack.c.l.b16 %v1443
    %v6414 = vunpack.c.h.b16 %v1443
    %v6415 = vunpack.c.l.b16 %v1444
    %v6416 = vunpack.c.h.b16 %v1444
    %v6417 = vunpack.c.l.b16 %v1445
    %v6418 = vunpack.c.h.b16 %v1445
    %v6419 = vunpack.c.l.b16 %v1446
    %v6420 = vunpack.c.h.b16 %v1446
    %v6421 = vunpack.c.l.b16 %v1447
    %v6422 = vunpack.c.h.b16 %v1447
    %v6423 = vunpack.c.l.b16 %v1448
    %v6424 = vunpack.c.h.b16 %v1448
    %v6425 = vunpack.c.l.b16 %v1449
    %v6426 = vunpack.c.h.b16 %v1449
    %v6427 = vunpack.c.l.b16 %v1450
    %v6428 = vunpack.c.h.b16 %v1450
    %v6429 = vunpack.c.l.b16 %v1451
    %v6430 = vunpack.c.h.b16 %v1451
    %v6431 = vunpack.c.l.b16 %v1452
    %v6432 = vunpack.c.h.b16 %v1452
    %v6433 = vunpack.c.l.b16 %v1453
    %v6434 = vunpack.c.h.b16 %v1453
    %v6435 = vunpack.c.l.b16 %v1454
    %v6436 = vunpack.c.h.b16 %v1454
    %v6437 = vunpack.c.l.b16 %v1455
    %v6438 = vunpack.c.h.b16 %v1455
    %v6439 = vunpack.c.l.b16 %v1456
    %v6440 = vunpack.c.h.b16 %v1456
    %v6441 = vunpack.c.l.b16 %v1457
    %v6442 = vunpack.c.h.b16 %v1457
    %v6443 = vunpack.c.l.b16 %v1458
    %v6444 = vunpack.c.h.b16 %v1458
    %v6445 = vunpack.c.l.b16 %v1459
    %v6446 = vunpack.c.h.b16 %v1459
    %v6447 = vunpack.c.l.b16 %v1460
    %v6448 = vunpack.c.h.b16 %v1460
    %v6449 = vunpack.c.l.b16 %v1461
    %v6450 = vunpack.c.h.b16 %v1461
    %v6451 = vunpack.c.l.b16 %v1462
    %v6452 = vunpack.c.h.b16 %v1462
    %v6453 = vunpack.c.l.b16 %v1463
    %v6454 = vunpack.c.h.b16 %v1463
    %v6455 = vunpack.c.l.b16 %v1464
    %v6456 = vunpack.c.h.b16 %v1464
    %v6457 = vunpack.c.l.b16 %v1465
    %v6458 = vunpack.c.h.b16 %v1465
    %v6459 = vunpack.c.l.b16 %v1466
    %v6460 = vunpack.c.h.b16 %v1466
    %v6461 = vunpack.c.l.b16 %v1467
    %v6462 = vunpack.c.h.b16 %v1467
    %v6463 = vunpack.c.l.b16 %v1468
    %v6464 = vunpack.c.h.b16 %v1468
    %v6465 = vunpack.c.l.b16 %v1469
    %v6466 = vunpack.c.h.b16 %v1469
    %v6467 = vunpack.c.l.b16 %v1470
    %v6468 = vunpack.c.h.b16 %v1470
    %v6469 = vunpack.c.l.b16 %v1471
    %v6470 = vunpack.c.h.b16 %v1471
    %v6471 = vunpack.c.l.b16 %v1472
    %v6472 = vunpack.c.h.b16 %v1472
    %v6473 = vunpack.c.l.b16 %v1473
    %v6474 = vunpack.c.h.b16 %v1473
    %v6475 = vunpack.c.l.b16 %v1474
    %v6476 = vunpack.c.h.b16 %v1474
    %v6477 = vunpack.c.l.b16 %v1475
    %v6478 = vunpack.c.h.b16 %v1475
    %v6479 = vunpack.c.l.b16 %v1476
    %v6480 = vunpack.c.h.b16 %v1476
    %v6481 = vunpack.c.l.b16 %v1477
    %v6482 = vunpack.c.h.b16 %v1477
    %v6483 = vunpack.c.l.b16 %v1478
    %v6484 = vunpack.c.h.b16 %v1478
    %v6485 = vunpack.c.l.b16 %v1479
    %v6486 = vunpack.c.h.b16 %v1479
    %v6487 = vunpack.c.l.b16 %v1480
    %v6488 = vunpack.c.h.b16 %v1480
    %v6489 = vunpack.c.l.b16 %v1481
    %v6490 = vunpack.c.h.b16 %v1481
    %v6491 = vunpack.c.l.b16 %v1482
    %v6492 = vunpack.c.h.b16 %v1482
    %v6493 = vunpack.c.l.b16 %v1483
    %v6494 = vunpack.c.h.b16 %v1483
    %v6495 = vunpack.c.l.b16 %v1484
    %v6496 = vunpack.c.h.b16 %v1484
    %v6497 = vunpack.c.l.b16 %v1485
    %v6498 = vunpack.c.h.b16 %v1485
    %v6499 = vunpack.c.l.b16 %v1486
    %v6500 = vunpack.c.h.b16 %v1486
    %v6501 = vunpack.c.l.b16 %v1487
    %v6502 = vunpack.c.h.b16 %v1487
    %v6503 = vunpack.c.l.b16 %v1488
    %v6504 = vunpack.c.h.b16 %v1488
    %v6505 = vunpack.c.l.b16 %v1489
    %v6506 = vunpack.c.h.b16 %v1489
    %v6507 = vunpack.c.l.b16 %v1490
    %v6508 = vunpack.c.h.b16 %v1490
    %v6509 = vunpack.c.l.b16 %v1491
    %v6510 = vunpack.c.h.b16 %v1491
    %v6511 = vunpack.c.l.b16 %v1492
    %v6512 = vunpack.c.h.b16 %v1492
    %v6513 = vunpack.c.l.b16 %v1493
    %v6514 = vunpack.c.h.b16 %v1493
    %v6515 = vunpack.c.l.b16 %v1494
    %v6516 = vunpack.c.h.b16 %v1494
    %v6517 = vunpack.c.l.b16 %v1495
    %v6518 = vunpack.c.h.b16 %v1495
    %v6519 = vunpack.c.l.b16 %v1496
    %v6520 = vunpack.c.h.b16 %v1496
    %v6521 = vunpack.c.l.b16 %v1497
    %v6522 = vunpack.c.h.b16 %v1497
    %v6523 = vunpack.c.l.b16 %v1498
    %v6524 = vunpack.c.h.b16 %v1498
    %v6525 = vunpack.c.l.b16 %v1499
    %v6526 = vunpack.c.h.b16 %v1499
    %v6527 = vunpack.c.l.b16 %v1500
    %v6528 = vunpack.c.h.b16 %v1500
    %v6529 = vunpack.c.l.b16 %v1501
    %v6530 = vunpack.c.h.b16 %v1501
    %v6531 = vunpack.c.l.b16 %v1502
    %v6532 = vunpack.c.h.b16 %v1502
    %v6533 = vunpack.c.l.b16 %v1503
    %v6534 = vunpack.c.h.b16 %v1503
    %v6535 = vunpack.c.l.b16 %v1504
    %v6536 = vunpack.c.h.b16 %v1504
    %v6537 = vunpack.c.l.b16 %v1505
    %v6538 = vunpack.c.h.b16 %v1505
    %v6539 = vunpack.c.l.b16 %v1506
    %v6540 = vunpack.c.h.b16 %v1506
    %v6541 = vunpack.c.l.b16 %v1507
    %v6542 = vunpack.c.h.b16 %v1507
    %v6543 = vunpack.c.l.b16 %v1508
    %v6544 = vunpack.c.h.b16 %v1508
    %v6545 = vunpack.c.l.b16 %v1509
    %v6546 = vunpack.c.h.b16 %v1509
    %v6547 = vunpack.c.l.b16 %v1510
    %v6548 = vunpack.c.h.b16 %v1510
    %v6549 = vunpack.c.l.b16 %v1511
    %v6550 = vunpack.c.h.b16 %v1511
    %v6551 = vunpack.c.l.b16 %v1512
    %v6552 = vunpack.c.h.b16 %v1512
    %v6553 = vunpack.c.l.b16 %v1513
    %v6554 = vunpack.c.h.b16 %v1513
    %v6555 = vunpack.c.l.b16 %v1514
    %v6556 = vunpack.c.h.b16 %v1514
    %v6557 = vunpack.c.l.b16 %v1515
    %v6558 = vunpack.c.h.b16 %v1515
    %v6559 = vunpack.c.l.b16 %v1516
    %v6560 = vunpack.c.h.b16 %v1516
    %v6561 = vunpack.c.l.b16 %v1517
    %v6562 = vunpack.c.h.b16 %v1517
    %v6563 = vunpack.c.l.b16 %v1518
    %v6564 = vunpack.c.h.b16 %v1518
    %v6565 = vunpack.c.l.b16 %v1519
    %v6566 = vunpack.c.h.b16 %v1519
    %v6567 = vunpack.c.l.b16 %v1520
    %v6568 = vunpack.c.h.b16 %v1520
    %v6569 = vunpack.c.l.b16 %v1521
    %v6570 = vunpack.c.h.b16 %v1521
    %v6571 = vunpack.c.l.b16 %v1522
    %v6572 = vunpack.c.h.b16 %v1522
    %v6573 = vunpack.c.l.b16 %v1523
    %v6574 = vunpack.c.h.b16 %v1523
    %v6575 = vunpack.c.l.b16 %v1524
    %v6576 = vunpack.c.h.b16 %v1524
    %v6577 = vunpack.c.l.b16 %v1525
    %v6578 = vunpack.c.h.b16 %v1525
    %v6579 = vunpack.c.l.b16 %v1526
    %v6580 = vunpack.c.h.b16 %v1526
    %v6581 = vunpack.c.l.b16 %v1527
    %v6582 = vunpack.c.h.b16 %v1527
    %v6583 = vunpack.c.l.b16 %v1528
    %v6584 = vunpack.c.h.b16 %v1528
    %v6585 = vunpack.c.l.b16 %v1529
    %v6586 = vunpack.c.h.b16 %v1529
    %v6587 = vunpack.c.l.b16 %v1530
    %v6588 = vunpack.c.h.b16 %v1530
    %v6589 = vunpack.c.l.b16 %v1531
    %v6590 = vunpack.c.h.b16 %v1531
    %v6591 = vunpack.c.l.b16 %v1532
    %v6592 = vunpack.c.h.b16 %v1532
    %v6593 = vunpack.c.l.b16 %v1533
    %v6594 = vunpack.c.h.b16 %v1533
    %v6595 = vunpack.c.l.b16 %v1534
    %v6596 = vunpack.c.h.b16 %v1534
    %v6597 = vunpack.c.l.b16 %v1535
    %v6598 = vunpack.c.h.b16 %v1535
    %v6599 = vunpack.c.l.b16 %v1536
    %v6600 = vunpack.c.h.b16 %v1536
    %v6601 = vunpack.c.l.b16 %v1537
    %v6602 = vunpack.c.h.b16 %v1537
    %v6603 = vunpack.c.l.b16 %v1538
    %v6604 = vunpack.c.h.b16 %v1538
    %v6605 = vunpack.c.l.b16 %v1539
    %v6606 = vunpack.c.h.b16 %v1539
    %v6607 = vunpack.c.l.b16 %v1540
    %v6608 = vunpack.c.h.b16 %v1540
    %v6609 = vunpack.c.l.b16 %v1541
    %v6610 = vunpack.c.h.b16 %v1541
    %v6611 = vunpack.c.l.b16 %v1542
    %v6612 = vunpack.c.h.b16 %v1542
    %v6613 = vunpack.c.l.b16 %v1543
    %v6614 = vunpack.c.h.b16 %v1543
    %v6615 = vunpack.c.l.b16 %v1544
    %v6616 = vunpack.c.h.b16 %v1544
    %v6617 = vunpack.c.l.b16 %v1545
    %v6618 = vunpack.c.h.b16 %v1545
    %v6619 = vunpack.c.l.b16 %v1546
    %v6620 = vunpack.c.h.b16 %v1546
    %v6621 = vunpack.c.l.b16 %v1547
    %v6622 = vunpack.c.h.b16 %v1547
    %v6623 = vunpack.c.l.b16 %v1548
    %v6624 = vunpack.c.h.b16 %v1548
    %v6625 = vunpack.c.l.b16 %v1549
    %v6626 = vunpack.c.h.b16 %v1549
    %v6627 = vunpack.c.l.b16 %v1550
    %v6628 = vunpack.c.h.b16 %v1550
    %v6629 = vunpack.c.l.b16 %v1551
    %v6630 = vunpack.c.h.b16 %v1551
    %v6631 = vunpack.c.l.b16 %v1552
    %v6632 = vunpack.c.h.b16 %v1552
    %v6633 = vunpack.c.l.b16 %v1553
    %v6634 = vunpack.c.h.b16 %v1553
    %v6635 = vunpack.c.l.b16 %v1554
    %v6636 = vunpack.c.h.b16 %v1554
    %v6637 = vunpack.c.l.b16 %v1555
    %v6638 = vunpack.c.h.b16 %v1555
    %v6639 = vunpack.c.l.b16 %v1556
    %v6640 = vunpack.c.h.b16 %v1556
    %v6641 = vunpack.c.l.b16 %v1557
    %v6642 = vunpack.c.h.b16 %v1557
    %v6643 = vunpack.c.l.b16 %v1558
    %v6644 = vunpack.c.h.b16 %v1558
    %v6645 = vunpack.c.l.b16 %v1559
    %v6646 = vunpack.c.h.b16 %v1559
    %v6647 = vunpack.c.l.b16 %v1560
    %v6648 = vunpack.c.h.b16 %v1560
    %v6649 = vunpack.c.l.b16 %v1561
    %v6650 = vunpack.c.h.b16 %v1561
    %v6651 = vunpack.c.l.b16 %v1562
    %v6652 = vunpack.c.h.b16 %v1562
    %v6653 = vunpack.c.l.b16 %v1563
    %v6654 = vunpack.c.h.b16 %v1563
    %v6655 = vunpack.c.l.b16 %v1564
    %v6656 = vunpack.c.h.b16 %v1564
    %v6657 = vunpack.c.l.b16 %v1565
    %v6658 = vunpack.c.h.b16 %v1565
    %v6659 = vunpack.c.l.b16 %v1566
    %v6660 = vunpack.c.h.b16 %v1566
    %v6661 = vunpack.c.l.b16 %v1567
    %v6662 = vunpack.c.h.b16 %v1567
    %v6663 = vunpack.c.l.b16 %v1568
    %v6664 = vunpack.c.h.b16 %v1568
    %v6665 = vunpack.c.l.b16 %v1569
    %v6666 = vunpack.c.h.b16 %v1569
    %v6667 = vunpack.c.l.b16 %v1570
    %v6668 = vunpack.c.h.b16 %v1570
    %v6669 = vunpack.c.l.b16 %v1571
    %v6670 = vunpack.c.h.b16 %v1571
    %v6671 = vunpack.c.l.b16 %v1572
    %v6672 = vunpack.c.h.b16 %v1572
    %v6673 = vunpack.c.l.b16 %v1573
    %v6674 = vunpack.c.h.b16 %v1573
    %v6675 = vunpack.c.l.b16 %v1574
    %v6676 = vunpack.c.h.b16 %v1574
    %v6677 = vunpack.c.l.b16 %v1575
    %v6678 = vunpack.c.h.b16 %v1575
    %v6679 = vunpack.c.l.b16 %v1576
    %v6680 = vunpack.c.h.b16 %v1576
    %v6681 = vunpack.c.l.b16 %v1577
    %v6682 = vunpack.c.h.b16 %v1577
    %v6683 = vunpack.c.l.b16 %v1578
    %v6684 = vunpack.c.h.b16 %v1578
    %v6685 = vunpack.c.l.b16 %v1579
    %v6686 = vunpack.c.h.b16 %v1579
    %v6687 = vunpack.c.l.b16 %v1580
    %v6688 = vunpack.c.h.b16 %v1580
    %v6689 = vunpack.c.l.b16 %v1581
    %v6690 = vunpack.c.h.b16 %v1581
    %v6691 = vunpack.c.l.b16 %v1582
    %v6692 = vunpack.c.h.b16 %v1582
    %v6693 = vunpack.c.l.b16 %v1583
    %v6694 = vunpack.c.h.b16 %v1583
    %v6695 = vunpack.c.l.b16 %v1584
    %v6696 = vunpack.c.h.b16 %v1584
    %v6697 = vunpack.c.l.b16 %v1585
    %v6698 = vunpack.c.h.b16 %v1585
    %v6699 = vunpack.c.l.b16 %v1586
    %v6700 = vunpack.c.h.b16 %v1586
    %v6701 = vunpack.c.l.b16 %v1587
    %v6702 = vunpack.c.h.b16 %v1587
    %v6703 = vunpack.c.l.b16 %v1588
    %v6704 = vunpack.c.h.b16 %v1588
    %v6705 = vunpack.c.l.b16 %v1589
    %v6706 = vunpack.c.h.b16 %v1589
    %v6707 = vunpack.c.l.b16 %v1590
    %v6708 = vunpack.c.h.b16 %v1590
    %v6709 = vunpack.c.l.b16 %v1591
    %v6710 = vunpack.c.h.b16 %v1591
    %v6711 = vunpack.c.l.b16 %v1592
    %v6712 = vunpack.c.h.b16 %v1592
    %v6713 = vunpack.c.l.b16 %v1593
    %v6714 = vunpack.c.h.b16 %v1593
    %v6715 = vunpack.c.l.b16 %v1594
    %v6716 = vunpack.c.h.b16 %v1594
    %v6717 = vunpack.c.l.b16 %v1595
    %v6718 = vunpack.c.h.b16 %v1595
    %v6719 = vunpack.c.l.b16 %v1596
    %v6720 = vunpack.c.h.b16 %v1596
    %v6721 = vunpack.c.l.b16 %v1597
    %v6722 = vunpack.c.h.b16 %v1597
    %v6723 = vunpack.c.l.b16 %v1598
    %v6724 = vunpack.c.h.b16 %v1598
    %v6725 = vunpack.c.l.b16 %v1599
    %v6726 = vunpack.c.h.b16 %v1599
    %v6727 = vunpack.c.l.b16 %v1600
    %v6728 = vunpack.c.h.b16 %v1600
    %v6729 = vunpack.c.l.b16 %v1601
    %v6730 = vunpack.c.h.b16 %v1601
    %v6731 = vunpack.c.l.b16 %v1602
    %v6732 = vunpack.c.h.b16 %v1602
    %v6733 = vunpack.c.l.b16 %v1603
    %v6734 = vunpack.c.h.b16 %v1603
    %v6735 = vunpack.c.l.b16 %v1604
    %v6736 = vunpack.c.h.b16 %v1604
    %v6737 = vunpack.c.l.b16 %v1605
    %v6738 = vunpack.c.h.b16 %v1605
    %v6739 = vunpack.c.l.b16 %v1606
    %v6740 = vunpack.c.h.b16 %v1606
    %v6741 = vunpack.c.l.b16 %v1607
    %v6742 = vunpack.c.h.b16 %v1607
    %v6743 = vunpack.c.l.b16 %v1608
    %v6744 = vunpack.c.h.b16 %v1608
    %v6745 = vunpack.c.l.b16 %v1609
    %v6746 = vunpack.c.h.b16 %v1609
    %v6747 = vunpack.c.l.b16 %v1610
    %v6748 = vunpack.c.h.b16 %v1610
    %v6749 = vunpack.c.l.b16 %v1611
    %v6750 = vunpack.c.h.b16 %v1611
    %v6751 = vunpack.c.l.b16 %v1612
    %v6752 = vunpack.c.h.b16 %v1612
    %v6753 = vunpack.c.l.b16 %v1613
    %v6754 = vunpack.c.h.b16 %v1613
    %v6755 = vunpack.c.l.b16 %v1614
    %v6756 = vunpack.c.h.b16 %v1614
    %v6757 = vunpack.c.l.b16 %v1615
    %v6758 = vunpack.c.h.b16 %v1615
    %v6759 = vunpack.c.l.b16 %v1616
    %v6760 = vunpack.c.h.b16 %v1616
    %v6761 = vunpack.c.l.b16 %v1617
    %v6762 = vunpack.c.h.b16 %v1617
    %v6763 = vunpack.c.l.b16 %v1618
    %v6764 = vunpack.c.h.b16 %v1618
    %v6765 = vunpack.c.l.b16 %v1619
    %v6766 = vunpack.c.h.b16 %v1619
    %v6767 = vunpack.c.l.b16 %v1620
    %v6768 = vunpack.c.h.b16 %v1620
    %v6769 = vunpack.c.l.b16 %v1621
    %v6770 = vunpack.c.h.b16 %v1621
    %v6771 = vunpack.c.l.b16 %v1622
    %v6772 = vunpack.c.h.b16 %v1622
    %v6773 = vunpack.c.l.b16 %v1623
    %v6774 = vunpack.c.h.b16 %v1623
    %v6775 = vunpack.c.l.b16 %v1624
    %v6776 = vunpack.c.h.b16 %v1624
    %v6777 = vunpack.c.l.b16 %v1625
    %v6778 = vunpack.c.h.b16 %v1625
    %v6779 = vunpack.c.l.b16 %v1626
    %v6780 = vunpack.c.h.b16 %v1626
    %v6781 = vunpack.c.l.b16 %v1627
    %v6782 = vunpack.c.h.b16 %v1627
    %v6783 = vunpack.c.l.b16 %v1628
    %v6784 = vunpack.c.h.b16 %v1628
    %v6785 = vunpack.c.l.b16 %v1629
    %v6786 = vunpack.c.h.b16 %v1629
    %v6787 = vunpack.c.l.b16 %v1630
    %v6788 = vunpack.c.h.b16 %v1630
    %v6789 = vunpack.c.l.b16 %v1631
    %v6790 = vunpack.c.h.b16 %v1631
    %v6791 = vunpack.c.l.b16 %v1632
    %v6792 = vunpack.c.h.b16 %v1632
    %v6793 = vunpack.c.l.b16 %v1633
    %v6794 = vunpack.c.h.b16 %v1633
    %v6795 = vunpack.c.l.b16 %v1634
    %v6796 = vunpack.c.h.b16 %v1634
    %v6797 = vunpack.c.l.b16 %v1635
    %v6798 = vunpack.c.h.b16 %v1635
    %v6799 = vunpack.c.l.b16 %v1636
    %v6800 = vunpack.c.h.b16 %v1636
    %v6801 = vunpack.c.l.b16 %v1637
    %v6802 = vunpack.c.h.b16 %v1637
    %v6803 = vunpack.c.l.b16 %v1638
    %v6804 = vunpack.c.h.b16 %v1638
    %v6805 = vunpack.c.l.b16 %v1639
    %v6806 = vunpack.c.h.b16 %v1639
    %v6807 = vunpack.c.l.b16 %v1640
    %v6808 = vunpack.c.h.b16 %v1640
    %v6809 = vunpack.c.l.b16 %v1641
    %v6810 = vunpack.c.h.b16 %v1641
    %v6811 = vunpack.c.l.b16 %v1642
    %v6812 = vunpack.c.h.b16 %v1642
    %v6813 = vunpack.c.l.b16 %v1643
    %v6814 = vunpack.c.h.b16 %v1643
    %v6815 = vunpack.c.l.b16 %v1644
    %v6816 = vunpack.c.h.b16 %v1644
    %v6817 = vunpack.c.l.b16 %v1645
    %v6818 = vunpack.c.h.b16 %v1645
    %v6819 = vunpack.c.l.b16 %v1646
    %v6820 = vunpack.c.h.b16 %v1646
    %v6821 = vunpack.c.l.b16 %v1647
    %v6822 = vunpack.c.h.b16 %v1647
    %v6823 = vunpack.c.l.b16 %v1648
    %v6824 = vunpack.c.h.b16 %v1648
    %v6825 = vunpack.c.l.b16 %v1649
    %v6826 = vunpack.c.h.b16 %v1649
    %v6827 = vunpack.c.l.b16 %v1650
    %v6828 = vunpack.c.h.b16 %v1650
    %v6829 = vunpack.c.l.b16 %v1651
    %v6830 = vunpack.c.h.b16 %v1651
    %v6831 = vunpack.c.l.b16 %v1652
    %v6832 = vunpack.c.h.b16 %v1652
    %v6833 = vunpack.c.l.b16 %v1653
    %v6834 = vunpack.c.h.b16 %v1653
    %v6835 = vunpack.c.l.b16 %v1654
    %v6836 = vunpack.c.h.b16 %v1654
    %v6837 = vunpack.c.l.b16 %v1655
    %v6838 = vunpack.c.h.b16 %v1655
    %v6839 = vunpack.c.l.b16 %v1656
    %v6840 = vunpack.c.h.b16 %v1656
    %v6841 = vunpack.c.l.b16 %v1657
    %v6842 = vunpack.c.h.b16 %v1657
    %v6843 = vunpack.c.l.b16 %v1658
    %v6844 = vunpack.c.h.b16 %v1658
    %v6845 = vunpack.c.l.b16 %v1659
    %v6846 = vunpack.c.h.b16 %v1659
    %v6847 = vunpack.c.l.b16 %v1660
    %v6848 = vunpack.c.h.b16 %v1660
    %v6849 = vunpack.c.l.b16 %v1661
    %v6850 = vunpack.c.h.b16 %v1661
    %v6851 = vunpack.c.l.b16 %v1662
    %v6852 = vunpack.c.h.b16 %v1662
    %v6853 = vunpack.c.l.b16 %v1663
    %v6854 = vunpack.c.h.b16 %v1663
    %v6855 = vunpack.c.l.b16 %v1664
    %v6856 = vunpack.c.h.b16 %v1664
    %v6857 = vunpack.c.l.b16 %v1665
    %v6858 = vunpack.c.h.b16 %v1665
    %v6859 = vunpack.c.l.b16 %v1666
    %v6860 = vunpack.c.h.b16 %v1666
    %v6861 = vunpack.c.l.b16 %v1667
    %v6862 = vunpack.c.h.b16 %v1667
    %v6863 = vunpack.c.l.b16 %v1668
    %v6864 = vunpack.c.h.b16 %v1668
    %v6865 = vunpack.c.l.b16 %v1669
    %v6866 = vunpack.c.h.b16 %v1669
    %v6867 = vunpack.c.l.b16 %v1670
    %v6868 = vunpack.c.h.b16 %v1670
    %v6869 = vunpack.c.l.b16 %v1671
    %v6870 = vunpack.c.h.b16 %v1671
    %v6871 = vunpack.c.l.b16 %v1672
    %v6872 = vunpack.c.h.b16 %v1672
    %v6873 = vunpack.c.l.b16 %v1673
    %v6874 = vunpack.c.h.b16 %v1673
    %v6875 = vunpack.c.l.b16 %v1674
    %v6876 = vunpack.c.h.b16 %v1674
    %v6877 = vunpack.c.l.b16 %v1675
    %v6878 = vunpack.c.h.b16 %v1675
    %v6879 = vunpack.c.l.b16 %v1676
    %v6880 = vunpack.c.h.b16 %v1676
    %v6881 = vunpack.c.l.b16 %v1677
    %v6882 = vunpack.c.h.b16 %v1677
    %v6883 = vunpack.c.l.b16 %v1678
    %v6884 = vunpack.c.h.b16 %v1678
    %v6885 = vunpack.c.l.b16 %v1679
    %v6886 = vunpack.c.h.b16 %v1679
    %v6887 = vunpack.c.l.b16 %v1680
    %v6888 = vunpack.c.h.b16 %v1680
    %v6889 = vunpack.c.l.b16 %v1681
    %v6890 = vunpack.c.h.b16 %v1681
    %v6891 = vunpack.c.l.b16 %v1682
    %v6892 = vunpack.c.h.b16 %v1682
    %v6893 = vunpack.c.l.b16 %v1683
    %v6894 = vunpack.c.h.b16 %v1683
    %v6895 = vunpack.c.l.b16 %v1684
    %v6896 = vunpack.c.h.b16 %v1684
    %v6897 = vunpack.c.l.b16 %v1685
    %v6898 = vunpack.c.h.b16 %v1685
    %v6899 = vunpack.c.l.b16 %v1686
    %v6900 = vunpack.c.h.b16 %v1686
    %v6901 = vunpack.c.l.b16 %v1687
    %v6902 = vunpack.c.h.b16 %v1687
    %v6903 = vunpack.c.l.b16 %v1688
    %v6904 = vunpack.c.h.b16 %v1688
    %v6905 = vunpack.c.l.b16 %v1689
    %v6906 = vunpack.c.h.b16 %v1689
    %v6907 = vunpack.c.l.b16 %v1690
    %v6908 = vunpack.c.h.b16 %v1690
    %v6909 = vunpack.c.l.b16 %v1691
    %v6910 = vunpack.c.h.b16 %v1691
    %v6911 = vunpack.c.l.b16 %v1692
    %v6912 = vunpack.c.h.b16 %v1692
    %v6913 = vunpack.c.l.b16 %v1693
    %v6914 = vunpack.c.h.b16 %v1693
    %v6915 = vunpack.c.l.b16 %v1694
    %v6916 = vunpack.c.h.b16 %v1694
    %v6917 = vunpack.c.l.b16 %v1695
    %v6918 = vunpack.c.h.b16 %v1695
    %v6919 = vunpack.c.l.b16 %v1696
    %v6920 = vunpack.c.h.b16 %v1696
    %v6921 = vunpack.c.l.b16 %v1697
    %v6922 = vunpack.c.h.b16 %v1697
    %v6923 = vunpack.c.l.b16 %v1698
    %v6924 = vunpack.c.h.b16 %v1698
    %v6925 = vunpack.c.l.b16 %v1699
    %v6926 = vunpack.c.h.b16 %v1699
    %v6927 = vunpack.c.l.b16 %v1700
    %v6928 = vunpack.c.h.b16 %v1700
    %v6929 = vunpack.c.l.b16 %v1701
    %v6930 = vunpack.c.h.b16 %v1701
    %v6931 = vunpack.c.l.b16 %v1702
    %v6932 = vunpack.c.h.b16 %v1702
    %v6933 = vunpack.c.l.b16 %v1703
    %v6934 = vunpack.c.h.b16 %v1703
    %v6935 = vunpack.c.l.b16 %v1704
    %v6936 = vunpack.c.h.b16 %v1704
    %v6937 = vunpack.c.l.b16 %v1705
    %v6938 = vunpack.c.h.b16 %v1705
    %v6939 = vunpack.c.l.b16 %v1706
    %v6940 = vunpack.c.h.b16 %v1706
    %v6941 = vunpack.c.l.b16 %v1707
    %v6942 = vunpack.c.h.b16 %v1707
    %v6943 = vunpack.c.l.b16 %v1708
    %v6944 = vunpack.c.h.b16 %v1708
    %v6945 = vunpack.c.l.b16 %v1709
    %v6946 = vunpack.c.h.b16 %v1709
    %v6947 = vunpack.c.l.b16 %v1710
    %v6948 = vunpack.c.h.b16 %v1710
    %v6949 = vunpack.c.l.b16 %v1711
    %v6950 = vunpack.c.h.b16 %v1711
    %v6951 = vunpack.c.l.b16 %v1712
    %v6952 = vunpack.c.h.b16 %v1712
    %v6953 = vunpack.c.l.b16 %v1713
    %v6954 = vunpack.c.h.b16 %v1713
    %v6955 = vunpack.c.l.b16 %v1714
    %v6956 = vunpack.c.h.b16 %v1714
    %v6957 = vunpack.c.l.b16 %v1715
    %v6958 = vunpack.c.h.b16 %v1715
    %v6959 = vunpack.c.l.b16 %v1716
    %v6960 = vunpack.c.h.b16 %v1716
    %v6961 = vunpack.c.l.b16 %v1717
    %v6962 = vunpack.c.h.b16 %v1717
    %v6963 = vunpack.c.l.b16 %v1718
    %v6964 = vunpack.c.h.b16 %v1718
    %v6965 = vunpack.c.l.b16 %v1719
    %v6966 = vunpack.c.h.b16 %v1719
    %v6967 = vunpack.c.l.b16 %v1720
    %v6968 = vunpack.c.h.b16 %v1720
    %v6969 = vunpack.c.l.b16 %v1721
    %v6970 = vunpack.c.h.b16 %v1721
    %v6971 = vunpack.c.l.b16 %v1722
    %v6972 = vunpack.c.h.b16 %v1722
    %v6973 = vunpack.c.l.b16 %v1723
    %v6974 = vunpack.c.h.b16 %v1723
    %v6975 = vunpack.c.l.b16 %v1724
    %v6976 = vunpack.c.h.b16 %v1724
    %v6977 = vunpack.c.l.b16 %v1725
    %v6978 = vunpack.c.h.b16 %v1725
    %v6979 = vunpack.c.l.b16 %v1726
    %v6980 = vunpack.c.h.b16 %v1726
    %v6981 = vunpack.c.l.b16 %v1727
    %v6982 = vunpack.c.h.b16 %v1727
    %v6983 = vunpack.c.l.b16 %v1728
    %v6984 = vunpack.c.h.b16 %v1728
    %v6985 = vunpack.c.l.b16 %v1729
    %v6986 = vunpack.c.h.b16 %v1729
    %v6987 = vunpack.c.l.b16 %v1730
    %v6988 = vunpack.c.h.b16 %v1730
    %v6989 = vunpack.c.l.b16 %v1731
    %v6990 = vunpack.c.h.b16 %v1731
    %v6991 = vunpack.c.l.b16 %v1732
    %v6992 = vunpack.c.h.b16 %v1732
    %v6993 = vunpack.c.l.b16 %v1733
    %v6994 = vunpack.c.h.b16 %v1733
    %v6995 = vunpack.c.l.b16 %v1734
    %v6996 = vunpack.c.h.b16 %v1734
    %v6997 = vunpack.c.l.b16 %v1735
    %v6998 = vunpack.c.h.b16 %v1735
    %v6999 = vunpack.c.l.b16 %v1736
    %v7000 = vunpack.c.h.b16 %v1736
    %v7001 = vunpack.c.l.b16 %v1737
    %v7002 = vunpack.c.h.b16 %v1737
    %v7003 = vunpack.c.l.b16 %v1738
    %v7004 = vunpack.c.h.b16 %v1738
    %v7005 = vunpack.c.l.b16 %v1739
    %v7006 = vunpack.c.h.b16 %v1739
    %v7007 = vunpack.c.l.b16 %v1740
    %v7008 = vunpack.c.h.b16 %v1740
    %v7009 = vunpack.c.l.b16 %v1741
    %v7010 = vunpack.c.h.b16 %v1741
    %v7011 = vunpack.c.l.b16 %v1742
    %v7012 = vunpack.c.h.b16 %v1742
    %v7013 = vunpack.c.l.b16 %v1743
    %v7014 = vunpack.c.h.b16 %v1743
    %v7015 = vunpack.c.l.b16 %v1744
    %v7016 = vunpack.c.h.b16 %v1744
    %v7017 = vunpack.c.l.b16 %v1745
    %v7018 = vunpack.c.h.b16 %v1745
    %v7019 = vunpack.c.l.b16 %v1746
    %v7020 = vunpack.c.h.b16 %v1746
    %v7021 = vunpack.c.l.b16 %v1747
    %v7022 = vunpack.c.h.b16 %v1747
    %v7023 = vunpack.c.l.b16 %v1748
    %v7024 = vunpack.c.h.b16 %v1748
    %v7025 = vunpack.c.l.b16 %v1749
    %v7026 = vunpack.c.h.b16 %v1749
    %v7027 = vunpack.c.l.b16 %v1750
    %v7028 = vunpack.c.h.b16 %v1750
    %v7029 = vunpack.c.l.b16 %v1751
    %v7030 = vunpack.c.h.b16 %v1751
    %v7031 = vunpack.c.l.b16 %v1752
    %v7032 = vunpack.c.h.b16 %v1752
    %v7033 = vunpack.c.l.b16 %v1753
    %v7034 = vunpack.c.h.b16 %v1753
    %v7035 = vunpack.c.l.b16 %v1754
    %v7036 = vunpack.c.h.b16 %v1754
    %v7037 = vunpack.c.l.b16 %v1755
    %v7038 = vunpack.c.h.b16 %v1755
    %v7039 = vunpack.c.l.b16 %v1756
    %v7040 = vunpack.c.h.b16 %v1756
    %v7041 = vunpack.c.l.b16 %v1757
    %v7042 = vunpack.c.h.b16 %v1757
    %v7043 = vunpack.c.l.b16 %v1758
    %v7044 = vunpack.c.h.b16 %v1758
    %v7045 = vunpack.c.l.b16 %v1759
    %v7046 = vunpack.c.h.b16 %v1759
    %v7047 = vunpack.c.l.b16 %v1760
    %v7048 = vunpack.c.h.b16 %v1760
    %v7049 = vunpack.c.l.b16 %v1761
    %v7050 = vunpack.c.h.b16 %v1761
    %v7051 = vunpack.c.l.b16 %v1762
    %v7052 = vunpack.c.h.b16 %v1762
    %v7053 = vunpack.c.l.b16 %v1763
    %v7054 = vunpack.c.h.b16 %v1763
    %v7055 = vunpack.c.l.b16 %v1764
    %v7056 = vunpack.c.h.b16 %v1764
    %v7057 = vunpack.c.l.b16 %v1765
    %v7058 = vunpack.c.h.b16 %v1765
    %v7059 = vunpack.c.l.b16 %v1766
    %v7060 = vunpack.c.h.b16 %v1766
    %v7061 = vunpack.c.l.b16 %v1767
    %v7062 = vunpack.c.h.b16 %v1767
    %v7063 = vunpack.c.l.b16 %v1768
    %v7064 = vunpack.c.h.b16 %v1768
    %v7065 = vunpack.c.l.b16 %v1769
    %v7066 = vunpack.c.h.b16 %v1769
    %v7067 = vunpack.c.l.b16 %v1770
    %v7068 = vunpack.c.h.b16 %v1770
    %v7069 = vunpack.c.l.b16 %v1771
    %v7070 = vunpack.c.h.b16 %v1771
    %v7071 = vunpack.c.l.b16 %v1772
    %v7072 = vunpack.c.h.b16 %v1772
    %v7073 = vunpack.c.l.b16 %v1773
    %v7074 = vunpack.c.h.b16 %v1773
    %v7075 = vunpack.c.l.b16 %v1774
    %v7076 = vunpack.c.h.b16 %v1774
    %v7077 = vunpack.c.l.b16 %v1775
    %v7078 = vunpack.c.h.b16 %v1775
    %v7079 = vunpack.c.l.b16 %v1776
    %v7080 = vunpack.c.h.b16 %v1776
    %v7081 = vunpack.c.l.b16 %v1777
    %v7082 = vunpack.c.h.b16 %v1777
    %v7083 = vunpack.c.l.b16 %v1778
    %v7084 = vunpack.c.h.b16 %v1778
    %v7085 = vunpack.c.l.b16 %v1779
    %v7086 = vunpack.c.h.b16 %v1779
    %v7087 = vunpack.c.l.b16 %v1780
    %v7088 = vunpack.c.h.b16 %v1780
    %v7089 = vunpack.c.l.b16 %v1781
    %v7090 = vunpack.c.h.b16 %v1781
    %v7091 = vunpack.c.l.b16 %v1782
    %v7092 = vunpack.c.h.b16 %v1782
    %v7093 = vunpack.c.l.b16 %v1783
    %v7094 = vunpack.c.h.b16 %v1783
    %v7095 = vunpack.c.l.b16 %v1784
    %v7096 = vunpack.c.h.b16 %v1784
    %v7097 = vunpack.c.l.b16 %v1785
    %v7098 = vunpack.c.h.b16 %v1785
    %v7099 = vunpack.c.l.b16 %v1786
    %v7100 = vunpack.c.h.b16 %v1786
    %v7101 = vunpack.c.l.b16 %v1787
    %v7102 = vunpack.c.h.b16 %v1787
    %v7103 = vunpack.c.l.b16 %v1788
    %v7104 = vunpack.c.h.b16 %v1788
    %v7105 = vunpack.c.l.b16 %v1789
    %v7106 = vunpack.c.h.b16 %v1789
    %v7107 = vunpack.c.l.b16 %v1790
    %v7108 = vunpack.c.h.b16 %v1790
    %v7109 = vunpack.c.l.b16 %v1791
    %v7110 = vunpack.c.h.b16 %v1791
    %v7111 = vunpack.c.l.b16 %v1792
    %v7112 = vunpack.c.h.b16 %v1792
    %v7113 = vunpack.c.l.b16 %v1793
    %v7114 = vunpack.c.h.b16 %v1793
    %v7115 = vunpack.c.l.b16 %v1794
    %v7116 = vunpack.c.h.b16 %v1794
    %v7117 = vunpack.c.l.b16 %v1795
    %v7118 = vunpack.c.h.b16 %v1795
    %v7119 = vunpack.c.l.b16 %v1796
    %v7120 = vunpack.c.h.b16 %v1796
    %v7121 = vunpack.c.l.b16 %v1797
    %v7122 = vunpack.c.h.b16 %v1797
    %v7123 = vunpack.c.l.b16 %v1798
    %v7124 = vunpack.c.h.b16 %v1798
    %v7125 = vunpack.c.l.b16 %v1799
    %v7126 = vunpack.c.h.b16 %v1799
    %v7127 = vunpack.c.l.b16 %v1800
    %v7128 = vunpack.c.h.b16 %v1800
    %v7129 = vunpack.c.l.b16 %v1801
    %v7130 = vunpack.c.h.b16 %v1801
    %v7131 = vunpack.c.l.b16 %v1802
    %v7132 = vunpack.c.h.b16 %v1802
    %v7133 = vunpack.c.l.b16 %v1803
    %v7134 = vunpack.c.h.b16 %v1803
    %v7135 = vunpack.c.l.b16 %v1804
    %v7136 = vunpack.c.h.b16 %v1804
    %v7137 = vunpack.c.l.b16 %v1805
    %v7138 = vunpack.c.h.b16 %v1805
    %v7139 = vunpack.c.l.b16 %v1806
    %v7140 = vunpack.c.h.b16 %v1806
    %v7141 = vunpack.c.l.b16 %v1807
    %v7142 = vunpack.c.h.b16 %v1807
    %v7143 = vunpack.c.l.b16 %v1808
    %v7144 = vunpack.c.h.b16 %v1808
    %v7145 = vunpack.c.l.b16 %v1809
    %v7146 = vunpack.c.h.b16 %v1809
    %v7147 = vunpack.c.l.b16 %v1810
    %v7148 = vunpack.c.h.b16 %v1810
    %v7149 = vunpack.c.l.b16 %v1811
    %v7150 = vunpack.c.h.b16 %v1811
    %v7151 = vunpack.c.l.b16 %v1812
    %v7152 = vunpack.c.h.b16 %v1812
    %v7153 = vunpack.c.l.b16 %v1813
    %v7154 = vunpack.c.h.b16 %v1813
    %v7155 = vunpack.c.l.b16 %v1814
    %v7156 = vunpack.c.h.b16 %v1814
    %v7157 = vunpack.c.l.b16 %v1815
    %v7158 = vunpack.c.h.b16 %v1815
    %v7159 = vunpack.c.l.b16 %v1816
    %v7160 = vunpack.c.h.b16 %v1816
    %v7161 = vunpack.c.l.b16 %v1817
    %v7162 = vunpack.c.h.b16 %v1817
    %v7163 = vunpack.c.l.b16 %v1818
    %v7164 = vunpack.c.h.b16 %v1818
    %v7165 = vunpack.c.l.b16 %v1819
    %v7166 = vunpack.c.h.b16 %v1819
    %v7167 = vunpack.c.l.b16 %v1820
    %v7168 = vunpack.c.h.b16 %v1820
    %v7169 = vunpack.c.l.b16 %v1821
    %v7170 = vunpack.c.h.b16 %v1821
    %v7171 = vunpack.c.l.b16 %v1822
    %v7172 = vunpack.c.h.b16 %v1822
    %v7173 = vunpack.c.l.b16 %v1823
    %v7174 = vunpack.c.h.b16 %v1823
    %v7175 = vunpack.c.l.b16 %v1824
    %v7176 = vunpack.c.h.b16 %v1824
    %v7177 = vunpack.c.l.b16 %v1825
    %v7178 = vunpack.c.h.b16 %v1825
    %v7179 = vunpack.c.l.b16 %v1826
    %v7180 = vunpack.c.h.b16 %v1826
    %v7181 = vunpack.c.l.b16 %v1827
    %v7182 = vunpack.c.h.b16 %v1827
    %v7183 = vunpack.c.l.b16 %v1828
    %v7184 = vunpack.c.h.b16 %v1828
    %v7185 = vunpack.c.l.b16 %v1829
    %v7186 = vunpack.c.h.b16 %v1829
    %v7187 = vunpack.c.l.b16 %v1830
    %v7188 = vunpack.c.h.b16 %v1830
    %v7189 = vunpack.c.l.b16 %v1831
    %v7190 = vunpack.c.h.b16 %v1831
    %v7191 = vunpack.c.l.b16 %v1832
    %v7192 = vunpack.c.h.b16 %v1832
    %v7193 = vunpack.c.l.b16 %v1833
    %v7194 = vunpack.c.h.b16 %v1833
    %v7195 = vunpack.c.l.b16 %v1834
    %v7196 = vunpack.c.h.b16 %v1834
    %v7197 = vunpack.c.l.b16 %v1835
    %v7198 = vunpack.c.h.b16 %v1835
    %v7199 = vunpack.c.l.b16 %v1836
    %v7200 = vunpack.c.h.b16 %v1836
    %v7201 = vunpack.c.l.b16 %v1837
    %v7202 = vunpack.c.h.b16 %v1837
    %v7203 = vunpack.c.l.b16 %v1838
    %v7204 = vunpack.c.h.b16 %v1838
    %v7205 = vunpack.c.l.b16 %v1839
    %v7206 = vunpack.c.h.b16 %v1839
    %v7207 = vunpack.c.l.b16 %v1840
    %v7208 = vunpack.c.h.b16 %v1840
    %v7209 = vunpack.c.l.b16 %v1841
    %v7210 = vunpack.c.h.b16 %v1841
    %v7211 = vunpack.c.l.b16 %v1842
    %v7212 = vunpack.c.h.b16 %v1842
    %v7213 = vunpack.c.l.b16 %v1843
    %v7214 = vunpack.c.h.b16 %v1843
    %v7215 = vunpack.c.l.b16 %v1844
    %v7216 = vunpack.c.h.b16 %v1844
    %v7217 = vunpack.c.l.b16 %v1845
    %v7218 = vunpack.c.h.b16 %v1845
    %v7219 = vunpack.c.l.b16 %v1846
    %v7220 = vunpack.c.h.b16 %v1846
    %v7221 = vunpack.c.l.b16 %v1847
    %v7222 = vunpack.c.h.b16 %v1847
    %v7223 = vunpack.c.l.b16 %v1848
    %v7224 = vunpack.c.h.b16 %v1848
    %v7225 = vunpack.c.l.b16 %v1849
    %v7226 = vunpack.c.h.b16 %v1849
    %v7227 = vunpack.c.l.b16 %v1850
    %v7228 = vunpack.c.h.b16 %v1850
    %v7229 = vunpack.c.l.b16 %v1851
    %v7230 = vunpack.c.h.b16 %v1851
    %v7231 = vunpack.c.l.b16 %v1852
    %v7232 = vunpack.c.h.b16 %v1852
    %v7233 = vunpack.c.l.b16 %v1853
    %v7234 = vunpack.c.h.b16 %v1853
    %v7235 = vunpack.c.l.b16 %v1854
    %v7236 = vunpack.c.h.b16 %v1854
    %v7237 = vunpack.c.l.b16 %v1855
    %v7238 = vunpack.c.h.b16 %v1855
    %v7239 = vunpack.c.l.b16 %v1856
    %v7240 = vunpack.c.h.b16 %v1856
    %v7241 = vunpack.c.l.b16 %v1857
    %v7242 = vunpack.c.h.b16 %v1857
    %v7243 = vunpack.c.l.b16 %v1858
    %v7244 = vunpack.c.h.b16 %v1858
    %v7245 = vunpack.c.l.b16 %v1859
    %v7246 = vunpack.c.h.b16 %v1859
    %v7247 = vunpack.c.l.b16 %v1860
    %v7248 = vunpack.c.h.b16 %v1860
    %v7249 = vunpack.c.l.b16 %v1861
    %v7250 = vunpack.c.h.b16 %v1861
    %v7251 = vunpack.c.l.b16 %v1862
    %v7252 = vunpack.c.h.b16 %v1862
    %v7253 = vunpack.c.l.b16 %v1863
    %v7254 = vunpack.c.h.b16 %v1863
    %v7255 = vunpack.c.l.b16 %v1864
    %v7256 = vunpack.c.h.b16 %v1864
    %v7257 = vunpack.c.l.b16 %v1865
    %v7258 = vunpack.c.h.b16 %v1865
    %v7259 = vunpack.c.l.b16 %v1866
    %v7260 = vunpack.c.h.b16 %v1866
    %v7261 = vunpack.c.l.b16 %v1867
    %v7262 = vunpack.c.h.b16 %v1867
    %v7263 = vunpack.c.l.b16 %v1868
    %v7264 = vunpack.c.h.b16 %v1868
    %v7265 = vunpack.c.l.b16 %v1869
    %v7266 = vunpack.c.h.b16 %v1869
    %v7267 = vunpack.c.l.b16 %v1870
    %v7268 = vunpack.c.h.b16 %v1870
    %v7269 = vunpack.c.l.b16 %v1871
    %v7270 = vunpack.c.h.b16 %v1871
    %v7271 = vunpack.c.l.b16 %v1872
    %v7272 = vunpack.c.h.b16 %v1872
    %v7273 = vunpack.c.l.b16 %v1873
    %v7274 = vunpack.c.h.b16 %v1873
    %v7275 = vunpack.c.l.b16 %v1874
    %v7276 = vunpack.c.h.b16 %v1874
    %v7277 = vunpack.c.l.b16 %v1875
    %v7278 = vunpack.c.h.b16 %v1875
    %v7279 = vunpack.c.l.b16 %v1876
    %v7280 = vunpack.c.h.b16 %v1876
    %v7281 = vunpack.c.l.b16 %v1877
    %v7282 = vunpack.c.h.b16 %v1877
    %v7283 = vunpack.c.l.b16 %v1878
    %v7284 = vunpack.c.h.b16 %v1878
    %v7285 = vunpack.c.l.b16 %v1879
    %v7286 = vunpack.c.h.b16 %v1879
    %v7287 = vunpack.c.l.b16 %v1880
    %v7288 = vunpack.c.h.b16 %v1880
    %v7289 = vunpack.c.l.b16 %v1881
    %v7290 = vunpack.c.h.b16 %v1881
    %v7291 = vunpack.c.l.b16 %v1882
    %v7292 = vunpack.c.h.b16 %v1882
    %v7293 = vunpack.c.l.b16 %v1883
    %v7294 = vunpack.c.h.b16 %v1883
    %v7295 = vunpack.c.l.b16 %v1884
    %v7296 = vunpack.c.h.b16 %v1884
    %v7297 = vunpack.c.l.b16 %v1885
    %v7298 = vunpack.c.h.b16 %v1885
    %v7299 = vunpack.c.l.b16 %v1886
    %v7300 = vunpack.c.h.b16 %v1886
    %v7301 = vunpack.c.l.b16 %v1887
    %v7302 = vunpack.c.h.b16 %v1887
    %v7303 = vunpack.c.l.b16 %v1888
    %v7304 = vunpack.c.h.b16 %v1888
    %v7305 = vunpack.c.l.b16 %v1889
    %v7306 = vunpack.c.h.b16 %v1889
    %v7307 = vunpack.c.l.b16 %v1890
    %v7308 = vunpack.c.h.b16 %v1890
    %v7309 = vunpack.c.l.b16 %v1891
    %v7310 = vunpack.c.h.b16 %v1891
    %v7311 = vunpack.c.l.b16 %v1892
    %v7312 = vunpack.c.h.b16 %v1892
    %v7313 = vunpack.c.l.b16 %v1893
    %v7314 = vunpack.c.h.b16 %v1893
    %v7315 = vunpack.c.l.b16 %v1894
    %v7316 = vunpack.c.h.b16 %v1894
    %v7317 = vunpack.c.l.b16 %v1895
    %v7318 = vunpack.c.h.b16 %v1895
    %v7319 = vunpack.c.l.b16 %v1896
    %v7320 = vunpack.c.h.b16 %v1896
    %v7321 = vunpack.c.l.b16 %v1897
    %v7322 = vunpack.c.h.b16 %v1897
    %v7323 = vunpack.c.l.b16 %v1898
    %v7324 = vunpack.c.h.b16 %v1898
    %v7325 = vunpack.c.l.b16 %v1899
    %v7326 = vunpack.c.h.b16 %v1899
    %v7327 = vunpack.c.l.b16 %v1900
    %v7328 = vunpack.c.h.b16 %v1900
    %v7329 = vunpack.c.l.b16 %v1901
    %v7330 = vunpack.c.h.b16 %v1901
    %v7331 = vunpack.c.l.b16 %v1902
    %v7332 = vunpack.c.h.b16 %v1902
    %v7333 = vunpack.c.l.b16 %v1903
    %v7334 = vunpack.c.h.b16 %v1903
    %v7335 = vunpack.c.l.b16 %v1904
    %v7336 = vunpack.c.h.b16 %v1904
    %v7337 = vunpack.c.l.b16 %v1905
    %v7338 = vunpack.c.h.b16 %v1905
    %v7339 = vunpack.c.l.b16 %v1906
    %v7340 = vunpack.c.h.b16 %v1906
    %v7341 = vunpack.c.l.b16 %v1907
    %v7342 = vunpack.c.h.b16 %v1907
    %v7343 = vunpack.c.l.b16 %v1908
    %v7344 = vunpack.c.h.b16 %v1908
    %v7345 = vunpack.c.l.b16 %v1909
    %v7346 = vunpack.c.h.b16 %v1909
    %v7347 = vunpack.c.l.b16 %v1910
    %v7348 = vunpack.c.h.b16 %v1910
    %v7349 = vunpack.c.l.b16 %v1911
    %v7350 = vunpack.c.h.b16 %v1911
    %v7351 = vunpack.c.l.b16 %v1912
    %v7352 = vunpack.c.h.b16 %v1912
    %v7353 = vunpack.c.l.b16 %v1913
    %v7354 = vunpack.c.h.b16 %v1913
    %v7355 = vunpack.c.l.b16 %v1914
    %v7356 = vunpack.c.h.b16 %v1914
    %v7357 = vunpack.c.l.b16 %v1915
    %v7358 = vunpack.c.h.b16 %v1915
    %v7359 = vunpack.c.l.b16 %v1916
    %v7360 = vunpack.c.h.b16 %v1916
    %v7361 = vunpack.c.l.b16 %v1917
    %v7362 = vunpack.c.h.b16 %v1917
    %v7363 = vunpack.c.l.b16 %v1918
    %v7364 = vunpack.c.h.b16 %v1918
    %v7365 = vunpack.c.l.b16 %v1919
    %v7366 = vunpack.c.h.b16 %v1919
    %v7367 = vunpack.c.l.b16 %v1920
    %v7368 = vunpack.c.h.b16 %v1920
    %v7369 = vunpack.c.l.b16 %v1921
    %v7370 = vunpack.c.h.b16 %v1921
    %v7371 = vunpack.c.l.b16 %v1922
    %v7372 = vunpack.c.h.b16 %v1922
    %v7373 = vunpack.c.l.b16 %v1923
    %v7374 = vunpack.c.h.b16 %v1923
    %v7375 = vunpack.c.l.b16 %v1924
    %v7376 = vunpack.c.h.b16 %v1924
    %v7377 = vunpack.c.l.b16 %v1925
    %v7378 = vunpack.c.h.b16 %v1925
    %v7379 = vunpack.c.l.b16 %v1926
    %v7380 = vunpack.c.h.b16 %v1926
    %v7381 = vunpack.c.l.b16 %v1927
    %v7382 = vunpack.c.h.b16 %v1927
    %v7383 = vunpack.c.l.b16 %v1928
    %v7384 = vunpack.c.h.b16 %v1928
    %v7385 = vunpack.c.l.b16 %v1929
    %v7386 = vunpack.c.h.b16 %v1929
    %v7387 = vunpack.c.l.b16 %v1930
    %v7388 = vunpack.c.h.b16 %v1930
    %v7389 = vunpack.c.l.b16 %v1931
    %v7390 = vunpack.c.h.b16 %v1931
    %v7391 = vunpack.c.l.b16 %v1932
    %v7392 = vunpack.c.h.b16 %v1932
    %v7393 = vunpack.c.l.b16 %v1933
    %v7394 = vunpack.c.h.b16 %v1933
    %v7395 = vunpack.c.l.b16 %v1934
    %v7396 = vunpack.c.h.b16 %v1934
    %v7397 = vunpack.c.l.b16 %v1935
    %v7398 = vunpack.c.h.b16 %v1935
    %v7399 = vunpack.c.l.b16 %v1936
    %v7400 = vunpack.c.h.b16 %v1936
    %v7401 = vunpack.c.l.b16 %v1937
    %v7402 = vunpack.c.h.b16 %v1937
    %v7403 = vunpack.c.l.b16 %v1938
    %v7404 = vunpack.c.h.b16 %v1938
    %v7405 = vunpack.c.l.b16 %v1939
    %v7406 = vunpack.c.h.b16 %v1939
    %v7407 = vunpack.c.l.b16 %v1940
    %v7408 = vunpack.c.h.b16 %v1940
    %v7409 = vunpack.c.l.b16 %v1941
    %v7410 = vunpack.c.h.b16 %v1941
    %v7411 = vunpack.c.l.b16 %v1942
    %v7412 = vunpack.c.h.b16 %v1942
    %v7413 = vunpack.c.l.b16 %v1943
    %v7414 = vunpack.c.h.b16 %v1943
    %v7415 = vunpack.c.l.b16 %v1944
    %v7416 = vunpack.c.h.b16 %v1944
    %v7417 = vunpack.c.l.b16 %v1945
    %v7418 = vunpack.c.h.b16 %v1945
    %v7419 = vunpack.c.l.b16 %v1946
    %v7420 = vunpack.c.h.b16 %v1946
    %v7421 = vunpack.c.l.b16 %v1947
    %v7422 = vunpack.c.h.b16 %v1947
    %v7423 = vunpack.c.l.b16 %v1948
    %v7424 = vunpack.c.h.b16 %v1948
    %v7425 = vunpack.c.l.b16 %v1949
    %v7426 = vunpack.c.h.b16 %v1949
    %v7427 = vunpack.c.l.b16 %v1950
    %v7428 = vunpack.c.h.b16 %v1950
    %v7429 = vunpack.c.l.b16 %v1951
    %v7430 = vunpack.c.h.b16 %v1951
    %v7431 = vunpack.c.l.b16 %v1952
    %v7432 = vunpack.c.h.b16 %v1952
    %v7433 = vunpack.c.l.b16 %v1953
    %v7434 = vunpack.c.h.b16 %v1953
    %v7435 = vunpack.c.l.b16 %v1954
    %v7436 = vunpack.c.h.b16 %v1954
    %v7437 = vunpack.c.l.b16 %v1955
    %v7438 = vunpack.c.h.b16 %v1955
    %v7439 = vunpack.c.l.b16 %v1956
    %v7440 = vunpack.c.h.b16 %v1956
    %v7441 = vunpack.c.l.b16 %v1957
    %v7442 = vunpack.c.h.b16 %v1957
    %v7443 = vunpack.c.l.b16 %v1958
    %v7444 = vunpack.c.h.b16 %v1958
    %v7445 = vunpack.c.l.b16 %v1959
    %v7446 = vunpack.c.h.b16 %v1959
    %v7447 = vunpack.c.l.b16 %v1960
    %v7448 = vunpack.c.h.b16 %v1960
    %v7449 = vunpack.c.l.b16 %v1961
    %v7450 = vunpack.c.h.b16 %v1961
    %v7451 = vunpack.c.l.b16 %v1962
    %v7452 = vunpack.c.h.b16 %v1962
    %v7453 = vunpack.c.l.b16 %v1963
    %v7454 = vunpack.c.h.b16 %v1963
    %v7455 = vunpack.c.l.b16 %v1964
    %v7456 = vunpack.c.h.b16 %v1964
    %v7457 = vunpack.c.l.b16 %v1965
    %v7458 = vunpack.c.h.b16 %v1965
    %v7459 = vunpack.c.l.b16 %v1966
    %v7460 = vunpack.c.h.b16 %v1966
    %v7461 = vunpack.c.l.b16 %v1967
    %v7462 = vunpack.c.h.b16 %v1967
    %v7463 = vunpack.c.l.b16 %v1968
    %v7464 = vunpack.c.h.b16 %v1968
    %v7465 = vunpack.c.l.b16 %v1969
    %v7466 = vunpack.c.h.b16 %v1969
    %v7467 = vunpack.c.l.b16 %v1970
    %v7468 = vunpack.c.h.b16 %v1970
    %v7469 = vunpack.c.l.b16 %v1971
    %v7470 = vunpack.c.h.b16 %v1971
    %v7471 = vunpack.c.l.b16 %v1972
    %v7472 = vunpack.c.h.b16 %v1972
    %v7473 = vunpack.c.l.b16 %v1973
    %v7474 = vunpack.c.h.b16 %v1973
    %v7475 = vunpack.c.l.b16 %v1974
    %v7476 = vunpack.c.h.b16 %v1974
    %v7477 = vunpack.c.l.b16 %v1975
    %v7478 = vunpack.c.h.b16 %v1975
    %v7479 = vunpack.c.l.b16 %v1976
    %v7480 = vunpack.c.h.b16 %v1976
    %v7481 = vunpack.c.l.b16 %v1977
    %v7482 = vunpack.c.h.b16 %v1977
    %v7483 = vunpack.c.l.b16 %v1978
    %v7484 = vunpack.c.h.b16 %v1978
    %v7485 = vunpack.c.l.b16 %v1979
    %v7486 = vunpack.c.h.b16 %v1979
    %v7487 = vunpack.c.l.b16 %v1980
    %v7488 = vunpack.c.h.b16 %v1980
    %v7489 = vunpack.c.l.b16 %v1981
    %v7490 = vunpack.c.h.b16 %v1981
    %v7491 = vunpack.c.l.b16 %v1982
    %v7492 = vunpack.c.h.b16 %v1982
    %v7493 = vunpack.c.l.b16 %v1983
    %v7494 = vunpack.c.h.b16 %v1983
    %v7495 = vunpack.c.l.b16 %v1984
    %v7496 = vunpack.c.h.b16 %v1984
    %v7497 = vunpack.c.l.b16 %v1985
    %v7498 = vunpack.c.h.b16 %v1985
    %v7499 = vunpack.c.l.b16 %v1986
    %v7500 = vunpack.c.h.b16 %v1986
    %v7501 = vunpack.c.l.b16 %v1987
    %v7502 = vunpack.c.h.b16 %v1987
    %v7503 = vunpack.c.l.b16 %v1988
    %v7504 = vunpack.c.h.b16 %v1988
    %v7505 = vunpack.c.l.b16 %v1989
    %v7506 = vunpack.c.h.b16 %v1989
    %v7507 = vunpack.c.l.b16 %v1990
    %v7508 = vunpack.c.h.b16 %v1990
    %v7509 = vunpack.c.l.b16 %v1991
    %v7510 = vunpack.c.h.b16 %v1991
    %v7511 = vunpack.c.l.b16 %v1992
    %v7512 = vunpack.c.h.b16 %v1992
    %v7513 = vunpack.c.l.b16 %v1993
    %v7514 = vunpack.c.h.b16 %v1993
    %v7515 = vunpack.c.l.b16 %v1994
    %v7516 = vunpack.c.h.b16 %v1994
    %v7517 = vunpack.c.l.b16 %v1995
    %v7518 = vunpack.c.h.b16 %v1995
    %v7519 = vunpack.c.l.b16 %v1996
    %v7520 = vunpack.c.h.b16 %v1996
    %v7521 = vunpack.c.l.b16 %v1997
    %v7522 = vunpack.c.h.b16 %v1997
    %v7523 = vunpack.c.l.b16 %v1998
    %v7524 = vunpack.c.h.b16 %v1998
    %v7525 = vunpack.c.l.b16 %v1999
    %v7526 = vunpack.c.h.b16 %v1999
    %v7527 = vunpack.c.l.b16 %v2000
    %v7528 = vunpack.c.h.b16 %v2000
    %v7529 = vunpack.c.l.b16 %v2001
    %v7530 = vunpack.c.h.b16 %v2001
    %v7531 = vunpack.c.l.b16 %v2002
    %v7532 = vunpack.c.h.b16 %v2002
    %v7533 = vunpack.c.l.b16 %v2003
    %v7534 = vunpack.c.h.b16 %v2003
    %v7535 = vunpack.c.l.b16 %v2004
    %v7536 = vunpack.c.h.b16 %v2004
    %v7537 = vunpack.c.l.b16 %v2005
    %v7538 = vunpack.c.h.b16 %v2005
    %v7539 = vunpack.c.l.b16 %v2006
    %v7540 = vunpack.c.h.b16 %v2006
    %v7541 = vunpack.c.l.b16 %v2007
    %v7542 = vunpack.c.h.b16 %v2007
    %v7543 = vunpack.c.l.b16 %v2008
    %v7544 = vunpack.c.h.b16 %v2008
    %v7545 = vunpack.c.l.b16 %v2009
    %v7546 = vunpack.c.h.b16 %v2009
    %v7547 = vunpack.c.l.b16 %v2010
    %v7548 = vunpack.c.h.b16 %v2010
    %v7549 = vunpack.c.l.b16 %v2011
    %v7550 = vunpack.c.h.b16 %v2011
    %v7551 = vunpack.c.l.b16 %v2012
    %v7552 = vunpack.c.h.b16 %v2012
    %v7553 = vunpack.c.l.b16 %v2013
    %v7554 = vunpack.c.h.b16 %v2013
    %v7555 = vunpack.c.l.b16 %v2014
    %v7556 = vunpack.c.h.b16 %v2014
    %v7557 = vunpack.c.l.b16 %v2015
    %v7558 = vunpack.c.h.b16 %v2015
    %v7559 = vunpack.c.l.b16 %v2016
    %v7560 = vunpack.c.h.b16 %v2016
    %v7561 = vunpack.c.l.b16 %v2017
    %v7562 = vunpack.c.h.b16 %v2017
    %v7563 = vunpack.c.l.b16 %v2018
    %v7564 = vunpack.c.h.b16 %v2018
    %v7565 = vunpack.c.l.b16 %v2019
    %v7566 = vunpack.c.h.b16 %v2019
    %v7567 = vunpack.c.l.b16 %v2020
    %v7568 = vunpack.c.h.b16 %v2020
    %v7569 = vunpack.c.l.b16 %v2021
    %v7570 = vunpack.c.h.b16 %v2021
    %v7571 = vunpack.c.l.b16 %v2022
    %v7572 = vunpack.c.h.b16 %v2022
    %v7573 = vunpack.c.l.b16 %v2023
    %v7574 = vunpack.c.h.b16 %v2023
    %v7575 = vunpack.c.l.b16 %v2024
    %v7576 = vunpack.c.h.b16 %v2024
    %v7577 = vunpack.c.l.b16 %v2025
    %v7578 = vunpack.c.h.b16 %v2025
    %v7579 = vunpack.c.l.b16 %v2026
    %v7580 = vunpack.c.h.b16 %v2026
    %v7581 = vunpack.c.l.b16 %v2027
    %v7582 = vunpack.c.h.b16 %v2027
    %v7583 = vunpack.c.l.b16 %v2028
    %v7584 = vunpack.c.h.b16 %v2028
    %v7585 = vunpack.c.l.b16 %v2029
    %v7586 = vunpack.c.h.b16 %v2029
    %v7587 = vunpack.c.l.b16 %v2030
    %v7588 = vunpack.c.h.b16 %v2030
    %v7589 = vunpack.c.l.b16 %v2031
    %v7590 = vunpack.c.h.b16 %v2031
    %v7591 = vunpack.c.l.b16 %v2032
    %v7592 = vunpack.c.h.b16 %v2032
    %v7593 = vunpack.c.l.b16 %v2033
    %v7594 = vunpack.c.h.b16 %v2033
    %v7595 = vunpack.c.l.b16 %v2034
    %v7596 = vunpack.c.h.b16 %v2034
    %v7597 = vunpack.c.l.b16 %v2035
    %v7598 = vunpack.c.h.b16 %v2035
    %v7599 = vunpack.c.l.b16 %v2036
    %v7600 = vunpack.c.h.b16 %v2036
    %v7601 = vunpack.c.l.b16 %v2037
    %v7602 = vunpack.c.h.b16 %v2037
    %v7603 = vunpack.c.l.b16 %v2038
    %v7604 = vunpack.c.h.b16 %v2038
    %v7605 = vunpack.c.l.b16 %v2039
    %v7606 = vunpack.c.h.b16 %v2039
    %v7607 = vunpack.c.l.b16 %v2040
    %v7608 = vunpack.c.h.b16 %v2040
    %v7609 = vunpack.c.l.b16 %v2041
    %v7610 = vunpack.c.h.b16 %v2041
    %v7611 = vunpack.c.l.b16 %v2042
    %v7612 = vunpack.c.h.b16 %v2042
    %v7613 = vunpack.c.l.b16 %v2043
    %v7614 = vunpack.c.h.b16 %v2043
    %v7615 = vunpack.c.l.b16 %v2044
    %v7616 = vunpack.c.h.b16 %v2044
    %v7617 = vunpack.c.l.b16 %v2045
    %v7618 = vunpack.c.h.b16 %v2045
    %v7619 = vunpack.c.l.b16 %v2046
    %v7620 = vunpack.c.h.b16 %v2046
    %v7621 = vunpack.c.l.b16 %v2047
    %v7622 = vunpack.c.h.b16 %v2047
    %v7623 = vunpack.c.l.b16 %v2048
    %v7624 = vunpack.c.h.b16 %v2048
    %v7625 = vunpack.c.l.b16 %v2049
    %v7626 = vunpack.c.h.b16 %v2049
    %v7627 = vunpack.c.l.b16 %v2050
    %v7628 = vunpack.c.h.b16 %v2050
    %v7629 = vunpack.c.l.b16 %v2051
    %v7630 = vunpack.c.h.b16 %v2051
    %v7631 = vunpack.c.l.b16 %v2052
    %v7632 = vunpack.c.h.b16 %v2052
    %v7633 = vunpack.c.l.b16 %v2053
    %v7634 = vunpack.c.h.b16 %v2053
    %v7635 = vunpack.c.l.b16 %v2054
    %v7636 = vunpack.c.h.b16 %v2054
    %v7637 = vunpack.c.l.b16 %v2055
    %v7638 = vunpack.c.h.b16 %v2055
    %v7639 = vunpack.c.l.b16 %v2056
    %v7640 = vunpack.c.h.b16 %v2056
    %v7641 = vunpack.c.l.b16 %v2057
    %v7642 = vunpack.c.h.b16 %v2057
    %v7643 = vunpack.c.l.b16 %v2058
    %v7644 = vunpack.c.h.b16 %v2058
    %v7645 = vunpack.c.l.b16 %v2059
    %v7646 = vunpack.c.h.b16 %v2059
    %v7647 = vunpack.c.l.b16 %v2060
    %v7648 = vunpack.c.h.b16 %v2060
    %v7649 = vunpack.c.l.b16 %v2061
    %v7650 = vunpack.c.h.b16 %v2061
    %v7651 = vunpack.c.l.b16 %v2062
    %v7652 = vunpack.c.h.b16 %v2062
    %v7653 = vunpack.c.l.b16 %v2063
    %v7654 = vunpack.c.h.b16 %v2063
    %v7655 = vunpack.c.l.b16 %v2064
    %v7656 = vunpack.c.h.b16 %v2064
    %v7657 = vunpack.c.l.b16 %v2065
    %v7658 = vunpack.c.h.b16 %v2065
    %v7659 = vunpack.c.l.b16 %v2066
    %v7660 = vunpack.c.h.b16 %v2066
    %v7661 = vunpack.c.l.b16 %v2067
    %v7662 = vunpack.c.h.b16 %v2067
    %v7663 = vunpack.c.l.b16 %v2068
    %v7664 = vunpack.c.h.b16 %v2068
    %v7665 = vunpack.c.l.b16 %v2069
    %v7666 = vunpack.c.h.b16 %v2069
    %v7667 = vunpack.c.l.b16 %v2070
    %v7668 = vunpack.c.h.b16 %v2070
    %v7669 = vunpack.c.l.b16 %v2071
    %v7670 = vunpack.c.h.b16 %v2071
    %v7671 = vunpack.c.l.b16 %v2072
    %v7672 = vunpack.c.h.b16 %v2072
    %v7673 = vunpack.c.l.b16 %v2073
    %v7674 = vunpack.c.h.b16 %v2073
    %v7675 = vunpack.c.l.b16 %v2074
    %v7676 = vunpack.c.h.b16 %v2074
    %v7677 = vunpack.c.l.b16 %v2075
    %v7678 = vunpack.c.h.b16 %v2075
    %v7679 = vunpack.c.l.b16 %v2076
    %v7680 = vunpack.c.h.b16 %v2076
    %v7681 = vunpack.c.l.b16 %v2077
    %v7682 = vunpack.c.h.b16 %v2077
    %v7683 = vunpack.c.l.b16 %v2078
    %v7684 = vunpack.c.h.b16 %v2078
    %v7685 = vunpack.c.l.b16 %v2079
    %v7686 = vunpack.c.h.b16 %v2079
    %v7687 = vunpack.c.l.b16 %v2080
    %v7688 = vunpack.c.h.b16 %v2080
    %v7689 = vunpack.c.l.b16 %v2081
    %v7690 = vunpack.c.h.b16 %v2081
    %v7691 = vunpack.c.l.b16 %v2082
    %v7692 = vunpack.c.h.b16 %v2082
    %v7693 = vunpack.c.l.b16 %v2083
    %v7694 = vunpack.c.h.b16 %v2083
    %v7695 = vunpack.c.l.b16 %v2084
    %v7696 = vunpack.c.h.b16 %v2084
    %v7697 = vunpack.c.l.b16 %v2085
    %v7698 = vunpack.c.h.b16 %v2085
    %v7699 = vunpack.c.l.b16 %v2086
    %v7700 = vunpack.c.h.b16 %v2086
    %v7701 = vunpack.c.l.b16 %v2087
    %v7702 = vunpack.c.h.b16 %v2087
    %v7703 = vunpack.c.l.b16 %v2088
    %v7704 = vunpack.c.h.b16 %v2088
    %v7705 = vunpack.c.l.b16 %v2089
    %v7706 = vunpack.c.h.b16 %v2089
    %v7707 = vunpack.c.l.b16 %v2090
    %v7708 = vunpack.c.h.b16 %v2090
    %v7709 = vunpack.c.l.b16 %v2091
    %v7710 = vunpack.c.h.b16 %v2091
    %v7711 = vunpack.c.l.b16 %v2092
    %v7712 = vunpack.c.h.b16 %v2092
    %v7713 = vunpack.c.l.b16 %v2093
    %v7714 = vunpack.c.h.b16 %v2093
    %v7715 = vunpack.c.l.b16 %v2094
    %v7716 = vunpack.c.h.b16 %v2094
    %v7717 = vunpack.c.l.b16 %v2095
    %v7718 = vunpack.c.h.b16 %v2095
    %v7719 = vunpack.c.l.b16 %v2096
    %v7720 = vunpack.c.h.b16 %v2096
    %v7721 = vunpack.c.l.b16 %v2097
    %v7722 = vunpack.c.h.b16 %v2097
    %v7723 = vunpack.c.l.b16 %v2098
    %v7724 = vunpack.c.h.b16 %v2098
    %v7725 = vunpack.c.l.b16 %v2099
    %v7726 = vunpack.c.h.b16 %v2099
    %v7727 = vunpack.c.l.b16 %v2100
    %v7728 = vunpack.c.h.b16 %v2100
    %v7729 = vunpack.c.l.b16 %v2101
    %v7730 = vunpack.c.h.b16 %v2101
    %v7731 = vunpack.c.l.b16 %v2102
    %v7732 = vunpack.c.h.b16 %v2102
    %v7733 = vunpack.c.l.b16 %v2103
    %v7734 = vunpack.c.h.b16 %v2103
    %v7735 = vunpack.c.l.b16 %v2104
    %v7736 = vunpack.c.h.b16 %v2104
    %v7737 = vunpack.c.l.b16 %v2105
    %v7738 = vunpack.c.h.b16 %v2105
    %v7739 = vunpack.c.l.b16 %v2106
    %v7740 = vunpack.c.h.b16 %v2106
    %v7741 = vunpack.c.l.b16 %v2107
    %v7742 = vunpack.c.h.b16 %v2107
    %v7743 = vunpack.c.l.b16 %v2108
    %v7744 = vunpack.c.h.b16 %v2108
    %v7745 = vunpack.c.l.b16 %v2109
    %v7746 = vunpack.c.h.b16 %v2109
    %v7747 = vunpack.c.l.b16 %v2110
    %v7748 = vunpack.c.h.b16 %v2110
    %v7749 = vunpack.c.l.b16 %v2111
    %v7750 = vunpack.c.h.b16 %v2111
    %v7751 = vunpack.c.l.b16 %v2112
    %v7752 = vunpack.c.h.b16 %v2112
    %v7753 = vunpack.c.l.b16 %v2113
    %v7754 = vunpack.c.h.b16 %v2113
    %v7755 = vunpack.c.l.b16 %v2114
    %v7756 = vunpack.c.h.b16 %v2114
    %v7757 = vunpack.c.l.b16 %v2115
    %v7758 = vunpack.c.h.b16 %v2115
    %v7759 = vunpack.c.l.b16 %v2116
    %v7760 = vunpack.c.h.b16 %v2116
    %v7761 = vunpack.c.l.b16 %v2117
    %v7762 = vunpack.c.h.b16 %v2117
    %v7763 = vunpack.c.l.b16 %v2118
    %v7764 = vunpack.c.h.b16 %v2118
    %v7765 = vunpack.c.l.b16 %v2119
    %v7766 = vunpack.c.h.b16 %v2119
    %v7767 = vunpack.c.l.b16 %v2120
    %v7768 = vunpack.c.h.b16 %v2120
    %v7769 = vunpack.c.l.b16 %v2121
    %v7770 = vunpack.c.h.b16 %v2121
    %v7771 = vunpack.c.l.b16 %v2122
    %v7772 = vunpack.c.h.b16 %v2122
    %v7773 = vunpack.c.l.b16 %v2123
    %v7774 = vunpack.c.h.b16 %v2123
    %v7775 = vunpack.c.l.b16 %v2124
    %v7776 = vunpack.c.h.b16 %v2124
    %v7777 = vunpack.c.l.b16 %v2125
    %v7778 = vunpack.c.h.b16 %v2125
    %v7779 = vunpack.c.l.b16 %v2126
    %v7780 = vunpack.c.h.b16 %v2126
    %v7781 = vunpack.c.l.b16 %v2127
    %v7782 = vunpack.c.h.b16 %v2127
    %v7783 = vunpack.c.l.b16 %v2128
    %v7784 = vunpack.c.h.b16 %v2128
    %v7785 = vunpack.c.l.b16 %v2129
    %v7786 = vunpack.c.h.b16 %v2129
    %v7787 = vunpack.c.l.b16 %v2130
    %v7788 = vunpack.c.h.b16 %v2130
    %v7789 = vunpack.c.l.b16 %v2131
    %v7790 = vunpack.c.h.b16 %v2131
    %v7791 = vunpack.c.l.b16 %v2132
    %v7792 = vunpack.c.h.b16 %v2132
    %v7793 = vunpack.c.l.b16 %v2133
    %v7794 = vunpack.c.h.b16 %v2133
    %v7795 = vunpack.c.l.b16 %v2134
    %v7796 = vunpack.c.h.b16 %v2134
    %v7797 = vunpack.c.l.b16 %v2135
    %v7798 = vunpack.c.h.b16 %v2135
    %v7799 = vunpack.c.l.b16 %v2136
    %v7800 = vunpack.c.h.b16 %v2136
    %v7801 = vunpack.c.l.b16 %v2137
    %v7802 = vunpack.c.h.b16 %v2137
    %v7803 = vunpack.c.l.b16 %v2138
    %v7804 = vunpack.c.h.b16 %v2138
    %v7805 = vunpack.c.l.b16 %v2139
    %v7806 = vunpack.c.h.b16 %v2139
    %v7807 = vunpack.c.l.b16 %v2140
    %v7808 = vunpack.c.h.b16 %v2140
    %v7809 = vunpack.c.l.b16 %v2141
    %v7810 = vunpack.c.h.b16 %v2141
    %v7811 = vunpack.c.l.b16 %v2142
    %v7812 = vunpack.c.h.b16 %v2142
    %v7813 = vunpack.c.l.b16 %v2143
    %v7814 = vunpack.c.h.b16 %v2143
    %v7815 = vunpack.c.l.b16 %v2144
    %v7816 = vunpack.c.h.b16 %v2144
    %v7817 = vunpack.c.l.b16 %v2145
    %v7818 = vunpack.c.h.b16 %v2145
    %v7819 = vunpack.c.l.b16 %v2146
    %v7820 = vunpack.c.h.b16 %v2146
    %v7821 = vunpack.c.l.b16 %v2147
    %v7822 = vunpack.c.h.b16 %v2147
    %v7823 = vunpack.c.l.b16 %v2148
    %v7824 = vunpack.c.h.b16 %v2148
    %v7825 = vunpack.c.l.b16 %v2149
    %v7826 = vunpack.c.h.b16 %v2149
    %v7827 = vunpack.c.l.b16 %v2150
    %v7828 = vunpack.c.h.b16 %v2150
    %v7829 = vunpack.c.l.b16 %v2151
    %v7830 = vunpack.c.h.b16 %v2151
    %v7831 = vunpack.c.l.b16 %v2152
    %v7832 = vunpack.c.h.b16 %v2152
    %v7833 = vunpack.c.l.b16 %v2153
    %v7834 = vunpack.c.h.b16 %v2153
    %v7835 = vunpack.c.l.b16 %v2154
    %v7836 = vunpack.c.h.b16 %v2154
    %v7837 = vunpack.c.l.b16 %v2155
    %v7838 = vunpack.c.h.b16 %v2155
    %v7839 = vunpack.c.l.b16 %v2156
    %v7840 = vunpack.c.h.b16 %v2156
    %v7841 = vunpack.c.l.b16 %v2157
    %v7842 = vunpack.c.h.b16 %v2157
    %v7843 = vunpack.c.l.b16 %v2158
    %v7844 = vunpack.c.h.b16 %v2158
    %v7845 = vunpack.c.l.b16 %v2159
    %v7846 = vunpack.c.h.b16 %v2159
    %v7847 = vunpack.c.l.b16 %v2160
    %v7848 = vunpack.c.h.b16 %v2160
    %v7849 = vunpack.c.l.b16 %v2161
    %v7850 = vunpack.c.h.b16 %v2161
    %v7851 = vunpack.c.l.b16 %v2162
    %v7852 = vunpack.c.h.b16 %v2162
    %v7853 = vunpack.c.l.b16 %v2163
    %v7854 = vunpack.c.h.b16 %v2163
    %v7855 = vunpack.c.l.b16 %v2164
    %v7856 = vunpack.c.h.b16 %v2164
    %v7857 = vunpack.c.l.b16 %v2165
    %v7858 = vunpack.c.h.b16 %v2165
    %v7859 = vunpack.c.l.b16 %v2166
    %v7860 = vunpack.c.h.b16 %v2166
    %v7861 = vunpack.c.l.b16 %v2167
    %v7862 = vunpack.c.h.b16 %v2167
    %v7863 = vunpack.c.l.b16 %v2168
    %v7864 = vunpack.c.h.b16 %v2168
    %v7865 = vunpack.c.l.b16 %v2169
    %v7866 = vunpack.c.h.b16 %v2169
    %v7867 = vunpack.c.l.b16 %v2170
    %v7868 = vunpack.c.h.b16 %v2170
    %v7869 = vunpack.c.l.b16 %v2171
    %v7870 = vunpack.c.h.b16 %v2171
    %v7871 = vunpack.c.l.b16 %v2172
    %v7872 = vunpack.c.h.b16 %v2172
    %v7873 = vunpack.c.l.b16 %v2173
    %v7874 = vunpack.c.h.b16 %v2173
    %v7875 = vunpack.c.l.b16 %v2174
    %v7876 = vunpack.c.h.b16 %v2174
    %v7877 = vunpack.c.l.b16 %v2175
    %v7878 = vunpack.c.h.b16 %v2175
    %v7879 = vunpack.c.l.b16 %v2176
    %v7880 = vunpack.c.h.b16 %v2176
    %v7881 = vunpack.c.l.b16 %v2177
    %v7882 = vunpack.c.h.b16 %v2177
    %v7883 = vunpack.c.l.b16 %v2178
    %v7884 = vunpack.c.h.b16 %v2178
    %v7885 = vunpack.c.l.b16 %v2179
    %v7886 = vunpack.c.h.b16 %v2179
    %v7887 = vunpack.c.l.b16 %v2180
    %v7888 = vunpack.c.h.b16 %v2180
    %v7889 = vunpack.c.l.b16 %v2181
    %v7890 = vunpack.c.h.b16 %v2181
    %v7891 = vunpack.c.l.b16 %v2182
    %v7892 = vunpack.c.h.b16 %v2182
    %v7893 = vunpack.c.l.b16 %v2183
    %v7894 = vunpack.c.h.b16 %v2183
    %v7895 = vunpack.c.l.b16 %v2184
    %v7896 = vunpack.c.h.b16 %v2184
    %v7897 = vunpack.c.l.b16 %v2185
    %v7898 = vunpack.c.h.b16 %v2185
    %v7899 = vunpack.c.l.b16 %v2186
    %v7900 = vunpack.c.h.b16 %v2186
    %v7901 = vunpack.c.l.b16 %v2187
    %v7902 = vunpack.c.h.b16 %v2187
    %v7903 = vunpack.c.l.b16 %v2188
    %v7904 = vunpack.c.h.b16 %v2188
    %v7905 = vunpack.c.l.b16 %v2189
    %v7906 = vunpack.c.h.b16 %v2189
    %v7907 = vunpack.c.l.b16 %v2190
    %v7908 = vunpack.c.h.b16 %v2190
    %v7909 = vunpack.c.l.b16 %v2191
    %v7910 = vunpack.c.h.b16 %v2191
    %v7911 = vunpack.c.l.b16 %v2192
    %v7912 = vunpack.c.h.b16 %v2192
    %v7913 = vunpack.c.l.b16 %v2193
    %v7914 = vunpack.c.h.b16 %v2193
    %v7915 = vunpack.c.l.b16 %v2194
    %v7916 = vunpack.c.h.b16 %v2194
    %v7917 = vunpack.c.l.b16 %v2195
    %v7918 = vunpack.c.h.b16 %v2195
    %v7919 = vunpack.c.l.b16 %v2196
    %v7920 = vunpack.c.h.b16 %v2196
    %v7921 = vunpack.c.l.b16 %v2197
    %v7922 = vunpack.c.h.b16 %v2197
    %v7923 = vunpack.c.l.b16 %v2198
    %v7924 = vunpack.c.h.b16 %v2198
    %v7925 = vunpack.c.l.b16 %v2199
    %v7926 = vunpack.c.h.b16 %v2199
    %v7927 = vunpack.c.l.b16 %v2200
    %v7928 = vunpack.c.h.b16 %v2200
    %v7929 = vunpack.c.l.b16 %v2201
    %v7930 = vunpack.c.h.b16 %v2201
    %v7931 = vunpack.c.l.b16 %v2202
    %v7932 = vunpack.c.h.b16 %v2202
    %v7933 = vunpack.c.l.b16 %v2203
    %v7934 = vunpack.c.h.b16 %v2203
    %v7935 = vunpack.c.l.b16 %v2204
    %v7936 = vunpack.c.h.b16 %v2204
    %v7937 = vunpack.c.l.b16 %v2205
    %v7938 = vunpack.c.h.b16 %v2205
    %v7939 = vunpack.c.l.b16 %v2206
    %v7940 = vunpack.c.h.b16 %v2206
    %v7941 = vunpack.c.l.b16 %v2207
    %v7942 = vunpack.c.h.b16 %v2207
    %v7943 = vunpack.c.l.b16 %v2208
    %v7944 = vunpack.c.h.b16 %v2208
    %v7945 = vunpack.c.l.b16 %v2209
    %v7946 = vunpack.c.h.b16 %v2209
    %v7947 = vunpack.c.l.b16 %v2210
    %v7948 = vunpack.c.h.b16 %v2210
    %v7949 = vunpack.c.l.b16 %v2211
    %v7950 = vunpack.c.h.b16 %v2211
    %v7951 = vunpack.c.l.b16 %v2212
    %v7952 = vunpack.c.h.b16 %v2212
    %v7953 = vunpack.c.l.b16 %v2213
    %v7954 = vunpack.c.h.b16 %v2213
    %v7955 = vunpack.c.l.b16 %v2214
    %v7956 = vunpack.c.h.b16 %v2214
    %v7957 = vunpack.c.l.b16 %v2215
    %v7958 = vunpack.c.h.b16 %v2215
    %v7959 = vunpack.c.l.b16 %v2216
    %v7960 = vunpack.c.h.b16 %v2216
    %v7961 = vunpack.c.l.b16 %v2217
    %v7962 = vunpack.c.h.b16 %v2217
    %v7963 = vunpack.c.l.b16 %v2218
    %v7964 = vunpack.c.h.b16 %v2218
    %v7965 = vunpack.c.l.b16 %v2219
    %v7966 = vunpack.c.h.b16 %v2219
    %v7967 = vunpack.c.l.b16 %v2220
    %v7968 = vunpack.c.h.b16 %v2220
    %v7969 = vunpack.c.l.b16 %v2221
    %v7970 = vunpack.c.h.b16 %v2221
    %v7971 = vunpack.c.l.b16 %v2222
    %v7972 = vunpack.c.h.b16 %v2222
    %v7973 = vunpack.c.l.b16 %v2223
    %v7974 = vunpack.c.h.b16 %v2223
    %v7975 = vunpack.c.l.b16 %v2224
    %v7976 = vunpack.c.h.b16 %v2224
    %v7977 = vunpack.c.l.b16 %v2225
    %v7978 = vunpack.c.h.b16 %v2225
    %v7979 = vunpack.c.l.b16 %v2226
    %v7980 = vunpack.c.h.b16 %v2226
    %v7981 = vunpack.c.l.b16 %v2227
    %v7982 = vunpack.c.h.b16 %v2227
    %v7983 = vunpack.c.l.b16 %v2228
    %v7984 = vunpack.c.h.b16 %v2228
    %v7985 = vunpack.c.l.b16 %v2229
    %v7986 = vunpack.c.h.b16 %v2229
    %v7987 = vunpack.c.l.b16 %v2230
    %v7988 = vunpack.c.h.b16 %v2230
    %v7989 = vunpack.c.l.b16 %v2231
    %v7990 = vunpack.c.h.b16 %v2231
    %v7991 = vunpack.c.l.b16 %v2232
    %v7992 = vunpack.c.h.b16 %v2232
    %v7993 = vunpack.c.l.b16 %v2233
    %v7994 = vunpack.c.h.b16 %v2233
    %v7995 = vunpack.c.l.b16 %v2234
    %v7996 = vunpack.c.h.b16 %v2234
    %v7997 = vunpack.c.l.b16 %v2235
    %v7998 = vunpack.c.h.b16 %v2235
    %v7999 = vunpack.c.l.b16 %v2236
    %v8000 = vunpack.c.h.b16 %v2236
    %v8001 = vunpack.c.l.b16 %v2237
    %v8002 = vunpack.c.h.b16 %v2237
    %v8003 = vunpack.c.l.b16 %v2238
    %v8004 = vunpack.c.h.b16 %v2238
    %v8005 = vunpack.c.l.b16 %v2239
    %v8006 = vunpack.c.h.b16 %v2239
    %v8007 = vunpack.c.l.b16 %v2240
    %v8008 = vunpack.c.h.b16 %v2240
    %v8009 = vunpack.c.l.b16 %v2241
    %v8010 = vunpack.c.h.b16 %v2241
    %v8011 = vunpack.c.l.b16 %v2242
    %v8012 = vunpack.c.h.b16 %v2242
    %v8013 = vunpack.c.l.b16 %v2243
    %v8014 = vunpack.c.h.b16 %v2243
    %v8015 = vunpack.c.l.b16 %v2244
    %v8016 = vunpack.c.h.b16 %v2244
    %v8017 = vunpack.c.l.b16 %v2245
    %v8018 = vunpack.c.h.b16 %v2245
    %v8019 = vunpack.c.l.b16 %v2246
    %v8020 = vunpack.c.h.b16 %v2246
    %v8021 = vunpack.c.l.b16 %v2247
    %v8022 = vunpack.c.h.b16 %v2247
    %v8023 = vunpack.c.l.b16 %v2248
    %v8024 = vunpack.c.h.b16 %v2248
    %v8025 = vunpack.c.l.b16 %v2249
    %v8026 = vunpack.c.h.b16 %v2249
    %v8027 = vunpack.c.l.b16 %v2250
    %v8028 = vunpack.c.h.b16 %v2250
    %v8029 = vpack.c.b16 %v4197, %v4189
    %v8030 = vpack.c.b16 %v4198, %v4190
    %v8031 = vpack.c.b16 %v4199, %v4191
    %v8032 = vpack.c.b16 %v4200, %v4192
    %v8033 = vpack.c.b16 %v4201, %v4193
    %v8034 = vpack.c.b16 %v4202, %v4194
    %v8035 = vpack.c.b16 %v4203, %v4195
    %v8036 = vpack.c.b16 %v4204, %v4196
    %v8037 = vpack.c.b16 %v4213, %v4205
    %v8038 = vpack.c.b16 %v4214, %v4206
    %v8039 = vpack.c.b16 %v4215, %v4207
    %v8040 = vpack.c.b16 %v4216, %v4208
    %v8041 = vpack.c.b16 %v4217, %v4209
    %v8042 = vpack.c.b16 %v4218, %v4210
    %v8043 = vpack.c.b16 %v4219, %v4211
    %v8044 = vpack.c.b16 %v4220, %v4212
    %v8045 = vpack.c.b16 %v4229, %v4221
    %v8046 = vpack.c.b16 %v4230, %v4222
    %v8047 = vpack.c.b16 %v4231, %v4223
    %v8048 = vpack.c.b16 %v4232, %v4224
    %v8049 = vpack.c.b16 %v4233, %v4225
    %v8050 = vpack.c.b16 %v4234, %v4226
    %v8051 = vpack.c.b16 %v4235, %v4227
    %v8052 = vpack.c.b16 %v4236, %v4228
    %v8053 = vpack.c.b16 %v4245, %v4237
    %v8054 = vpack.c.b16 %v4246, %v4238
    %v8055 = vpack.c.b16 %v4247, %v4239
    %v8056 = vpack.c.b16 %v4248, %v4240
    %v8057 = vpack.c.b16 %v4249, %v4241
    %v8058 = vpack.c.b16 %v4250, %v4242
    %v8059 = vpack.c.b16 %v4251, %v4243
    %v8060 = vpack.c.b16 %v4252, %v4244
    %v8061 = vpack.c.b16 %v4261, %v4253
    %v8062 = vpack.c.b16 %v4262, %v4254
    %v8063 = vpack.c.b16 %v4263, %v4255
    %v8064 = vpack.c.b16 %v4264, %v4256
    %v8065 = vpack.c.b16 %v4265, %v4257
    %v8066 = vpack.c.b16 %v4266, %v4258
    %v8067 = vpack.c.b16 %v4267, %v4259
    %v8068 = vpack.c.b16 %v4268, %v4260
    %v8069 = vpack.c.b16 %v4277, %v4269
    %v8070 = vpack.c.b16 %v4278, %v4270
    %v8071 = vpack.c.b16 %v4279, %v4271
    %v8072 = vpack.c.b16 %v4280, %v4272
    %v8073 = vpack.c.b16 %v4281, %v4273
    %v8074 = vpack.c.b16 %v4282, %v4274
    %v8075 = vpack.c.b16 %v4283, %v4275
    %v8076 = vpack.c.b16 %v4284, %v4276
    %v8077 = vpack.c.b16 %v4293, %v4285
    %v8078 = vpack.c.b16 %v4294, %v4286
    %v8079 = vpack.c.b16 %v4295, %v4287
    %v8080 = vpack.c.b16 %v4296, %v4288
    %v8081 = vpack.c.b16 %v4297, %v4289
    %v8082 = vpack.c.b16 %v4298, %v4290
    %v8083 = vpack.c.b16 %v4299, %v4291
    %v8084 = vpack.c.b16 %v4300, %v4292
    %v8085 = vpack.c.b16 %v4309, %v4301
    %v8086 = vpack.c.b16 %v4310, %v4302
    %v8087 = vpack.c.b16 %v4311, %v4303
    %v8088 = vpack.c.b16 %v4312, %v4304
    %v8089 = vpack.c.b16 %v4313, %v4305
    %v8090 = vpack.c.b16 %v4314, %v4306
    %v8091 = vpack.c.b16 %v4315, %v4307
    %v8092 = vpack.c.b16 %v4316, %v4308
    %v8093 = vpack.c.b16 %v4325, %v4317
    %v8094 = vpack.c.b16 %v4326, %v4318
    %v8095 = vpack.c.b16 %v4327, %v4319
    %v8096 = vpack.c.b16 %v4328, %v4320
    %v8097 = vpack.c.b16 %v4329, %v4321
    %v8098 = vpack.c.b16 %v4330, %v4322
    %v8099 = vpack.c.b16 %v4331, %v4323
    %v8100 = vpack.c.b16 %v4332, %v4324
    %v8101 = vpack.c.b16 %v4341, %v4333
    %v8102 = vpack.c.b16 %v4342, %v4334
    %v8103 = vpack.c.b16 %v4343, %v4335
    %v8104 = vpack.c.b16 %v4344, %v4336
    %v8105 = vpack.c.b16 %v4345, %v4337
    %v8106 = vpack.c.b16 %v4346, %v4338
    %v8107 = vpack.c.b16 %v4347, %v4339
    %v8108 = vpack.c.b16 %v4348, %v4340
    %v8109 = vpack.c.b16 %v4357, %v4349
    %v8110 = vpack.c.b16 %v4358, %v4350
    %v8111 = vpack.c.b16 %v4359, %v4351
    %v8112 = vpack.c.b16 %v4360, %v4352
    %v8113 = vpack.c.b16 %v4361, %v4353
    %v8114 = vpack.c.b16 %v4362, %v4354
    %v8115 = vpack.c.b16 %v4363, %v4355
    %v8116 = vpack.c.b16 %v4364, %v4356
    %v8117 = vpack.c.b16 %v4373, %v4365
    %v8118 = vpack.c.b16 %v4374, %v4366
    %v8119 = vpack.c.b16 %v4375, %v4367
    %v8120 = vpack.c.b16 %v4376, %v4368
    %v8121 = vpack.c.b16 %v4377, %v4369
    %v8122 = vpack.c.b16 %v4378, %v4370
    %v8123 = vpack.c.b16 %v4379, %v4371
    %v8124 = vpack.c.b16 %v4380, %v4372
    %v8125 = vpack.c.b16 %v4389, %v4381
    %v8126 = vpack.c.b16 %v4390, %v4382
    %v8127 = vpack.c.b16 %v4391, %v4383
    %v8128 = vpack.c.b16 %v4392, %v4384
    %v8129 = vpack.c.b16 %v4393, %v4385
    %v8130 = vpack.c.b16 %v4394, %v4386
    %v8131 = vpack.c.b16 %v4395, %v4387
    %v8132 = vpack.c.b16 %v4396, %v4388
    %v8133 = vpack.c.b16 %v4405, %v4397
    %v8134 = vpack.c.b16 %v4406, %v4398
    %v8135 = vpack.c.b16 %v4407, %v4399
    %v8136 = vpack.c.b16 %v4408, %v4400
    %v8137 = vpack.c.b16 %v4409, %v4401
    %v8138 = vpack.c.b16 %v4410, %v4402
    %v8139 = vpack.c.b16 %v4411, %v4403
    %v8140 = vpack.c.b16 %v4412, %v4404
    %v8141 = vpack.c.b16 %v4421, %v4413
    %v8142 = vpack.c.b16 %v4422, %v4414
    %v8143 = vpack.c.b16 %v4423, %v4415
    %v8144 = vpack.c.b16 %v4424, %v4416
    %v8145 = vpack.c.b16 %v4425, %v4417
    %v8146 = vpack.c.b16 %v4426, %v4418
    %v8147 = vpack.c.b16 %v4427, %v4419
    %v8148 = vpack.c.b16 %v4428, %v4420
    %v8149 = vpack.c.b16 %v4437, %v4429
    %v8150 = vpack.c.b16 %v4438, %v4430
    %v8151 = vpack.c.b16 %v4439, %v4431
    %v8152 = vpack.c.b16 %v4440, %v4432
    %v8153 = vpack.c.b16 %v4441, %v4433
    %v8154 = vpack.c.b16 %v4442, %v4434
    %v8155 = vpack.c.b16 %v4443, %v4435
    %v8156 = vpack.c.b16 %v4444, %v4436
    %v8157 = vpack.c.b16 %v4453, %v4445
    %v8158 = vpack.c.b16 %v4454, %v4446
    %v8159 = vpack.c.b16 %v4455, %v4447
    %v8160 = vpack.c.b16 %v4456, %v4448
    %v8161 = vpack.c.b16 %v4457, %v4449
    %v8162 = vpack.c.b16 %v4458, %v4450
    %v8163 = vpack.c.b16 %v4459, %v4451
    %v8164 = vpack.c.b16 %v4460, %v4452
    %v8165 = vpack.c.b16 %v4469, %v4461
    %v8166 = vpack.c.b16 %v4470, %v4462
    %v8167 = vpack.c.b16 %v4471, %v4463
    %v8168 = vpack.c.b16 %v4472, %v4464
    %v8169 = vpack.c.b16 %v4473, %v4465
    %v8170 = vpack.c.b16 %v4474, %v4466
    %v8171 = vpack.c.b16 %v4475, %v4467
    %v8172 = vpack.c.b16 %v4476, %v4468
    %v8173 = vpack.c.b16 %v4485, %v4477
    %v8174 = vpack.c.b16 %v4486, %v4478
    %v8175 = vpack.c.b16 %v4487, %v4479
    %v8176 = vpack.c.b16 %v4488, %v4480
    %v8177 = vpack.c.b16 %v4489, %v4481
    %v8178 = vpack.c.b16 %v4490, %v4482
    %v8179 = vpack.c.b16 %v4491, %v4483
    %v8180 = vpack.c.b16 %v4492, %v4484
    %v8181 = vpack.c.b16 %v4501, %v4493
    %v8182 = vpack.c.b16 %v4502, %v4494
    %v8183 = vpack.c.b16 %v4503, %v4495
    %v8184 = vpack.c.b16 %v4504, %v4496
    %v8185 = vpack.c.b16 %v4505, %v4497
    %v8186 = vpack.c.b16 %v4506, %v4498
    %v8187 = vpack.c.b16 %v4507, %v4499
    %v8188 = vpack.c.b16 %v4508, %v4500
    %v8189 = vpack.c.b16 %v4517, %v4509
    %v8190 = vpack.c.b16 %v4518, %v4510
    %v8191 = vpack.c.b16 %v4519, %v4511
    %v8192 = vpack.c.b16 %v4520, %v4512
    %v8193 = vpack.c.b16 %v4521, %v4513
    %v8194 = vpack.c.b16 %v4522, %v4514
    %v8195 = vpack.c.b16 %v4523, %v4515
    %v8196 = vpack.c.b16 %v4524, %v4516
    %v8197 = vpack.c.b16 %v4533, %v4525
    %v8198 = vpack.c.b16 %v4534, %v4526
    %v8199 = vpack.c.b16 %v4535, %v4527
    %v8200 = vpack.c.b16 %v4536, %v4528
    %v8201 = vpack.c.b16 %v4537, %v4529
    %v8202 = vpack.c.b16 %v4538, %v4530
    %v8203 = vpack.c.b16 %v4539, %v4531
    %v8204 = vpack.c.b16 %v4540, %v4532
    %v8205 = vpack.c.b16 %v4549, %v4541
    %v8206 = vpack.c.b16 %v4550, %v4542
    %v8207 = vpack.c.b16 %v4551, %v4543
    %v8208 = vpack.c.b16 %v4552, %v4544
    %v8209 = vpack.c.b16 %v4553, %v4545
    %v8210 = vpack.c.b16 %v4554, %v4546
    %v8211 = vpack.c.b16 %v4555, %v4547
    %v8212 = vpack.c.b16 %v4556, %v4548
    %v8213 = vpack.c.b16 %v4565, %v4557
    %v8214 = vpack.c.b16 %v4566, %v4558
    %v8215 = vpack.c.b16 %v4567, %v4559
    %v8216 = vpack.c.b16 %v4568, %v4560
    %v8217 = vpack.c.b16 %v4569, %v4561
    %v8218 = vpack.c.b16 %v4570, %v4562
    %v8219 = vpack.c.b16 %v4571, %v4563
    %v8220 = vpack.c.b16 %v4572, %v4564
    %v8221 = vpack.c.b16 %v4581, %v4573
    %v8222 = vpack.c.b16 %v4582, %v4574
    %v8223 = vpack.c.b16 %v4583, %v4575
    %v8224 = vpack.c.b16 %v4584, %v4576
    %v8225 = vpack.c.b16 %v4585, %v4577
    %v8226 = vpack.c.b16 %v4586, %v4578
    %v8227 = vpack.c.b16 %v4587, %v4579
    %v8228 = vpack.c.b16 %v4588, %v4580
    %v8229 = vpack.c.b16 %v4597, %v4589
    %v8230 = vpack.c.b16 %v4598, %v4590
    %v8231 = vpack.c.b16 %v4599, %v4591
    %v8232 = vpack.c.b16 %v4600, %v4592
    %v8233 = vpack.c.b16 %v4601, %v4593
    %v8234 = vpack.c.b16 %v4602, %v4594
    %v8235 = vpack.c.b16 %v4603, %v4595
    %v8236 = vpack.c.b16 %v4604, %v4596
    %v8237 = vpack.c.b16 %v4613, %v4605
    %v8238 = vpack.c.b16 %v4614, %v4606
    %v8239 = vpack.c.b16 %v4615, %v4607
    %v8240 = vpack.c.b16 %v4616, %v4608
    %v8241 = vpack.c.b16 %v4617, %v4609
    %v8242 = vpack.c.b16 %v4618, %v4610
    %v8243 = vpack.c.b16 %v4619, %v4611
    %v8244 = vpack.c.b16 %v4620, %v4612
    %v8245 = vpack.c.b16 %v4629, %v4621
    %v8246 = vpack.c.b16 %v4630, %v4622
    %v8247 = vpack.c.b16 %v4631, %v4623
    %v8248 = vpack.c.b16 %v4632, %v4624
    %v8249 = vpack.c.b16 %v4633, %v4625
    %v8250 = vpack.c.b16 %v4634, %v4626
    %v8251 = vpack.c.b16 %v4635, %v4627
    %v8252 = vpack.c.b16 %v4636, %v4628
    %v8253 = vpack.c.b16 %v4645, %v4637
    %v8254 = vpack.c.b16 %v4646, %v4638
    %v8255 = vpack.c.b16 %v4647, %v4639
    %v8256 = vpack.c.b16 %v4648, %v4640
    %v8257 = vpack.c.b16 %v4649, %v4641
    %v8258 = vpack.c.b16 %v4650, %v4642
    %v8259 = vpack.c.b16 %v4651, %v4643
    %v8260 = vpack.c.b16 %v4652, %v4644
    %v8261 = vpack.c.b16 %v4661, %v4653
    %v8262 = vpack.c.b16 %v4662, %v4654
    %v8263 = vpack.c.b16 %v4663, %v4655
    %v8264 = vpack.c.b16 %v4664, %v4656
    %v8265 = vpack.c.b16 %v4665, %v4657
    %v8266 = vpack.c.b16 %v4666, %v4658
    %v8267 = vpack.c.b16 %v4667, %v4659
    %v8268 = vpack.c.b16 %v4668, %v4660
    %v8269 = vpack.c.b16 %v4677, %v4669
    %v8270 = vpack.c.b16 %v4678, %v4670
    %v8271 = vpack.c.b16 %v4679, %v4671
    %v8272 = vpack.c.b16 %v4680, %v4672
    %v8273 = vpack.c.b16 %v4681, %v4673
    %v8274 = vpack.c.b16 %v4682, %v4674
    %v8275 = vpack.c.b16 %v4683, %v4675
    %v8276 = vpack.c.b16 %v4684, %v4676
    %v8277 = vpack.c.b16 %v4693, %v4685
    %v8278 = vpack.c.b16 %v4694, %v4686
    %v8279 = vpack.c.b16 %v4695, %v4687
    %v8280 = vpack.c.b16 %v4696, %v4688
    %v8281 = vpack.c.b16 %v4697, %v4689
    %v8282 = vpack.c.b16 %v4698, %v4690
    %v8283 = vpack.c.b16 %v4699, %v4691
    %v8284 = vpack.c.b16 %v4700, %v4692
    %v8285 = vpack.c.b16 %v4709, %v4701
    %v8286 = vpack.c.b16 %v4710, %v4702
    %v8287 = vpack.c.b16 %v4711, %v4703
    %v8288 = vpack.c.b16 %v4712, %v4704
    %v8289 = vpack.c.b16 %v4713, %v4705
    %v8290 = vpack.c.b16 %v4714, %v4706
    %v8291 = vpack.c.b16 %v4715, %v4707
    %v8292 = vpack.c.b16 %v4716, %v4708
    %v8293 = vpack.c.b16 %v4725, %v4717
    %v8294 = vpack.c.b16 %v4726, %v4718
    %v8295 = vpack.c.b16 %v4727, %v4719
    %v8296 = vpack.c.b16 %v4728, %v4720
    %v8297 = vpack.c.b16 %v4729, %v4721
    %v8298 = vpack.c.b16 %v4730, %v4722
    %v8299 = vpack.c.b16 %v4731, %v4723
    %v8300 = vpack.c.b16 %v4732, %v4724
    %v8301 = vpack.c.b16 %v4741, %v4733
    %v8302 = vpack.c.b16 %v4742, %v4734
    %v8303 = vpack.c.b16 %v4743, %v4735
    %v8304 = vpack.c.b16 %v4744, %v4736
    %v8305 = vpack.c.b16 %v4745, %v4737
    %v8306 = vpack.c.b16 %v4746, %v4738
    %v8307 = vpack.c.b16 %v4747, %v4739
    %v8308 = vpack.c.b16 %v4748, %v4740
    %v8309 = vpack.c.b16 %v4757, %v4749
    %v8310 = vpack.c.b16 %v4758, %v4750
    %v8311 = vpack.c.b16 %v4759, %v4751
    %v8312 = vpack.c.b16 %v4760, %v4752
    %v8313 = vpack.c.b16 %v4761, %v4753
    %v8314 = vpack.c.b16 %v4762, %v4754
    %v8315 = vpack.c.b16 %v4763, %v4755
    %v8316 = vpack.c.b16 %v4764, %v4756
    %v8317 = vpack.c.b16 %v4773, %v4765
    %v8318 = vpack.c.b16 %v4774, %v4766
    %v8319 = vpack.c.b16 %v4775, %v4767
    %v8320 = vpack.c.b16 %v4776, %v4768
    %v8321 = vpack.c.b16 %v4777, %v4769
    %v8322 = vpack.c.b16 %v4778, %v4770
    %v8323 = vpack.c.b16 %v4779, %v4771
    %v8324 = vpack.c.b16 %v4780, %v4772
    %v8325 = vpack.c.b16 %v4789, %v4781
    %v8326 = vpack.c.b16 %v4790, %v4782
    %v8327 = vpack.c.b16 %v4791, %v4783
    %v8328 = vpack.c.b16 %v4792, %v4784
    %v8329 = vpack.c.b16 %v4793, %v4785
    %v8330 = vpack.c.b16 %v4794, %v4786
    %v8331 = vpack.c.b16 %v4795, %v4787
    %v8332 = vpack.c.b16 %v4796, %v4788
    %v8333 = vpack.c.b16 %v4805, %v4797
    %v8334 = vpack.c.b16 %v4806, %v4798
    %v8335 = vpack.c.b16 %v4807, %v4799
    %v8336 = vpack.c.b16 %v4808, %v4800
    %v8337 = vpack.c.b16 %v4809, %v4801
    %v8338 = vpack.c.b16 %v4810, %v4802
    %v8339 = vpack.c.b16 %v4811, %v4803
    %v8340 = vpack.c.b16 %v4812, %v4804
    %v8341 = vpack.c.b16 %v4821, %v4813
    %v8342 = vpack.c.b16 %v4822, %v4814
    %v8343 = vpack.c.b16 %v4823, %v4815
    %v8344 = vpack.c.b16 %v4824, %v4816
    %v8345 = vpack.c.b16 %v4825, %v4817
    %v8346 = vpack.c.b16 %v4826, %v4818
    %v8347 = vpack.c.b16 %v4827, %v4819
    %v8348 = vpack.c.b16 %v4828, %v4820
    %v8349 = vpack.c.b16 %v4837, %v4829
    %v8350 = vpack.c.b16 %v4838, %v4830
    %v8351 = vpack.c.b16 %v4839, %v4831
    %v8352 = vpack.c.b16 %v4840, %v4832
    %v8353 = vpack.c.b16 %v4841, %v4833
    %v8354 = vpack.c.b16 %v4842, %v4834
    %v8355 = vpack.c.b16 %v4843, %v4835
    %v8356 = vpack.c.b16 %v4844, %v4836
    %v8357 = vpack.c.b16 %v4853, %v4845
    %v8358 = vpack.c.b16 %v4854, %v4846
    %v8359 = vpack.c.b16 %v4855, %v4847
    %v8360 = vpack.c.b16 %v4856, %v4848
    %v8361 = vpack.c.b16 %v4857, %v4849
    %v8362 = vpack.c.b16 %v4858, %v4850
    %v8363 = vpack.c.b16 %v4859, %v4851
    %v8364 = vpack.c.b16 %v4860, %v4852
    %v8365 = vpack.c.b16 %v4869, %v4861
    %v8366 = vpack.c.b16 %v4870, %v4862
    %v8367 = vpack.c.b16 %v4871, %v4863
    %v8368 = vpack.c.b16 %v4872, %v4864
    %v8369 = vpack.c.b16 %v4873, %v4865
    %v8370 = vpack.c.b16 %v4874, %v4866
    %v8371 = vpack.c.b16 %v4875, %v4867
    %v8372 = vpack.c.b16 %v4876, %v4868
    %v8373 = vpack.c.b16 %v4885, %v4877
    %v8374 = vpack.c.b16 %v4886, %v4878
    %v8375 = vpack.c.b16 %v4887, %v4879
    %v8376 = vpack.c.b16 %v4888, %v4880
    %v8377 = vpack.c.b16 %v4889, %v4881
    %v8378 = vpack.c.b16 %v4890, %v4882
    %v8379 = vpack.c.b16 %v4891, %v4883
    %v8380 = vpack.c.b16 %v4892, %v4884
    %v8381 = vpack.c.b16 %v4901, %v4893
    %v8382 = vpack.c.b16 %v4902, %v4894
    %v8383 = vpack.c.b16 %v4903, %v4895
    %v8384 = vpack.c.b16 %v4904, %v4896
    %v8385 = vpack.c.b16 %v4905, %v4897
    %v8386 = vpack.c.b16 %v4906, %v4898
    %v8387 = vpack.c.b16 %v4907, %v4899
    %v8388 = vpack.c.b16 %v4908, %v4900
    %v8389 = vpack.c.b16 %v4917, %v4909
    %v8390 = vpack.c.b16 %v4918, %v4910
    %v8391 = vpack.c.b16 %v4919, %v4911
    %v8392 = vpack.c.b16 %v4920, %v4912
    %v8393 = vpack.c.b16 %v4921, %v4913
    %v8394 = vpack.c.b16 %v4922, %v4914
    %v8395 = vpack.c.b16 %v4923, %v4915
    %v8396 = vpack.c.b16 %v4924, %v4916
    %v8397 = vpack.c.b16 %v4933, %v4925
    %v8398 = vpack.c.b16 %v4934, %v4926
    %v8399 = vpack.c.b16 %v4935, %v4927
    %v8400 = vpack.c.b16 %v4936, %v4928
    %v8401 = vpack.c.b16 %v4937, %v4929
    %v8402 = vpack.c.b16 %v4938, %v4930
    %v8403 = vpack.c.b16 %v4939, %v4931
    %v8404 = vpack.c.b16 %v4940, %v4932
    %v8405 = vpack.c.b16 %v4949, %v4941
    %v8406 = vpack.c.b16 %v4950, %v4942
    %v8407 = vpack.c.b16 %v4951, %v4943
    %v8408 = vpack.c.b16 %v4952, %v4944
    %v8409 = vpack.c.b16 %v4953, %v4945
    %v8410 = vpack.c.b16 %v4954, %v4946
    %v8411 = vpack.c.b16 %v4955, %v4947
    %v8412 = vpack.c.b16 %v4956, %v4948
    %v8413 = vpack.c.b16 %v4965, %v4957
    %v8414 = vpack.c.b16 %v4966, %v4958
    %v8415 = vpack.c.b16 %v4967, %v4959
    %v8416 = vpack.c.b16 %v4968, %v4960
    %v8417 = vpack.c.b16 %v4969, %v4961
    %v8418 = vpack.c.b16 %v4970, %v4962
    %v8419 = vpack.c.b16 %v4971, %v4963
    %v8420 = vpack.c.b16 %v4972, %v4964
    %v8421 = vpack.c.b16 %v4981, %v4973
    %v8422 = vpack.c.b16 %v4982, %v4974
    %v8423 = vpack.c.b16 %v4983, %v4975
    %v8424 = vpack.c.b16 %v4984, %v4976
    %v8425 = vpack.c.b16 %v4985, %v4977
    %v8426 = vpack.c.b16 %v4986, %v4978
    %v8427 = vpack.c.b16 %v4987, %v4979
    %v8428 = vpack.c.b16 %v4988, %v4980
    %v8429 = vpack.c.b16 %v4997, %v4989
    %v8430 = vpack.c.b16 %v4998, %v4990
    %v8431 = vpack.c.b16 %v4999, %v4991
    %v8432 = vpack.c.b16 %v5000, %v4992
    %v8433 = vpack.c.b16 %v5001, %v4993
    %v8434 = vpack.c.b16 %v5002, %v4994
    %v8435 = vpack.c.b16 %v5003, %v4995
    %v8436 = vpack.c.b16 %v5004, %v4996
    %v8437 = vpack.c.b16 %v5013, %v5005
    %v8438 = vpack.c.b16 %v5014, %v5006
    %v8439 = vpack.c.b16 %v5015, %v5007
    %v8440 = vpack.c.b16 %v5016, %v5008
    %v8441 = vpack.c.b16 %v5017, %v5009
    %v8442 = vpack.c.b16 %v5018, %v5010
    %v8443 = vpack.c.b16 %v5019, %v5011
    %v8444 = vpack.c.b16 %v5020, %v5012
    %v8445 = vpack.c.b16 %v5029, %v5021
    %v8446 = vpack.c.b16 %v5030, %v5022
    %v8447 = vpack.c.b16 %v5031, %v5023
    %v8448 = vpack.c.b16 %v5032, %v5024
    %v8449 = vpack.c.b16 %v5033, %v5025
    %v8450 = vpack.c.b16 %v5034, %v5026
    %v8451 = vpack.c.b16 %v5035, %v5027
    %v8452 = vpack.c.b16 %v5036, %v5028
    %v8453 = vpack.c.b16 %v5045, %v5037
    %v8454 = vpack.c.b16 %v5046, %v5038
    %v8455 = vpack.c.b16 %v5047, %v5039
    %v8456 = vpack.c.b16 %v5048, %v5040
    %v8457 = vpack.c.b16 %v5049, %v5041
    %v8458 = vpack.c.b16 %v5050, %v5042
    %v8459 = vpack.c.b16 %v5051, %v5043
    %v8460 = vpack.c.b16 %v5052, %v5044
    %v8461 = vpack.c.b16 %v5061, %v5053
    %v8462 = vpack.c.b16 %v5062, %v5054
    %v8463 = vpack.c.b16 %v5063, %v5055
    %v8464 = vpack.c.b16 %v5064, %v5056
    %v8465 = vpack.c.b16 %v5065, %v5057
    %v8466 = vpack.c.b16 %v5066, %v5058
    %v8467 = vpack.c.b16 %v5067, %v5059
    %v8468 = vpack.c.b16 %v5068, %v5060
    %v8469 = vpack.c.b16 %v5077, %v5069
    %v8470 = vpack.c.b16 %v5078, %v5070
    %v8471 = vpack.c.b16 %v5079, %v5071
    %v8472 = vpack.c.b16 %v5080, %v5072
    %v8473 = vpack.c.b16 %v5081, %v5073
    %v8474 = vpack.c.b16 %v5082, %v5074
    %v8475 = vpack.c.b16 %v5083, %v5075
    %v8476 = vpack.c.b16 %v5084, %v5076
    %v8477 = vpack.c.b16 %v5093, %v5085
    %v8478 = vpack.c.b16 %v5094, %v5086
    %v8479 = vpack.c.b16 %v5095, %v5087
    %v8480 = vpack.c.b16 %v5096, %v5088
    %v8481 = vpack.c.b16 %v5097, %v5089
    %v8482 = vpack.c.b16 %v5098, %v5090
    %v8483 = vpack.c.b16 %v5099, %v5091
    %v8484 = vpack.c.b16 %v5100, %v5092
    %v8485 = vpack.c.b16 %v5109, %v5101
    %v8486 = vpack.c.b16 %v5110, %v5102
    %v8487 = vpack.c.b16 %v5111, %v5103
    %v8488 = vpack.c.b16 %v5112, %v5104
    %v8489 = vpack.c.b16 %v5113, %v5105
    %v8490 = vpack.c.b16 %v5114, %v5106
    %v8491 = vpack.c.b16 %v5115, %v5107
    %v8492 = vpack.c.b16 %v5116, %v5108
    %v8493 = vpack.c.b16 %v5125, %v5117
    %v8494 = vpack.c.b16 %v5126, %v5118
    %v8495 = vpack.c.b16 %v5127, %v5119
    %v8496 = vpack.c.b16 %v5128, %v5120
    %v8497 = vpack.c.b16 %v5129, %v5121
    %v8498 = vpack.c.b16 %v5130, %v5122
    %v8499 = vpack.c.b16 %v5131, %v5123
    %v8500 = vpack.c.b16 %v5132, %v5124
    %v8501 = vpack.c.b16 %v5141, %v5133
    %v8502 = vpack.c.b16 %v5142, %v5134
    %v8503 = vpack.c.b16 %v5143, %v5135
    %v8504 = vpack.c.b16 %v5144, %v5136
    %v8505 = vpack.c.b16 %v5145, %v5137
    %v8506 = vpack.c.b16 %v5146, %v5138
    %v8507 = vpack.c.b16 %v5147, %v5139
    %v8508 = vpack.c.b16 %v5148, %v5140
    %v8509 = vpack.c.b16 %v5157, %v5149
    %v8510 = vpack.c.b16 %v5158, %v5150
    %v8511 = vpack.c.b16 %v5159, %v5151
    %v8512 = vpack.c.b16 %v5160, %v5152
    %v8513 = vpack.c.b16 %v5161, %v5153
    %v8514 = vpack.c.b16 %v5162, %v5154
    %v8515 = vpack.c.b16 %v5163, %v5155
    %v8516 = vpack.c.b16 %v5164, %v5156
    %v8517 = vpack.c.b16 %v5173, %v5165
    %v8518 = vpack.c.b16 %v5174, %v5166
    %v8519 = vpack.c.b16 %v5175, %v5167
    %v8520 = vpack.c.b16 %v5176, %v5168
    %v8521 = vpack.c.b16 %v5177, %v5169
    %v8522 = vpack.c.b16 %v5178, %v5170
    %v8523 = vpack.c.b16 %v5179, %v5171
    %v8524 = vpack.c.b16 %v5180, %v5172
    %v8525 = vpack.c.b16 %v5189, %v5181
    %v8526 = vpack.c.b16 %v5190, %v5182
    %v8527 = vpack.c.b16 %v5191, %v5183
    %v8528 = vpack.c.b16 %v5192, %v5184
    %v8529 = vpack.c.b16 %v5193, %v5185
    %v8530 = vpack.c.b16 %v5194, %v5186
    %v8531 = vpack.c.b16 %v5195, %v5187
    %v8532 = vpack.c.b16 %v5196, %v5188
    %v8533 = vpack.c.b16 %v5205, %v5197
    %v8534 = vpack.c.b16 %v5206, %v5198
    %v8535 = vpack.c.b16 %v5207, %v5199
    %v8536 = vpack.c.b16 %v5208, %v5200
    %v8537 = vpack.c.b16 %v5209, %v5201
    %v8538 = vpack.c.b16 %v5210, %v5202
    %v8539 = vpack.c.b16 %v5211, %v5203
    %v8540 = vpack.c.b16 %v5212, %v5204
    %v8541 = vpack.c.b16 %v5221, %v5213
    %v8542 = vpack.c.b16 %v5222, %v5214
    %v8543 = vpack.c.b16 %v5223, %v5215
    %v8544 = vpack.c.b16 %v5224, %v5216
    %v8545 = vpack.c.b16 %v5225, %v5217
    %v8546 = vpack.c.b16 %v5226, %v5218
    %v8547 = vpack.c.b16 %v5227, %v5219
    %v8548 = vpack.c.b16 %v5228, %v5220
    %v8549 = vpack.c.b16 %v5237, %v5229
    %v8550 = vpack.c.b16 %v5238, %v5230
    %v8551 = vpack.c.b16 %v5239, %v5231
    %v8552 = vpack.c.b16 %v5240, %v5232
    %v8553 = vpack.c.b16 %v5241, %v5233
    %v8554 = vpack.c.b16 %v5242, %v5234
    %v8555 = vpack.c.b16 %v5243, %v5235
    %v8556 = vpack.c.b16 %v5244, %v5236
    %v8557 = vpack.c.b16 %v5253, %v5245
    %v8558 = vpack.c.b16 %v5254, %v5246
    %v8559 = vpack.c.b16 %v5255, %v5247
    %v8560 = vpack.c.b16 %v5256, %v5248
    %v8561 = vpack.c.b16 %v5257, %v5249
    %v8562 = vpack.c.b16 %v5258, %v5250
    %v8563 = vpack.c.b16 %v5259, %v5251
    %v8564 = vpack.c.b16 %v5260, %v5252
    %v8565 = vpack.c.b16 %v5269, %v5261
    %v8566 = vpack.c.b16 %v5270, %v5262
    %v8567 = vpack.c.b16 %v5271, %v5263
    %v8568 = vpack.c.b16 %v5272, %v5264
    %v8569 = vpack.c.b16 %v5273, %v5265
    %v8570 = vpack.c.b16 %v5274, %v5266
    %v8571 = vpack.c.b16 %v5275, %v5267
    %v8572 = vpack.c.b16 %v5276, %v5268
    %v8573 = vpack.c.b16 %v5285, %v5277
    %v8574 = vpack.c.b16 %v5286, %v5278
    %v8575 = vpack.c.b16 %v5287, %v5279
    %v8576 = vpack.c.b16 %v5288, %v5280
    %v8577 = vpack.c.b16 %v5289, %v5281
    %v8578 = vpack.c.b16 %v5290, %v5282
    %v8579 = vpack.c.b16 %v5291, %v5283
    %v8580 = vpack.c.b16 %v5292, %v5284
    %v8581 = vpack.c.b16 %v5301, %v5293
    %v8582 = vpack.c.b16 %v5302, %v5294
    %v8583 = vpack.c.b16 %v5303, %v5295
    %v8584 = vpack.c.b16 %v5304, %v5296
    %v8585 = vpack.c.b16 %v5305, %v5297
    %v8586 = vpack.c.b16 %v5306, %v5298
    %v8587 = vpack.c.b16 %v5307, %v5299
    %v8588 = vpack.c.b16 %v5308, %v5300
    %v8589 = vpack.c.b16 %v5317, %v5309
    %v8590 = vpack.c.b16 %v5318, %v5310
    %v8591 = vpack.c.b16 %v5319, %v5311
    %v8592 = vpack.c.b16 %v5320, %v5312
    %v8593 = vpack.c.b16 %v5321, %v5313
    %v8594 = vpack.c.b16 %v5322, %v5314
    %v8595 = vpack.c.b16 %v5323, %v5315
    %v8596 = vpack.c.b16 %v5324, %v5316
    %v8597 = vpack.c.b16 %v5333, %v5325
    %v8598 = vpack.c.b16 %v5334, %v5326
    %v8599 = vpack.c.b16 %v5335, %v5327
    %v8600 = vpack.c.b16 %v5336, %v5328
    %v8601 = vpack.c.b16 %v5337, %v5329
    %v8602 = vpack.c.b16 %v5338, %v5330
    %v8603 = vpack.c.b16 %v5339, %v5331
    %v8604 = vpack.c.b16 %v5340, %v5332
    %v8605 = vpack.c.b16 %v5349, %v5341
    %v8606 = vpack.c.b16 %v5350, %v5342
    %v8607 = vpack.c.b16 %v5351, %v5343
    %v8608 = vpack.c.b16 %v5352, %v5344
    %v8609 = vpack.c.b16 %v5353, %v5345
    %v8610 = vpack.c.b16 %v5354, %v5346
    %v8611 = vpack.c.b16 %v5355, %v5347
    %v8612 = vpack.c.b16 %v5356, %v5348
    %v8613 = vpack.c.b16 %v5365, %v5357
    %v8614 = vpack.c.b16 %v5366, %v5358
    %v8615 = vpack.c.b16 %v5367, %v5359
    %v8616 = vpack.c.b16 %v5368, %v5360
    %v8617 = vpack.c.b16 %v5369, %v5361
    %v8618 = vpack.c.b16 %v5370, %v5362
    %v8619 = vpack.c.b16 %v5371, %v5363
    %v8620 = vpack.c.b16 %v5372, %v5364
    %v8621 = vpack.c.b16 %v5381, %v5373
    %v8622 = vpack.c.b16 %v5382, %v5374
    %v8623 = vpack.c.b16 %v5383, %v5375
    %v8624 = vpack.c.b16 %v5384, %v5376
    %v8625 = vpack.c.b16 %v5385, %v5377
    %v8626 = vpack.c.b16 %v5386, %v5378
    %v8627 = vpack.c.b16 %v5387, %v5379
    %v8628 = vpack.c.b16 %v5388, %v5380
    %v8629 = vpack.c.b16 %v5397, %v5389
    %v8630 = vpack.c.b16 %v5398, %v5390
    %v8631 = vpack.c.b16 %v5399, %v5391
    %v8632 = vpack.c.b16 %v5400, %v5392
    %v8633 = vpack.c.b16 %v5401, %v5393
    %v8634 = vpack.c.b16 %v5402, %v5394
    %v8635 = vpack.c.b16 %v5403, %v5395
    %v8636 = vpack.c.b16 %v5404, %v5396
    %v8637 = vpack.c.b16 %v5413, %v5405
    %v8638 = vpack.c.b16 %v5414, %v5406
    %v8639 = vpack.c.b16 %v5415, %v5407
    %v8640 = vpack.c.b16 %v5416, %v5408
    %v8641 = vpack.c.b16 %v5417, %v5409
    %v8642 = vpack.c.b16 %v5418, %v5410
    %v8643 = vpack.c.b16 %v5419, %v5411
    %v8644 = vpack.c.b16 %v5420, %v5412
    %v8645 = vpack.c.b16 %v5429, %v5421
    %v8646 = vpack.c.b16 %v5430, %v5422
    %v8647 = vpack.c.b16 %v5431, %v5423
    %v8648 = vpack.c.b16 %v5432, %v5424
    %v8649 = vpack.c.b16 %v5433, %v5425
    %v8650 = vpack.c.b16 %v5434, %v5426
    %v8651 = vpack.c.b16 %v5435, %v5427
    %v8652 = vpack.c.b16 %v5436, %v5428
    %v8653 = vpack.c.b16 %v5445, %v5437
    %v8654 = vpack.c.b16 %v5446, %v5438
    %v8655 = vpack.c.b16 %v5447, %v5439
    %v8656 = vpack.c.b16 %v5448, %v5440
    %v8657 = vpack.c.b16 %v5449, %v5441
    %v8658 = vpack.c.b16 %v5450, %v5442
    %v8659 = vpack.c.b16 %v5451, %v5443
    %v8660 = vpack.c.b16 %v5452, %v5444
    %v8661 = vpack.c.b16 %v5461, %v5453
    %v8662 = vpack.c.b16 %v5462, %v5454
    %v8663 = vpack.c.b16 %v5463, %v5455
    %v8664 = vpack.c.b16 %v5464, %v5456
    %v8665 = vpack.c.b16 %v5465, %v5457
    %v8666 = vpack.c.b16 %v5466, %v5458
    %v8667 = vpack.c.b16 %v5467, %v5459
    %v8668 = vpack.c.b16 %v5468, %v5460
    %v8669 = vpack.c.b16 %v5477, %v5469
    %v8670 = vpack.c.b16 %v5478, %v5470
    %v8671 = vpack.c.b16 %v5479, %v5471
    %v8672 = vpack.c.b16 %v5480, %v5472
    %v8673 = vpack.c.b16 %v5481, %v5473
    %v8674 = vpack.c.b16 %v5482, %v5474
    %v8675 = vpack.c.b16 %v5483, %v5475
    %v8676 = vpack.c.b16 %v5484, %v5476
    %v8677 = vpack.c.b16 %v5493, %v5485
    %v8678 = vpack.c.b16 %v5494, %v5486
    %v8679 = vpack.c.b16 %v5495, %v5487
    %v8680 = vpack.c.b16 %v5496, %v5488
    %v8681 = vpack.c.b16 %v5497, %v5489
    %v8682 = vpack.c.b16 %v5498, %v5490
    %v8683 = vpack.c.b16 %v5499, %v5491
    %v8684 = vpack.c.b16 %v5500, %v5492
    %v8685 = vpack.c.b16 %v5509, %v5501
    %v8686 = vpack.c.b16 %v5510, %v5502
    %v8687 = vpack.c.b16 %v5511, %v5503
    %v8688 = vpack.c.b16 %v5512, %v5504
    %v8689 = vpack.c.b16 %v5513, %v5505
    %v8690 = vpack.c.b16 %v5514, %v5506
    %v8691 = vpack.c.b16 %v5515, %v5507
    %v8692 = vpack.c.b16 %v5516, %v5508
    %v8693 = vpack.c.b16 %v5525, %v5517
    %v8694 = vpack.c.b16 %v5526, %v5518
    %v8695 = vpack.c.b16 %v5527, %v5519
    %v8696 = vpack.c.b16 %v5528, %v5520
    %v8697 = vpack.c.b16 %v5529, %v5521
    %v8698 = vpack.c.b16 %v5530, %v5522
    %v8699 = vpack.c.b16 %v5531, %v5523
    %v8700 = vpack.c.b16 %v5532, %v5524
    %v8701 = vpack.c.b16 %v5541, %v5533
    %v8702 = vpack.c.b16 %v5542, %v5534
    %v8703 = vpack.c.b16 %v5543, %v5535
    %v8704 = vpack.c.b16 %v5544, %v5536
    %v8705 = vpack.c.b16 %v5545, %v5537
    %v8706 = vpack.c.b16 %v5546, %v5538
    %v8707 = vpack.c.b16 %v5547, %v5539
    %v8708 = vpack.c.b16 %v5548, %v5540
    %v8709 = vpack.c.b16 %v5557, %v5549
    %v8710 = vpack.c.b16 %v5558, %v5550
    %v8711 = vpack.c.b16 %v5559, %v5551
    %v8712 = vpack.c.b16 %v5560, %v5552
    %v8713 = vpack.c.b16 %v5561, %v5553
    %v8714 = vpack.c.b16 %v5562, %v5554
    %v8715 = vpack.c.b16 %v5563, %v5555
    %v8716 = vpack.c.b16 %v5564, %v5556
    %v8717 = vpack.c.b16 %v5573, %v5565
    %v8718 = vpack.c.b16 %v5574, %v5566
    %v8719 = vpack.c.b16 %v5575, %v5567
    %v8720 = vpack.c.b16 %v5576, %v5568
    %v8721 = vpack.c.b16 %v5577, %v5569
    %v8722 = vpack.c.b16 %v5578, %v5570
    %v8723 = vpack.c.b16 %v5579, %v5571
    %v8724 = vpack.c.b16 %v5580, %v5572
    %v8725 = vpack.c.b16 %v5589, %v5581
    %v8726 = vpack.c.b16 %v5590, %v5582
    %v8727 = vpack.c.b16 %v5591, %v5583
    %v8728 = vpack.c.b16 %v5592, %v5584
    %v8729 = vpack.c.b16 %v5593, %v5585
    %v8730 = vpack.c.b16 %v5594, %v5586
    %v8731 = vpack.c.b16 %v5595, %v5587
    %v8732 = vpack.c.b16 %v5596, %v5588
    %v8733 = vpack.c.b16 %v5605, %v5597
    %v8734 = vpack.c.b16 %v5606, %v5598
    %v8735 = vpack.c.b16 %v5607, %v5599
    %v8736 = vpack.c.b16 %v5608, %v5600
    %v8737 = vpack.c.b16 %v5609, %v5601
    %v8738 = vpack.c.b16 %v5610, %v5602
    %v8739 = vpack.c.b16 %v5611, %v5603
    %v8740 = vpack.c.b16 %v5612, %v5604
    %v8741 = vpack.c.b16 %v5621, %v5613
    %v8742 = vpack.c.b16 %v5622, %v5614
    %v8743 = vpack.c.b16 %v5623, %v5615
    %v8744 = vpack.c.b16 %v5624, %v5616
    %v8745 = vpack.c.b16 %v5625, %v5617
    %v8746 = vpack.c.b16 %v5626, %v5618
    %v8747 = vpack.c.b16 %v5627, %v5619
    %v8748 = vpack.c.b16 %v5628, %v5620
    %v8749 = vpack.c.b16 %v5637, %v5629
    %v8750 = vpack.c.b16 %v5638, %v5630
    %v8751 = vpack.c.b16 %v5639, %v5631
    %v8752 = vpack.c.b16 %v5640, %v5632
    %v8753 = vpack.c.b16 %v5641, %v5633
    %v8754 = vpack.c.b16 %v5642, %v5634
    %v8755 = vpack.c.b16 %v5643, %v5635
    %v8756 = vpack.c.b16 %v5644, %v5636
    %v8757 = vpack.c.b16 %v5653, %v5645
    %v8758 = vpack.c.b16 %v5654, %v5646
    %v8759 = vpack.c.b16 %v5655, %v5647
    %v8760 = vpack.c.b16 %v5656, %v5648
    %v8761 = vpack.c.b16 %v5657, %v5649
    %v8762 = vpack.c.b16 %v5658, %v5650
    %v8763 = vpack.c.b16 %v5659, %v5651
    %v8764 = vpack.c.b16 %v5660, %v5652
    %v8765 = vpack.c.b16 %v5669, %v5661
    %v8766 = vpack.c.b16 %v5670, %v5662
    %v8767 = vpack.c.b16 %v5671, %v5663
    %v8768 = vpack.c.b16 %v5672, %v5664
    %v8769 = vpack.c.b16 %v5673, %v5665
    %v8770 = vpack.c.b16 %v5674, %v5666
    %v8771 = vpack.c.b16 %v5675, %v5667
    %v8772 = vpack.c.b16 %v5676, %v5668
    %v8773 = vpack.c.b16 %v5685, %v5677
    %v8774 = vpack.c.b16 %v5686, %v5678
    %v8775 = vpack.c.b16 %v5687, %v5679
    %v8776 = vpack.c.b16 %v5688, %v5680
    %v8777 = vpack.c.b16 %v5689, %v5681
    %v8778 = vpack.c.b16 %v5690, %v5682
    %v8779 = vpack.c.b16 %v5691, %v5683
    %v8780 = vpack.c.b16 %v5692, %v5684
    %v8781 = vpack.c.b16 %v5701, %v5693
    %v8782 = vpack.c.b16 %v5702, %v5694
    %v8783 = vpack.c.b16 %v5703, %v5695
    %v8784 = vpack.c.b16 %v5704, %v5696
    %v8785 = vpack.c.b16 %v5705, %v5697
    %v8786 = vpack.c.b16 %v5706, %v5698
    %v8787 = vpack.c.b16 %v5707, %v5699
    %v8788 = vpack.c.b16 %v5708, %v5700
    %v8789 = vpack.c.b16 %v5717, %v5709
    %v8790 = vpack.c.b16 %v5718, %v5710
    %v8791 = vpack.c.b16 %v5719, %v5711
    %v8792 = vpack.c.b16 %v5720, %v5712
    %v8793 = vpack.c.b16 %v5721, %v5713
    %v8794 = vpack.c.b16 %v5722, %v5714
    %v8795 = vpack.c.b16 %v5723, %v5715
    %v8796 = vpack.c.b16 %v5724, %v5716
    %v8797 = vpack.c.b16 %v5733, %v5725
    %v8798 = vpack.c.b16 %v5734, %v5726
    %v8799 = vpack.c.b16 %v5735, %v5727
    %v8800 = vpack.c.b16 %v5736, %v5728
    %v8801 = vpack.c.b16 %v5737, %v5729
    %v8802 = vpack.c.b16 %v5738, %v5730
    %v8803 = vpack.c.b16 %v5739, %v5731
    %v8804 = vpack.c.b16 %v5740, %v5732
    %v8805 = vpack.c.b16 %v5749, %v5741
    %v8806 = vpack.c.b16 %v5750, %v5742
    %v8807 = vpack.c.b16 %v5751, %v5743
    %v8808 = vpack.c.b16 %v5752, %v5744
    %v8809 = vpack.c.b16 %v5753, %v5745
    %v8810 = vpack.c.b16 %v5754, %v5746
    %v8811 = vpack.c.b16 %v5755, %v5747
    %v8812 = vpack.c.b16 %v5756, %v5748
    %v8813 = vpack.c.b16 %v5765, %v5757
    %v8814 = vpack.c.b16 %v5766, %v5758
    %v8815 = vpack.c.b16 %v5767, %v5759
    %v8816 = vpack.c.b16 %v5768, %v5760
    %v8817 = vpack.c.b16 %v5769, %v5761
    %v8818 = vpack.c.b16 %v5770, %v5762
    %v8819 = vpack.c.b16 %v5771, %v5763
    %v8820 = vpack.c.b16 %v5772, %v5764
    %v8821 = vpack.c.b16 %v5781, %v5773
    %v8822 = vpack.c.b16 %v5782, %v5774
    %v8823 = vpack.c.b16 %v5783, %v5775
    %v8824 = vpack.c.b16 %v5784, %v5776
    %v8825 = vpack.c.b16 %v5785, %v5777
    %v8826 = vpack.c.b16 %v5786, %v5778
    %v8827 = vpack.c.b16 %v5787, %v5779
    %v8828 = vpack.c.b16 %v5788, %v5780
    %v8829 = vpack.c.b16 %v5797, %v5789
    %v8830 = vpack.c.b16 %v5798, %v5790
    %v8831 = vpack.c.b16 %v5799, %v5791
    %v8832 = vpack.c.b16 %v5800, %v5792
    %v8833 = vpack.c.b16 %v5801, %v5793
    %v8834 = vpack.c.b16 %v5802, %v5794
    %v8835 = vpack.c.b16 %v5803, %v5795
    %v8836 = vpack.c.b16 %v5804, %v5796
    %v8837 = vpack.c.b16 %v5813, %v5805
    %v8838 = vpack.c.b16 %v5814, %v5806
    %v8839 = vpack.c.b16 %v5815, %v5807
    %v8840 = vpack.c.b16 %v5816, %v5808
    %v8841 = vpack.c.b16 %v5817, %v5809
    %v8842 = vpack.c.b16 %v5818, %v5810
    %v8843 = vpack.c.b16 %v5819, %v5811
    %v8844 = vpack.c.b16 %v5820, %v5812
    %v8845 = vpack.c.b16 %v5829, %v5821
    %v8846 = vpack.c.b16 %v5830, %v5822
    %v8847 = vpack.c.b16 %v5831, %v5823
    %v8848 = vpack.c.b16 %v5832, %v5824
    %v8849 = vpack.c.b16 %v5833, %v5825
    %v8850 = vpack.c.b16 %v5834, %v5826
    %v8851 = vpack.c.b16 %v5835, %v5827
    %v8852 = vpack.c.b16 %v5836, %v5828
    %v8853 = vpack.c.b16 %v5845, %v5837
    %v8854 = vpack.c.b16 %v5846, %v5838
    %v8855 = vpack.c.b16 %v5847, %v5839
    %v8856 = vpack.c.b16 %v5848, %v5840
    %v8857 = vpack.c.b16 %v5849, %v5841
    %v8858 = vpack.c.b16 %v5850, %v5842
    %v8859 = vpack.c.b16 %v5851, %v5843
    %v8860 = vpack.c.b16 %v5852, %v5844
    %v8861 = vpack.c.b16 %v5861, %v5853
    %v8862 = vpack.c.b16 %v5862, %v5854
    %v8863 = vpack.c.b16 %v5863, %v5855
    %v8864 = vpack.c.b16 %v5864, %v5856
    %v8865 = vpack.c.b16 %v5865, %v5857
    %v8866 = vpack.c.b16 %v5866, %v5858
    %v8867 = vpack.c.b16 %v5867, %v5859
    %v8868 = vpack.c.b16 %v5868, %v5860
    %v8869 = vpack.c.b16 %v5877, %v5869
    %v8870 = vpack.c.b16 %v5878, %v5870
    %v8871 = vpack.c.b16 %v5879, %v5871
    %v8872 = vpack.c.b16 %v5880, %v5872
    %v8873 = vpack.c.b16 %v5881, %v5873
    %v8874 = vpack.c.b16 %v5882, %v5874
    %v8875 = vpack.c.b16 %v5883, %v5875
    %v8876 = vpack.c.b16 %v5884, %v5876
    %v8877 = vpack.c.b16 %v5893, %v5885
    %v8878 = vpack.c.b16 %v5894, %v5886
    %v8879 = vpack.c.b16 %v5895, %v5887
    %v8880 = vpack.c.b16 %v5896, %v5888
    %v8881 = vpack.c.b16 %v5897, %v5889
    %v8882 = vpack.c.b16 %v5898, %v5890
    %v8883 = vpack.c.b16 %v5899, %v5891
    %v8884 = vpack.c.b16 %v5900, %v5892
    %v8885 = vpack.c.b16 %v5909, %v5901
    %v8886 = vpack.c.b16 %v5910, %v5902
    %v8887 = vpack.c.b16 %v5911, %v5903
    %v8888 = vpack.c.b16 %v5912, %v5904
    %v8889 = vpack.c.b16 %v5913, %v5905
    %v8890 = vpack.c.b16 %v5914, %v5906
    %v8891 = vpack.c.b16 %v5915, %v5907
    %v8892 = vpack.c.b16 %v5916, %v5908
    %v8893 = vpack.c.b16 %v5925, %v5917
    %v8894 = vpack.c.b16 %v5926, %v5918
    %v8895 = vpack.c.b16 %v5927, %v5919
    %v8896 = vpack.c.b16 %v5928, %v5920
    %v8897 = vpack.c.b16 %v5929, %v5921
    %v8898 = vpack.c.b16 %v5930, %v5922
    %v8899 = vpack.c.b16 %v5931, %v5923
    %v8900 = vpack.c.b16 %v5932, %v5924
    %v8901 = vpack.c.b16 %v5941, %v5933
    %v8902 = vpack.c.b16 %v5942, %v5934
    %v8903 = vpack.c.b16 %v5943, %v5935
    %v8904 = vpack.c.b16 %v5944, %v5936
    %v8905 = vpack.c.b16 %v5945, %v5937
    %v8906 = vpack.c.b16 %v5946, %v5938
    %v8907 = vpack.c.b16 %v5947, %v5939
    %v8908 = vpack.c.b16 %v5948, %v5940
    %v8909 = vpack.c.b16 %v5957, %v5949
    %v8910 = vpack.c.b16 %v5958, %v5950
    %v8911 = vpack.c.b16 %v5959, %v5951
    %v8912 = vpack.c.b16 %v5960, %v5952
    %v8913 = vpack.c.b16 %v5961, %v5953
    %v8914 = vpack.c.b16 %v5962, %v5954
    %v8915 = vpack.c.b16 %v5963, %v5955
    %v8916 = vpack.c.b16 %v5964, %v5956
    %v8917 = vpack.c.b16 %v5973, %v5965
    %v8918 = vpack.c.b16 %v5974, %v5966
    %v8919 = vpack.c.b16 %v5975, %v5967
    %v8920 = vpack.c.b16 %v5976, %v5968
    %v8921 = vpack.c.b16 %v5977, %v5969
    %v8922 = vpack.c.b16 %v5978, %v5970
    %v8923 = vpack.c.b16 %v5979, %v5971
    %v8924 = vpack.c.b16 %v5980, %v5972
    %v8925 = vpack.c.b16 %v5989, %v5981
    %v8926 = vpack.c.b16 %v5990, %v5982
    %v8927 = vpack.c.b16 %v5991, %v5983
    %v8928 = vpack.c.b16 %v5992, %v5984
    %v8929 = vpack.c.b16 %v5993, %v5985
    %v8930 = vpack.c.b16 %v5994, %v5986
    %v8931 = vpack.c.b16 %v5995, %v5987
    %v8932 = vpack.c.b16 %v5996, %v5988
    %v8933 = vpack.c.b16 %v6005, %v5997
    %v8934 = vpack.c.b16 %v6006, %v5998
    %v8935 = vpack.c.b16 %v6007, %v5999
    %v8936 = vpack.c.b16 %v6008, %v6000
    %v8937 = vpack.c.b16 %v6009, %v6001
    %v8938 = vpack.c.b16 %v6010, %v6002
    %v8939 = vpack.c.b16 %v6011, %v6003
    %v8940 = vpack.c.b16 %v6012, %v6004
    %v8941 = vpack.c.b16 %v6021, %v6013
    %v8942 = vpack.c.b16 %v6022, %v6014
    %v8943 = vpack.c.b16 %v6023, %v6015
    %v8944 = vpack.c.b16 %v6024, %v6016
    %v8945 = vpack.c.b16 %v6025, %v6017
    %v8946 = vpack.c.b16 %v6026, %v6018
    %v8947 = vpack.c.b16 %v6027, %v6019
    %v8948 = vpack.c.b16 %v6028, %v6020
    %v8949 = vpack.c.b16 %v6037, %v6029
    %v8950 = vpack.c.b16 %v6038, %v6030
    %v8951 = vpack.c.b16 %v6039, %v6031
    %v8952 = vpack.c.b16 %v6040, %v6032
    %v8953 = vpack.c.b16 %v6041, %v6033
    %v8954 = vpack.c.b16 %v6042, %v6034
    %v8955 = vpack.c.b16 %v6043, %v6035
    %v8956 = vpack.c.b16 %v6044, %v6036
    %v8957 = vpack.c.b16 %v6053, %v6045
    %v8958 = vpack.c.b16 %v6054, %v6046
    %v8959 = vpack.c.b16 %v6055, %v6047
    %v8960 = vpack.c.b16 %v6056, %v6048
    %v8961 = vpack.c.b16 %v6057, %v6049
    %v8962 = vpack.c.b16 %v6058, %v6050
    %v8963 = vpack.c.b16 %v6059, %v6051
    %v8964 = vpack.c.b16 %v6060, %v6052
    %v8965 = vpack.c.b16 %v6069, %v6061
    %v8966 = vpack.c.b16 %v6070, %v6062
    %v8967 = vpack.c.b16 %v6071, %v6063
    %v8968 = vpack.c.b16 %v6072, %v6064
    %v8969 = vpack.c.b16 %v6073, %v6065
    %v8970 = vpack.c.b16 %v6074, %v6066
    %v8971 = vpack.c.b16 %v6075, %v6067
    %v8972 = vpack.c.b16 %v6076, %v6068
    %v8973 = vpack.c.b16 %v6085, %v6077
    %v8974 = vpack.c.b16 %v6086, %v6078
    %v8975 = vpack.c.b16 %v6087, %v6079
    %v8976 = vpack.c.b16 %v6088, %v6080
    %v8977 = vpack.c.b16 %v6089, %v6081
    %v8978 = vpack.c.b16 %v6090, %v6082
    %v8979 = vpack.c.b16 %v6091, %v6083
    %v8980 = vpack.c.b16 %v6092, %v6084
    %v8981 = vpack.c.b16 %v6101, %v6093
    %v8982 = vpack.c.b16 %v6102, %v6094
    %v8983 = vpack.c.b16 %v6103, %v6095
    %v8984 = vpack.c.b16 %v6104, %v6096
    %v8985 = vpack.c.b16 %v6105, %v6097
    %v8986 = vpack.c.b16 %v6106, %v6098
    %v8987 = vpack.c.b16 %v6107, %v6099
    %v8988 = vpack.c.b16 %v6108, %v6100
    %v8989 = vpack.c.b16 %v6117, %v6109
    %v8990 = vpack.c.b16 %v6118, %v6110
    %v8991 = vpack.c.b16 %v6119, %v6111
    %v8992 = vpack.c.b16 %v6120, %v6112
    %v8993 = vpack.c.b16 %v6121, %v6113
    %v8994 = vpack.c.b16 %v6122, %v6114
    %v8995 = vpack.c.b16 %v6123, %v6115
    %v8996 = vpack.c.b16 %v6124, %v6116
    %v8997 = vpack.c.b16 %v6133, %v6125
    %v8998 = vpack.c.b16 %v6134, %v6126
    %v8999 = vpack.c.b16 %v6135, %v6127
    %v9000 = vpack.c.b16 %v6136, %v6128
    %v9001 = vpack.c.b16 %v6137, %v6129
    %v9002 = vpack.c.b16 %v6138, %v6130
    %v9003 = vpack.c.b16 %v6139, %v6131
    %v9004 = vpack.c.b16 %v6140, %v6132
    %v9005 = vpack.c.b16 %v6149, %v6141
    %v9006 = vpack.c.b16 %v6150, %v6142
    %v9007 = vpack.c.b16 %v6151, %v6143
    %v9008 = vpack.c.b16 %v6152, %v6144
    %v9009 = vpack.c.b16 %v6153, %v6145
    %v9010 = vpack.c.b16 %v6154, %v6146
    %v9011 = vpack.c.b16 %v6155, %v6147
    %v9012 = vpack.c.b16 %v6156, %v6148
    %v9013 = vpack.c.b16 %v6165, %v6157
    %v9014 = vpack.c.b16 %v6166, %v6158
    %v9015 = vpack.c.b16 %v6167, %v6159
    %v9016 = vpack.c.b16 %v6168, %v6160
    %v9017 = vpack.c.b16 %v6169, %v6161
    %v9018 = vpack.c.b16 %v6170, %v6162
    %v9019 = vpack.c.b16 %v6171, %v6163
    %v9020 = vpack.c.b16 %v6172, %v6164
    %v9021 = vpack.c.b16 %v6181, %v6173
    %v9022 = vpack.c.b16 %v6182, %v6174
    %v9023 = vpack.c.b16 %v6183, %v6175
    %v9024 = vpack.c.b16 %v6184, %v6176
    %v9025 = vpack.c.b16 %v6185, %v6177
    %v9026 = vpack.c.b16 %v6186, %v6178
    %v9027 = vpack.c.b16 %v6187, %v6179
    %v9028 = vpack.c.b16 %v6188, %v6180
    %v9029 = vpack.c.b16 %v6197, %v6189
    %v9030 = vpack.c.b16 %v6198, %v6190
    %v9031 = vpack.c.b16 %v6199, %v6191
    %v9032 = vpack.c.b16 %v6200, %v6192
    %v9033 = vpack.c.b16 %v6201, %v6193
    %v9034 = vpack.c.b16 %v6202, %v6194
    %v9035 = vpack.c.b16 %v6203, %v6195
    %v9036 = vpack.c.b16 %v6204, %v6196
    %v9037 = vpack.c.b16 %v6213, %v6205
    %v9038 = vpack.c.b16 %v6214, %v6206
    %v9039 = vpack.c.b16 %v6215, %v6207
    %v9040 = vpack.c.b16 %v6216, %v6208
    %v9041 = vpack.c.b16 %v6217, %v6209
    %v9042 = vpack.c.b16 %v6218, %v6210
    %v9043 = vpack.c.b16 %v6219, %v6211
    %v9044 = vpack.c.b16 %v6220, %v6212
    %v9045 = vpack.c.b16 %v6229, %v6221
    %v9046 = vpack.c.b16 %v6230, %v6222
    %v9047 = vpack.c.b16 %v6231, %v6223
    %v9048 = vpack.c.b16 %v6232, %v6224
    %v9049 = vpack.c.b16 %v6233, %v6225
    %v9050 = vpack.c.b16 %v6234, %v6226
    %v9051 = vpack.c.b16 %v6235, %v6227
    %v9052 = vpack.c.b16 %v6236, %v6228
    %v9053 = vpack.c.b16 %v6245, %v6237
    %v9054 = vpack.c.b16 %v6246, %v6238
    %v9055 = vpack.c.b16 %v6247, %v6239
    %v9056 = vpack.c.b16 %v6248, %v6240
    %v9057 = vpack.c.b16 %v6249, %v6241
    %v9058 = vpack.c.b16 %v6250, %v6242
    %v9059 = vpack.c.b16 %v6251, %v6243
    %v9060 = vpack.c.b16 %v6252, %v6244
    %v9061 = vpack.c.b16 %v6261, %v6253
    %v9062 = vpack.c.b16 %v6262, %v6254
    %v9063 = vpack.c.b16 %v6263, %v6255
    %v9064 = vpack.c.b16 %v6264, %v6256
    %v9065 = vpack.c.b16 %v6265, %v6257
    %v9066 = vpack.c.b16 %v6266, %v6258
    %v9067 = vpack.c.b16 %v6267, %v6259
    %v9068 = vpack.c.b16 %v6268, %v6260
    %v9069 = vpack.c.b16 %v6277, %v6269
    %v9070 = vpack.c.b16 %v6278, %v6270
    %v9071 = vpack.c.b16 %v6279, %v6271
    %v9072 = vpack.c.b16 %v6280, %v6272
    %v9073 = vpack.c.b16 %v6281, %v6273
    %v9074 = vpack.c.b16 %v6282, %v6274
    %v9075 = vpack.c.b16 %v6283, %v6275
    %v9076 = vpack.c.b16 %v6284, %v6276
    %v9077 = vpack.c.b16 %v6293, %v6285
    %v9078 = vpack.c.b16 %v6294, %v6286
    %v9079 = vpack.c.b16 %v6295, %v6287
    %v9080 = vpack.c.b16 %v6296, %v6288
    %v9081 = vpack.c.b16 %v6297, %v6289
    %v9082 = vpack.c.b16 %v6298, %v6290
    %v9083 = vpack.c.b16 %v6299, %v6291
    %v9084 = vpack.c.b16 %v6300, %v6292
    %v9085 = vpack.c.b16 %v6309, %v6301
    %v9086 = vpack.c.b16 %v6310, %v6302
    %v9087 = vpack.c.b16 %v6311, %v6303
    %v9088 = vpack.c.b16 %v6312, %v6304
    %v9089 = vpack.c.b16 %v6313, %v6305
    %v9090 = vpack.c.b16 %v6314, %v6306
    %v9091 = vpack.c.b16 %v6315, %v6307
    %v9092 = vpack.c.b16 %v6316, %v6308
    %v9093 = vpack.c.b16 %v6325, %v6317
    %v9094 = vpack.c.b16 %v6326, %v6318
    %v9095 = vpack.c.b16 %v6327, %v6319
    %v9096 = vpack.c.b16 %v6328, %v6320
    %v9097 = vpack.c.b16 %v6329, %v6321
    %v9098 = vpack.c.b16 %v6330, %v6322
    %v9099 = vpack.c.b16 %v6331, %v6323
    %v9100 = vpack.c.b16 %v6332, %v6324
    %v9101 = vpack.c.b16 %v6341, %v6333
    %v9102 = vpack.c.b16 %v6342, %v6334
    %v9103 = vpack.c.b16 %v6343, %v6335
    %v9104 = vpack.c.b16 %v6344, %v6336
    %v9105 = vpack.c.b16 %v6345, %v6337
    %v9106 = vpack.c.b16 %v6346, %v6338
    %v9107 = vpack.c.b16 %v6347, %v6339
    %v9108 = vpack.c.b16 %v6348, %v6340
    %v9109 = vpack.c.b16 %v6357, %v6349
    %v9110 = vpack.c.b16 %v6358, %v6350
    %v9111 = vpack.c.b16 %v6359, %v6351
    %v9112 = vpack.c.b16 %v6360, %v6352
    %v9113 = vpack.c.b16 %v6361, %v6353
    %v9114 = vpack.c.b16 %v6362, %v6354
    %v9115 = vpack.c.b16 %v6363, %v6355
    %v9116 = vpack.c.b16 %v6364, %v6356
    %v9117 = vpack.c.b16 %v6373, %v6365
    %v9118 = vpack.c.b16 %v6374, %v6366
    %v9119 = vpack.c.b16 %v6375, %v6367
    %v9120 = vpack.c.b16 %v6376, %v6368
    %v9121 = vpack.c.b16 %v6377, %v6369
    %v9122 = vpack.c.b16 %v6378, %v6370
    %v9123 = vpack.c.b16 %v6379, %v6371
    %v9124 = vpack.c.b16 %v6380, %v6372
    %v9125 = vpack.c.b16 %v6389, %v6381
    %v9126 = vpack.c.b16 %v6390, %v6382
    %v9127 = vpack.c.b16 %v6391, %v6383
    %v9128 = vpack.c.b16 %v6392, %v6384
    %v9129 = vpack.c.b16 %v6393, %v6385
    %v9130 = vpack.c.b16 %v6394, %v6386
    %v9131 = vpack.c.b16 %v6395, %v6387
    %v9132 = vpack.c.b16 %v6396, %v6388
    %v9133 = vpack.c.b16 %v6405, %v6397
    %v9134 = vpack.c.b16 %v6406, %v6398
    %v9135 = vpack.c.b16 %v6407, %v6399
    %v9136 = vpack.c.b16 %v6408, %v6400
    %v9137 = vpack.c.b16 %v6409, %v6401
    %v9138 = vpack.c.b16 %v6410, %v6402
    %v9139 = vpack.c.b16 %v6411, %v6403
    %v9140 = vpack.c.b16 %v6412, %v6404
    %v9141 = vpack.c.b16 %v6421, %v6413
    %v9142 = vpack.c.b16 %v6422, %v6414
    %v9143 = vpack.c.b16 %v6423, %v6415
    %v9144 = vpack.c.b16 %v6424, %v6416
    %v9145 = vpack.c.b16 %v6425, %v6417
    %v9146 = vpack.c.b16 %v6426, %v6418
    %v9147 = vpack.c.b16 %v6427, %v6419
    %v9148 = vpack.c.b16 %v6428, %v6420
    %v9149 = vpack.c.b16 %v6437, %v6429
    %v9150 = vpack.c.b16 %v6438, %v6430
    %v9151 = vpack.c.b16 %v6439, %v6431
    %v9152 = vpack.c.b16 %v6440, %v6432
    %v9153 = vpack.c.b16 %v6441, %v6433
    %v9154 = vpack.c.b16 %v6442, %v6434
    %v9155 = vpack.c.b16 %v6443, %v6435
    %v9156 = vpack.c.b16 %v6444, %v6436
    %v9157 = vpack.c.b16 %v6453, %v6445
    %v9158 = vpack.c.b16 %v6454, %v6446
    %v9159 = vpack.c.b16 %v6455, %v6447
    %v9160 = vpack.c.b16 %v6456, %v6448
    %v9161 = vpack.c.b16 %v6457, %v6449
    %v9162 = vpack.c.b16 %v6458, %v6450
    %v9163 = vpack.c.b16 %v6459, %v6451
    %v9164 = vpack.c.b16 %v6460, %v6452
    %v9165 = vpack.c.b16 %v6469, %v6461
    %v9166 = vpack.c.b16 %v6470, %v6462
    %v9167 = vpack.c.b16 %v6471, %v6463
    %v9168 = vpack.c.b16 %v6472, %v6464
    %v9169 = vpack.c.b16 %v6473, %v6465
    %v9170 = vpack.c.b16 %v6474, %v6466
    %v9171 = vpack.c.b16 %v6475, %v6467
    %v9172 = vpack.c.b16 %v6476, %v6468
    %v9173 = vpack.c.b16 %v6485, %v6477
    %v9174 = vpack.c.b16 %v6486, %v6478
    %v9175 = vpack.c.b16 %v6487, %v6479
    %v9176 = vpack.c.b16 %v6488, %v6480
    %v9177 = vpack.c.b16 %v6489, %v6481
    %v9178 = vpack.c.b16 %v6490, %v6482
    %v9179 = vpack.c.b16 %v6491, %v6483
    %v9180 = vpack.c.b16 %v6492, %v6484
    %v9181 = vpack.c.b16 %v6501, %v6493
    %v9182 = vpack.c.b16 %v6502, %v6494
    %v9183 = vpack.c.b16 %v6503, %v6495
    %v9184 = vpack.c.b16 %v6504, %v6496
    %v9185 = vpack.c.b16 %v6505, %v6497
    %v9186 = vpack.c.b16 %v6506, %v6498
    %v9187 = vpack.c.b16 %v6507, %v6499
    %v9188 = vpack.c.b16 %v6508, %v6500
    %v9189 = vpack.c.b16 %v6517, %v6509
    %v9190 = vpack.c.b16 %v6518, %v6510
    %v9191 = vpack.c.b16 %v6519, %v6511
    %v9192 = vpack.c.b16 %v6520, %v6512
    %v9193 = vpack.c.b16 %v6521, %v6513
    %v9194 = vpack.c.b16 %v6522, %v6514
    %v9195 = vpack.c.b16 %v6523, %v6515
    %v9196 = vpack.c.b16 %v6524, %v6516
    %v9197 = vpack.c.b16 %v6533, %v6525
    %v9198 = vpack.c.b16 %v6534, %v6526
    %v9199 = vpack.c.b16 %v6535, %v6527
    %v9200 = vpack.c.b16 %v6536, %v6528
    %v9201 = vpack.c.b16 %v6537, %v6529
    %v9202 = vpack.c.b16 %v6538, %v6530
    %v9203 = vpack.c.b16 %v6539, %v6531
    %v9204 = vpack.c.b16 %v6540, %v6532
    %v9205 = vpack.c.b16 %v6549, %v6541
    %v9206 = vpack.c.b16 %v6550, %v6542
    %v9207 = vpack.c.b16 %v6551, %v6543
    %v9208 = vpack.c.b16 %v6552, %v6544
    %v9209 = vpack.c.b16 %v6553, %v6545
    %v9210 = vpack.c.b16 %v6554, %v6546
    %v9211 = vpack.c.b16 %v6555, %v6547
    %v9212 = vpack.c.b16 %v6556, %v6548
    %v9213 = vpack.c.b16 %v6565, %v6557
    %v9214 = vpack.c.b16 %v6566, %v6558
    %v9215 = vpack.c.b16 %v6567, %v6559
    %v9216 = vpack.c.b16 %v6568, %v6560
    %v9217 = vpack.c.b16 %v6569, %v6561
    %v9218 = vpack.c.b16 %v6570, %v6562
    %v9219 = vpack.c.b16 %v6571, %v6563
    %v9220 = vpack.c.b16 %v6572, %v6564
    %v9221 = vpack.c.b16 %v6581, %v6573
    %v9222 = vpack.c.b16 %v6582, %v6574
    %v9223 = vpack.c.b16 %v6583, %v6575
    %v9224 = vpack.c.b16 %v6584, %v6576
    %v9225 = vpack.c.b16 %v6585, %v6577
    %v9226 = vpack.c.b16 %v6586, %v6578
    %v9227 = vpack.c.b16 %v6587, %v6579
    %v9228 = vpack.c.b16 %v6588, %v6580
    %v9229 = vpack.c.b16 %v6597, %v6589
    %v9230 = vpack.c.b16 %v6598, %v6590
    %v9231 = vpack.c.b16 %v6599, %v6591
    %v9232 = vpack.c.b16 %v6600, %v6592
    %v9233 = vpack.c.b16 %v6601, %v6593
    %v9234 = vpack.c.b16 %v6602, %v6594
    %v9235 = vpack.c.b16 %v6603, %v6595
    %v9236 = vpack.c.b16 %v6604, %v6596
    %v9237 = vpack.c.b16 %v6613, %v6605
    %v9238 = vpack.c.b16 %v6614, %v6606
    %v9239 = vpack.c.b16 %v6615, %v6607
    %v9240 = vpack.c.b16 %v6616, %v6608
    %v9241 = vpack.c.b16 %v6617, %v6609
    %v9242 = vpack.c.b16 %v6618, %v6610
    %v9243 = vpack.c.b16 %v6619, %v6611
    %v9244 = vpack.c.b16 %v6620, %v6612
    %v9245 = vpack.c.b16 %v6629, %v6621
    %v9246 = vpack.c.b16 %v6630, %v6622
    %v9247 = vpack.c.b16 %v6631, %v6623
    %v9248 = vpack.c.b16 %v6632, %v6624
    %v9249 = vpack.c.b16 %v6633, %v6625
    %v9250 = vpack.c.b16 %v6634, %v6626
    %v9251 = vpack.c.b16 %v6635, %v6627
    %v9252 = vpack.c.b16 %v6636, %v6628
    %v9253 = vpack.c.b16 %v6645, %v6637
    %v9254 = vpack.c.b16 %v6646, %v6638
    %v9255 = vpack.c.b16 %v6647, %v6639
    %v9256 = vpack.c.b16 %v6648, %v6640
    %v9257 = vpack.c.b16 %v6649, %v6641
    %v9258 = vpack.c.b16 %v6650, %v6642
    %v9259 = vpack.c.b16 %v6651, %v6643
    %v9260 = vpack.c.b16 %v6652, %v6644
    %v9261 = vpack.c.b16 %v6661, %v6653
    %v9262 = vpack.c.b16 %v6662, %v6654
    %v9263 = vpack.c.b16 %v6663, %v6655
    %v9264 = vpack.c.b16 %v6664, %v6656
    %v9265 = vpack.c.b16 %v6665, %v6657
    %v9266 = vpack.c.b16 %v6666, %v6658
    %v9267 = vpack.c.b16 %v6667, %v6659
    %v9268 = vpack.c.b16 %v6668, %v6660
    %v9269 = vpack.c.b16 %v6677, %v6669
    %v9270 = vpack.c.b16 %v6678, %v6670
    %v9271 = vpack.c.b16 %v6679, %v6671
    %v9272 = vpack.c.b16 %v6680, %v6672
    %v9273 = vpack.c.b16 %v6681, %v6673
    %v9274 = vpack.c.b16 %v6682, %v6674
    %v9275 = vpack.c.b16 %v6683, %v6675
    %v9276 = vpack.c.b16 %v6684, %v6676
    %v9277 = vpack.c.b16 %v6693, %v6685
    %v9278 = vpack.c.b16 %v6694, %v6686
    %v9279 = vpack.c.b16 %v6695, %v6687
    %v9280 = vpack.c.b16 %v6696, %v6688
    %v9281 = vpack.c.b16 %v6697, %v6689
    %v9282 = vpack.c.b16 %v6698, %v6690
    %v9283 = vpack.c.b16 %v6699, %v6691
    %v9284 = vpack.c.b16 %v6700, %v6692
    %v9285 = vpack.c.b16 %v6709, %v6701
    %v9286 = vpack.c.b16 %v6710, %v6702
    %v9287 = vpack.c.b16 %v6711, %v6703
    %v9288 = vpack.c.b16 %v6712, %v6704
    %v9289 = vpack.c.b16 %v6713, %v6705
    %v9290 = vpack.c.b16 %v6714, %v6706
    %v9291 = vpack.c.b16 %v6715, %v6707
    %v9292 = vpack.c.b16 %v6716, %v6708
    %v9293 = vpack.c.b16 %v6725, %v6717
    %v9294 = vpack.c.b16 %v6726, %v6718
    %v9295 = vpack.c.b16 %v6727, %v6719
    %v9296 = vpack.c.b16 %v6728, %v6720
    %v9297 = vpack.c.b16 %v6729, %v6721
    %v9298 = vpack.c.b16 %v6730, %v6722
    %v9299 = vpack.c.b16 %v6731, %v6723
    %v9300 = vpack.c.b16 %v6732, %v6724
    %v9301 = vpack.c.b16 %v6741, %v6733
    %v9302 = vpack.c.b16 %v6742, %v6734
    %v9303 = vpack.c.b16 %v6743, %v6735
    %v9304 = vpack.c.b16 %v6744, %v6736
    %v9305 = vpack.c.b16 %v6745, %v6737
    %v9306 = vpack.c.b16 %v6746, %v6738
    %v9307 = vpack.c.b16 %v6747, %v6739
    %v9308 = vpack.c.b16 %v6748, %v6740
    %v9309 = vpack.c.b16 %v6757, %v6749
    %v9310 = vpack.c.b16 %v6758, %v6750
    %v9311 = vpack.c.b16 %v6759, %v6751
    %v9312 = vpack.c.b16 %v6760, %v6752
    %v9313 = vpack.c.b16 %v6761, %v6753
    %v9314 = vpack.c.b16 %v6762, %v6754
    %v9315 = vpack.c.b16 %v6763, %v6755
    %v9316 = vpack.c.b16 %v6764, %v6756
    %v9317 = vpack.c.b16 %v6773, %v6765
    %v9318 = vpack.c.b16 %v6774, %v6766
    %v9319 = vpack.c.b16 %v6775, %v6767
    %v9320 = vpack.c.b16 %v6776, %v6768
    %v9321 = vpack.c.b16 %v6777, %v6769
    %v9322 = vpack.c.b16 %v6778, %v6770
    %v9323 = vpack.c.b16 %v6779, %v6771
    %v9324 = vpack.c.b16 %v6780, %v6772
    %v9325 = vpack.c.b16 %v6789, %v6781
    %v9326 = vpack.c.b16 %v6790, %v6782
    %v9327 = vpack.c.b16 %v6791, %v6783
    %v9328 = vpack.c.b16 %v6792, %v6784
    %v9329 = vpack.c.b16 %v6793, %v6785
    %v9330 = vpack.c.b16 %v6794, %v6786
    %v9331 = vpack.c.b16 %v6795, %v6787
    %v9332 = vpack.c.b16 %v6796, %v6788
    %v9333 = vpack.c.b16 %v6805, %v6797
    %v9334 = vpack.c.b16 %v6806, %v6798
    %v9335 = vpack.c.b16 %v6807, %v6799
    %v9336 = vpack.c.b16 %v6808, %v6800
    %v9337 = vpack.c.b16 %v6809, %v6801
    %v9338 = vpack.c.b16 %v6810, %v6802
    %v9339 = vpack.c.b16 %v6811, %v6803
    %v9340 = vpack.c.b16 %v6812, %v6804
    %v9341 = vpack.c.b16 %v6821, %v6813
    %v9342 = vpack.c.b16 %v6822, %v6814
    %v9343 = vpack.c.b16 %v6823, %v6815
    %v9344 = vpack.c.b16 %v6824, %v6816
    %v9345 = vpack.c.b16 %v6825, %v6817
    %v9346 = vpack.c.b16 %v6826, %v6818
    %v9347 = vpack.c.b16 %v6827, %v6819
    %v9348 = vpack.c.b16 %v6828, %v6820
    %v9349 = vpack.c.b16 %v6837, %v6829
    %v9350 = vpack.c.b16 %v6838, %v6830
    %v9351 = vpack.c.b16 %v6839, %v6831
    %v9352 = vpack.c.b16 %v6840, %v6832
    %v9353 = vpack.c.b16 %v6841, %v6833
    %v9354 = vpack.c.b16 %v6842, %v6834
    %v9355 = vpack.c.b16 %v6843, %v6835
    %v9356 = vpack.c.b16 %v6844, %v6836
    %v9357 = vpack.c.b16 %v6853, %v6845
    %v9358 = vpack.c.b16 %v6854, %v6846
    %v9359 = vpack.c.b16 %v6855, %v6847
    %v9360 = vpack.c.b16 %v6856, %v6848
    %v9361 = vpack.c.b16 %v6857, %v6849
    %v9362 = vpack.c.b16 %v6858, %v6850
    %v9363 = vpack.c.b16 %v6859, %v6851
    %v9364 = vpack.c.b16 %v6860, %v6852
    %v9365 = vpack.c.b16 %v6869, %v6861
    %v9366 = vpack.c.b16 %v6870, %v6862
    %v9367 = vpack.c.b16 %v6871, %v6863
    %v9368 = vpack.c.b16 %v6872, %v6864
    %v9369 = vpack.c.b16 %v6873, %v6865
    %v9370 = vpack.c.b16 %v6874, %v6866
    %v9371 = vpack.c.b16 %v6875, %v6867
    %v9372 = vpack.c.b16 %v6876, %v6868
    %v9373 = vpack.c.b16 %v6885, %v6877
    %v9374 = vpack.c.b16 %v6886, %v6878
    %v9375 = vpack.c.b16 %v6887, %v6879
    %v9376 = vpack.c.b16 %v6888, %v6880
    %v9377 = vpack.c.b16 %v6889, %v6881
    %v9378 = vpack.c.b16 %v6890, %v6882
    %v9379 = vpack.c.b16 %v6891, %v6883
    %v9380 = vpack.c.b16 %v6892, %v6884
    %v9381 = vpack.c.b16 %v6901, %v6893
    %v9382 = vpack.c.b16 %v6902, %v6894
    %v9383 = vpack.c.b16 %v6903, %v6895
    %v9384 = vpack.c.b16 %v6904, %v6896
    %v9385 = vpack.c.b16 %v6905, %v6897
    %v9386 = vpack.c.b16 %v6906, %v6898
    %v9387 = vpack.c.b16 %v6907, %v6899
    %v9388 = vpack.c.b16 %v6908, %v6900
    %v9389 = vpack.c.b16 %v6917, %v6909
    %v9390 = vpack.c.b16 %v6918, %v6910
    %v9391 = vpack.c.b16 %v6919, %v6911
    %v9392 = vpack.c.b16 %v6920, %v6912
    %v9393 = vpack.c.b16 %v6921, %v6913
    %v9394 = vpack.c.b16 %v6922, %v6914
    %v9395 = vpack.c.b16 %v6923, %v6915
    %v9396 = vpack.c.b16 %v6924, %v6916
    %v9397 = vpack.c.b16 %v6933, %v6925
    %v9398 = vpack.c.b16 %v6934, %v6926
    %v9399 = vpack.c.b16 %v6935, %v6927
    %v9400 = vpack.c.b16 %v6936, %v6928
    %v9401 = vpack.c.b16 %v6937, %v6929
    %v9402 = vpack.c.b16 %v6938, %v6930
    %v9403 = vpack.c.b16 %v6939, %v6931
    %v9404 = vpack.c.b16 %v6940, %v6932
    %v9405 = vpack.c.b16 %v6949, %v6941
    %v9406 = vpack.c.b16 %v6950, %v6942
    %v9407 = vpack.c.b16 %v6951, %v6943
    %v9408 = vpack.c.b16 %v6952, %v6944
    %v9409 = vpack.c.b16 %v6953, %v6945
    %v9410 = vpack.c.b16 %v6954, %v6946
    %v9411 = vpack.c.b16 %v6955, %v6947
    %v9412 = vpack.c.b16 %v6956, %v6948
    %v9413 = vpack.c.b16 %v6965, %v6957
    %v9414 = vpack.c.b16 %v6966, %v6958
    %v9415 = vpack.c.b16 %v6967, %v6959
    %v9416 = vpack.c.b16 %v6968, %v6960
    %v9417 = vpack.c.b16 %v6969, %v6961
    %v9418 = vpack.c.b16 %v6970, %v6962
    %v9419 = vpack.c.b16 %v6971, %v6963
    %v9420 = vpack.c.b16 %v6972, %v6964
    %v9421 = vpack.c.b16 %v6981, %v6973
    %v9422 = vpack.c.b16 %v6982, %v6974
    %v9423 = vpack.c.b16 %v6983, %v6975
    %v9424 = vpack.c.b16 %v6984, %v6976
    %v9425 = vpack.c.b16 %v6985, %v6977
    %v9426 = vpack.c.b16 %v6986, %v6978
    %v9427 = vpack.c.b16 %v6987, %v6979
    %v9428 = vpack.c.b16 %v6988, %v6980
    %v9429 = vpack.c.b16 %v6997, %v6989
    %v9430 = vpack.c.b16 %v6998, %v6990
    %v9431 = vpack.c.b16 %v6999, %v6991
    %v9432 = vpack.c.b16 %v7000, %v6992
    %v9433 = vpack.c.b16 %v7001, %v6993
    %v9434 = vpack.c.b16 %v7002, %v6994
    %v9435 = vpack.c.b16 %v7003, %v6995
    %v9436 = vpack.c.b16 %v7004, %v6996
    %v9437 = vpack.c.b16 %v7013, %v7005
    %v9438 = vpack.c.b16 %v7014, %v7006
    %v9439 = vpack.c.b16 %v7015, %v7007
    %v9440 = vpack.c.b16 %v7016, %v7008
    %v9441 = vpack.c.b16 %v7017, %v7009
    %v9442 = vpack.c.b16 %v7018, %v7010
    %v9443 = vpack.c.b16 %v7019, %v7011
    %v9444 = vpack.c.b16 %v7020, %v7012
    %v9445 = vpack.c.b16 %v7029, %v7021
    %v9446 = vpack.c.b16 %v7030, %v7022
    %v9447 = vpack.c.b16 %v7031, %v7023
    %v9448 = vpack.c.b16 %v7032, %v7024
    %v9449 = vpack.c.b16 %v7033, %v7025
    %v9450 = vpack.c.b16 %v7034, %v7026
    %v9451 = vpack.c.b16 %v7035, %v7027
    %v9452 = vpack.c.b16 %v7036, %v7028
    %v9453 = vpack.c.b16 %v7045, %v7037
    %v9454 = vpack.c.b16 %v7046, %v7038
    %v9455 = vpack.c.b16 %v7047, %v7039
    %v9456 = vpack.c.b16 %v7048, %v7040
    %v9457 = vpack.c.b16 %v7049, %v7041
    %v9458 = vpack.c.b16 %v7050, %v7042
    %v9459 = vpack.c.b16 %v7051, %v7043
    %v9460 = vpack.c.b16 %v7052, %v7044
    %v9461 = vpack.c.b16 %v7061, %v7053
    %v9462 = vpack.c.b16 %v7062, %v7054
    %v9463 = vpack.c.b16 %v7063, %v7055
    %v9464 = vpack.c.b16 %v7064, %v7056
    %v9465 = vpack.c.b16 %v7065, %v7057
    %v9466 = vpack.c.b16 %v7066, %v7058
    %v9467 = vpack.c.b16 %v7067, %v7059
    %v9468 = vpack.c.b16 %v7068, %v7060
    %v9469 = vpack.c.b16 %v7077, %v7069
    %v9470 = vpack.c.b16 %v7078, %v7070
    %v9471 = vpack.c.b16 %v7079, %v7071
    %v9472 = vpack.c.b16 %v7080, %v7072
    %v9473 = vpack.c.b16 %v7081, %v7073
    %v9474 = vpack.c.b16 %v7082, %v7074
    %v9475 = vpack.c.b16 %v7083, %v7075
    %v9476 = vpack.c.b16 %v7084, %v7076
    %v9477 = vpack.c.b16 %v7093, %v7085
    %v9478 = vpack.c.b16 %v7094, %v7086
    %v9479 = vpack.c.b16 %v7095, %v7087
    %v9480 = vpack.c.b16 %v7096, %v7088
    %v9481 = vpack.c.b16 %v7097, %v7089
    %v9482 = vpack.c.b16 %v7098, %v7090
    %v9483 = vpack.c.b16 %v7099, %v7091
    %v9484 = vpack.c.b16 %v7100, %v7092
    %v9485 = vpack.c.b16 %v7109, %v7101
    %v9486 = vpack.c.b16 %v7110, %v7102
    %v9487 = vpack.c.b16 %v7111, %v7103
    %v9488 = vpack.c.b16 %v7112, %v7104
    %v9489 = vpack.c.b16 %v7113, %v7105
    %v9490 = vpack.c.b16 %v7114, %v7106
    %v9491 = vpack.c.b16 %v7115, %v7107
    %v9492 = vpack.c.b16 %v7116, %v7108
    %v9493 = vpack.c.b16 %v7125, %v7117
    %v9494 = vpack.c.b16 %v7126, %v7118
    %v9495 = vpack.c.b16 %v7127, %v7119
    %v9496 = vpack.c.b16 %v7128, %v7120
    %v9497 = vpack.c.b16 %v7129, %v7121
    %v9498 = vpack.c.b16 %v7130, %v7122
    %v9499 = vpack.c.b16 %v7131, %v7123
    %v9500 = vpack.c.b16 %v7132, %v7124
    %v9501 = vpack.c.b16 %v7141, %v7133
    %v9502 = vpack.c.b16 %v7142, %v7134
    %v9503 = vpack.c.b16 %v7143, %v7135
    %v9504 = vpack.c.b16 %v7144, %v7136
    %v9505 = vpack.c.b16 %v7145, %v7137
    %v9506 = vpack.c.b16 %v7146, %v7138
    %v9507 = vpack.c.b16 %v7147, %v7139
    %v9508 = vpack.c.b16 %v7148, %v7140
    %v9509 = vpack.c.b16 %v7157, %v7149
    %v9510 = vpack.c.b16 %v7158, %v7150
    %v9511 = vpack.c.b16 %v7159, %v7151
    %v9512 = vpack.c.b16 %v7160, %v7152
    %v9513 = vpack.c.b16 %v7161, %v7153
    %v9514 = vpack.c.b16 %v7162, %v7154
    %v9515 = vpack.c.b16 %v7163, %v7155
    %v9516 = vpack.c.b16 %v7164, %v7156
    %v9517 = vpack.c.b16 %v7173, %v7165
    %v9518 = vpack.c.b16 %v7174, %v7166
    %v9519 = vpack.c.b16 %v7175, %v7167
    %v9520 = vpack.c.b16 %v7176, %v7168
    %v9521 = vpack.c.b16 %v7177, %v7169
    %v9522 = vpack.c.b16 %v7178, %v7170
    %v9523 = vpack.c.b16 %v7179, %v7171
    %v9524 = vpack.c.b16 %v7180, %v7172
    %v9525 = vpack.c.b16 %v7189, %v7181
    %v9526 = vpack.c.b16 %v7190, %v7182
    %v9527 = vpack.c.b16 %v7191, %v7183
    %v9528 = vpack.c.b16 %v7192, %v7184
    %v9529 = vpack.c.b16 %v7193, %v7185
    %v9530 = vpack.c.b16 %v7194, %v7186
    %v9531 = vpack.c.b16 %v7195, %v7187
    %v9532 = vpack.c.b16 %v7196, %v7188
    %v9533 = vpack.c.b16 %v7205, %v7197
    %v9534 = vpack.c.b16 %v7206, %v7198
    %v9535 = vpack.c.b16 %v7207, %v7199
    %v9536 = vpack.c.b16 %v7208, %v7200
    %v9537 = vpack.c.b16 %v7209, %v7201
    %v9538 = vpack.c.b16 %v7210, %v7202
    %v9539 = vpack.c.b16 %v7211, %v7203
    %v9540 = vpack.c.b16 %v7212, %v7204
    %v9541 = vpack.c.b16 %v7221, %v7213
    %v9542 = vpack.c.b16 %v7222, %v7214
    %v9543 = vpack.c.b16 %v7223, %v7215
    %v9544 = vpack.c.b16 %v7224, %v7216
    %v9545 = vpack.c.b16 %v7225, %v7217
    %v9546 = vpack.c.b16 %v7226, %v7218
    %v9547 = vpack.c.b16 %v7227, %v7219
    %v9548 = vpack.c.b16 %v7228, %v7220
    %v9549 = vpack.c.b16 %v7237, %v7229
    %v9550 = vpack.c.b16 %v7238, %v7230
    %v9551 = vpack.c.b16 %v7239, %v7231
    %v9552 = vpack.c.b16 %v7240, %v7232
    %v9553 = vpack.c.b16 %v7241, %v7233
    %v9554 = vpack.c.b16 %v7242, %v7234
    %v9555 = vpack.c.b16 %v7243, %v7235
    %v9556 = vpack.c.b16 %v7244, %v7236
    %v9557 = vpack.c.b16 %v7253, %v7245
    %v9558 = vpack.c.b16 %v7254, %v7246
    %v9559 = vpack.c.b16 %v7255, %v7247
    %v9560 = vpack.c.b16 %v7256, %v7248
    %v9561 = vpack.c.b16 %v7257, %v7249
    %v9562 = vpack.c.b16 %v7258, %v7250
    %v9563 = vpack.c.b16 %v7259, %v7251
    %v9564 = vpack.c.b16 %v7260, %v7252
    %v9565 = vpack.c.b16 %v7269, %v7261
    %v9566 = vpack.c.b16 %v7270, %v7262
    %v9567 = vpack.c.b16 %v7271, %v7263
    %v9568 = vpack.c.b16 %v7272, %v7264
    %v9569 = vpack.c.b16 %v7273, %v7265
    %v9570 = vpack.c.b16 %v7274, %v7266
    %v9571 = vpack.c.b16 %v7275, %v7267
    %v9572 = vpack.c.b16 %v7276, %v7268
    %v9573 = vpack.c.b16 %v7285, %v7277
    %v9574 = vpack.c.b16 %v7286, %v7278
    %v9575 = vpack.c.b16 %v7287, %v7279
    %v9576 = vpack.c.b16 %v7288, %v7280
    %v9577 = vpack.c.b16 %v7289, %v7281
    %v9578 = vpack.c.b16 %v7290, %v7282
    %v9579 = vpack.c.b16 %v7291, %v7283
    %v9580 = vpack.c.b16 %v7292, %v7284
    %v9581 = vpack.c.b16 %v7301, %v7293
    %v9582 = vpack.c.b16 %v7302, %v7294
    %v9583 = vpack.c.b16 %v7303, %v7295
    %v9584 = vpack.c.b16 %v7304, %v7296
    %v9585 = vpack.c.b16 %v7305, %v7297
    %v9586 = vpack.c.b16 %v7306, %v7298
    %v9587 = vpack.c.b16 %v7307, %v7299
    %v9588 = vpack.c.b16 %v7308, %v7300
    %v9589 = vpack.c.b16 %v7317, %v7309
    %v9590 = vpack.c.b16 %v7318, %v7310
    %v9591 = vpack.c.b16 %v7319, %v7311
    %v9592 = vpack.c.b16 %v7320, %v7312
    %v9593 = vpack.c.b16 %v7321, %v7313
    %v9594 = vpack.c.b16 %v7322, %v7314
    %v9595 = vpack.c.b16 %v7323, %v7315
    %v9596 = vpack.c.b16 %v7324, %v7316
    %v9597 = vpack.c.b16 %v7333, %v7325
    %v9598 = vpack.c.b16 %v7334, %v7326
    %v9599 = vpack.c.b16 %v7335, %v7327
    %v9600 = vpack.c.b16 %v7336, %v7328
    %v9601 = vpack.c.b16 %v7337, %v7329
    %v9602 = vpack.c.b16 %v7338, %v7330
    %v9603 = vpack.c.b16 %v7339, %v7331
    %v9604 = vpack.c.b16 %v7340, %v7332
    %v9605 = vpack.c.b16 %v7349, %v7341
    %v9606 = vpack.c.b16 %v7350, %v7342
    %v9607 = vpack.c.b16 %v7351, %v7343
    %v9608 = vpack.c.b16 %v7352, %v7344
    %v9609 = vpack.c.b16 %v7353, %v7345
    %v9610 = vpack.c.b16 %v7354, %v7346
    %v9611 = vpack.c.b16 %v7355, %v7347
    %v9612 = vpack.c.b16 %v7356, %v7348
    %v9613 = vpack.c.b16 %v7365, %v7357
    %v9614 = vpack.c.b16 %v7366, %v7358
    %v9615 = vpack.c.b16 %v7367, %v7359
    %v9616 = vpack.c.b16 %v7368, %v7360
    %v9617 = vpack.c.b16 %v7369, %v7361
    %v9618 = vpack.c.b16 %v7370, %v7362
    %v9619 = vpack.c.b16 %v7371, %v7363
    %v9620 = vpack.c.b16 %v7372, %v7364
    %v9621 = vpack.c.b16 %v7381, %v7373
    %v9622 = vpack.c.b16 %v7382, %v7374
    %v9623 = vpack.c.b16 %v7383, %v7375
    %v9624 = vpack.c.b16 %v7384, %v7376
    %v9625 = vpack.c.b16 %v7385, %v7377
    %v9626 = vpack.c.b16 %v7386, %v7378
    %v9627 = vpack.c.b16 %v7387, %v7379
    %v9628 = vpack.c.b16 %v7388, %v7380
    %v9629 = vpack.c.b16 %v7397, %v7389
    %v9630 = vpack.c.b16 %v7398, %v7390
    %v9631 = vpack.c.b16 %v7399, %v7391
    %v9632 = vpack.c.b16 %v7400, %v7392
    %v9633 = vpack.c.b16 %v7401, %v7393
    %v9634 = vpack.c.b16 %v7402, %v7394
    %v9635 = vpack.c.b16 %v7403, %v7395
    %v9636 = vpack.c.b16 %v7404, %v7396
    %v9637 = vpack.c.b16 %v7413, %v7405
    %v9638 = vpack.c.b16 %v7414, %v7406
    %v9639 = vpack.c.b16 %v7415, %v7407
    %v9640 = vpack.c.b16 %v7416, %v7408
    %v9641 = vpack.c.b16 %v7417, %v7409
    %v9642 = vpack.c.b16 %v7418, %v7410
    %v9643 = vpack.c.b16 %v7419, %v7411
    %v9644 = vpack.c.b16 %v7420, %v7412
    %v9645 = vpack.c.b16 %v7429, %v7421
    %v9646 = vpack.c.b16 %v7430, %v7422
    %v9647 = vpack.c.b16 %v7431, %v7423
    %v9648 = vpack.c.b16 %v7432, %v7424
    %v9649 = vpack.c.b16 %v7433, %v7425
    %v9650 = vpack.c.b16 %v7434, %v7426
    %v9651 = vpack.c.b16 %v7435, %v7427
    %v9652 = vpack.c.b16 %v7436, %v7428
    %v9653 = vpack.c.b16 %v7445, %v7437
    %v9654 = vpack.c.b16 %v7446, %v7438
    %v9655 = vpack.c.b16 %v7447, %v7439
    %v9656 = vpack.c.b16 %v7448, %v7440
    %v9657 = vpack.c.b16 %v7449, %v7441
    %v9658 = vpack.c.b16 %v7450, %v7442
    %v9659 = vpack.c.b16 %v7451, %v7443
    %v9660 = vpack.c.b16 %v7452, %v7444
    %v9661 = vpack.c.b16 %v7461, %v7453
    %v9662 = vpack.c.b16 %v7462, %v7454
    %v9663 = vpack.c.b16 %v7463, %v7455
    %v9664 = vpack.c.b16 %v7464, %v7456
    %v9665 = vpack.c.b16 %v7465, %v7457
    %v9666 = vpack.c.b16 %v7466, %v7458
    %v9667 = vpack.c.b16 %v7467, %v7459
    %v9668 = vpack.c.b16 %v7468, %v7460
    %v9669 = vpack.c.b16 %v7477, %v7469
    %v9670 = vpack.c.b16 %v7478, %v7470
    %v9671 = vpack.c.b16 %v7479, %v7471
    %v9672 = vpack.c.b16 %v7480, %v7472
    %v9673 = vpack.c.b16 %v7481, %v7473
    %v9674 = vpack.c.b16 %v7482, %v7474
    %v9675 = vpack.c.b16 %v7483, %v7475
    %v9676 = vpack.c.b16 %v7484, %v7476
    %v9677 = vpack.c.b16 %v7493, %v7485
    %v9678 = vpack.c.b16 %v7494, %v7486
    %v9679 = vpack.c.b16 %v7495, %v7487
    %v9680 = vpack.c.b16 %v7496, %v7488
    %v9681 = vpack.c.b16 %v7497, %v7489
    %v9682 = vpack.c.b16 %v7498, %v7490
    %v9683 = vpack.c.b16 %v7499, %v7491
    %v9684 = vpack.c.b16 %v7500, %v7492
    %v9685 = vpack.c.b16 %v7509, %v7501
    %v9686 = vpack.c.b16 %v7510, %v7502
    %v9687 = vpack.c.b16 %v7511, %v7503
    %v9688 = vpack.c.b16 %v7512, %v7504
    %v9689 = vpack.c.b16 %v7513, %v7505
    %v9690 = vpack.c.b16 %v7514, %v7506
    %v9691 = vpack.c.b16 %v7515, %v7507
    %v9692 = vpack.c.b16 %v7516, %v7508
    %v9693 = vpack.c.b16 %v7525, %v7517
    %v9694 = vpack.c.b16 %v7526, %v7518
    %v9695 = vpack.c.b16 %v7527, %v7519
    %v9696 = vpack.c.b16 %v7528, %v7520
    %v9697 = vpack.c.b16 %v7529, %v7521
    %v9698 = vpack.c.b16 %v7530, %v7522
    %v9699 = vpack.c.b16 %v7531, %v7523
    %v9700 = vpack.c.b16 %v7532, %v7524
    %v9701 = vpack.c.b16 %v7541, %v7533
    %v9702 = vpack.c.b16 %v7542, %v7534
    %v9703 = vpack.c.b16 %v7543, %v7535
    %v9704 = vpack.c.b16 %v7544, %v7536
    %v9705 = vpack.c.b16 %v7545, %v7537
    %v9706 = vpack.c.b16 %v7546, %v7538
    %v9707 = vpack.c.b16 %v7547, %v7539
    %v9708 = vpack.c.b16 %v7548, %v7540
    %v9709 = vpack.c.b16 %v7557, %v7549
    %v9710 = vpack.c.b16 %v7558, %v7550
    %v9711 = vpack.c.b16 %v7559, %v7551
    %v9712 = vpack.c.b16 %v7560, %v7552
    %v9713 = vpack.c.b16 %v7561, %v7553
    %v9714 = vpack.c.b16 %v7562, %v7554
    %v9715 = vpack.c.b16 %v7563, %v7555
    %v9716 = vpack.c.b16 %v7564, %v7556
    %v9717 = vpack.c.b16 %v7573, %v7565
    %v9718 = vpack.c.b16 %v7574, %v7566
    %v9719 = vpack.c.b16 %v7575, %v7567
    %v9720 = vpack.c.b16 %v7576, %v7568
    %v9721 = vpack.c.b16 %v7577, %v7569
    %v9722 = vpack.c.b16 %v7578, %v7570
    %v9723 = vpack.c.b16 %v7579, %v7571
    %v9724 = vpack.c.b16 %v7580, %v7572
    %v9725 = vpack.c.b16 %v7589, %v7581
    %v9726 = vpack.c.b16 %v7590, %v7582
    %v9727 = vpack.c.b16 %v7591, %v7583
    %v9728 = vpack.c.b16 %v7592, %v7584
    %v9729 = vpack.c.b16 %v7593, %v7585
    %v9730 = vpack.c.b16 %v7594, %v7586
    %v9731 = vpack.c.b16 %v7595, %v7587
    %v9732 = vpack.c.b16 %v7596, %v7588
    %v9733 = vpack.c.b16 %v7605, %v7597
    %v9734 = vpack.c.b16 %v7606, %v7598
    %v9735 = vpack.c.b16 %v7607, %v7599
    %v9736 = vpack.c.b16 %v7608, %v7600
    %v9737 = vpack.c.b16 %v7609, %v7601
    %v9738 = vpack.c.b16 %v7610, %v7602
    %v9739 = vpack.c.b16 %v7611, %v7603
    %v9740 = vpack.c.b16 %v7612, %v7604
    %v9741 = vpack.c.b16 %v7621, %v7613
    %v9742 = vpack.c.b16 %v7622, %v7614
    %v9743 = vpack.c.b16 %v7623, %v7615
    %v9744 = vpack.c.b16 %v7624, %v7616
    %v9745 = vpack.c.b16 %v7625, %v7617
    %v9746 = vpack.c.b16 %v7626, %v7618
    %v9747 = vpack.c.b16 %v7627, %v7619
    %v9748 = vpack.c.b16 %v7628, %v7620
    %v9749 = vpack.c.b16 %v7637, %v7629
    %v9750 = vpack.c.b16 %v7638, %v7630
    %v9751 = vpack.c.b16 %v7639, %v7631
    %v9752 = vpack.c.b16 %v7640, %v7632
    %v9753 = vpack.c.b16 %v7641, %v7633
    %v9754 = vpack.c.b16 %v7642, %v7634
    %v9755 = vpack.c.b16 %v7643, %v7635
    %v9756 = vpack.c.b16 %v7644, %v7636
    %v9757 = vpack.c.b16 %v7653, %v7645
    %v9758 = vpack.c.b16 %v7654, %v7646
    %v9759 = vpack.c.b16 %v7655, %v7647
    %v9760 = vpack.c.b16 %v7656, %v7648
    %v9761 = vpack.c.b16 %v7657, %v7649
    %v9762 = vpack.c.b16 %v7658, %v7650
    %v9763 = vpack.c.b16 %v7659, %v7651
    %v9764 = vpack.c.b16 %v7660, %v7652
    %v9765 = vpack.c.b16 %v7669, %v7661
    %v9766 = vpack.c.b16 %v7670, %v7662
    %v9767 = vpack.c.b16 %v7671, %v7663
    %v9768 = vpack.c.b16 %v7672, %v7664
    %v9769 = vpack.c.b16 %v7673, %v7665
    %v9770 = vpack.c.b16 %v7674, %v7666
    %v9771 = vpack.c.b16 %v7675, %v7667
    %v9772 = vpack.c.b16 %v7676, %v7668
    %v9773 = vpack.c.b16 %v7685, %v7677
    %v9774 = vpack.c.b16 %v7686, %v7678
    %v9775 = vpack.c.b16 %v7687, %v7679
    %v9776 = vpack.c.b16 %v7688, %v7680
    %v9777 = vpack.c.b16 %v7689, %v7681
    %v9778 = vpack.c.b16 %v7690, %v7682
    %v9779 = vpack.c.b16 %v7691, %v7683
    %v9780 = vpack.c.b16 %v7692, %v7684
    %v9781 = vpack.c.b16 %v7701, %v7693
    %v9782 = vpack.c.b16 %v7702, %v7694
    %v9783 = vpack.c.b16 %v7703, %v7695
    %v9784 = vpack.c.b16 %v7704, %v7696
    %v9785 = vpack.c.b16 %v7705, %v7697
    %v9786 = vpack.c.b16 %v7706, %v7698
    %v9787 = vpack.c.b16 %v7707, %v7699
    %v9788 = vpack.c.b16 %v7708, %v7700
    %v9789 = vpack.c.b16 %v7717, %v7709
    %v9790 = vpack.c.b16 %v7718, %v7710
    %v9791 = vpack.c.b16 %v7719, %v7711
    %v9792 = vpack.c.b16 %v7720, %v7712
    %v9793 = vpack.c.b16 %v7721, %v7713
    %v9794 = vpack.c.b16 %v7722, %v7714
    %v9795 = vpack.c.b16 %v7723, %v7715
    %v9796 = vpack.c.b16 %v7724, %v7716
    %v9797 = vpack.c.b16 %v7733, %v7725
    %v9798 = vpack.c.b16 %v7734, %v7726
    %v9799 = vpack.c.b16 %v7735, %v7727
    %v9800 = vpack.c.b16 %v7736, %v7728
    %v9801 = vpack.c.b16 %v7737, %v7729
    %v9802 = vpack.c.b16 %v7738, %v7730
    %v9803 = vpack.c.b16 %v7739, %v7731
    %v9804 = vpack.c.b16 %v7740, %v7732
    %v9805 = vpack.c.b16 %v7749, %v7741
    %v9806 = vpack.c.b16 %v7750, %v7742
    %v9807 = vpack.c.b16 %v7751, %v7743
    %v9808 = vpack.c.b16 %v7752, %v7744
    %v9809 = vpack.c.b16 %v7753, %v7745
    %v9810 = vpack.c.b16 %v7754, %v7746
    %v9811 = vpack.c.b16 %v7755, %v7747
    %v9812 = vpack.c.b16 %v7756, %v7748
    %v9813 = vpack.c.b16 %v7765, %v7757
    %v9814 = vpack.c.b16 %v7766, %v7758
    %v9815 = vpack.c.b16 %v7767, %v7759
    %v9816 = vpack.c.b16 %v7768, %v7760
    %v9817 = vpack.c.b16 %v7769, %v7761
    %v9818 = vpack.c.b16 %v7770, %v7762
    %v9819 = vpack.c.b16 %v7771, %v7763
    %v9820 = vpack.c.b16 %v7772, %v7764
    %v9821 = vpack.c.b16 %v7781, %v7773
    %v9822 = vpack.c.b16 %v7782, %v7774
    %v9823 = vpack.c.b16 %v7783, %v7775
    %v9824 = vpack.c.b16 %v7784, %v7776
    %v9825 = vpack.c.b16 %v7785, %v7777
    %v9826 = vpack.c.b16 %v7786, %v7778
    %v9827 = vpack.c.b16 %v7787, %v7779
    %v9828 = vpack.c.b16 %v7788, %v7780
    %v9829 = vpack.c.b16 %v7797, %v7789
    %v9830 = vpack.c.b16 %v7798, %v7790
    %v9831 = vpack.c.b16 %v7799, %v7791
    %v9832 = vpack.c.b16 %v7800, %v7792
    %v9833 = vpack.c.b16 %v7801, %v7793
    %v9834 = vpack.c.b16 %v7802, %v7794
    %v9835 = vpack.c.b16 %v7803, %v7795
    %v9836 = vpack.c.b16 %v7804, %v7796
    %v9837 = vpack.c.b16 %v7813, %v7805
    %v9838 = vpack.c.b16 %v7814, %v7806
    %v9839 = vpack.c.b16 %v7815, %v7807
    %v9840 = vpack.c.b16 %v7816, %v7808
    %v9841 = vpack.c.b16 %v7817, %v7809
    %v9842 = vpack.c.b16 %v7818, %v7810
    %v9843 = vpack.c.b16 %v7819, %v7811
    %v9844 = vpack.c.b16 %v7820, %v7812
    %v9845 = vpack.c.b16 %v7829, %v7821
    %v9846 = vpack.c.b16 %v7830, %v7822
    %v9847 = vpack.c.b16 %v7831, %v7823
    %v9848 = vpack.c.b16 %v7832, %v7824
    %v9849 = vpack.c.b16 %v7833, %v7825
    %v9850 = vpack.c.b16 %v7834, %v7826
    %v9851 = vpack.c.b16 %v7835, %v7827
    %v9852 = vpack.c.b16 %v7836, %v7828
    %v9853 = vpack.c.b16 %v7845, %v7837
    %v9854 = vpack.c.b16 %v7846, %v7838
    %v9855 = vpack.c.b16 %v7847, %v7839
    %v9856 = vpack.c.b16 %v7848, %v7840
    %v9857 = vpack.c.b16 %v7849, %v7841
    %v9858 = vpack.c.b16 %v7850, %v7842
    %v9859 = vpack.c.b16 %v7851, %v7843
    %v9860 = vpack.c.b16 %v7852, %v7844
    %v9861 = vpack.c.b16 %v7861, %v7853
    %v9862 = vpack.c.b16 %v7862, %v7854
    %v9863 = vpack.c.b16 %v7863, %v7855
    %v9864 = vpack.c.b16 %v7864, %v7856
    %v9865 = vpack.c.b16 %v7865, %v7857
    %v9866 = vpack.c.b16 %v7866, %v7858
    %v9867 = vpack.c.b16 %v7867, %v7859
    %v9868 = vpack.c.b16 %v7868, %v7860
    %v9869 = vpack.c.b16 %v7877, %v7869
    %v9870 = vpack.c.b16 %v7878, %v7870
    %v9871 = vpack.c.b16 %v7879, %v7871
    %v9872 = vpack.c.b16 %v7880, %v7872
    %v9873 = vpack.c.b16 %v7881, %v7873
    %v9874 = vpack.c.b16 %v7882, %v7874
    %v9875 = vpack.c.b16 %v7883, %v7875
    %v9876 = vpack.c.b16 %v7884, %v7876
    %v9877 = vpack.c.b16 %v7893, %v7885
    %v9878 = vpack.c.b16 %v7894, %v7886
    %v9879 = vpack.c.b16 %v7895, %v7887
    %v9880 = vpack.c.b16 %v7896, %v7888
    %v9881 = vpack.c.b16 %v7897, %v7889
    %v9882 = vpack.c.b16 %v7898, %v7890
    %v9883 = vpack.c.b16 %v7899, %v7891
    %v9884 = vpack.c.b16 %v7900, %v7892
    %v9885 = vpack.c.b16 %v7909, %v7901
    %v9886 = vpack.c.b16 %v7910, %v7902
    %v9887 = vpack.c.b16 %v7911, %v7903
    %v9888 = vpack.c.b16 %v7912, %v7904
    %v9889 = vpack.c.b16 %v7913, %v7905
    %v9890 = vpack.c.b16 %v7914, %v7906
    %v9891 = vpack.c.b16 %v7915, %v7907
    %v9892 = vpack.c.b16 %v7916, %v7908
    %v9893 = vpack.c.b16 %v7925, %v7917
    %v9894 = vpack.c.b16 %v7926, %v7918
    %v9895 = vpack.c.b16 %v7927, %v7919
    %v9896 = vpack.c.b16 %v7928, %v7920
    %v9897 = vpack.c.b16 %v7929, %v7921
    %v9898 = vpack.c.b16 %v7930, %v7922
    %v9899 = vpack.c.b16 %v7931, %v7923
    %v9900 = vpack.c.b16 %v7932, %v7924
    %v9901 = vpack.c.b16 %v7941, %v7933
    %v9902 = vpack.c.b16 %v7942, %v7934
    %v9903 = vpack.c.b16 %v7943, %v7935
    %v9904 = vpack.c.b16 %v7944, %v7936
    %v9905 = vpack.c.b16 %v7945, %v7937
    %v9906 = vpack.c.b16 %v7946, %v7938
    %v9907 = vpack.c.b16 %v7947, %v7939
    %v9908 = vpack.c.b16 %v7948, %v7940
    %v9909 = vpack.c.b16 %v7957, %v7949
    %v9910 = vpack.c.b16 %v7958, %v7950
    %v9911 = vpack.c.b16 %v7959, %v7951
    %v9912 = vpack.c.b16 %v7960, %v7952
    %v9913 = vpack.c.b16 %v7961, %v7953
    %v9914 = vpack.c.b16 %v7962, %v7954
    %v9915 = vpack.c.b16 %v7963, %v7955
    %v9916 = vpack.c.b16 %v7964, %v7956
    %v9917 = vpack.c.b16 %v7973, %v7965
    %v9918 = vpack.c.b16 %v7974, %v7966
    %v9919 = vpack.c.b16 %v7975, %v7967
    %v9920 = vpack.c.b16 %v7976, %v7968
    %v9921 = vpack.c.b16 %v7977, %v7969
    %v9922 = vpack.c.b16 %v7978, %v7970
    %v9923 = vpack.c.b16 %v7979, %v7971
    %v9924 = vpack.c.b16 %v7980, %v7972
    %v9925 = vpack.c.b16 %v7989, %v7981
    %v9926 = vpack.c.b16 %v7990, %v7982
    %v9927 = vpack.c.b16 %v7991, %v7983
    %v9928 = vpack.c.b16 %v7992, %v7984
    %v9929 = vpack.c.b16 %v7993, %v7985
    %v9930 = vpack.c.b16 %v7994, %v7986
    %v9931 = vpack.c.b16 %v7995, %v7987
    %v9932 = vpack.c.b16 %v7996, %v7988
    %v9933 = vpack.c.b16 %v8005, %v7997
    %v9934 = vpack.c.b16 %v8006, %v7998
    %v9935 = vpack.c.b16 %v8007, %v7999
    %v9936 = vpack.c.b16 %v8008, %v8000
    %v9937 = vpack.c.b16 %v8009, %v8001
    %v9938 = vpack.c.b16 %v8010, %v8002
    %v9939 = vpack.c.b16 %v8011, %v8003
    %v9940 = vpack.c.b16 %v8012, %v8004
    %v9941 = vpack.c.b16 %v8021, %v8013
    %v9942 = vpack.c.b16 %v8022, %v8014
    %v9943 = vpack.c.b16 %v8023, %v8015
    %v9944 = vpack.c.b16 %v8024, %v8016
    %v9945 = vpack.c.b16 %v8025, %v8017
    %v9946 = vpack.c.b16 %v8026, %v8018
    %v9947 = vpack.c.b16 %v8027, %v8019
    %v9948 = vpack.c.b16 %v8028, %v8020
    %11869 = vmatpush.bf16.msra.mxu0 %v8085
    %11870 = vmatpush.bf16.msra.mxu0 %v8077
    %11871 = vmatpush.bf16.msra.mxu0 %v8069
    %11872 = vmatpush.bf16.msra.mxu0 %v8061
    %11873 = vmatpush.bf16.msra.mxu0 %v8053
    %11874 = vmatpush.bf16.msra.mxu0 %v8045
    %11875 = vmatpush.bf16.msra.mxu0 %v8037
    %11876 = vmatpush.bf16.msra.mxu0 %v8029
    %11877 = vmatmul.bf16.gmra.mxu0 %v301
    %v11878 = vpop.f32.mrf.mxu0
    %v11879 = vadd.f32 %v2253, %v11878
    %v11880 = vpop.f32.mrf.mxu0
    %11881 = vdwg.mxu0
    %11882 = vmatpush.bf16.msra.mxu0 %v8149
    %11883 = vmatpush.bf16.msra.mxu0 %v8141
    %11884 = vmatpush.bf16.msra.mxu0 %v8133
    %11885 = vmatpush.bf16.msra.mxu0 %v8125
    %11886 = vmatpush.bf16.msra.mxu0 %v8117
    %11887 = vmatpush.bf16.msra.mxu0 %v8109
    %11888 = vmatpush.bf16.msra.mxu0 %v8101
    %11889 = vmatpush.bf16.msra.mxu0 %v8093
    %11890 = vmatmul.bf16.gmra.mxu0 %v302
    %v11891 = vpop.f32.mrf.mxu0
    %v11892 = vadd.f32 %v11879, %v11891
    %v11893 = vpop.f32.mrf.mxu0
    %11894 = vdwg.mxu0
    %11895 = vmatpush.bf16.msra.mxu0 %v8213
    %11896 = vmatpush.bf16.msra.mxu0 %v8205
    %11897 = vmatpush.bf16.msra.mxu0 %v8197
    %11898 = vmatpush.bf16.msra.mxu0 %v8189
    %11899 = vmatpush.bf16.msra.mxu0 %v8181
    %11900 = vmatpush.bf16.msra.mxu0 %v8173
    %11901 = vmatpush.bf16.msra.mxu0 %v8165
    %11902 = vmatpush.bf16.msra.mxu0 %v8157
    %11903 = vmatmul.bf16.gmra.mxu0 %v303
    %v11904 = vpop.f32.mrf.mxu0
    %v11905 = vadd.f32 %v11892, %v11904
    %v11906 = vpop.f32.mrf.mxu0
    %11907 = vdwg.mxu0
    %11908 = vmatpush.bf16.msra.mxu0 %v8277
    %11909 = vmatpush.bf16.msra.mxu0 %v8269
    %11910 = vmatpush.bf16.msra.mxu0 %v8261
    %11911 = vmatpush.bf16.msra.mxu0 %v8253
    %11912 = vmatpush.bf16.msra.mxu0 %v8245
    %11913 = vmatpush.bf16.msra.mxu0 %v8237
    %11914 = vmatpush.bf16.msra.mxu0 %v8229
    %11915 = vmatpush.bf16.msra.mxu0 %v8221
    %11916 = vmatmul.bf16.gmra.mxu0 %v304
    %v11917 = vpop.f32.mrf.mxu0
    %v11918 = vadd.f32 %v11905, %v11917
    %v11919 = vpop.f32.mrf.mxu0
    %11920 = vdwg.mxu0
    %11921 = vmatpush.bf16.msra.mxu0 %v8341
    %11922 = vmatpush.bf16.msra.mxu0 %v8333
    %11923 = vmatpush.bf16.msra.mxu0 %v8325
    %11924 = vmatpush.bf16.msra.mxu0 %v8317
    %11925 = vmatpush.bf16.msra.mxu0 %v8309
    %11926 = vmatpush.bf16.msra.mxu0 %v8301
    %11927 = vmatpush.bf16.msra.mxu0 %v8293
    %11928 = vmatpush.bf16.msra.mxu0 %v8285
    %11929 = vmatmul.bf16.gmra.mxu0 %v305
    %v11930 = vpop.f32.mrf.mxu0
    %v11931 = vadd.f32 %v11918, %v11930
    %v11932 = vpop.f32.mrf.mxu0
    %11933 = vdwg.mxu0
    %11934 = vmatpush.bf16.msra.mxu0 %v8405
    %11935 = vmatpush.bf16.msra.mxu0 %v8397
    %11936 = vmatpush.bf16.msra.mxu0 %v8389
    %11937 = vmatpush.bf16.msra.mxu0 %v8381
    %11938 = vmatpush.bf16.msra.mxu0 %v8373
    %11939 = vmatpush.bf16.msra.mxu0 %v8365
    %11940 = vmatpush.bf16.msra.mxu0 %v8357
    %11941 = vmatpush.bf16.msra.mxu0 %v8349
    %11942 = vmatmul.bf16.gmra.mxu0 %v306
    %v11943 = vpop.f32.mrf.mxu0
    %v11944 = vadd.f32 %v11931, %v11943
    %v11945 = vpop.f32.mrf.mxu0
    %11946 = vdwg.mxu0
    %11947 = vmatpush.bf16.msra.mxu0 %v8469
    %11948 = vmatpush.bf16.msra.mxu0 %v8461
    %11949 = vmatpush.bf16.msra.mxu0 %v8453
    %11950 = vmatpush.bf16.msra.mxu0 %v8445
    %11951 = vmatpush.bf16.msra.mxu0 %v8437
    %11952 = vmatpush.bf16.msra.mxu0 %v8429
    %11953 = vmatpush.bf16.msra.mxu0 %v8421
    %11954 = vmatpush.bf16.msra.mxu0 %v8413
    %11955 = vmatmul.bf16.gmra.mxu0 %v307
    %v11956 = vpop.f32.mrf.mxu0
    %v11957 = vadd.f32 %v11944, %v11956
    %v11958 = vpop.f32.mrf.mxu0
    %11959 = vdwg.mxu0
    %11960 = vmatpush.bf16.msra.mxu0 %v8533
    %11961 = vmatpush.bf16.msra.mxu0 %v8525
    %11962 = vmatpush.bf16.msra.mxu0 %v8517
    %11963 = vmatpush.bf16.msra.mxu0 %v8509
    %11964 = vmatpush.bf16.msra.mxu0 %v8501
    %11965 = vmatpush.bf16.msra.mxu0 %v8493
    %11966 = vmatpush.bf16.msra.mxu0 %v8485
    %11967 = vmatpush.bf16.msra.mxu0 %v8477
    %11968 = vmatmul.bf16.gmra.mxu0 %v308
    %v11969 = vpop.f32.mrf.mxu0
    %v11970 = vadd.f32 %v11957, %v11969
    %v11971 = vpop.f32.mrf.mxu0
    %11972 = vdwg.mxu0
    %11973 = vmatpush.bf16.msra.mxu0 %v8597
    %11974 = vmatpush.bf16.msra.mxu0 %v8589
    %11975 = vmatpush.bf16.msra.mxu0 %v8581
    %11976 = vmatpush.bf16.msra.mxu0 %v8573
    %11977 = vmatpush.bf16.msra.mxu0 %v8565
    %11978 = vmatpush.bf16.msra.mxu0 %v8557
    %11979 = vmatpush.bf16.msra.mxu0 %v8549
    %11980 = vmatpush.bf16.msra.mxu0 %v8541
    %11981 = vmatmul.bf16.gmra.mxu0 %v309
    %v11982 = vpop.f32.mrf.mxu0
    %v11983 = vadd.f32 %v11970, %v11982
    %v11984 = vpop.f32.mrf.mxu0
    %11985 = vdwg.mxu0
    %11986 = vmatpush.bf16.msra.mxu0 %v8661
    %11987 = vmatpush.bf16.msra.mxu0 %v8653
    %11988 = vmatpush.bf16.msra.mxu0 %v8645
    %11989 = vmatpush.bf16.msra.mxu0 %v8637
    %11990 = vmatpush.bf16.msra.mxu0 %v8629
    %11991 = vmatpush.bf16.msra.mxu0 %v8621
    %11992 = vmatpush.bf16.msra.mxu0 %v8613
    %11993 = vmatpush.bf16.msra.mxu0 %v8605
    %11994 = vmatmul.bf16.gmra.mxu0 %v310
    %v11995 = vpop.f32.mrf.mxu0
    %v11996 = vadd.f32 %v11983, %v11995
    %v11997 = vpop.f32.mrf.mxu0
    %11998 = vdwg.mxu0
    %11999 = vmatpush.bf16.msra.mxu0 %v8725
    %12000 = vmatpush.bf16.msra.mxu0 %v8717
    %12001 = vmatpush.bf16.msra.mxu0 %v8709
    %12002 = vmatpush.bf16.msra.mxu0 %v8701
    %12003 = vmatpush.bf16.msra.mxu0 %v8693
    %12004 = vmatpush.bf16.msra.mxu0 %v8685
    %12005 = vmatpush.bf16.msra.mxu0 %v8677
    %12006 = vmatpush.bf16.msra.mxu0 %v8669
    %12007 = vmatmul.bf16.gmra.mxu0 %v311
    %v12008 = vpop.f32.mrf.mxu0
    %v12009 = vadd.f32 %v11996, %v12008
    %v12010 = vpop.f32.mrf.mxu0
    %12011 = vdwg.mxu0
    %12012 = vmatpush.bf16.msra.mxu0 %v8789
    %12013 = vmatpush.bf16.msra.mxu0 %v8781
    %12014 = vmatpush.bf16.msra.mxu0 %v8773
    %12015 = vmatpush.bf16.msra.mxu0 %v8765
    %12016 = vmatpush.bf16.msra.mxu0 %v8757
    %12017 = vmatpush.bf16.msra.mxu0 %v8749
    %12018 = vmatpush.bf16.msra.mxu0 %v8741
    %12019 = vmatpush.bf16.msra.mxu0 %v8733
    %12020 = vmatmul.bf16.gmra.mxu0 %v312
    %v12021 = vpop.f32.mrf.mxu0
    %v12022 = vadd.f32 %v12009, %v12021
    %v12023 = vpop.f32.mrf.mxu0
    %12024 = vdwg.mxu0
    %12025 = vmatpush.bf16.msra.mxu0 %v8853
    %12026 = vmatpush.bf16.msra.mxu0 %v8845
    %12027 = vmatpush.bf16.msra.mxu0 %v8837
    %12028 = vmatpush.bf16.msra.mxu0 %v8829
    %12029 = vmatpush.bf16.msra.mxu0 %v8821
    %12030 = vmatpush.bf16.msra.mxu0 %v8813
    %12031 = vmatpush.bf16.msra.mxu0 %v8805
    %12032 = vmatpush.bf16.msra.mxu0 %v8797
    %12033 = vmatmul.bf16.gmra.mxu0 %v313
    %v12034 = vpop.f32.mrf.mxu0
    %v12035 = vadd.f32 %v12022, %v12034
    %v12036 = vpop.f32.mrf.mxu0
    %12037 = vdwg.mxu0
    %12038 = vmatpush.bf16.msra.mxu0 %v8917
    %12039 = vmatpush.bf16.msra.mxu0 %v8909
    %12040 = vmatpush.bf16.msra.mxu0 %v8901
    %12041 = vmatpush.bf16.msra.mxu0 %v8893
    %12042 = vmatpush.bf16.msra.mxu0 %v8885
    %12043 = vmatpush.bf16.msra.mxu0 %v8877
    %12044 = vmatpush.bf16.msra.mxu0 %v8869
    %12045 = vmatpush.bf16.msra.mxu0 %v8861
    %12046 = vmatmul.bf16.gmra.mxu0 %v314
    %v12047 = vpop.f32.mrf.mxu0
    %v12048 = vadd.f32 %v12035, %v12047
    %v12049 = vpop.f32.mrf.mxu0
    %12050 = vdwg.mxu0
    %12051 = vmatpush.bf16.msra.mxu0 %v8981
    %12052 = vmatpush.bf16.msra.mxu0 %v8973
    %12053 = vmatpush.bf16.msra.mxu0 %v8965
    %12054 = vmatpush.bf16.msra.mxu0 %v8957
    %12055 = vmatpush.bf16.msra.mxu0 %v8949
    %12056 = vmatpush.bf16.msra.mxu0 %v8941
    %12057 = vmatpush.bf16.msra.mxu0 %v8933
    %12058 = vmatpush.bf16.msra.mxu0 %v8925
    %12059 = vmatmul.bf16.gmra.mxu0 %v315
    %v12060 = vpop.f32.mrf.mxu0
    %v12061 = vadd.f32 %v12048, %v12060
    %v12062 = vpop.f32.mrf.mxu0
    %12063 = vdwg.mxu0
    %12064 = vmatpush.bf16.msra.mxu0 %v9045
    %12065 = vmatpush.bf16.msra.mxu0 %v9037
    %12066 = vmatpush.bf16.msra.mxu0 %v9029
    %12067 = vmatpush.bf16.msra.mxu0 %v9021
    %12068 = vmatpush.bf16.msra.mxu0 %v9013
    %12069 = vmatpush.bf16.msra.mxu0 %v9005
    %12070 = vmatpush.bf16.msra.mxu0 %v8997
    %12071 = vmatpush.bf16.msra.mxu0 %v8989
    %12072 = vmatmul.bf16.gmra.mxu0 %v316
    %v12073 = vpop.f32.mrf.mxu0
    %v12074 = vadd.f32 %v12061, %v12073
    %v12075 = vpop.f32.mrf.mxu0
    %12076 = vdwg.mxu0
    %12077 = vmatpush.bf16.msra.mxu0 %v9109
    %12078 = vmatpush.bf16.msra.mxu0 %v9101
    %12079 = vmatpush.bf16.msra.mxu0 %v9093
    %12080 = vmatpush.bf16.msra.mxu0 %v9085
    %12081 = vmatpush.bf16.msra.mxu0 %v9077
    %12082 = vmatpush.bf16.msra.mxu0 %v9069
    %12083 = vmatpush.bf16.msra.mxu0 %v9061
    %12084 = vmatpush.bf16.msra.mxu0 %v9053
    %12085 = vmatmul.bf16.gmra.mxu0 %v317
    %v12086 = vpop.f32.mrf.mxu0
    %v12087 = vadd.f32 %v12074, %v12086
    %v12088 = vpop.f32.mrf.mxu0
    %12089 = vdwg.mxu0
    %12090 = vmatpush.bf16.msra.mxu0 %v9173
    %12091 = vmatpush.bf16.msra.mxu0 %v9165
    %12092 = vmatpush.bf16.msra.mxu0 %v9157
    %12093 = vmatpush.bf16.msra.mxu0 %v9149
    %12094 = vmatpush.bf16.msra.mxu0 %v9141
    %12095 = vmatpush.bf16.msra.mxu0 %v9133
    %12096 = vmatpush.bf16.msra.mxu0 %v9125
    %12097 = vmatpush.bf16.msra.mxu0 %v9117
    %12098 = vmatmul.bf16.gmra.mxu0 %v318
    %v12099 = vpop.f32.mrf.mxu0
    %v12100 = vadd.f32 %v12087, %v12099
    %v12101 = vpop.f32.mrf.mxu0
    %12102 = vdwg.mxu0
    %12103 = vmatpush.bf16.msra.mxu0 %v9237
    %12104 = vmatpush.bf16.msra.mxu0 %v9229
    %12105 = vmatpush.bf16.msra.mxu0 %v9221
    %12106 = vmatpush.bf16.msra.mxu0 %v9213
    %12107 = vmatpush.bf16.msra.mxu0 %v9205
    %12108 = vmatpush.bf16.msra.mxu0 %v9197
    %12109 = vmatpush.bf16.msra.mxu0 %v9189
    %12110 = vmatpush.bf16.msra.mxu0 %v9181
    %12111 = vmatmul.bf16.gmra.mxu0 %v319
    %v12112 = vpop.f32.mrf.mxu0
    %v12113 = vadd.f32 %v12100, %v12112
    %v12114 = vpop.f32.mrf.mxu0
    %12115 = vdwg.mxu0
    %12116 = vmatpush.bf16.msra.mxu0 %v9301
    %12117 = vmatpush.bf16.msra.mxu0 %v9293
    %12118 = vmatpush.bf16.msra.mxu0 %v9285
    %12119 = vmatpush.bf16.msra.mxu0 %v9277
    %12120 = vmatpush.bf16.msra.mxu0 %v9269
    %12121 = vmatpush.bf16.msra.mxu0 %v9261
    %12122 = vmatpush.bf16.msra.mxu0 %v9253
    %12123 = vmatpush.bf16.msra.mxu0 %v9245
    %12124 = vmatmul.bf16.gmra.mxu0 %v320
    %v12125 = vpop.f32.mrf.mxu0
    %v12126 = vadd.f32 %v12113, %v12125
    %v12127 = vpop.f32.mrf.mxu0
    %12128 = vdwg.mxu0
    %12129 = vmatpush.bf16.msra.mxu0 %v9365
    %12130 = vmatpush.bf16.msra.mxu0 %v9357
    %12131 = vmatpush.bf16.msra.mxu0 %v9349
    %12132 = vmatpush.bf16.msra.mxu0 %v9341
    %12133 = vmatpush.bf16.msra.mxu0 %v9333
    %12134 = vmatpush.bf16.msra.mxu0 %v9325
    %12135 = vmatpush.bf16.msra.mxu0 %v9317
    %12136 = vmatpush.bf16.msra.mxu0 %v9309
    %12137 = vmatmul.bf16.gmra.mxu0 %v321
    %v12138 = vpop.f32.mrf.mxu0
    %v12139 = vadd.f32 %v12126, %v12138
    %v12140 = vpop.f32.mrf.mxu0
    %12141 = vdwg.mxu0
    %12142 = vmatpush.bf16.msra.mxu0 %v9429
    %12143 = vmatpush.bf16.msra.mxu0 %v9421
    %12144 = vmatpush.bf16.msra.mxu0 %v9413
    %12145 = vmatpush.bf16.msra.mxu0 %v9405
    %12146 = vmatpush.bf16.msra.mxu0 %v9397
    %12147 = vmatpush.bf16.msra.mxu0 %v9389
    %12148 = vmatpush.bf16.msra.mxu0 %v9381
    %12149 = vmatpush.bf16.msra.mxu0 %v9373
    %12150 = vmatmul.bf16.gmra.mxu0 %v322
    %v12151 = vpop.f32.mrf.mxu0
    %v12152 = vadd.f32 %v12139, %v12151
    %v12153 = vpop.f32.mrf.mxu0
    %12154 = vdwg.mxu0
    %12155 = vmatpush.bf16.msra.mxu0 %v9493
    %12156 = vmatpush.bf16.msra.mxu0 %v9485
    %12157 = vmatpush.bf16.msra.mxu0 %v9477
    %12158 = vmatpush.bf16.msra.mxu0 %v9469
    %12159 = vmatpush.bf16.msra.mxu0 %v9461
    %12160 = vmatpush.bf16.msra.mxu0 %v9453
    %12161 = vmatpush.bf16.msra.mxu0 %v9445
    %12162 = vmatpush.bf16.msra.mxu0 %v9437
    %12163 = vmatmul.bf16.gmra.mxu0 %v323
    %v12164 = vpop.f32.mrf.mxu0
    %v12165 = vadd.f32 %v12152, %v12164
    %v12166 = vpop.f32.mrf.mxu0
    %12167 = vdwg.mxu0
    %12168 = vmatpush.bf16.msra.mxu0 %v9557
    %12169 = vmatpush.bf16.msra.mxu0 %v9549
    %12170 = vmatpush.bf16.msra.mxu0 %v9541
    %12171 = vmatpush.bf16.msra.mxu0 %v9533
    %12172 = vmatpush.bf16.msra.mxu0 %v9525
    %12173 = vmatpush.bf16.msra.mxu0 %v9517
    %12174 = vmatpush.bf16.msra.mxu0 %v9509
    %12175 = vmatpush.bf16.msra.mxu0 %v9501
    %12176 = vmatmul.bf16.gmra.mxu0 %v324
    %v12177 = vpop.f32.mrf.mxu0
    %v12178 = vadd.f32 %v12165, %v12177
    %v12179 = vpop.f32.mrf.mxu0
    %12180 = vdwg.mxu0
    %12181 = vmatpush.bf16.msra.mxu0 %v9621
    %12182 = vmatpush.bf16.msra.mxu0 %v9613
    %12183 = vmatpush.bf16.msra.mxu0 %v9605
    %12184 = vmatpush.bf16.msra.mxu0 %v9597
    %12185 = vmatpush.bf16.msra.mxu0 %v9589
    %12186 = vmatpush.bf16.msra.mxu0 %v9581
    %12187 = vmatpush.bf16.msra.mxu0 %v9573
    %12188 = vmatpush.bf16.msra.mxu0 %v9565
    %12189 = vmatmul.bf16.gmra.mxu0 %v325
    %v12190 = vpop.f32.mrf.mxu0
    %v12191 = vadd.f32 %v12178, %v12190
    %v12192 = vpop.f32.mrf.mxu0
    %12193 = vdwg.mxu0
    %12194 = vmatpush.bf16.msra.mxu0 %v9685
    %12195 = vmatpush.bf16.msra.mxu0 %v9677
    %12196 = vmatpush.bf16.msra.mxu0 %v9669
    %12197 = vmatpush.bf16.msra.mxu0 %v9661
    %12198 = vmatpush.bf16.msra.mxu0 %v9653
    %12199 = vmatpush.bf16.msra.mxu0 %v9645
    %12200 = vmatpush.bf16.msra.mxu0 %v9637
    %12201 = vmatpush.bf16.msra.mxu0 %v9629
    %12202 = vmatmul.bf16.gmra.mxu0 %v326
    %v12203 = vpop.f32.mrf.mxu0
    %v12204 = vadd.f32 %v12191, %v12203
    %v12205 = vpop.f32.mrf.mxu0
    %12206 = vdwg.mxu0
    %12207 = vmatpush.bf16.msra.mxu0 %v9749
    %12208 = vmatpush.bf16.msra.mxu0 %v9741
    %12209 = vmatpush.bf16.msra.mxu0 %v9733
    %12210 = vmatpush.bf16.msra.mxu0 %v9725
    %12211 = vmatpush.bf16.msra.mxu0 %v9717
    %12212 = vmatpush.bf16.msra.mxu0 %v9709
    %12213 = vmatpush.bf16.msra.mxu0 %v9701
    %12214 = vmatpush.bf16.msra.mxu0 %v9693
    %12215 = vmatmul.bf16.gmra.mxu0 %v327
    %v12216 = vpop.f32.mrf.mxu0
    %v12217 = vadd.f32 %v12204, %v12216
    %v12218 = vpop.f32.mrf.mxu0
    %12219 = vdwg.mxu0
    %12220 = vmatpush.bf16.msra.mxu0 %v9813
    %12221 = vmatpush.bf16.msra.mxu0 %v9805
    %12222 = vmatpush.bf16.msra.mxu0 %v9797
    %12223 = vmatpush.bf16.msra.mxu0 %v9789
    %12224 = vmatpush.bf16.msra.mxu0 %v9781
    %12225 = vmatpush.bf16.msra.mxu0 %v9773
    %12226 = vmatpush.bf16.msra.mxu0 %v9765
    %12227 = vmatpush.bf16.msra.mxu0 %v9757
    %12228 = vmatmul.bf16.gmra.mxu0 %v328
    %v12229 = vpop.f32.mrf.mxu0
    %v12230 = vadd.f32 %v12217, %v12229
    %v12231 = vpop.f32.mrf.mxu0
    %12232 = vdwg.mxu0
    %12233 = vmatpush.bf16.msra.mxu0 %v9877
    %12234 = vmatpush.bf16.msra.mxu0 %v9869
    %12235 = vmatpush.bf16.msra.mxu0 %v9861
    %12236 = vmatpush.bf16.msra.mxu0 %v9853
    %12237 = vmatpush.bf16.msra.mxu0 %v9845
    %12238 = vmatpush.bf16.msra.mxu0 %v9837
    %12239 = vmatpush.bf16.msra.mxu0 %v9829
    %12240 = vmatpush.bf16.msra.mxu0 %v9821
    %12241 = vmatmul.bf16.gmra.mxu0 %v329
    %v12242 = vpop.f32.mrf.mxu0
    %v12243 = vadd.f32 %v12230, %v12242
    %v12244 = vpop.f32.mrf.mxu0
    %12245 = vdwg.mxu0
    %12246 = vmatpush.bf16.msra.mxu0 %v9941
    %12247 = vmatpush.bf16.msra.mxu0 %v9933
    %12248 = vmatpush.bf16.msra.mxu0 %v9925
    %12249 = vmatpush.bf16.msra.mxu0 %v9917
    %12250 = vmatpush.bf16.msra.mxu0 %v9909
    %12251 = vmatpush.bf16.msra.mxu0 %v9901
    %12252 = vmatpush.bf16.msra.mxu0 %v9893
    %12253 = vmatpush.bf16.msra.mxu0 %v9885
    %12254 = vmatmul.bf16.gmra.mxu0 %v330
    %v12255 = vpop.f32.mrf.mxu0
    %v12256 = vadd.f32 %v12243, %v12255
    %v12257 = vpop.f32.mrf.mxu0
    %12258 = vdwg.mxu0
    %12259 = vmatpush.bf16.msra.mxu0 %v8086
    %12260 = vmatpush.bf16.msra.mxu0 %v8078
    %12261 = vmatpush.bf16.msra.mxu0 %v8070
    %12262 = vmatpush.bf16.msra.mxu0 %v8062
    %12263 = vmatpush.bf16.msra.mxu0 %v8054
    %12264 = vmatpush.bf16.msra.mxu0 %v8046
    %12265 = vmatpush.bf16.msra.mxu0 %v8038
    %12266 = vmatpush.bf16.msra.mxu0 %v8030
    %12267 = vmatmul.bf16.gmra.mxu0 %v301
    %v12268 = vpop.f32.mrf.mxu0
    %v12269 = vadd.f32 %v2254, %v12268
    %v12270 = vpop.f32.mrf.mxu0
    %12271 = vdwg.mxu0
    %12272 = vmatpush.bf16.msra.mxu0 %v8150
    %12273 = vmatpush.bf16.msra.mxu0 %v8142
    %12274 = vmatpush.bf16.msra.mxu0 %v8134
    %12275 = vmatpush.bf16.msra.mxu0 %v8126
    %12276 = vmatpush.bf16.msra.mxu0 %v8118
    %12277 = vmatpush.bf16.msra.mxu0 %v8110
    %12278 = vmatpush.bf16.msra.mxu0 %v8102
    %12279 = vmatpush.bf16.msra.mxu0 %v8094
    %12280 = vmatmul.bf16.gmra.mxu0 %v302
    %v12281 = vpop.f32.mrf.mxu0
    %v12282 = vadd.f32 %v12269, %v12281
    %v12283 = vpop.f32.mrf.mxu0
    %12284 = vdwg.mxu0
    %12285 = vmatpush.bf16.msra.mxu0 %v8214
    %12286 = vmatpush.bf16.msra.mxu0 %v8206
    %12287 = vmatpush.bf16.msra.mxu0 %v8198
    %12288 = vmatpush.bf16.msra.mxu0 %v8190
    %12289 = vmatpush.bf16.msra.mxu0 %v8182
    %12290 = vmatpush.bf16.msra.mxu0 %v8174
    %12291 = vmatpush.bf16.msra.mxu0 %v8166
    %12292 = vmatpush.bf16.msra.mxu0 %v8158
    %12293 = vmatmul.bf16.gmra.mxu0 %v303
    %v12294 = vpop.f32.mrf.mxu0
    %v12295 = vadd.f32 %v12282, %v12294
    %v12296 = vpop.f32.mrf.mxu0
    %12297 = vdwg.mxu0
    %12298 = vmatpush.bf16.msra.mxu0 %v8278
    %12299 = vmatpush.bf16.msra.mxu0 %v8270
    %12300 = vmatpush.bf16.msra.mxu0 %v8262
    %12301 = vmatpush.bf16.msra.mxu0 %v8254
    %12302 = vmatpush.bf16.msra.mxu0 %v8246
    %12303 = vmatpush.bf16.msra.mxu0 %v8238
    %12304 = vmatpush.bf16.msra.mxu0 %v8230
    %12305 = vmatpush.bf16.msra.mxu0 %v8222
    %12306 = vmatmul.bf16.gmra.mxu0 %v304
    %v12307 = vpop.f32.mrf.mxu0
    %v12308 = vadd.f32 %v12295, %v12307
    %v12309 = vpop.f32.mrf.mxu0
    %12310 = vdwg.mxu0
    %12311 = vmatpush.bf16.msra.mxu0 %v8342
    %12312 = vmatpush.bf16.msra.mxu0 %v8334
    %12313 = vmatpush.bf16.msra.mxu0 %v8326
    %12314 = vmatpush.bf16.msra.mxu0 %v8318
    %12315 = vmatpush.bf16.msra.mxu0 %v8310
    %12316 = vmatpush.bf16.msra.mxu0 %v8302
    %12317 = vmatpush.bf16.msra.mxu0 %v8294
    %12318 = vmatpush.bf16.msra.mxu0 %v8286
    %12319 = vmatmul.bf16.gmra.mxu0 %v305
    %v12320 = vpop.f32.mrf.mxu0
    %v12321 = vadd.f32 %v12308, %v12320
    %v12322 = vpop.f32.mrf.mxu0
    %12323 = vdwg.mxu0
    %12324 = vmatpush.bf16.msra.mxu0 %v8406
    %12325 = vmatpush.bf16.msra.mxu0 %v8398
    %12326 = vmatpush.bf16.msra.mxu0 %v8390
    %12327 = vmatpush.bf16.msra.mxu0 %v8382
    %12328 = vmatpush.bf16.msra.mxu0 %v8374
    %12329 = vmatpush.bf16.msra.mxu0 %v8366
    %12330 = vmatpush.bf16.msra.mxu0 %v8358
    %12331 = vmatpush.bf16.msra.mxu0 %v8350
    %12332 = vmatmul.bf16.gmra.mxu0 %v306
    %v12333 = vpop.f32.mrf.mxu0
    %v12334 = vadd.f32 %v12321, %v12333
    %v12335 = vpop.f32.mrf.mxu0
    %12336 = vdwg.mxu0
    %12337 = vmatpush.bf16.msra.mxu0 %v8470
    %12338 = vmatpush.bf16.msra.mxu0 %v8462
    %12339 = vmatpush.bf16.msra.mxu0 %v8454
    %12340 = vmatpush.bf16.msra.mxu0 %v8446
    %12341 = vmatpush.bf16.msra.mxu0 %v8438
    %12342 = vmatpush.bf16.msra.mxu0 %v8430
    %12343 = vmatpush.bf16.msra.mxu0 %v8422
    %12344 = vmatpush.bf16.msra.mxu0 %v8414
    %12345 = vmatmul.bf16.gmra.mxu0 %v307
    %v12346 = vpop.f32.mrf.mxu0
    %v12347 = vadd.f32 %v12334, %v12346
    %v12348 = vpop.f32.mrf.mxu0
    %12349 = vdwg.mxu0
    %12350 = vmatpush.bf16.msra.mxu0 %v8534
    %12351 = vmatpush.bf16.msra.mxu0 %v8526
    %12352 = vmatpush.bf16.msra.mxu0 %v8518
    %12353 = vmatpush.bf16.msra.mxu0 %v8510
    %12354 = vmatpush.bf16.msra.mxu0 %v8502
    %12355 = vmatpush.bf16.msra.mxu0 %v8494
    %12356 = vmatpush.bf16.msra.mxu0 %v8486
    %12357 = vmatpush.bf16.msra.mxu0 %v8478
    %12358 = vmatmul.bf16.gmra.mxu0 %v308
    %v12359 = vpop.f32.mrf.mxu0
    %v12360 = vadd.f32 %v12347, %v12359
    %v12361 = vpop.f32.mrf.mxu0
    %12362 = vdwg.mxu0
    %12363 = vmatpush.bf16.msra.mxu0 %v8598
    %12364 = vmatpush.bf16.msra.mxu0 %v8590
    %12365 = vmatpush.bf16.msra.mxu0 %v8582
    %12366 = vmatpush.bf16.msra.mxu0 %v8574
    %12367 = vmatpush.bf16.msra.mxu0 %v8566
    %12368 = vmatpush.bf16.msra.mxu0 %v8558
    %12369 = vmatpush.bf16.msra.mxu0 %v8550
    %12370 = vmatpush.bf16.msra.mxu0 %v8542
    %12371 = vmatmul.bf16.gmra.mxu0 %v309
    %v12372 = vpop.f32.mrf.mxu0
    %v12373 = vadd.f32 %v12360, %v12372
    %v12374 = vpop.f32.mrf.mxu0
    %12375 = vdwg.mxu0
    %12376 = vmatpush.bf16.msra.mxu0 %v8662
    %12377 = vmatpush.bf16.msra.mxu0 %v8654
    %12378 = vmatpush.bf16.msra.mxu0 %v8646
    %12379 = vmatpush.bf16.msra.mxu0 %v8638
    %12380 = vmatpush.bf16.msra.mxu0 %v8630
    %12381 = vmatpush.bf16.msra.mxu0 %v8622
    %12382 = vmatpush.bf16.msra.mxu0 %v8614
    %12383 = vmatpush.bf16.msra.mxu0 %v8606
    %12384 = vmatmul.bf16.gmra.mxu0 %v310
    %v12385 = vpop.f32.mrf.mxu0
    %v12386 = vadd.f32 %v12373, %v12385
    %v12387 = vpop.f32.mrf.mxu0
    %12388 = vdwg.mxu0
    %12389 = vmatpush.bf16.msra.mxu0 %v8726
    %12390 = vmatpush.bf16.msra.mxu0 %v8718
    %12391 = vmatpush.bf16.msra.mxu0 %v8710
    %12392 = vmatpush.bf16.msra.mxu0 %v8702
    %12393 = vmatpush.bf16.msra.mxu0 %v8694
    %12394 = vmatpush.bf16.msra.mxu0 %v8686
    %12395 = vmatpush.bf16.msra.mxu0 %v8678
    %12396 = vmatpush.bf16.msra.mxu0 %v8670
    %12397 = vmatmul.bf16.gmra.mxu0 %v311
    %v12398 = vpop.f32.mrf.mxu0
    %v12399 = vadd.f32 %v12386, %v12398
    %v12400 = vpop.f32.mrf.mxu0
    %12401 = vdwg.mxu0
    %12402 = vmatpush.bf16.msra.mxu0 %v8790
    %12403 = vmatpush.bf16.msra.mxu0 %v8782
    %12404 = vmatpush.bf16.msra.mxu0 %v8774
    %12405 = vmatpush.bf16.msra.mxu0 %v8766
    %12406 = vmatpush.bf16.msra.mxu0 %v8758
    %12407 = vmatpush.bf16.msra.mxu0 %v8750
    %12408 = vmatpush.bf16.msra.mxu0 %v8742
    %12409 = vmatpush.bf16.msra.mxu0 %v8734
    %12410 = vmatmul.bf16.gmra.mxu0 %v312
    %v12411 = vpop.f32.mrf.mxu0
    %v12412 = vadd.f32 %v12399, %v12411
    %v12413 = vpop.f32.mrf.mxu0
    %12414 = vdwg.mxu0
    %12415 = vmatpush.bf16.msra.mxu0 %v8854
    %12416 = vmatpush.bf16.msra.mxu0 %v8846
    %12417 = vmatpush.bf16.msra.mxu0 %v8838
    %12418 = vmatpush.bf16.msra.mxu0 %v8830
    %12419 = vmatpush.bf16.msra.mxu0 %v8822
    %12420 = vmatpush.bf16.msra.mxu0 %v8814
    %12421 = vmatpush.bf16.msra.mxu0 %v8806
    %12422 = vmatpush.bf16.msra.mxu0 %v8798
    %12423 = vmatmul.bf16.gmra.mxu0 %v313
    %v12424 = vpop.f32.mrf.mxu0
    %v12425 = vadd.f32 %v12412, %v12424
    %v12426 = vpop.f32.mrf.mxu0
    %12427 = vdwg.mxu0
    %12428 = vmatpush.bf16.msra.mxu0 %v8918
    %12429 = vmatpush.bf16.msra.mxu0 %v8910
    %12430 = vmatpush.bf16.msra.mxu0 %v8902
    %12431 = vmatpush.bf16.msra.mxu0 %v8894
    %12432 = vmatpush.bf16.msra.mxu0 %v8886
    %12433 = vmatpush.bf16.msra.mxu0 %v8878
    %12434 = vmatpush.bf16.msra.mxu0 %v8870
    %12435 = vmatpush.bf16.msra.mxu0 %v8862
    %12436 = vmatmul.bf16.gmra.mxu0 %v314
    %v12437 = vpop.f32.mrf.mxu0
    %v12438 = vadd.f32 %v12425, %v12437
    %v12439 = vpop.f32.mrf.mxu0
    %12440 = vdwg.mxu0
    %12441 = vmatpush.bf16.msra.mxu0 %v8982
    %12442 = vmatpush.bf16.msra.mxu0 %v8974
    %12443 = vmatpush.bf16.msra.mxu0 %v8966
    %12444 = vmatpush.bf16.msra.mxu0 %v8958
    %12445 = vmatpush.bf16.msra.mxu0 %v8950
    %12446 = vmatpush.bf16.msra.mxu0 %v8942
    %12447 = vmatpush.bf16.msra.mxu0 %v8934
    %12448 = vmatpush.bf16.msra.mxu0 %v8926
    %12449 = vmatmul.bf16.gmra.mxu0 %v315
    %v12450 = vpop.f32.mrf.mxu0
    %v12451 = vadd.f32 %v12438, %v12450
    %v12452 = vpop.f32.mrf.mxu0
    %12453 = vdwg.mxu0
    %12454 = vmatpush.bf16.msra.mxu0 %v9046
    %12455 = vmatpush.bf16.msra.mxu0 %v9038
    %12456 = vmatpush.bf16.msra.mxu0 %v9030
    %12457 = vmatpush.bf16.msra.mxu0 %v9022
    %12458 = vmatpush.bf16.msra.mxu0 %v9014
    %12459 = vmatpush.bf16.msra.mxu0 %v9006
    %12460 = vmatpush.bf16.msra.mxu0 %v8998
    %12461 = vmatpush.bf16.msra.mxu0 %v8990
    %12462 = vmatmul.bf16.gmra.mxu0 %v316
    %v12463 = vpop.f32.mrf.mxu0
    %v12464 = vadd.f32 %v12451, %v12463
    %v12465 = vpop.f32.mrf.mxu0
    %12466 = vdwg.mxu0
    %12467 = vmatpush.bf16.msra.mxu0 %v9110
    %12468 = vmatpush.bf16.msra.mxu0 %v9102
    %12469 = vmatpush.bf16.msra.mxu0 %v9094
    %12470 = vmatpush.bf16.msra.mxu0 %v9086
    %12471 = vmatpush.bf16.msra.mxu0 %v9078
    %12472 = vmatpush.bf16.msra.mxu0 %v9070
    %12473 = vmatpush.bf16.msra.mxu0 %v9062
    %12474 = vmatpush.bf16.msra.mxu0 %v9054
    %12475 = vmatmul.bf16.gmra.mxu0 %v317
    %v12476 = vpop.f32.mrf.mxu0
    %v12477 = vadd.f32 %v12464, %v12476
    %v12478 = vpop.f32.mrf.mxu0
    %12479 = vdwg.mxu0
    %12480 = vmatpush.bf16.msra.mxu0 %v9174
    %12481 = vmatpush.bf16.msra.mxu0 %v9166
    %12482 = vmatpush.bf16.msra.mxu0 %v9158
    %12483 = vmatpush.bf16.msra.mxu0 %v9150
    %12484 = vmatpush.bf16.msra.mxu0 %v9142
    %12485 = vmatpush.bf16.msra.mxu0 %v9134
    %12486 = vmatpush.bf16.msra.mxu0 %v9126
    %12487 = vmatpush.bf16.msra.mxu0 %v9118
    %12488 = vmatmul.bf16.gmra.mxu0 %v318
    %v12489 = vpop.f32.mrf.mxu0
    %v12490 = vadd.f32 %v12477, %v12489
    %v12491 = vpop.f32.mrf.mxu0
    %12492 = vdwg.mxu0
    %12493 = vmatpush.bf16.msra.mxu0 %v9238
    %12494 = vmatpush.bf16.msra.mxu0 %v9230
    %12495 = vmatpush.bf16.msra.mxu0 %v9222
    %12496 = vmatpush.bf16.msra.mxu0 %v9214
    %12497 = vmatpush.bf16.msra.mxu0 %v9206
    %12498 = vmatpush.bf16.msra.mxu0 %v9198
    %12499 = vmatpush.bf16.msra.mxu0 %v9190
    %12500 = vmatpush.bf16.msra.mxu0 %v9182
    %12501 = vmatmul.bf16.gmra.mxu0 %v319
    %v12502 = vpop.f32.mrf.mxu0
    %v12503 = vadd.f32 %v12490, %v12502
    %v12504 = vpop.f32.mrf.mxu0
    %12505 = vdwg.mxu0
    %12506 = vmatpush.bf16.msra.mxu0 %v9302
    %12507 = vmatpush.bf16.msra.mxu0 %v9294
    %12508 = vmatpush.bf16.msra.mxu0 %v9286
    %12509 = vmatpush.bf16.msra.mxu0 %v9278
    %12510 = vmatpush.bf16.msra.mxu0 %v9270
    %12511 = vmatpush.bf16.msra.mxu0 %v9262
    %12512 = vmatpush.bf16.msra.mxu0 %v9254
    %12513 = vmatpush.bf16.msra.mxu0 %v9246
    %12514 = vmatmul.bf16.gmra.mxu0 %v320
    %v12515 = vpop.f32.mrf.mxu0
    %v12516 = vadd.f32 %v12503, %v12515
    %v12517 = vpop.f32.mrf.mxu0
    %12518 = vdwg.mxu0
    %12519 = vmatpush.bf16.msra.mxu0 %v9366
    %12520 = vmatpush.bf16.msra.mxu0 %v9358
    %12521 = vmatpush.bf16.msra.mxu0 %v9350
    %12522 = vmatpush.bf16.msra.mxu0 %v9342
    %12523 = vmatpush.bf16.msra.mxu0 %v9334
    %12524 = vmatpush.bf16.msra.mxu0 %v9326
    %12525 = vmatpush.bf16.msra.mxu0 %v9318
    %12526 = vmatpush.bf16.msra.mxu0 %v9310
    %12527 = vmatmul.bf16.gmra.mxu0 %v321
    %v12528 = vpop.f32.mrf.mxu0
    %v12529 = vadd.f32 %v12516, %v12528
    %v12530 = vpop.f32.mrf.mxu0
    %12531 = vdwg.mxu0
    %12532 = vmatpush.bf16.msra.mxu0 %v9430
    %12533 = vmatpush.bf16.msra.mxu0 %v9422
    %12534 = vmatpush.bf16.msra.mxu0 %v9414
    %12535 = vmatpush.bf16.msra.mxu0 %v9406
    %12536 = vmatpush.bf16.msra.mxu0 %v9398
    %12537 = vmatpush.bf16.msra.mxu0 %v9390
    %12538 = vmatpush.bf16.msra.mxu0 %v9382
    %12539 = vmatpush.bf16.msra.mxu0 %v9374
    %12540 = vmatmul.bf16.gmra.mxu0 %v322
    %v12541 = vpop.f32.mrf.mxu0
    %v12542 = vadd.f32 %v12529, %v12541
    %v12543 = vpop.f32.mrf.mxu0
    %12544 = vdwg.mxu0
    %12545 = vmatpush.bf16.msra.mxu0 %v9494
    %12546 = vmatpush.bf16.msra.mxu0 %v9486
    %12547 = vmatpush.bf16.msra.mxu0 %v9478
    %12548 = vmatpush.bf16.msra.mxu0 %v9470
    %12549 = vmatpush.bf16.msra.mxu0 %v9462
    %12550 = vmatpush.bf16.msra.mxu0 %v9454
    %12551 = vmatpush.bf16.msra.mxu0 %v9446
    %12552 = vmatpush.bf16.msra.mxu0 %v9438
    %12553 = vmatmul.bf16.gmra.mxu0 %v323
    %v12554 = vpop.f32.mrf.mxu0
    %v12555 = vadd.f32 %v12542, %v12554
    %v12556 = vpop.f32.mrf.mxu0
    %12557 = vdwg.mxu0
    %12558 = vmatpush.bf16.msra.mxu0 %v9558
    %12559 = vmatpush.bf16.msra.mxu0 %v9550
    %12560 = vmatpush.bf16.msra.mxu0 %v9542
    %12561 = vmatpush.bf16.msra.mxu0 %v9534
    %12562 = vmatpush.bf16.msra.mxu0 %v9526
    %12563 = vmatpush.bf16.msra.mxu0 %v9518
    %12564 = vmatpush.bf16.msra.mxu0 %v9510
    %12565 = vmatpush.bf16.msra.mxu0 %v9502
    %12566 = vmatmul.bf16.gmra.mxu0 %v324
    %v12567 = vpop.f32.mrf.mxu0
    %v12568 = vadd.f32 %v12555, %v12567
    %v12569 = vpop.f32.mrf.mxu0
    %12570 = vdwg.mxu0
    %12571 = vmatpush.bf16.msra.mxu0 %v9622
    %12572 = vmatpush.bf16.msra.mxu0 %v9614
    %12573 = vmatpush.bf16.msra.mxu0 %v9606
    %12574 = vmatpush.bf16.msra.mxu0 %v9598
    %12575 = vmatpush.bf16.msra.mxu0 %v9590
    %12576 = vmatpush.bf16.msra.mxu0 %v9582
    %12577 = vmatpush.bf16.msra.mxu0 %v9574
    %12578 = vmatpush.bf16.msra.mxu0 %v9566
    %12579 = vmatmul.bf16.gmra.mxu0 %v325
    %v12580 = vpop.f32.mrf.mxu0
    %v12581 = vadd.f32 %v12568, %v12580
    %v12582 = vpop.f32.mrf.mxu0
    %12583 = vdwg.mxu0
    %12584 = vmatpush.bf16.msra.mxu0 %v9686
    %12585 = vmatpush.bf16.msra.mxu0 %v9678
    %12586 = vmatpush.bf16.msra.mxu0 %v9670
    %12587 = vmatpush.bf16.msra.mxu0 %v9662
    %12588 = vmatpush.bf16.msra.mxu0 %v9654
    %12589 = vmatpush.bf16.msra.mxu0 %v9646
    %12590 = vmatpush.bf16.msra.mxu0 %v9638
    %12591 = vmatpush.bf16.msra.mxu0 %v9630
    %12592 = vmatmul.bf16.gmra.mxu0 %v326
    %v12593 = vpop.f32.mrf.mxu0
    %v12594 = vadd.f32 %v12581, %v12593
    %v12595 = vpop.f32.mrf.mxu0
    %12596 = vdwg.mxu0
    %12597 = vmatpush.bf16.msra.mxu0 %v9750
    %12598 = vmatpush.bf16.msra.mxu0 %v9742
    %12599 = vmatpush.bf16.msra.mxu0 %v9734
    %12600 = vmatpush.bf16.msra.mxu0 %v9726
    %12601 = vmatpush.bf16.msra.mxu0 %v9718
    %12602 = vmatpush.bf16.msra.mxu0 %v9710
    %12603 = vmatpush.bf16.msra.mxu0 %v9702
    %12604 = vmatpush.bf16.msra.mxu0 %v9694
    %12605 = vmatmul.bf16.gmra.mxu0 %v327
    %v12606 = vpop.f32.mrf.mxu0
    %v12607 = vadd.f32 %v12594, %v12606
    %v12608 = vpop.f32.mrf.mxu0
    %12609 = vdwg.mxu0
    %12610 = vmatpush.bf16.msra.mxu0 %v9814
    %12611 = vmatpush.bf16.msra.mxu0 %v9806
    %12612 = vmatpush.bf16.msra.mxu0 %v9798
    %12613 = vmatpush.bf16.msra.mxu0 %v9790
    %12614 = vmatpush.bf16.msra.mxu0 %v9782
    %12615 = vmatpush.bf16.msra.mxu0 %v9774
    %12616 = vmatpush.bf16.msra.mxu0 %v9766
    %12617 = vmatpush.bf16.msra.mxu0 %v9758
    %12618 = vmatmul.bf16.gmra.mxu0 %v328
    %v12619 = vpop.f32.mrf.mxu0
    %v12620 = vadd.f32 %v12607, %v12619
    %v12621 = vpop.f32.mrf.mxu0
    %12622 = vdwg.mxu0
    %12623 = vmatpush.bf16.msra.mxu0 %v9878
    %12624 = vmatpush.bf16.msra.mxu0 %v9870
    %12625 = vmatpush.bf16.msra.mxu0 %v9862
    %12626 = vmatpush.bf16.msra.mxu0 %v9854
    %12627 = vmatpush.bf16.msra.mxu0 %v9846
    %12628 = vmatpush.bf16.msra.mxu0 %v9838
    %12629 = vmatpush.bf16.msra.mxu0 %v9830
    %12630 = vmatpush.bf16.msra.mxu0 %v9822
    %12631 = vmatmul.bf16.gmra.mxu0 %v329
    %v12632 = vpop.f32.mrf.mxu0
    %v12633 = vadd.f32 %v12620, %v12632
    %v12634 = vpop.f32.mrf.mxu0
    %12635 = vdwg.mxu0
    %12636 = vmatpush.bf16.msra.mxu0 %v9942
    %12637 = vmatpush.bf16.msra.mxu0 %v9934
    %12638 = vmatpush.bf16.msra.mxu0 %v9926
    %12639 = vmatpush.bf16.msra.mxu0 %v9918
    %12640 = vmatpush.bf16.msra.mxu0 %v9910
    %12641 = vmatpush.bf16.msra.mxu0 %v9902
    %12642 = vmatpush.bf16.msra.mxu0 %v9894
    %12643 = vmatpush.bf16.msra.mxu0 %v9886
    %12644 = vmatmul.bf16.gmra.mxu0 %v330
    %v12645 = vpop.f32.mrf.mxu0
    %v12646 = vadd.f32 %v12633, %v12645
    %v12647 = vpop.f32.mrf.mxu0
    %12648 = vdwg.mxu0
    %12649 = vmatpush.bf16.msra.mxu0 %v8087
    %12650 = vmatpush.bf16.msra.mxu0 %v8079
    %12651 = vmatpush.bf16.msra.mxu0 %v8071
    %12652 = vmatpush.bf16.msra.mxu0 %v8063
    %12653 = vmatpush.bf16.msra.mxu0 %v8055
    %12654 = vmatpush.bf16.msra.mxu0 %v8047
    %12655 = vmatpush.bf16.msra.mxu0 %v8039
    %12656 = vmatpush.bf16.msra.mxu0 %v8031
    %12657 = vmatmul.bf16.gmra.mxu0 %v301
    %v12658 = vpop.f32.mrf.mxu0
    %v12659 = vadd.f32 %v2255, %v12658
    %v12660 = vpop.f32.mrf.mxu0
    %12661 = vdwg.mxu0
    %12662 = vmatpush.bf16.msra.mxu0 %v8151
    %12663 = vmatpush.bf16.msra.mxu0 %v8143
    %12664 = vmatpush.bf16.msra.mxu0 %v8135
    %12665 = vmatpush.bf16.msra.mxu0 %v8127
    %12666 = vmatpush.bf16.msra.mxu0 %v8119
    %12667 = vmatpush.bf16.msra.mxu0 %v8111
    %12668 = vmatpush.bf16.msra.mxu0 %v8103
    %12669 = vmatpush.bf16.msra.mxu0 %v8095
    %12670 = vmatmul.bf16.gmra.mxu0 %v302
    %v12671 = vpop.f32.mrf.mxu0
    %v12672 = vadd.f32 %v12659, %v12671
    %v12673 = vpop.f32.mrf.mxu0
    %12674 = vdwg.mxu0
    %12675 = vmatpush.bf16.msra.mxu0 %v8215
    %12676 = vmatpush.bf16.msra.mxu0 %v8207
    %12677 = vmatpush.bf16.msra.mxu0 %v8199
    %12678 = vmatpush.bf16.msra.mxu0 %v8191
    %12679 = vmatpush.bf16.msra.mxu0 %v8183
    %12680 = vmatpush.bf16.msra.mxu0 %v8175
    %12681 = vmatpush.bf16.msra.mxu0 %v8167
    %12682 = vmatpush.bf16.msra.mxu0 %v8159
    %12683 = vmatmul.bf16.gmra.mxu0 %v303
    %v12684 = vpop.f32.mrf.mxu0
    %v12685 = vadd.f32 %v12672, %v12684
    %v12686 = vpop.f32.mrf.mxu0
    %12687 = vdwg.mxu0
    %12688 = vmatpush.bf16.msra.mxu0 %v8279
    %12689 = vmatpush.bf16.msra.mxu0 %v8271
    %12690 = vmatpush.bf16.msra.mxu0 %v8263
    %12691 = vmatpush.bf16.msra.mxu0 %v8255
    %12692 = vmatpush.bf16.msra.mxu0 %v8247
    %12693 = vmatpush.bf16.msra.mxu0 %v8239
    %12694 = vmatpush.bf16.msra.mxu0 %v8231
    %12695 = vmatpush.bf16.msra.mxu0 %v8223
    %12696 = vmatmul.bf16.gmra.mxu0 %v304
    %v12697 = vpop.f32.mrf.mxu0
    %v12698 = vadd.f32 %v12685, %v12697
    %v12699 = vpop.f32.mrf.mxu0
    %12700 = vdwg.mxu0
    %12701 = vmatpush.bf16.msra.mxu0 %v8343
    %12702 = vmatpush.bf16.msra.mxu0 %v8335
    %12703 = vmatpush.bf16.msra.mxu0 %v8327
    %12704 = vmatpush.bf16.msra.mxu0 %v8319
    %12705 = vmatpush.bf16.msra.mxu0 %v8311
    %12706 = vmatpush.bf16.msra.mxu0 %v8303
    %12707 = vmatpush.bf16.msra.mxu0 %v8295
    %12708 = vmatpush.bf16.msra.mxu0 %v8287
    %12709 = vmatmul.bf16.gmra.mxu0 %v305
    %v12710 = vpop.f32.mrf.mxu0
    %v12711 = vadd.f32 %v12698, %v12710
    %v12712 = vpop.f32.mrf.mxu0
    %12713 = vdwg.mxu0
    %12714 = vmatpush.bf16.msra.mxu0 %v8407
    %12715 = vmatpush.bf16.msra.mxu0 %v8399
    %12716 = vmatpush.bf16.msra.mxu0 %v8391
    %12717 = vmatpush.bf16.msra.mxu0 %v8383
    %12718 = vmatpush.bf16.msra.mxu0 %v8375
    %12719 = vmatpush.bf16.msra.mxu0 %v8367
    %12720 = vmatpush.bf16.msra.mxu0 %v8359
    %12721 = vmatpush.bf16.msra.mxu0 %v8351
    %12722 = vmatmul.bf16.gmra.mxu0 %v306
    %v12723 = vpop.f32.mrf.mxu0
    %v12724 = vadd.f32 %v12711, %v12723
    %v12725 = vpop.f32.mrf.mxu0
    %12726 = vdwg.mxu0
    %12727 = vmatpush.bf16.msra.mxu0 %v8471
    %12728 = vmatpush.bf16.msra.mxu0 %v8463
    %12729 = vmatpush.bf16.msra.mxu0 %v8455
    %12730 = vmatpush.bf16.msra.mxu0 %v8447
    %12731 = vmatpush.bf16.msra.mxu0 %v8439
    %12732 = vmatpush.bf16.msra.mxu0 %v8431
    %12733 = vmatpush.bf16.msra.mxu0 %v8423
    %12734 = vmatpush.bf16.msra.mxu0 %v8415
    %12735 = vmatmul.bf16.gmra.mxu0 %v307
    %v12736 = vpop.f32.mrf.mxu0
    %v12737 = vadd.f32 %v12724, %v12736
    %v12738 = vpop.f32.mrf.mxu0
    %12739 = vdwg.mxu0
    %12740 = vmatpush.bf16.msra.mxu0 %v8535
    %12741 = vmatpush.bf16.msra.mxu0 %v8527
    %12742 = vmatpush.bf16.msra.mxu0 %v8519
    %12743 = vmatpush.bf16.msra.mxu0 %v8511
    %12744 = vmatpush.bf16.msra.mxu0 %v8503
    %12745 = vmatpush.bf16.msra.mxu0 %v8495
    %12746 = vmatpush.bf16.msra.mxu0 %v8487
    %12747 = vmatpush.bf16.msra.mxu0 %v8479
    %12748 = vmatmul.bf16.gmra.mxu0 %v308
    %v12749 = vpop.f32.mrf.mxu0
    %v12750 = vadd.f32 %v12737, %v12749
    %v12751 = vpop.f32.mrf.mxu0
    %12752 = vdwg.mxu0
    %12753 = vmatpush.bf16.msra.mxu0 %v8599
    %12754 = vmatpush.bf16.msra.mxu0 %v8591
    %12755 = vmatpush.bf16.msra.mxu0 %v8583
    %12756 = vmatpush.bf16.msra.mxu0 %v8575
    %12757 = vmatpush.bf16.msra.mxu0 %v8567
    %12758 = vmatpush.bf16.msra.mxu0 %v8559
    %12759 = vmatpush.bf16.msra.mxu0 %v8551
    %12760 = vmatpush.bf16.msra.mxu0 %v8543
    %12761 = vmatmul.bf16.gmra.mxu0 %v309
    %v12762 = vpop.f32.mrf.mxu0
    %v12763 = vadd.f32 %v12750, %v12762
    %v12764 = vpop.f32.mrf.mxu0
    %12765 = vdwg.mxu0
    %12766 = vmatpush.bf16.msra.mxu0 %v8663
    %12767 = vmatpush.bf16.msra.mxu0 %v8655
    %12768 = vmatpush.bf16.msra.mxu0 %v8647
    %12769 = vmatpush.bf16.msra.mxu0 %v8639
    %12770 = vmatpush.bf16.msra.mxu0 %v8631
    %12771 = vmatpush.bf16.msra.mxu0 %v8623
    %12772 = vmatpush.bf16.msra.mxu0 %v8615
    %12773 = vmatpush.bf16.msra.mxu0 %v8607
    %12774 = vmatmul.bf16.gmra.mxu0 %v310
    %v12775 = vpop.f32.mrf.mxu0
    %v12776 = vadd.f32 %v12763, %v12775
    %v12777 = vpop.f32.mrf.mxu0
    %12778 = vdwg.mxu0
    %12779 = vmatpush.bf16.msra.mxu0 %v8727
    %12780 = vmatpush.bf16.msra.mxu0 %v8719
    %12781 = vmatpush.bf16.msra.mxu0 %v8711
    %12782 = vmatpush.bf16.msra.mxu0 %v8703
    %12783 = vmatpush.bf16.msra.mxu0 %v8695
    %12784 = vmatpush.bf16.msra.mxu0 %v8687
    %12785 = vmatpush.bf16.msra.mxu0 %v8679
    %12786 = vmatpush.bf16.msra.mxu0 %v8671
    %12787 = vmatmul.bf16.gmra.mxu0 %v311
    %v12788 = vpop.f32.mrf.mxu0
    %v12789 = vadd.f32 %v12776, %v12788
    %v12790 = vpop.f32.mrf.mxu0
    %12791 = vdwg.mxu0
    %12792 = vmatpush.bf16.msra.mxu0 %v8791
    %12793 = vmatpush.bf16.msra.mxu0 %v8783
    %12794 = vmatpush.bf16.msra.mxu0 %v8775
    %12795 = vmatpush.bf16.msra.mxu0 %v8767
    %12796 = vmatpush.bf16.msra.mxu0 %v8759
    %12797 = vmatpush.bf16.msra.mxu0 %v8751
    %12798 = vmatpush.bf16.msra.mxu0 %v8743
    %12799 = vmatpush.bf16.msra.mxu0 %v8735
    %12800 = vmatmul.bf16.gmra.mxu0 %v312
    %v12801 = vpop.f32.mrf.mxu0
    %v12802 = vadd.f32 %v12789, %v12801
    %v12803 = vpop.f32.mrf.mxu0
    %12804 = vdwg.mxu0
    %12805 = vmatpush.bf16.msra.mxu0 %v8855
    %12806 = vmatpush.bf16.msra.mxu0 %v8847
    %12807 = vmatpush.bf16.msra.mxu0 %v8839
    %12808 = vmatpush.bf16.msra.mxu0 %v8831
    %12809 = vmatpush.bf16.msra.mxu0 %v8823
    %12810 = vmatpush.bf16.msra.mxu0 %v8815
    %12811 = vmatpush.bf16.msra.mxu0 %v8807
    %12812 = vmatpush.bf16.msra.mxu0 %v8799
    %12813 = vmatmul.bf16.gmra.mxu0 %v313
    %v12814 = vpop.f32.mrf.mxu0
    %v12815 = vadd.f32 %v12802, %v12814
    %v12816 = vpop.f32.mrf.mxu0
    %12817 = vdwg.mxu0
    %12818 = vmatpush.bf16.msra.mxu0 %v8919
    %12819 = vmatpush.bf16.msra.mxu0 %v8911
    %12820 = vmatpush.bf16.msra.mxu0 %v8903
    %12821 = vmatpush.bf16.msra.mxu0 %v8895
    %12822 = vmatpush.bf16.msra.mxu0 %v8887
    %12823 = vmatpush.bf16.msra.mxu0 %v8879
    %12824 = vmatpush.bf16.msra.mxu0 %v8871
    %12825 = vmatpush.bf16.msra.mxu0 %v8863
    %12826 = vmatmul.bf16.gmra.mxu0 %v314
    %v12827 = vpop.f32.mrf.mxu0
    %v12828 = vadd.f32 %v12815, %v12827
    %v12829 = vpop.f32.mrf.mxu0
    %12830 = vdwg.mxu0
    %12831 = vmatpush.bf16.msra.mxu0 %v8983
    %12832 = vmatpush.bf16.msra.mxu0 %v8975
    %12833 = vmatpush.bf16.msra.mxu0 %v8967
    %12834 = vmatpush.bf16.msra.mxu0 %v8959
    %12835 = vmatpush.bf16.msra.mxu0 %v8951
    %12836 = vmatpush.bf16.msra.mxu0 %v8943
    %12837 = vmatpush.bf16.msra.mxu0 %v8935
    %12838 = vmatpush.bf16.msra.mxu0 %v8927
    %12839 = vmatmul.bf16.gmra.mxu0 %v315
    %v12840 = vpop.f32.mrf.mxu0
    %v12841 = vadd.f32 %v12828, %v12840
    %v12842 = vpop.f32.mrf.mxu0
    %12843 = vdwg.mxu0
    %12844 = vmatpush.bf16.msra.mxu0 %v9047
    %12845 = vmatpush.bf16.msra.mxu0 %v9039
    %12846 = vmatpush.bf16.msra.mxu0 %v9031
    %12847 = vmatpush.bf16.msra.mxu0 %v9023
    %12848 = vmatpush.bf16.msra.mxu0 %v9015
    %12849 = vmatpush.bf16.msra.mxu0 %v9007
    %12850 = vmatpush.bf16.msra.mxu0 %v8999
    %12851 = vmatpush.bf16.msra.mxu0 %v8991
    %12852 = vmatmul.bf16.gmra.mxu0 %v316
    %v12853 = vpop.f32.mrf.mxu0
    %v12854 = vadd.f32 %v12841, %v12853
    %v12855 = vpop.f32.mrf.mxu0
    %12856 = vdwg.mxu0
    %12857 = vmatpush.bf16.msra.mxu0 %v9111
    %12858 = vmatpush.bf16.msra.mxu0 %v9103
    %12859 = vmatpush.bf16.msra.mxu0 %v9095
    %12860 = vmatpush.bf16.msra.mxu0 %v9087
    %12861 = vmatpush.bf16.msra.mxu0 %v9079
    %12862 = vmatpush.bf16.msra.mxu0 %v9071
    %12863 = vmatpush.bf16.msra.mxu0 %v9063
    %12864 = vmatpush.bf16.msra.mxu0 %v9055
    %12865 = vmatmul.bf16.gmra.mxu0 %v317
    %v12866 = vpop.f32.mrf.mxu0
    %v12867 = vadd.f32 %v12854, %v12866
    %v12868 = vpop.f32.mrf.mxu0
    %12869 = vdwg.mxu0
    %12870 = vmatpush.bf16.msra.mxu0 %v9175
    %12871 = vmatpush.bf16.msra.mxu0 %v9167
    %12872 = vmatpush.bf16.msra.mxu0 %v9159
    %12873 = vmatpush.bf16.msra.mxu0 %v9151
    %12874 = vmatpush.bf16.msra.mxu0 %v9143
    %12875 = vmatpush.bf16.msra.mxu0 %v9135
    %12876 = vmatpush.bf16.msra.mxu0 %v9127
    %12877 = vmatpush.bf16.msra.mxu0 %v9119
    %12878 = vmatmul.bf16.gmra.mxu0 %v318
    %v12879 = vpop.f32.mrf.mxu0
    %v12880 = vadd.f32 %v12867, %v12879
    %v12881 = vpop.f32.mrf.mxu0
    %12882 = vdwg.mxu0
    %12883 = vmatpush.bf16.msra.mxu0 %v9239
    %12884 = vmatpush.bf16.msra.mxu0 %v9231
    %12885 = vmatpush.bf16.msra.mxu0 %v9223
    %12886 = vmatpush.bf16.msra.mxu0 %v9215
    %12887 = vmatpush.bf16.msra.mxu0 %v9207
    %12888 = vmatpush.bf16.msra.mxu0 %v9199
    %12889 = vmatpush.bf16.msra.mxu0 %v9191
    %12890 = vmatpush.bf16.msra.mxu0 %v9183
    %12891 = vmatmul.bf16.gmra.mxu0 %v319
    %v12892 = vpop.f32.mrf.mxu0
    %v12893 = vadd.f32 %v12880, %v12892
    %v12894 = vpop.f32.mrf.mxu0
    %12895 = vdwg.mxu0
    %12896 = vmatpush.bf16.msra.mxu0 %v9303
    %12897 = vmatpush.bf16.msra.mxu0 %v9295
    %12898 = vmatpush.bf16.msra.mxu0 %v9287
    %12899 = vmatpush.bf16.msra.mxu0 %v9279
    %12900 = vmatpush.bf16.msra.mxu0 %v9271
    %12901 = vmatpush.bf16.msra.mxu0 %v9263
    %12902 = vmatpush.bf16.msra.mxu0 %v9255
    %12903 = vmatpush.bf16.msra.mxu0 %v9247
    %12904 = vmatmul.bf16.gmra.mxu0 %v320
    %v12905 = vpop.f32.mrf.mxu0
    %v12906 = vadd.f32 %v12893, %v12905
    %v12907 = vpop.f32.mrf.mxu0
    %12908 = vdwg.mxu0
    %12909 = vmatpush.bf16.msra.mxu0 %v9367
    %12910 = vmatpush.bf16.msra.mxu0 %v9359
    %12911 = vmatpush.bf16.msra.mxu0 %v9351
    %12912 = vmatpush.bf16.msra.mxu0 %v9343
    %12913 = vmatpush.bf16.msra.mxu0 %v9335
    %12914 = vmatpush.bf16.msra.mxu0 %v9327
    %12915 = vmatpush.bf16.msra.mxu0 %v9319
    %12916 = vmatpush.bf16.msra.mxu0 %v9311
    %12917 = vmatmul.bf16.gmra.mxu0 %v321
    %v12918 = vpop.f32.mrf.mxu0
    %v12919 = vadd.f32 %v12906, %v12918
    %v12920 = vpop.f32.mrf.mxu0
    %12921 = vdwg.mxu0
    %12922 = vmatpush.bf16.msra.mxu0 %v9431
    %12923 = vmatpush.bf16.msra.mxu0 %v9423
    %12924 = vmatpush.bf16.msra.mxu0 %v9415
    %12925 = vmatpush.bf16.msra.mxu0 %v9407
    %12926 = vmatpush.bf16.msra.mxu0 %v9399
    %12927 = vmatpush.bf16.msra.mxu0 %v9391
    %12928 = vmatpush.bf16.msra.mxu0 %v9383
    %12929 = vmatpush.bf16.msra.mxu0 %v9375
    %12930 = vmatmul.bf16.gmra.mxu0 %v322
    %v12931 = vpop.f32.mrf.mxu0
    %v12932 = vadd.f32 %v12919, %v12931
    %v12933 = vpop.f32.mrf.mxu0
    %12934 = vdwg.mxu0
    %12935 = vmatpush.bf16.msra.mxu0 %v9495
    %12936 = vmatpush.bf16.msra.mxu0 %v9487
    %12937 = vmatpush.bf16.msra.mxu0 %v9479
    %12938 = vmatpush.bf16.msra.mxu0 %v9471
    %12939 = vmatpush.bf16.msra.mxu0 %v9463
    %12940 = vmatpush.bf16.msra.mxu0 %v9455
    %12941 = vmatpush.bf16.msra.mxu0 %v9447
    %12942 = vmatpush.bf16.msra.mxu0 %v9439
    %12943 = vmatmul.bf16.gmra.mxu0 %v323
    %v12944 = vpop.f32.mrf.mxu0
    %v12945 = vadd.f32 %v12932, %v12944
    %v12946 = vpop.f32.mrf.mxu0
    %12947 = vdwg.mxu0
    %12948 = vmatpush.bf16.msra.mxu0 %v9559
    %12949 = vmatpush.bf16.msra.mxu0 %v9551
    %12950 = vmatpush.bf16.msra.mxu0 %v9543
    %12951 = vmatpush.bf16.msra.mxu0 %v9535
    %12952 = vmatpush.bf16.msra.mxu0 %v9527
    %12953 = vmatpush.bf16.msra.mxu0 %v9519
    %12954 = vmatpush.bf16.msra.mxu0 %v9511
    %12955 = vmatpush.bf16.msra.mxu0 %v9503
    %12956 = vmatmul.bf16.gmra.mxu0 %v324
    %v12957 = vpop.f32.mrf.mxu0
    %v12958 = vadd.f32 %v12945, %v12957
    %v12959 = vpop.f32.mrf.mxu0
    %12960 = vdwg.mxu0
    %12961 = vmatpush.bf16.msra.mxu0 %v9623
    %12962 = vmatpush.bf16.msra.mxu0 %v9615
    %12963 = vmatpush.bf16.msra.mxu0 %v9607
    %12964 = vmatpush.bf16.msra.mxu0 %v9599
    %12965 = vmatpush.bf16.msra.mxu0 %v9591
    %12966 = vmatpush.bf16.msra.mxu0 %v9583
    %12967 = vmatpush.bf16.msra.mxu0 %v9575
    %12968 = vmatpush.bf16.msra.mxu0 %v9567
    %12969 = vmatmul.bf16.gmra.mxu0 %v325
    %v12970 = vpop.f32.mrf.mxu0
    %v12971 = vadd.f32 %v12958, %v12970
    %v12972 = vpop.f32.mrf.mxu0
    %12973 = vdwg.mxu0
    %12974 = vmatpush.bf16.msra.mxu0 %v9687
    %12975 = vmatpush.bf16.msra.mxu0 %v9679
    %12976 = vmatpush.bf16.msra.mxu0 %v9671
    %12977 = vmatpush.bf16.msra.mxu0 %v9663
    %12978 = vmatpush.bf16.msra.mxu0 %v9655
    %12979 = vmatpush.bf16.msra.mxu0 %v9647
    %12980 = vmatpush.bf16.msra.mxu0 %v9639
    %12981 = vmatpush.bf16.msra.mxu0 %v9631
    %12982 = vmatmul.bf16.gmra.mxu0 %v326
    %v12983 = vpop.f32.mrf.mxu0
    %v12984 = vadd.f32 %v12971, %v12983
    %v12985 = vpop.f32.mrf.mxu0
    %12986 = vdwg.mxu0
    %12987 = vmatpush.bf16.msra.mxu0 %v9751
    %12988 = vmatpush.bf16.msra.mxu0 %v9743
    %12989 = vmatpush.bf16.msra.mxu0 %v9735
    %12990 = vmatpush.bf16.msra.mxu0 %v9727
    %12991 = vmatpush.bf16.msra.mxu0 %v9719
    %12992 = vmatpush.bf16.msra.mxu0 %v9711
    %12993 = vmatpush.bf16.msra.mxu0 %v9703
    %12994 = vmatpush.bf16.msra.mxu0 %v9695
    %12995 = vmatmul.bf16.gmra.mxu0 %v327
    %v12996 = vpop.f32.mrf.mxu0
    %v12997 = vadd.f32 %v12984, %v12996
    %v12998 = vpop.f32.mrf.mxu0
    %12999 = vdwg.mxu0
    %13000 = vmatpush.bf16.msra.mxu0 %v9815
    %13001 = vmatpush.bf16.msra.mxu0 %v9807
    %13002 = vmatpush.bf16.msra.mxu0 %v9799
    %13003 = vmatpush.bf16.msra.mxu0 %v9791
    %13004 = vmatpush.bf16.msra.mxu0 %v9783
    %13005 = vmatpush.bf16.msra.mxu0 %v9775
    %13006 = vmatpush.bf16.msra.mxu0 %v9767
    %13007 = vmatpush.bf16.msra.mxu0 %v9759
    %13008 = vmatmul.bf16.gmra.mxu0 %v328
    %v13009 = vpop.f32.mrf.mxu0
    %v13010 = vadd.f32 %v12997, %v13009
    %v13011 = vpop.f32.mrf.mxu0
    %13012 = vdwg.mxu0
    %13013 = vmatpush.bf16.msra.mxu0 %v9879
    %13014 = vmatpush.bf16.msra.mxu0 %v9871
    %13015 = vmatpush.bf16.msra.mxu0 %v9863
    %13016 = vmatpush.bf16.msra.mxu0 %v9855
    %13017 = vmatpush.bf16.msra.mxu0 %v9847
    %13018 = vmatpush.bf16.msra.mxu0 %v9839
    %13019 = vmatpush.bf16.msra.mxu0 %v9831
    %13020 = vmatpush.bf16.msra.mxu0 %v9823
    %13021 = vmatmul.bf16.gmra.mxu0 %v329
    %v13022 = vpop.f32.mrf.mxu0
    %v13023 = vadd.f32 %v13010, %v13022
    %v13024 = vpop.f32.mrf.mxu0
    %13025 = vdwg.mxu0
    %13026 = vmatpush.bf16.msra.mxu0 %v9943
    %13027 = vmatpush.bf16.msra.mxu0 %v9935
    %13028 = vmatpush.bf16.msra.mxu0 %v9927
    %13029 = vmatpush.bf16.msra.mxu0 %v9919
    %13030 = vmatpush.bf16.msra.mxu0 %v9911
    %13031 = vmatpush.bf16.msra.mxu0 %v9903
    %13032 = vmatpush.bf16.msra.mxu0 %v9895
    %13033 = vmatpush.bf16.msra.mxu0 %v9887
    %13034 = vmatmul.bf16.gmra.mxu0 %v330
    %v13035 = vpop.f32.mrf.mxu0
    %v13036 = vadd.f32 %v13023, %v13035
    %v13037 = vpop.f32.mrf.mxu0
    %13038 = vdwg.mxu0
    %13039 = vmatpush.bf16.msra.mxu0 %v8088
    %13040 = vmatpush.bf16.msra.mxu0 %v8080
    %13041 = vmatpush.bf16.msra.mxu0 %v8072
    %13042 = vmatpush.bf16.msra.mxu0 %v8064
    %13043 = vmatpush.bf16.msra.mxu0 %v8056
    %13044 = vmatpush.bf16.msra.mxu0 %v8048
    %13045 = vmatpush.bf16.msra.mxu0 %v8040
    %13046 = vmatpush.bf16.msra.mxu0 %v8032
    %13047 = vmatmul.bf16.gmra.mxu0 %v301
    %v13048 = vpop.f32.mrf.mxu0
    %v13049 = vadd.f32 %v2256, %v13048
    %v13050 = vpop.f32.mrf.mxu0
    %13051 = vdwg.mxu0
    %13052 = vmatpush.bf16.msra.mxu0 %v8152
    %13053 = vmatpush.bf16.msra.mxu0 %v8144
    %13054 = vmatpush.bf16.msra.mxu0 %v8136
    %13055 = vmatpush.bf16.msra.mxu0 %v8128
    %13056 = vmatpush.bf16.msra.mxu0 %v8120
    %13057 = vmatpush.bf16.msra.mxu0 %v8112
    %13058 = vmatpush.bf16.msra.mxu0 %v8104
    %13059 = vmatpush.bf16.msra.mxu0 %v8096
    %13060 = vmatmul.bf16.gmra.mxu0 %v302
    %v13061 = vpop.f32.mrf.mxu0
    %v13062 = vadd.f32 %v13049, %v13061
    %v13063 = vpop.f32.mrf.mxu0
    %13064 = vdwg.mxu0
    %13065 = vmatpush.bf16.msra.mxu0 %v8216
    %13066 = vmatpush.bf16.msra.mxu0 %v8208
    %13067 = vmatpush.bf16.msra.mxu0 %v8200
    %13068 = vmatpush.bf16.msra.mxu0 %v8192
    %13069 = vmatpush.bf16.msra.mxu0 %v8184
    %13070 = vmatpush.bf16.msra.mxu0 %v8176
    %13071 = vmatpush.bf16.msra.mxu0 %v8168
    %13072 = vmatpush.bf16.msra.mxu0 %v8160
    %13073 = vmatmul.bf16.gmra.mxu0 %v303
    %v13074 = vpop.f32.mrf.mxu0
    %v13075 = vadd.f32 %v13062, %v13074
    %v13076 = vpop.f32.mrf.mxu0
    %13077 = vdwg.mxu0
    %13078 = vmatpush.bf16.msra.mxu0 %v8280
    %13079 = vmatpush.bf16.msra.mxu0 %v8272
    %13080 = vmatpush.bf16.msra.mxu0 %v8264
    %13081 = vmatpush.bf16.msra.mxu0 %v8256
    %13082 = vmatpush.bf16.msra.mxu0 %v8248
    %13083 = vmatpush.bf16.msra.mxu0 %v8240
    %13084 = vmatpush.bf16.msra.mxu0 %v8232
    %13085 = vmatpush.bf16.msra.mxu0 %v8224
    %13086 = vmatmul.bf16.gmra.mxu0 %v304
    %v13087 = vpop.f32.mrf.mxu0
    %v13088 = vadd.f32 %v13075, %v13087
    %v13089 = vpop.f32.mrf.mxu0
    %13090 = vdwg.mxu0
    %13091 = vmatpush.bf16.msra.mxu0 %v8344
    %13092 = vmatpush.bf16.msra.mxu0 %v8336
    %13093 = vmatpush.bf16.msra.mxu0 %v8328
    %13094 = vmatpush.bf16.msra.mxu0 %v8320
    %13095 = vmatpush.bf16.msra.mxu0 %v8312
    %13096 = vmatpush.bf16.msra.mxu0 %v8304
    %13097 = vmatpush.bf16.msra.mxu0 %v8296
    %13098 = vmatpush.bf16.msra.mxu0 %v8288
    %13099 = vmatmul.bf16.gmra.mxu0 %v305
    %v13100 = vpop.f32.mrf.mxu0
    %v13101 = vadd.f32 %v13088, %v13100
    %v13102 = vpop.f32.mrf.mxu0
    %13103 = vdwg.mxu0
    %13104 = vmatpush.bf16.msra.mxu0 %v8408
    %13105 = vmatpush.bf16.msra.mxu0 %v8400
    %13106 = vmatpush.bf16.msra.mxu0 %v8392
    %13107 = vmatpush.bf16.msra.mxu0 %v8384
    %13108 = vmatpush.bf16.msra.mxu0 %v8376
    %13109 = vmatpush.bf16.msra.mxu0 %v8368
    %13110 = vmatpush.bf16.msra.mxu0 %v8360
    %13111 = vmatpush.bf16.msra.mxu0 %v8352
    %13112 = vmatmul.bf16.gmra.mxu0 %v306
    %v13113 = vpop.f32.mrf.mxu0
    %v13114 = vadd.f32 %v13101, %v13113
    %v13115 = vpop.f32.mrf.mxu0
    %13116 = vdwg.mxu0
    %13117 = vmatpush.bf16.msra.mxu0 %v8472
    %13118 = vmatpush.bf16.msra.mxu0 %v8464
    %13119 = vmatpush.bf16.msra.mxu0 %v8456
    %13120 = vmatpush.bf16.msra.mxu0 %v8448
    %13121 = vmatpush.bf16.msra.mxu0 %v8440
    %13122 = vmatpush.bf16.msra.mxu0 %v8432
    %13123 = vmatpush.bf16.msra.mxu0 %v8424
    %13124 = vmatpush.bf16.msra.mxu0 %v8416
    %13125 = vmatmul.bf16.gmra.mxu0 %v307
    %v13126 = vpop.f32.mrf.mxu0
    %v13127 = vadd.f32 %v13114, %v13126
    %v13128 = vpop.f32.mrf.mxu0
    %13129 = vdwg.mxu0
    %13130 = vmatpush.bf16.msra.mxu0 %v8536
    %13131 = vmatpush.bf16.msra.mxu0 %v8528
    %13132 = vmatpush.bf16.msra.mxu0 %v8520
    %13133 = vmatpush.bf16.msra.mxu0 %v8512
    %13134 = vmatpush.bf16.msra.mxu0 %v8504
    %13135 = vmatpush.bf16.msra.mxu0 %v8496
    %13136 = vmatpush.bf16.msra.mxu0 %v8488
    %13137 = vmatpush.bf16.msra.mxu0 %v8480
    %13138 = vmatmul.bf16.gmra.mxu0 %v308
    %v13139 = vpop.f32.mrf.mxu0
    %v13140 = vadd.f32 %v13127, %v13139
    %v13141 = vpop.f32.mrf.mxu0
    %13142 = vdwg.mxu0
    %13143 = vmatpush.bf16.msra.mxu0 %v8600
    %13144 = vmatpush.bf16.msra.mxu0 %v8592
    %13145 = vmatpush.bf16.msra.mxu0 %v8584
    %13146 = vmatpush.bf16.msra.mxu0 %v8576
    %13147 = vmatpush.bf16.msra.mxu0 %v8568
    %13148 = vmatpush.bf16.msra.mxu0 %v8560
    %13149 = vmatpush.bf16.msra.mxu0 %v8552
    %13150 = vmatpush.bf16.msra.mxu0 %v8544
    %13151 = vmatmul.bf16.gmra.mxu0 %v309
    %v13152 = vpop.f32.mrf.mxu0
    %v13153 = vadd.f32 %v13140, %v13152
    %v13154 = vpop.f32.mrf.mxu0
    %13155 = vdwg.mxu0
    %13156 = vmatpush.bf16.msra.mxu0 %v8664
    %13157 = vmatpush.bf16.msra.mxu0 %v8656
    %13158 = vmatpush.bf16.msra.mxu0 %v8648
    %13159 = vmatpush.bf16.msra.mxu0 %v8640
    %13160 = vmatpush.bf16.msra.mxu0 %v8632
    %13161 = vmatpush.bf16.msra.mxu0 %v8624
    %13162 = vmatpush.bf16.msra.mxu0 %v8616
    %13163 = vmatpush.bf16.msra.mxu0 %v8608
    %13164 = vmatmul.bf16.gmra.mxu0 %v310
    %v13165 = vpop.f32.mrf.mxu0
    %v13166 = vadd.f32 %v13153, %v13165
    %v13167 = vpop.f32.mrf.mxu0
    %13168 = vdwg.mxu0
    %13169 = vmatpush.bf16.msra.mxu0 %v8728
    %13170 = vmatpush.bf16.msra.mxu0 %v8720
    %13171 = vmatpush.bf16.msra.mxu0 %v8712
    %13172 = vmatpush.bf16.msra.mxu0 %v8704
    %13173 = vmatpush.bf16.msra.mxu0 %v8696
    %13174 = vmatpush.bf16.msra.mxu0 %v8688
    %13175 = vmatpush.bf16.msra.mxu0 %v8680
    %13176 = vmatpush.bf16.msra.mxu0 %v8672
    %13177 = vmatmul.bf16.gmra.mxu0 %v311
    %v13178 = vpop.f32.mrf.mxu0
    %v13179 = vadd.f32 %v13166, %v13178
    %v13180 = vpop.f32.mrf.mxu0
    %13181 = vdwg.mxu0
    %13182 = vmatpush.bf16.msra.mxu0 %v8792
    %13183 = vmatpush.bf16.msra.mxu0 %v8784
    %13184 = vmatpush.bf16.msra.mxu0 %v8776
    %13185 = vmatpush.bf16.msra.mxu0 %v8768
    %13186 = vmatpush.bf16.msra.mxu0 %v8760
    %13187 = vmatpush.bf16.msra.mxu0 %v8752
    %13188 = vmatpush.bf16.msra.mxu0 %v8744
    %13189 = vmatpush.bf16.msra.mxu0 %v8736
    %13190 = vmatmul.bf16.gmra.mxu0 %v312
    %v13191 = vpop.f32.mrf.mxu0
    %v13192 = vadd.f32 %v13179, %v13191
    %v13193 = vpop.f32.mrf.mxu0
    %13194 = vdwg.mxu0
    %13195 = vmatpush.bf16.msra.mxu0 %v8856
    %13196 = vmatpush.bf16.msra.mxu0 %v8848
    %13197 = vmatpush.bf16.msra.mxu0 %v8840
    %13198 = vmatpush.bf16.msra.mxu0 %v8832
    %13199 = vmatpush.bf16.msra.mxu0 %v8824
    %13200 = vmatpush.bf16.msra.mxu0 %v8816
    %13201 = vmatpush.bf16.msra.mxu0 %v8808
    %13202 = vmatpush.bf16.msra.mxu0 %v8800
    %13203 = vmatmul.bf16.gmra.mxu0 %v313
    %v13204 = vpop.f32.mrf.mxu0
    %v13205 = vadd.f32 %v13192, %v13204
    %v13206 = vpop.f32.mrf.mxu0
    %13207 = vdwg.mxu0
    %13208 = vmatpush.bf16.msra.mxu0 %v8920
    %13209 = vmatpush.bf16.msra.mxu0 %v8912
    %13210 = vmatpush.bf16.msra.mxu0 %v8904
    %13211 = vmatpush.bf16.msra.mxu0 %v8896
    %13212 = vmatpush.bf16.msra.mxu0 %v8888
    %13213 = vmatpush.bf16.msra.mxu0 %v8880
    %13214 = vmatpush.bf16.msra.mxu0 %v8872
    %13215 = vmatpush.bf16.msra.mxu0 %v8864
    %13216 = vmatmul.bf16.gmra.mxu0 %v314
    %v13217 = vpop.f32.mrf.mxu0
    %v13218 = vadd.f32 %v13205, %v13217
    %v13219 = vpop.f32.mrf.mxu0
    %13220 = vdwg.mxu0
    %13221 = vmatpush.bf16.msra.mxu0 %v8984
    %13222 = vmatpush.bf16.msra.mxu0 %v8976
    %13223 = vmatpush.bf16.msra.mxu0 %v8968
    %13224 = vmatpush.bf16.msra.mxu0 %v8960
    %13225 = vmatpush.bf16.msra.mxu0 %v8952
    %13226 = vmatpush.bf16.msra.mxu0 %v8944
    %13227 = vmatpush.bf16.msra.mxu0 %v8936
    %13228 = vmatpush.bf16.msra.mxu0 %v8928
    %13229 = vmatmul.bf16.gmra.mxu0 %v315
    %v13230 = vpop.f32.mrf.mxu0
    %v13231 = vadd.f32 %v13218, %v13230
    %v13232 = vpop.f32.mrf.mxu0
    %13233 = vdwg.mxu0
    %13234 = vmatpush.bf16.msra.mxu0 %v9048
    %13235 = vmatpush.bf16.msra.mxu0 %v9040
    %13236 = vmatpush.bf16.msra.mxu0 %v9032
    %13237 = vmatpush.bf16.msra.mxu0 %v9024
    %13238 = vmatpush.bf16.msra.mxu0 %v9016
    %13239 = vmatpush.bf16.msra.mxu0 %v9008
    %13240 = vmatpush.bf16.msra.mxu0 %v9000
    %13241 = vmatpush.bf16.msra.mxu0 %v8992
    %13242 = vmatmul.bf16.gmra.mxu0 %v316
    %v13243 = vpop.f32.mrf.mxu0
    %v13244 = vadd.f32 %v13231, %v13243
    %v13245 = vpop.f32.mrf.mxu0
    %13246 = vdwg.mxu0
    %13247 = vmatpush.bf16.msra.mxu0 %v9112
    %13248 = vmatpush.bf16.msra.mxu0 %v9104
    %13249 = vmatpush.bf16.msra.mxu0 %v9096
    %13250 = vmatpush.bf16.msra.mxu0 %v9088
    %13251 = vmatpush.bf16.msra.mxu0 %v9080
    %13252 = vmatpush.bf16.msra.mxu0 %v9072
    %13253 = vmatpush.bf16.msra.mxu0 %v9064
    %13254 = vmatpush.bf16.msra.mxu0 %v9056
    %13255 = vmatmul.bf16.gmra.mxu0 %v317
    %v13256 = vpop.f32.mrf.mxu0
    %v13257 = vadd.f32 %v13244, %v13256
    %v13258 = vpop.f32.mrf.mxu0
    %13259 = vdwg.mxu0
    %13260 = vmatpush.bf16.msra.mxu0 %v9176
    %13261 = vmatpush.bf16.msra.mxu0 %v9168
    %13262 = vmatpush.bf16.msra.mxu0 %v9160
    %13263 = vmatpush.bf16.msra.mxu0 %v9152
    %13264 = vmatpush.bf16.msra.mxu0 %v9144
    %13265 = vmatpush.bf16.msra.mxu0 %v9136
    %13266 = vmatpush.bf16.msra.mxu0 %v9128
    %13267 = vmatpush.bf16.msra.mxu0 %v9120
    %13268 = vmatmul.bf16.gmra.mxu0 %v318
    %v13269 = vpop.f32.mrf.mxu0
    %v13270 = vadd.f32 %v13257, %v13269
    %v13271 = vpop.f32.mrf.mxu0
    %13272 = vdwg.mxu0
    %13273 = vmatpush.bf16.msra.mxu0 %v9240
    %13274 = vmatpush.bf16.msra.mxu0 %v9232
    %13275 = vmatpush.bf16.msra.mxu0 %v9224
    %13276 = vmatpush.bf16.msra.mxu0 %v9216
    %13277 = vmatpush.bf16.msra.mxu0 %v9208
    %13278 = vmatpush.bf16.msra.mxu0 %v9200
    %13279 = vmatpush.bf16.msra.mxu0 %v9192
    %13280 = vmatpush.bf16.msra.mxu0 %v9184
    %13281 = vmatmul.bf16.gmra.mxu0 %v319
    %v13282 = vpop.f32.mrf.mxu0
    %v13283 = vadd.f32 %v13270, %v13282
    %v13284 = vpop.f32.mrf.mxu0
    %13285 = vdwg.mxu0
    %13286 = vmatpush.bf16.msra.mxu0 %v9304
    %13287 = vmatpush.bf16.msra.mxu0 %v9296
    %13288 = vmatpush.bf16.msra.mxu0 %v9288
    %13289 = vmatpush.bf16.msra.mxu0 %v9280
    %13290 = vmatpush.bf16.msra.mxu0 %v9272
    %13291 = vmatpush.bf16.msra.mxu0 %v9264
    %13292 = vmatpush.bf16.msra.mxu0 %v9256
    %13293 = vmatpush.bf16.msra.mxu0 %v9248
    %13294 = vmatmul.bf16.gmra.mxu0 %v320
    %v13295 = vpop.f32.mrf.mxu0
    %v13296 = vadd.f32 %v13283, %v13295
    %v13297 = vpop.f32.mrf.mxu0
    %13298 = vdwg.mxu0
    %13299 = vmatpush.bf16.msra.mxu0 %v9368
    %13300 = vmatpush.bf16.msra.mxu0 %v9360
    %13301 = vmatpush.bf16.msra.mxu0 %v9352
    %13302 = vmatpush.bf16.msra.mxu0 %v9344
    %13303 = vmatpush.bf16.msra.mxu0 %v9336
    %13304 = vmatpush.bf16.msra.mxu0 %v9328
    %13305 = vmatpush.bf16.msra.mxu0 %v9320
    %13306 = vmatpush.bf16.msra.mxu0 %v9312
    %13307 = vmatmul.bf16.gmra.mxu0 %v321
    %v13308 = vpop.f32.mrf.mxu0
    %v13309 = vadd.f32 %v13296, %v13308
    %v13310 = vpop.f32.mrf.mxu0
    %13311 = vdwg.mxu0
    %13312 = vmatpush.bf16.msra.mxu0 %v9432
    %13313 = vmatpush.bf16.msra.mxu0 %v9424
    %13314 = vmatpush.bf16.msra.mxu0 %v9416
    %13315 = vmatpush.bf16.msra.mxu0 %v9408
    %13316 = vmatpush.bf16.msra.mxu0 %v9400
    %13317 = vmatpush.bf16.msra.mxu0 %v9392
    %13318 = vmatpush.bf16.msra.mxu0 %v9384
    %13319 = vmatpush.bf16.msra.mxu0 %v9376
    %13320 = vmatmul.bf16.gmra.mxu0 %v322
    %v13321 = vpop.f32.mrf.mxu0
    %v13322 = vadd.f32 %v13309, %v13321
    %v13323 = vpop.f32.mrf.mxu0
    %13324 = vdwg.mxu0
    %13325 = vmatpush.bf16.msra.mxu0 %v9496
    %13326 = vmatpush.bf16.msra.mxu0 %v9488
    %13327 = vmatpush.bf16.msra.mxu0 %v9480
    %13328 = vmatpush.bf16.msra.mxu0 %v9472
    %13329 = vmatpush.bf16.msra.mxu0 %v9464
    %13330 = vmatpush.bf16.msra.mxu0 %v9456
    %13331 = vmatpush.bf16.msra.mxu0 %v9448
    %13332 = vmatpush.bf16.msra.mxu0 %v9440
    %13333 = vmatmul.bf16.gmra.mxu0 %v323
    %v13334 = vpop.f32.mrf.mxu0
    %v13335 = vadd.f32 %v13322, %v13334
    %v13336 = vpop.f32.mrf.mxu0
    %13337 = vdwg.mxu0
    %13338 = vmatpush.bf16.msra.mxu0 %v9560
    %13339 = vmatpush.bf16.msra.mxu0 %v9552
    %13340 = vmatpush.bf16.msra.mxu0 %v9544
    %13341 = vmatpush.bf16.msra.mxu0 %v9536
    %13342 = vmatpush.bf16.msra.mxu0 %v9528
    %13343 = vmatpush.bf16.msra.mxu0 %v9520
    %13344 = vmatpush.bf16.msra.mxu0 %v9512
    %13345 = vmatpush.bf16.msra.mxu0 %v9504
    %13346 = vmatmul.bf16.gmra.mxu0 %v324
    %v13347 = vpop.f32.mrf.mxu0
    %v13348 = vadd.f32 %v13335, %v13347
    %v13349 = vpop.f32.mrf.mxu0
    %13350 = vdwg.mxu0
    %13351 = vmatpush.bf16.msra.mxu0 %v9624
    %13352 = vmatpush.bf16.msra.mxu0 %v9616
    %13353 = vmatpush.bf16.msra.mxu0 %v9608
    %13354 = vmatpush.bf16.msra.mxu0 %v9600
    %13355 = vmatpush.bf16.msra.mxu0 %v9592
    %13356 = vmatpush.bf16.msra.mxu0 %v9584
    %13357 = vmatpush.bf16.msra.mxu0 %v9576
    %13358 = vmatpush.bf16.msra.mxu0 %v9568
    %13359 = vmatmul.bf16.gmra.mxu0 %v325
    %v13360 = vpop.f32.mrf.mxu0
    %v13361 = vadd.f32 %v13348, %v13360
    %v13362 = vpop.f32.mrf.mxu0
    %13363 = vdwg.mxu0
    %13364 = vmatpush.bf16.msra.mxu0 %v9688
    %13365 = vmatpush.bf16.msra.mxu0 %v9680
    %13366 = vmatpush.bf16.msra.mxu0 %v9672
    %13367 = vmatpush.bf16.msra.mxu0 %v9664
    %13368 = vmatpush.bf16.msra.mxu0 %v9656
    %13369 = vmatpush.bf16.msra.mxu0 %v9648
    %13370 = vmatpush.bf16.msra.mxu0 %v9640
    %13371 = vmatpush.bf16.msra.mxu0 %v9632
    %13372 = vmatmul.bf16.gmra.mxu0 %v326
    %v13373 = vpop.f32.mrf.mxu0
    %v13374 = vadd.f32 %v13361, %v13373
    %v13375 = vpop.f32.mrf.mxu0
    %13376 = vdwg.mxu0
    %13377 = vmatpush.bf16.msra.mxu0 %v9752
    %13378 = vmatpush.bf16.msra.mxu0 %v9744
    %13379 = vmatpush.bf16.msra.mxu0 %v9736
    %13380 = vmatpush.bf16.msra.mxu0 %v9728
    %13381 = vmatpush.bf16.msra.mxu0 %v9720
    %13382 = vmatpush.bf16.msra.mxu0 %v9712
    %13383 = vmatpush.bf16.msra.mxu0 %v9704
    %13384 = vmatpush.bf16.msra.mxu0 %v9696
    %13385 = vmatmul.bf16.gmra.mxu0 %v327
    %v13386 = vpop.f32.mrf.mxu0
    %v13387 = vadd.f32 %v13374, %v13386
    %v13388 = vpop.f32.mrf.mxu0
    %13389 = vdwg.mxu0
    %13390 = vmatpush.bf16.msra.mxu0 %v9816
    %13391 = vmatpush.bf16.msra.mxu0 %v9808
    %13392 = vmatpush.bf16.msra.mxu0 %v9800
    %13393 = vmatpush.bf16.msra.mxu0 %v9792
    %13394 = vmatpush.bf16.msra.mxu0 %v9784
    %13395 = vmatpush.bf16.msra.mxu0 %v9776
    %13396 = vmatpush.bf16.msra.mxu0 %v9768
    %13397 = vmatpush.bf16.msra.mxu0 %v9760
    %13398 = vmatmul.bf16.gmra.mxu0 %v328
    %v13399 = vpop.f32.mrf.mxu0
    %v13400 = vadd.f32 %v13387, %v13399
    %v13401 = vpop.f32.mrf.mxu0
    %13402 = vdwg.mxu0
    %13403 = vmatpush.bf16.msra.mxu0 %v9880
    %13404 = vmatpush.bf16.msra.mxu0 %v9872
    %13405 = vmatpush.bf16.msra.mxu0 %v9864
    %13406 = vmatpush.bf16.msra.mxu0 %v9856
    %13407 = vmatpush.bf16.msra.mxu0 %v9848
    %13408 = vmatpush.bf16.msra.mxu0 %v9840
    %13409 = vmatpush.bf16.msra.mxu0 %v9832
    %13410 = vmatpush.bf16.msra.mxu0 %v9824
    %13411 = vmatmul.bf16.gmra.mxu0 %v329
    %v13412 = vpop.f32.mrf.mxu0
    %v13413 = vadd.f32 %v13400, %v13412
    %v13414 = vpop.f32.mrf.mxu0
    %13415 = vdwg.mxu0
    %13416 = vmatpush.bf16.msra.mxu0 %v9944
    %13417 = vmatpush.bf16.msra.mxu0 %v9936
    %13418 = vmatpush.bf16.msra.mxu0 %v9928
    %13419 = vmatpush.bf16.msra.mxu0 %v9920
    %13420 = vmatpush.bf16.msra.mxu0 %v9912
    %13421 = vmatpush.bf16.msra.mxu0 %v9904
    %13422 = vmatpush.bf16.msra.mxu0 %v9896
    %13423 = vmatpush.bf16.msra.mxu0 %v9888
    %13424 = vmatmul.bf16.gmra.mxu0 %v330
    %v13425 = vpop.f32.mrf.mxu0
    %v13426 = vadd.f32 %v13413, %v13425
    %v13427 = vpop.f32.mrf.mxu0
    %13428 = vdwg.mxu0
    %13429 = vmatpush.bf16.msra.mxu0 %v8089
    %13430 = vmatpush.bf16.msra.mxu0 %v8081
    %13431 = vmatpush.bf16.msra.mxu0 %v8073
    %13432 = vmatpush.bf16.msra.mxu0 %v8065
    %13433 = vmatpush.bf16.msra.mxu0 %v8057
    %13434 = vmatpush.bf16.msra.mxu0 %v8049
    %13435 = vmatpush.bf16.msra.mxu0 %v8041
    %13436 = vmatpush.bf16.msra.mxu0 %v8033
    %13437 = vmatmul.bf16.gmra.mxu0 %v301
    %v13438 = vpop.f32.mrf.mxu0
    %v13439 = vadd.f32 %v2257, %v13438
    %v13440 = vpop.f32.mrf.mxu0
    %13441 = vdwg.mxu0
    %13442 = vmatpush.bf16.msra.mxu0 %v8153
    %13443 = vmatpush.bf16.msra.mxu0 %v8145
    %13444 = vmatpush.bf16.msra.mxu0 %v8137
    %13445 = vmatpush.bf16.msra.mxu0 %v8129
    %13446 = vmatpush.bf16.msra.mxu0 %v8121
    %13447 = vmatpush.bf16.msra.mxu0 %v8113
    %13448 = vmatpush.bf16.msra.mxu0 %v8105
    %13449 = vmatpush.bf16.msra.mxu0 %v8097
    %13450 = vmatmul.bf16.gmra.mxu0 %v302
    %v13451 = vpop.f32.mrf.mxu0
    %v13452 = vadd.f32 %v13439, %v13451
    %v13453 = vpop.f32.mrf.mxu0
    %13454 = vdwg.mxu0
    %13455 = vmatpush.bf16.msra.mxu0 %v8217
    %13456 = vmatpush.bf16.msra.mxu0 %v8209
    %13457 = vmatpush.bf16.msra.mxu0 %v8201
    %13458 = vmatpush.bf16.msra.mxu0 %v8193
    %13459 = vmatpush.bf16.msra.mxu0 %v8185
    %13460 = vmatpush.bf16.msra.mxu0 %v8177
    %13461 = vmatpush.bf16.msra.mxu0 %v8169
    %13462 = vmatpush.bf16.msra.mxu0 %v8161
    %13463 = vmatmul.bf16.gmra.mxu0 %v303
    %v13464 = vpop.f32.mrf.mxu0
    %v13465 = vadd.f32 %v13452, %v13464
    %v13466 = vpop.f32.mrf.mxu0
    %13467 = vdwg.mxu0
    %13468 = vmatpush.bf16.msra.mxu0 %v8281
    %13469 = vmatpush.bf16.msra.mxu0 %v8273
    %13470 = vmatpush.bf16.msra.mxu0 %v8265
    %13471 = vmatpush.bf16.msra.mxu0 %v8257
    %13472 = vmatpush.bf16.msra.mxu0 %v8249
    %13473 = vmatpush.bf16.msra.mxu0 %v8241
    %13474 = vmatpush.bf16.msra.mxu0 %v8233
    %13475 = vmatpush.bf16.msra.mxu0 %v8225
    %13476 = vmatmul.bf16.gmra.mxu0 %v304
    %v13477 = vpop.f32.mrf.mxu0
    %v13478 = vadd.f32 %v13465, %v13477
    %v13479 = vpop.f32.mrf.mxu0
    %13480 = vdwg.mxu0
    %13481 = vmatpush.bf16.msra.mxu0 %v8345
    %13482 = vmatpush.bf16.msra.mxu0 %v8337
    %13483 = vmatpush.bf16.msra.mxu0 %v8329
    %13484 = vmatpush.bf16.msra.mxu0 %v8321
    %13485 = vmatpush.bf16.msra.mxu0 %v8313
    %13486 = vmatpush.bf16.msra.mxu0 %v8305
    %13487 = vmatpush.bf16.msra.mxu0 %v8297
    %13488 = vmatpush.bf16.msra.mxu0 %v8289
    %13489 = vmatmul.bf16.gmra.mxu0 %v305
    %v13490 = vpop.f32.mrf.mxu0
    %v13491 = vadd.f32 %v13478, %v13490
    %v13492 = vpop.f32.mrf.mxu0
    %13493 = vdwg.mxu0
    %13494 = vmatpush.bf16.msra.mxu0 %v8409
    %13495 = vmatpush.bf16.msra.mxu0 %v8401
    %13496 = vmatpush.bf16.msra.mxu0 %v8393
    %13497 = vmatpush.bf16.msra.mxu0 %v8385
    %13498 = vmatpush.bf16.msra.mxu0 %v8377
    %13499 = vmatpush.bf16.msra.mxu0 %v8369
    %13500 = vmatpush.bf16.msra.mxu0 %v8361
    %13501 = vmatpush.bf16.msra.mxu0 %v8353
    %13502 = vmatmul.bf16.gmra.mxu0 %v306
    %v13503 = vpop.f32.mrf.mxu0
    %v13504 = vadd.f32 %v13491, %v13503
    %v13505 = vpop.f32.mrf.mxu0
    %13506 = vdwg.mxu0
    %13507 = vmatpush.bf16.msra.mxu0 %v8473
    %13508 = vmatpush.bf16.msra.mxu0 %v8465
    %13509 = vmatpush.bf16.msra.mxu0 %v8457
    %13510 = vmatpush.bf16.msra.mxu0 %v8449
    %13511 = vmatpush.bf16.msra.mxu0 %v8441
    %13512 = vmatpush.bf16.msra.mxu0 %v8433
    %13513 = vmatpush.bf16.msra.mxu0 %v8425
    %13514 = vmatpush.bf16.msra.mxu0 %v8417
    %13515 = vmatmul.bf16.gmra.mxu0 %v307
    %v13516 = vpop.f32.mrf.mxu0
    %v13517 = vadd.f32 %v13504, %v13516
    %v13518 = vpop.f32.mrf.mxu0
    %13519 = vdwg.mxu0
    %13520 = vmatpush.bf16.msra.mxu0 %v8537
    %13521 = vmatpush.bf16.msra.mxu0 %v8529
    %13522 = vmatpush.bf16.msra.mxu0 %v8521
    %13523 = vmatpush.bf16.msra.mxu0 %v8513
    %13524 = vmatpush.bf16.msra.mxu0 %v8505
    %13525 = vmatpush.bf16.msra.mxu0 %v8497
    %13526 = vmatpush.bf16.msra.mxu0 %v8489
    %13527 = vmatpush.bf16.msra.mxu0 %v8481
    %13528 = vmatmul.bf16.gmra.mxu0 %v308
    %v13529 = vpop.f32.mrf.mxu0
    %v13530 = vadd.f32 %v13517, %v13529
    %v13531 = vpop.f32.mrf.mxu0
    %13532 = vdwg.mxu0
    %13533 = vmatpush.bf16.msra.mxu0 %v8601
    %13534 = vmatpush.bf16.msra.mxu0 %v8593
    %13535 = vmatpush.bf16.msra.mxu0 %v8585
    %13536 = vmatpush.bf16.msra.mxu0 %v8577
    %13537 = vmatpush.bf16.msra.mxu0 %v8569
    %13538 = vmatpush.bf16.msra.mxu0 %v8561
    %13539 = vmatpush.bf16.msra.mxu0 %v8553
    %13540 = vmatpush.bf16.msra.mxu0 %v8545
    %13541 = vmatmul.bf16.gmra.mxu0 %v309
    %v13542 = vpop.f32.mrf.mxu0
    %v13543 = vadd.f32 %v13530, %v13542
    %v13544 = vpop.f32.mrf.mxu0
    %13545 = vdwg.mxu0
    %13546 = vmatpush.bf16.msra.mxu0 %v8665
    %13547 = vmatpush.bf16.msra.mxu0 %v8657
    %13548 = vmatpush.bf16.msra.mxu0 %v8649
    %13549 = vmatpush.bf16.msra.mxu0 %v8641
    %13550 = vmatpush.bf16.msra.mxu0 %v8633
    %13551 = vmatpush.bf16.msra.mxu0 %v8625
    %13552 = vmatpush.bf16.msra.mxu0 %v8617
    %13553 = vmatpush.bf16.msra.mxu0 %v8609
    %13554 = vmatmul.bf16.gmra.mxu0 %v310
    %v13555 = vpop.f32.mrf.mxu0
    %v13556 = vadd.f32 %v13543, %v13555
    %v13557 = vpop.f32.mrf.mxu0
    %13558 = vdwg.mxu0
    %13559 = vmatpush.bf16.msra.mxu0 %v8729
    %13560 = vmatpush.bf16.msra.mxu0 %v8721
    %13561 = vmatpush.bf16.msra.mxu0 %v8713
    %13562 = vmatpush.bf16.msra.mxu0 %v8705
    %13563 = vmatpush.bf16.msra.mxu0 %v8697
    %13564 = vmatpush.bf16.msra.mxu0 %v8689
    %13565 = vmatpush.bf16.msra.mxu0 %v8681
    %13566 = vmatpush.bf16.msra.mxu0 %v8673
    %13567 = vmatmul.bf16.gmra.mxu0 %v311
    %v13568 = vpop.f32.mrf.mxu0
    %v13569 = vadd.f32 %v13556, %v13568
    %v13570 = vpop.f32.mrf.mxu0
    %13571 = vdwg.mxu0
    %13572 = vmatpush.bf16.msra.mxu0 %v8793
    %13573 = vmatpush.bf16.msra.mxu0 %v8785
    %13574 = vmatpush.bf16.msra.mxu0 %v8777
    %13575 = vmatpush.bf16.msra.mxu0 %v8769
    %13576 = vmatpush.bf16.msra.mxu0 %v8761
    %13577 = vmatpush.bf16.msra.mxu0 %v8753
    %13578 = vmatpush.bf16.msra.mxu0 %v8745
    %13579 = vmatpush.bf16.msra.mxu0 %v8737
    %13580 = vmatmul.bf16.gmra.mxu0 %v312
    %v13581 = vpop.f32.mrf.mxu0
    %v13582 = vadd.f32 %v13569, %v13581
    %v13583 = vpop.f32.mrf.mxu0
    %13584 = vdwg.mxu0
    %13585 = vmatpush.bf16.msra.mxu0 %v8857
    %13586 = vmatpush.bf16.msra.mxu0 %v8849
    %13587 = vmatpush.bf16.msra.mxu0 %v8841
    %13588 = vmatpush.bf16.msra.mxu0 %v8833
    %13589 = vmatpush.bf16.msra.mxu0 %v8825
    %13590 = vmatpush.bf16.msra.mxu0 %v8817
    %13591 = vmatpush.bf16.msra.mxu0 %v8809
    %13592 = vmatpush.bf16.msra.mxu0 %v8801
    %13593 = vmatmul.bf16.gmra.mxu0 %v313
    %v13594 = vpop.f32.mrf.mxu0
    %v13595 = vadd.f32 %v13582, %v13594
    %v13596 = vpop.f32.mrf.mxu0
    %13597 = vdwg.mxu0
    %13598 = vmatpush.bf16.msra.mxu0 %v8921
    %13599 = vmatpush.bf16.msra.mxu0 %v8913
    %13600 = vmatpush.bf16.msra.mxu0 %v8905
    %13601 = vmatpush.bf16.msra.mxu0 %v8897
    %13602 = vmatpush.bf16.msra.mxu0 %v8889
    %13603 = vmatpush.bf16.msra.mxu0 %v8881
    %13604 = vmatpush.bf16.msra.mxu0 %v8873
    %13605 = vmatpush.bf16.msra.mxu0 %v8865
    %13606 = vmatmul.bf16.gmra.mxu0 %v314
    %v13607 = vpop.f32.mrf.mxu0
    %v13608 = vadd.f32 %v13595, %v13607
    %v13609 = vpop.f32.mrf.mxu0
    %13610 = vdwg.mxu0
    %13611 = vmatpush.bf16.msra.mxu0 %v8985
    %13612 = vmatpush.bf16.msra.mxu0 %v8977
    %13613 = vmatpush.bf16.msra.mxu0 %v8969
    %13614 = vmatpush.bf16.msra.mxu0 %v8961
    %13615 = vmatpush.bf16.msra.mxu0 %v8953
    %13616 = vmatpush.bf16.msra.mxu0 %v8945
    %13617 = vmatpush.bf16.msra.mxu0 %v8937
    %13618 = vmatpush.bf16.msra.mxu0 %v8929
    %13619 = vmatmul.bf16.gmra.mxu0 %v315
    %v13620 = vpop.f32.mrf.mxu0
    %v13621 = vadd.f32 %v13608, %v13620
    %v13622 = vpop.f32.mrf.mxu0
    %13623 = vdwg.mxu0
    %13624 = vmatpush.bf16.msra.mxu0 %v9049
    %13625 = vmatpush.bf16.msra.mxu0 %v9041
    %13626 = vmatpush.bf16.msra.mxu0 %v9033
    %13627 = vmatpush.bf16.msra.mxu0 %v9025
    %13628 = vmatpush.bf16.msra.mxu0 %v9017
    %13629 = vmatpush.bf16.msra.mxu0 %v9009
    %13630 = vmatpush.bf16.msra.mxu0 %v9001
    %13631 = vmatpush.bf16.msra.mxu0 %v8993
    %13632 = vmatmul.bf16.gmra.mxu0 %v316
    %v13633 = vpop.f32.mrf.mxu0
    %v13634 = vadd.f32 %v13621, %v13633
    %v13635 = vpop.f32.mrf.mxu0
    %13636 = vdwg.mxu0
    %13637 = vmatpush.bf16.msra.mxu0 %v9113
    %13638 = vmatpush.bf16.msra.mxu0 %v9105
    %13639 = vmatpush.bf16.msra.mxu0 %v9097
    %13640 = vmatpush.bf16.msra.mxu0 %v9089
    %13641 = vmatpush.bf16.msra.mxu0 %v9081
    %13642 = vmatpush.bf16.msra.mxu0 %v9073
    %13643 = vmatpush.bf16.msra.mxu0 %v9065
    %13644 = vmatpush.bf16.msra.mxu0 %v9057
    %13645 = vmatmul.bf16.gmra.mxu0 %v317
    %v13646 = vpop.f32.mrf.mxu0
    %v13647 = vadd.f32 %v13634, %v13646
    %v13648 = vpop.f32.mrf.mxu0
    %13649 = vdwg.mxu0
    %13650 = vmatpush.bf16.msra.mxu0 %v9177
    %13651 = vmatpush.bf16.msra.mxu0 %v9169
    %13652 = vmatpush.bf16.msra.mxu0 %v9161
    %13653 = vmatpush.bf16.msra.mxu0 %v9153
    %13654 = vmatpush.bf16.msra.mxu0 %v9145
    %13655 = vmatpush.bf16.msra.mxu0 %v9137
    %13656 = vmatpush.bf16.msra.mxu0 %v9129
    %13657 = vmatpush.bf16.msra.mxu0 %v9121
    %13658 = vmatmul.bf16.gmra.mxu0 %v318
    %v13659 = vpop.f32.mrf.mxu0
    %v13660 = vadd.f32 %v13647, %v13659
    %v13661 = vpop.f32.mrf.mxu0
    %13662 = vdwg.mxu0
    %13663 = vmatpush.bf16.msra.mxu0 %v9241
    %13664 = vmatpush.bf16.msra.mxu0 %v9233
    %13665 = vmatpush.bf16.msra.mxu0 %v9225
    %13666 = vmatpush.bf16.msra.mxu0 %v9217
    %13667 = vmatpush.bf16.msra.mxu0 %v9209
    %13668 = vmatpush.bf16.msra.mxu0 %v9201
    %13669 = vmatpush.bf16.msra.mxu0 %v9193
    %13670 = vmatpush.bf16.msra.mxu0 %v9185
    %13671 = vmatmul.bf16.gmra.mxu0 %v319
    %v13672 = vpop.f32.mrf.mxu0
    %v13673 = vadd.f32 %v13660, %v13672
    %v13674 = vpop.f32.mrf.mxu0
    %13675 = vdwg.mxu0
    %13676 = vmatpush.bf16.msra.mxu0 %v9305
    %13677 = vmatpush.bf16.msra.mxu0 %v9297
    %13678 = vmatpush.bf16.msra.mxu0 %v9289
    %13679 = vmatpush.bf16.msra.mxu0 %v9281
    %13680 = vmatpush.bf16.msra.mxu0 %v9273
    %13681 = vmatpush.bf16.msra.mxu0 %v9265
    %13682 = vmatpush.bf16.msra.mxu0 %v9257
    %13683 = vmatpush.bf16.msra.mxu0 %v9249
    %13684 = vmatmul.bf16.gmra.mxu0 %v320
    %v13685 = vpop.f32.mrf.mxu0
    %v13686 = vadd.f32 %v13673, %v13685
    %v13687 = vpop.f32.mrf.mxu0
    %13688 = vdwg.mxu0
    %13689 = vmatpush.bf16.msra.mxu0 %v9369
    %13690 = vmatpush.bf16.msra.mxu0 %v9361
    %13691 = vmatpush.bf16.msra.mxu0 %v9353
    %13692 = vmatpush.bf16.msra.mxu0 %v9345
    %13693 = vmatpush.bf16.msra.mxu0 %v9337
    %13694 = vmatpush.bf16.msra.mxu0 %v9329
    %13695 = vmatpush.bf16.msra.mxu0 %v9321
    %13696 = vmatpush.bf16.msra.mxu0 %v9313
    %13697 = vmatmul.bf16.gmra.mxu0 %v321
    %v13698 = vpop.f32.mrf.mxu0
    %v13699 = vadd.f32 %v13686, %v13698
    %v13700 = vpop.f32.mrf.mxu0
    %13701 = vdwg.mxu0
    %13702 = vmatpush.bf16.msra.mxu0 %v9433
    %13703 = vmatpush.bf16.msra.mxu0 %v9425
    %13704 = vmatpush.bf16.msra.mxu0 %v9417
    %13705 = vmatpush.bf16.msra.mxu0 %v9409
    %13706 = vmatpush.bf16.msra.mxu0 %v9401
    %13707 = vmatpush.bf16.msra.mxu0 %v9393
    %13708 = vmatpush.bf16.msra.mxu0 %v9385
    %13709 = vmatpush.bf16.msra.mxu0 %v9377
    %13710 = vmatmul.bf16.gmra.mxu0 %v322
    %v13711 = vpop.f32.mrf.mxu0
    %v13712 = vadd.f32 %v13699, %v13711
    %v13713 = vpop.f32.mrf.mxu0
    %13714 = vdwg.mxu0
    %13715 = vmatpush.bf16.msra.mxu0 %v9497
    %13716 = vmatpush.bf16.msra.mxu0 %v9489
    %13717 = vmatpush.bf16.msra.mxu0 %v9481
    %13718 = vmatpush.bf16.msra.mxu0 %v9473
    %13719 = vmatpush.bf16.msra.mxu0 %v9465
    %13720 = vmatpush.bf16.msra.mxu0 %v9457
    %13721 = vmatpush.bf16.msra.mxu0 %v9449
    %13722 = vmatpush.bf16.msra.mxu0 %v9441
    %13723 = vmatmul.bf16.gmra.mxu0 %v323
    %v13724 = vpop.f32.mrf.mxu0
    %v13725 = vadd.f32 %v13712, %v13724
    %v13726 = vpop.f32.mrf.mxu0
    %13727 = vdwg.mxu0
    %13728 = vmatpush.bf16.msra.mxu0 %v9561
    %13729 = vmatpush.bf16.msra.mxu0 %v9553
    %13730 = vmatpush.bf16.msra.mxu0 %v9545
    %13731 = vmatpush.bf16.msra.mxu0 %v9537
    %13732 = vmatpush.bf16.msra.mxu0 %v9529
    %13733 = vmatpush.bf16.msra.mxu0 %v9521
    %13734 = vmatpush.bf16.msra.mxu0 %v9513
    %13735 = vmatpush.bf16.msra.mxu0 %v9505
    %13736 = vmatmul.bf16.gmra.mxu0 %v324
    %v13737 = vpop.f32.mrf.mxu0
    %v13738 = vadd.f32 %v13725, %v13737
    %v13739 = vpop.f32.mrf.mxu0
    %13740 = vdwg.mxu0
    %13741 = vmatpush.bf16.msra.mxu0 %v9625
    %13742 = vmatpush.bf16.msra.mxu0 %v9617
    %13743 = vmatpush.bf16.msra.mxu0 %v9609
    %13744 = vmatpush.bf16.msra.mxu0 %v9601
    %13745 = vmatpush.bf16.msra.mxu0 %v9593
    %13746 = vmatpush.bf16.msra.mxu0 %v9585
    %13747 = vmatpush.bf16.msra.mxu0 %v9577
    %13748 = vmatpush.bf16.msra.mxu0 %v9569
    %13749 = vmatmul.bf16.gmra.mxu0 %v325
    %v13750 = vpop.f32.mrf.mxu0
    %v13751 = vadd.f32 %v13738, %v13750
    %v13752 = vpop.f32.mrf.mxu0
    %13753 = vdwg.mxu0
    %13754 = vmatpush.bf16.msra.mxu0 %v9689
    %13755 = vmatpush.bf16.msra.mxu0 %v9681
    %13756 = vmatpush.bf16.msra.mxu0 %v9673
    %13757 = vmatpush.bf16.msra.mxu0 %v9665
    %13758 = vmatpush.bf16.msra.mxu0 %v9657
    %13759 = vmatpush.bf16.msra.mxu0 %v9649
    %13760 = vmatpush.bf16.msra.mxu0 %v9641
    %13761 = vmatpush.bf16.msra.mxu0 %v9633
    %13762 = vmatmul.bf16.gmra.mxu0 %v326
    %v13763 = vpop.f32.mrf.mxu0
    %v13764 = vadd.f32 %v13751, %v13763
    %v13765 = vpop.f32.mrf.mxu0
    %13766 = vdwg.mxu0
    %13767 = vmatpush.bf16.msra.mxu0 %v9753
    %13768 = vmatpush.bf16.msra.mxu0 %v9745
    %13769 = vmatpush.bf16.msra.mxu0 %v9737
    %13770 = vmatpush.bf16.msra.mxu0 %v9729
    %13771 = vmatpush.bf16.msra.mxu0 %v9721
    %13772 = vmatpush.bf16.msra.mxu0 %v9713
    %13773 = vmatpush.bf16.msra.mxu0 %v9705
    %13774 = vmatpush.bf16.msra.mxu0 %v9697
    %13775 = vmatmul.bf16.gmra.mxu0 %v327
    %v13776 = vpop.f32.mrf.mxu0
    %v13777 = vadd.f32 %v13764, %v13776
    %v13778 = vpop.f32.mrf.mxu0
    %13779 = vdwg.mxu0
    %13780 = vmatpush.bf16.msra.mxu0 %v9817
    %13781 = vmatpush.bf16.msra.mxu0 %v9809
    %13782 = vmatpush.bf16.msra.mxu0 %v9801
    %13783 = vmatpush.bf16.msra.mxu0 %v9793
    %13784 = vmatpush.bf16.msra.mxu0 %v9785
    %13785 = vmatpush.bf16.msra.mxu0 %v9777
    %13786 = vmatpush.bf16.msra.mxu0 %v9769
    %13787 = vmatpush.bf16.msra.mxu0 %v9761
    %13788 = vmatmul.bf16.gmra.mxu0 %v328
    %v13789 = vpop.f32.mrf.mxu0
    %v13790 = vadd.f32 %v13777, %v13789
    %v13791 = vpop.f32.mrf.mxu0
    %13792 = vdwg.mxu0
    %13793 = vmatpush.bf16.msra.mxu0 %v9881
    %13794 = vmatpush.bf16.msra.mxu0 %v9873
    %13795 = vmatpush.bf16.msra.mxu0 %v9865
    %13796 = vmatpush.bf16.msra.mxu0 %v9857
    %13797 = vmatpush.bf16.msra.mxu0 %v9849
    %13798 = vmatpush.bf16.msra.mxu0 %v9841
    %13799 = vmatpush.bf16.msra.mxu0 %v9833
    %13800 = vmatpush.bf16.msra.mxu0 %v9825
    %13801 = vmatmul.bf16.gmra.mxu0 %v329
    %v13802 = vpop.f32.mrf.mxu0
    %v13803 = vadd.f32 %v13790, %v13802
    %v13804 = vpop.f32.mrf.mxu0
    %13805 = vdwg.mxu0
    %13806 = vmatpush.bf16.msra.mxu0 %v9945
    %13807 = vmatpush.bf16.msra.mxu0 %v9937
    %13808 = vmatpush.bf16.msra.mxu0 %v9929
    %13809 = vmatpush.bf16.msra.mxu0 %v9921
    %13810 = vmatpush.bf16.msra.mxu0 %v9913
    %13811 = vmatpush.bf16.msra.mxu0 %v9905
    %13812 = vmatpush.bf16.msra.mxu0 %v9897
    %13813 = vmatpush.bf16.msra.mxu0 %v9889
    %13814 = vmatmul.bf16.gmra.mxu0 %v330
    %v13815 = vpop.f32.mrf.mxu0
    %v13816 = vadd.f32 %v13803, %v13815
    %v13817 = vpop.f32.mrf.mxu0
    %13818 = vdwg.mxu0
    %13819 = vmatpush.bf16.msra.mxu0 %v8090
    %13820 = vmatpush.bf16.msra.mxu0 %v8082
    %13821 = vmatpush.bf16.msra.mxu0 %v8074
    %13822 = vmatpush.bf16.msra.mxu0 %v8066
    %13823 = vmatpush.bf16.msra.mxu0 %v8058
    %13824 = vmatpush.bf16.msra.mxu0 %v8050
    %13825 = vmatpush.bf16.msra.mxu0 %v8042
    %13826 = vmatpush.bf16.msra.mxu0 %v8034
    %13827 = vmatmul.bf16.gmra.mxu0 %v301
    %v13828 = vpop.f32.mrf.mxu0
    %v13829 = vadd.f32 %v2258, %v13828
    %v13830 = vpop.f32.mrf.mxu0
    %13831 = vdwg.mxu0
    %13832 = vmatpush.bf16.msra.mxu0 %v8154
    %13833 = vmatpush.bf16.msra.mxu0 %v8146
    %13834 = vmatpush.bf16.msra.mxu0 %v8138
    %13835 = vmatpush.bf16.msra.mxu0 %v8130
    %13836 = vmatpush.bf16.msra.mxu0 %v8122
    %13837 = vmatpush.bf16.msra.mxu0 %v8114
    %13838 = vmatpush.bf16.msra.mxu0 %v8106
    %13839 = vmatpush.bf16.msra.mxu0 %v8098
    %13840 = vmatmul.bf16.gmra.mxu0 %v302
    %v13841 = vpop.f32.mrf.mxu0
    %v13842 = vadd.f32 %v13829, %v13841
    %v13843 = vpop.f32.mrf.mxu0
    %13844 = vdwg.mxu0
    %13845 = vmatpush.bf16.msra.mxu0 %v8218
    %13846 = vmatpush.bf16.msra.mxu0 %v8210
    %13847 = vmatpush.bf16.msra.mxu0 %v8202
    %13848 = vmatpush.bf16.msra.mxu0 %v8194
    %13849 = vmatpush.bf16.msra.mxu0 %v8186
    %13850 = vmatpush.bf16.msra.mxu0 %v8178
    %13851 = vmatpush.bf16.msra.mxu0 %v8170
    %13852 = vmatpush.bf16.msra.mxu0 %v8162
    %13853 = vmatmul.bf16.gmra.mxu0 %v303
    %v13854 = vpop.f32.mrf.mxu0
    %v13855 = vadd.f32 %v13842, %v13854
    %v13856 = vpop.f32.mrf.mxu0
    %13857 = vdwg.mxu0
    %13858 = vmatpush.bf16.msra.mxu0 %v8282
    %13859 = vmatpush.bf16.msra.mxu0 %v8274
    %13860 = vmatpush.bf16.msra.mxu0 %v8266
    %13861 = vmatpush.bf16.msra.mxu0 %v8258
    %13862 = vmatpush.bf16.msra.mxu0 %v8250
    %13863 = vmatpush.bf16.msra.mxu0 %v8242
    %13864 = vmatpush.bf16.msra.mxu0 %v8234
    %13865 = vmatpush.bf16.msra.mxu0 %v8226
    %13866 = vmatmul.bf16.gmra.mxu0 %v304
    %v13867 = vpop.f32.mrf.mxu0
    %v13868 = vadd.f32 %v13855, %v13867
    %v13869 = vpop.f32.mrf.mxu0
    %13870 = vdwg.mxu0
    %13871 = vmatpush.bf16.msra.mxu0 %v8346
    %13872 = vmatpush.bf16.msra.mxu0 %v8338
    %13873 = vmatpush.bf16.msra.mxu0 %v8330
    %13874 = vmatpush.bf16.msra.mxu0 %v8322
    %13875 = vmatpush.bf16.msra.mxu0 %v8314
    %13876 = vmatpush.bf16.msra.mxu0 %v8306
    %13877 = vmatpush.bf16.msra.mxu0 %v8298
    %13878 = vmatpush.bf16.msra.mxu0 %v8290
    %13879 = vmatmul.bf16.gmra.mxu0 %v305
    %v13880 = vpop.f32.mrf.mxu0
    %v13881 = vadd.f32 %v13868, %v13880
    %v13882 = vpop.f32.mrf.mxu0
    %13883 = vdwg.mxu0
    %13884 = vmatpush.bf16.msra.mxu0 %v8410
    %13885 = vmatpush.bf16.msra.mxu0 %v8402
    %13886 = vmatpush.bf16.msra.mxu0 %v8394
    %13887 = vmatpush.bf16.msra.mxu0 %v8386
    %13888 = vmatpush.bf16.msra.mxu0 %v8378
    %13889 = vmatpush.bf16.msra.mxu0 %v8370
    %13890 = vmatpush.bf16.msra.mxu0 %v8362
    %13891 = vmatpush.bf16.msra.mxu0 %v8354
    %13892 = vmatmul.bf16.gmra.mxu0 %v306
    %v13893 = vpop.f32.mrf.mxu0
    %v13894 = vadd.f32 %v13881, %v13893
    %v13895 = vpop.f32.mrf.mxu0
    %13896 = vdwg.mxu0
    %13897 = vmatpush.bf16.msra.mxu0 %v8474
    %13898 = vmatpush.bf16.msra.mxu0 %v8466
    %13899 = vmatpush.bf16.msra.mxu0 %v8458
    %13900 = vmatpush.bf16.msra.mxu0 %v8450
    %13901 = vmatpush.bf16.msra.mxu0 %v8442
    %13902 = vmatpush.bf16.msra.mxu0 %v8434
    %13903 = vmatpush.bf16.msra.mxu0 %v8426
    %13904 = vmatpush.bf16.msra.mxu0 %v8418
    %13905 = vmatmul.bf16.gmra.mxu0 %v307
    %v13906 = vpop.f32.mrf.mxu0
    %v13907 = vadd.f32 %v13894, %v13906
    %v13908 = vpop.f32.mrf.mxu0
    %13909 = vdwg.mxu0
    %13910 = vmatpush.bf16.msra.mxu0 %v8538
    %13911 = vmatpush.bf16.msra.mxu0 %v8530
    %13912 = vmatpush.bf16.msra.mxu0 %v8522
    %13913 = vmatpush.bf16.msra.mxu0 %v8514
    %13914 = vmatpush.bf16.msra.mxu0 %v8506
    %13915 = vmatpush.bf16.msra.mxu0 %v8498
    %13916 = vmatpush.bf16.msra.mxu0 %v8490
    %13917 = vmatpush.bf16.msra.mxu0 %v8482
    %13918 = vmatmul.bf16.gmra.mxu0 %v308
    %v13919 = vpop.f32.mrf.mxu0
    %v13920 = vadd.f32 %v13907, %v13919
    %v13921 = vpop.f32.mrf.mxu0
    %13922 = vdwg.mxu0
    %13923 = vmatpush.bf16.msra.mxu0 %v8602
    %13924 = vmatpush.bf16.msra.mxu0 %v8594
    %13925 = vmatpush.bf16.msra.mxu0 %v8586
    %13926 = vmatpush.bf16.msra.mxu0 %v8578
    %13927 = vmatpush.bf16.msra.mxu0 %v8570
    %13928 = vmatpush.bf16.msra.mxu0 %v8562
    %13929 = vmatpush.bf16.msra.mxu0 %v8554
    %13930 = vmatpush.bf16.msra.mxu0 %v8546
    %13931 = vmatmul.bf16.gmra.mxu0 %v309
    %v13932 = vpop.f32.mrf.mxu0
    %v13933 = vadd.f32 %v13920, %v13932
    %v13934 = vpop.f32.mrf.mxu0
    %13935 = vdwg.mxu0
    %13936 = vmatpush.bf16.msra.mxu0 %v8666
    %13937 = vmatpush.bf16.msra.mxu0 %v8658
    %13938 = vmatpush.bf16.msra.mxu0 %v8650
    %13939 = vmatpush.bf16.msra.mxu0 %v8642
    %13940 = vmatpush.bf16.msra.mxu0 %v8634
    %13941 = vmatpush.bf16.msra.mxu0 %v8626
    %13942 = vmatpush.bf16.msra.mxu0 %v8618
    %13943 = vmatpush.bf16.msra.mxu0 %v8610
    %13944 = vmatmul.bf16.gmra.mxu0 %v310
    %v13945 = vpop.f32.mrf.mxu0
    %v13946 = vadd.f32 %v13933, %v13945
    %v13947 = vpop.f32.mrf.mxu0
    %13948 = vdwg.mxu0
    %13949 = vmatpush.bf16.msra.mxu0 %v8730
    %13950 = vmatpush.bf16.msra.mxu0 %v8722
    %13951 = vmatpush.bf16.msra.mxu0 %v8714
    %13952 = vmatpush.bf16.msra.mxu0 %v8706
    %13953 = vmatpush.bf16.msra.mxu0 %v8698
    %13954 = vmatpush.bf16.msra.mxu0 %v8690
    %13955 = vmatpush.bf16.msra.mxu0 %v8682
    %13956 = vmatpush.bf16.msra.mxu0 %v8674
    %13957 = vmatmul.bf16.gmra.mxu0 %v311
    %v13958 = vpop.f32.mrf.mxu0
    %v13959 = vadd.f32 %v13946, %v13958
    %v13960 = vpop.f32.mrf.mxu0
    %13961 = vdwg.mxu0
    %13962 = vmatpush.bf16.msra.mxu0 %v8794
    %13963 = vmatpush.bf16.msra.mxu0 %v8786
    %13964 = vmatpush.bf16.msra.mxu0 %v8778
    %13965 = vmatpush.bf16.msra.mxu0 %v8770
    %13966 = vmatpush.bf16.msra.mxu0 %v8762
    %13967 = vmatpush.bf16.msra.mxu0 %v8754
    %13968 = vmatpush.bf16.msra.mxu0 %v8746
    %13969 = vmatpush.bf16.msra.mxu0 %v8738
    %13970 = vmatmul.bf16.gmra.mxu0 %v312
    %v13971 = vpop.f32.mrf.mxu0
    %v13972 = vadd.f32 %v13959, %v13971
    %v13973 = vpop.f32.mrf.mxu0
    %13974 = vdwg.mxu0
    %13975 = vmatpush.bf16.msra.mxu0 %v8858
    %13976 = vmatpush.bf16.msra.mxu0 %v8850
    %13977 = vmatpush.bf16.msra.mxu0 %v8842
    %13978 = vmatpush.bf16.msra.mxu0 %v8834
    %13979 = vmatpush.bf16.msra.mxu0 %v8826
    %13980 = vmatpush.bf16.msra.mxu0 %v8818
    %13981 = vmatpush.bf16.msra.mxu0 %v8810
    %13982 = vmatpush.bf16.msra.mxu0 %v8802
    %13983 = vmatmul.bf16.gmra.mxu0 %v313
    %v13984 = vpop.f32.mrf.mxu0
    %v13985 = vadd.f32 %v13972, %v13984
    %v13986 = vpop.f32.mrf.mxu0
    %13987 = vdwg.mxu0
    %13988 = vmatpush.bf16.msra.mxu0 %v8922
    %13989 = vmatpush.bf16.msra.mxu0 %v8914
    %13990 = vmatpush.bf16.msra.mxu0 %v8906
    %13991 = vmatpush.bf16.msra.mxu0 %v8898
    %13992 = vmatpush.bf16.msra.mxu0 %v8890
    %13993 = vmatpush.bf16.msra.mxu0 %v8882
    %13994 = vmatpush.bf16.msra.mxu0 %v8874
    %13995 = vmatpush.bf16.msra.mxu0 %v8866
    %13996 = vmatmul.bf16.gmra.mxu0 %v314
    %v13997 = vpop.f32.mrf.mxu0
    %v13998 = vadd.f32 %v13985, %v13997
    %v13999 = vpop.f32.mrf.mxu0
    %14000 = vdwg.mxu0
    %14001 = vmatpush.bf16.msra.mxu0 %v8986
    %14002 = vmatpush.bf16.msra.mxu0 %v8978
    %14003 = vmatpush.bf16.msra.mxu0 %v8970
    %14004 = vmatpush.bf16.msra.mxu0 %v8962
    %14005 = vmatpush.bf16.msra.mxu0 %v8954
    %14006 = vmatpush.bf16.msra.mxu0 %v8946
    %14007 = vmatpush.bf16.msra.mxu0 %v8938
    %14008 = vmatpush.bf16.msra.mxu0 %v8930
    %14009 = vmatmul.bf16.gmra.mxu0 %v315
    %v14010 = vpop.f32.mrf.mxu0
    %v14011 = vadd.f32 %v13998, %v14010
    %v14012 = vpop.f32.mrf.mxu0
    %14013 = vdwg.mxu0
    %14014 = vmatpush.bf16.msra.mxu0 %v9050
    %14015 = vmatpush.bf16.msra.mxu0 %v9042
    %14016 = vmatpush.bf16.msra.mxu0 %v9034
    %14017 = vmatpush.bf16.msra.mxu0 %v9026
    %14018 = vmatpush.bf16.msra.mxu0 %v9018
    %14019 = vmatpush.bf16.msra.mxu0 %v9010
    %14020 = vmatpush.bf16.msra.mxu0 %v9002
    %14021 = vmatpush.bf16.msra.mxu0 %v8994
    %14022 = vmatmul.bf16.gmra.mxu0 %v316
    %v14023 = vpop.f32.mrf.mxu0
    %v14024 = vadd.f32 %v14011, %v14023
    %v14025 = vpop.f32.mrf.mxu0
    %14026 = vdwg.mxu0
    %14027 = vmatpush.bf16.msra.mxu0 %v9114
    %14028 = vmatpush.bf16.msra.mxu0 %v9106
    %14029 = vmatpush.bf16.msra.mxu0 %v9098
    %14030 = vmatpush.bf16.msra.mxu0 %v9090
    %14031 = vmatpush.bf16.msra.mxu0 %v9082
    %14032 = vmatpush.bf16.msra.mxu0 %v9074
    %14033 = vmatpush.bf16.msra.mxu0 %v9066
    %14034 = vmatpush.bf16.msra.mxu0 %v9058
    %14035 = vmatmul.bf16.gmra.mxu0 %v317
    %v14036 = vpop.f32.mrf.mxu0
    %v14037 = vadd.f32 %v14024, %v14036
    %v14038 = vpop.f32.mrf.mxu0
    %14039 = vdwg.mxu0
    %14040 = vmatpush.bf16.msra.mxu0 %v9178
    %14041 = vmatpush.bf16.msra.mxu0 %v9170
    %14042 = vmatpush.bf16.msra.mxu0 %v9162
    %14043 = vmatpush.bf16.msra.mxu0 %v9154
    %14044 = vmatpush.bf16.msra.mxu0 %v9146
    %14045 = vmatpush.bf16.msra.mxu0 %v9138
    %14046 = vmatpush.bf16.msra.mxu0 %v9130
    %14047 = vmatpush.bf16.msra.mxu0 %v9122
    %14048 = vmatmul.bf16.gmra.mxu0 %v318
    %v14049 = vpop.f32.mrf.mxu0
    %v14050 = vadd.f32 %v14037, %v14049
    %v14051 = vpop.f32.mrf.mxu0
    %14052 = vdwg.mxu0
    %14053 = vmatpush.bf16.msra.mxu0 %v9242
    %14054 = vmatpush.bf16.msra.mxu0 %v9234
    %14055 = vmatpush.bf16.msra.mxu0 %v9226
    %14056 = vmatpush.bf16.msra.mxu0 %v9218
    %14057 = vmatpush.bf16.msra.mxu0 %v9210
    %14058 = vmatpush.bf16.msra.mxu0 %v9202
    %14059 = vmatpush.bf16.msra.mxu0 %v9194
    %14060 = vmatpush.bf16.msra.mxu0 %v9186
    %14061 = vmatmul.bf16.gmra.mxu0 %v319
    %v14062 = vpop.f32.mrf.mxu0
    %v14063 = vadd.f32 %v14050, %v14062
    %v14064 = vpop.f32.mrf.mxu0
    %14065 = vdwg.mxu0
    %14066 = vmatpush.bf16.msra.mxu0 %v9306
    %14067 = vmatpush.bf16.msra.mxu0 %v9298
    %14068 = vmatpush.bf16.msra.mxu0 %v9290
    %14069 = vmatpush.bf16.msra.mxu0 %v9282
    %14070 = vmatpush.bf16.msra.mxu0 %v9274
    %14071 = vmatpush.bf16.msra.mxu0 %v9266
    %14072 = vmatpush.bf16.msra.mxu0 %v9258
    %14073 = vmatpush.bf16.msra.mxu0 %v9250
    %14074 = vmatmul.bf16.gmra.mxu0 %v320
    %v14075 = vpop.f32.mrf.mxu0
    %v14076 = vadd.f32 %v14063, %v14075
    %v14077 = vpop.f32.mrf.mxu0
    %14078 = vdwg.mxu0
    %14079 = vmatpush.bf16.msra.mxu0 %v9370
    %14080 = vmatpush.bf16.msra.mxu0 %v9362
    %14081 = vmatpush.bf16.msra.mxu0 %v9354
    %14082 = vmatpush.bf16.msra.mxu0 %v9346
    %14083 = vmatpush.bf16.msra.mxu0 %v9338
    %14084 = vmatpush.bf16.msra.mxu0 %v9330
    %14085 = vmatpush.bf16.msra.mxu0 %v9322
    %14086 = vmatpush.bf16.msra.mxu0 %v9314
    %14087 = vmatmul.bf16.gmra.mxu0 %v321
    %v14088 = vpop.f32.mrf.mxu0
    %v14089 = vadd.f32 %v14076, %v14088
    %v14090 = vpop.f32.mrf.mxu0
    %14091 = vdwg.mxu0
    %14092 = vmatpush.bf16.msra.mxu0 %v9434
    %14093 = vmatpush.bf16.msra.mxu0 %v9426
    %14094 = vmatpush.bf16.msra.mxu0 %v9418
    %14095 = vmatpush.bf16.msra.mxu0 %v9410
    %14096 = vmatpush.bf16.msra.mxu0 %v9402
    %14097 = vmatpush.bf16.msra.mxu0 %v9394
    %14098 = vmatpush.bf16.msra.mxu0 %v9386
    %14099 = vmatpush.bf16.msra.mxu0 %v9378
    %14100 = vmatmul.bf16.gmra.mxu0 %v322
    %v14101 = vpop.f32.mrf.mxu0
    %v14102 = vadd.f32 %v14089, %v14101
    %v14103 = vpop.f32.mrf.mxu0
    %14104 = vdwg.mxu0
    %14105 = vmatpush.bf16.msra.mxu0 %v9498
    %14106 = vmatpush.bf16.msra.mxu0 %v9490
    %14107 = vmatpush.bf16.msra.mxu0 %v9482
    %14108 = vmatpush.bf16.msra.mxu0 %v9474
    %14109 = vmatpush.bf16.msra.mxu0 %v9466
    %14110 = vmatpush.bf16.msra.mxu0 %v9458
    %14111 = vmatpush.bf16.msra.mxu0 %v9450
    %14112 = vmatpush.bf16.msra.mxu0 %v9442
    %14113 = vmatmul.bf16.gmra.mxu0 %v323
    %v14114 = vpop.f32.mrf.mxu0
    %v14115 = vadd.f32 %v14102, %v14114
    %v14116 = vpop.f32.mrf.mxu0
    %14117 = vdwg.mxu0
    %14118 = vmatpush.bf16.msra.mxu0 %v9562
    %14119 = vmatpush.bf16.msra.mxu0 %v9554
    %14120 = vmatpush.bf16.msra.mxu0 %v9546
    %14121 = vmatpush.bf16.msra.mxu0 %v9538
    %14122 = vmatpush.bf16.msra.mxu0 %v9530
    %14123 = vmatpush.bf16.msra.mxu0 %v9522
    %14124 = vmatpush.bf16.msra.mxu0 %v9514
    %14125 = vmatpush.bf16.msra.mxu0 %v9506
    %14126 = vmatmul.bf16.gmra.mxu0 %v324
    %v14127 = vpop.f32.mrf.mxu0
    %v14128 = vadd.f32 %v14115, %v14127
    %v14129 = vpop.f32.mrf.mxu0
    %14130 = vdwg.mxu0
    %14131 = vmatpush.bf16.msra.mxu0 %v9626
    %14132 = vmatpush.bf16.msra.mxu0 %v9618
    %14133 = vmatpush.bf16.msra.mxu0 %v9610
    %14134 = vmatpush.bf16.msra.mxu0 %v9602
    %14135 = vmatpush.bf16.msra.mxu0 %v9594
    %14136 = vmatpush.bf16.msra.mxu0 %v9586
    %14137 = vmatpush.bf16.msra.mxu0 %v9578
    %14138 = vmatpush.bf16.msra.mxu0 %v9570
    %14139 = vmatmul.bf16.gmra.mxu0 %v325
    %v14140 = vpop.f32.mrf.mxu0
    %v14141 = vadd.f32 %v14128, %v14140
    %v14142 = vpop.f32.mrf.mxu0
    %14143 = vdwg.mxu0
    %14144 = vmatpush.bf16.msra.mxu0 %v9690
    %14145 = vmatpush.bf16.msra.mxu0 %v9682
    %14146 = vmatpush.bf16.msra.mxu0 %v9674
    %14147 = vmatpush.bf16.msra.mxu0 %v9666
    %14148 = vmatpush.bf16.msra.mxu0 %v9658
    %14149 = vmatpush.bf16.msra.mxu0 %v9650
    %14150 = vmatpush.bf16.msra.mxu0 %v9642
    %14151 = vmatpush.bf16.msra.mxu0 %v9634
    %14152 = vmatmul.bf16.gmra.mxu0 %v326
    %v14153 = vpop.f32.mrf.mxu0
    %v14154 = vadd.f32 %v14141, %v14153
    %v14155 = vpop.f32.mrf.mxu0
    %14156 = vdwg.mxu0
    %14157 = vmatpush.bf16.msra.mxu0 %v9754
    %14158 = vmatpush.bf16.msra.mxu0 %v9746
    %14159 = vmatpush.bf16.msra.mxu0 %v9738
    %14160 = vmatpush.bf16.msra.mxu0 %v9730
    %14161 = vmatpush.bf16.msra.mxu0 %v9722
    %14162 = vmatpush.bf16.msra.mxu0 %v9714
    %14163 = vmatpush.bf16.msra.mxu0 %v9706
    %14164 = vmatpush.bf16.msra.mxu0 %v9698
    %14165 = vmatmul.bf16.gmra.mxu0 %v327
    %v14166 = vpop.f32.mrf.mxu0
    %v14167 = vadd.f32 %v14154, %v14166
    %v14168 = vpop.f32.mrf.mxu0
    %14169 = vdwg.mxu0
    %14170 = vmatpush.bf16.msra.mxu0 %v9818
    %14171 = vmatpush.bf16.msra.mxu0 %v9810
    %14172 = vmatpush.bf16.msra.mxu0 %v9802
    %14173 = vmatpush.bf16.msra.mxu0 %v9794
    %14174 = vmatpush.bf16.msra.mxu0 %v9786
    %14175 = vmatpush.bf16.msra.mxu0 %v9778
    %14176 = vmatpush.bf16.msra.mxu0 %v9770
    %14177 = vmatpush.bf16.msra.mxu0 %v9762
    %14178 = vmatmul.bf16.gmra.mxu0 %v328
    %v14179 = vpop.f32.mrf.mxu0
    %v14180 = vadd.f32 %v14167, %v14179
    %v14181 = vpop.f32.mrf.mxu0
    %14182 = vdwg.mxu0
    %14183 = vmatpush.bf16.msra.mxu0 %v9882
    %14184 = vmatpush.bf16.msra.mxu0 %v9874
    %14185 = vmatpush.bf16.msra.mxu0 %v9866
    %14186 = vmatpush.bf16.msra.mxu0 %v9858
    %14187 = vmatpush.bf16.msra.mxu0 %v9850
    %14188 = vmatpush.bf16.msra.mxu0 %v9842
    %14189 = vmatpush.bf16.msra.mxu0 %v9834
    %14190 = vmatpush.bf16.msra.mxu0 %v9826
    %14191 = vmatmul.bf16.gmra.mxu0 %v329
    %v14192 = vpop.f32.mrf.mxu0
    %v14193 = vadd.f32 %v14180, %v14192
    %v14194 = vpop.f32.mrf.mxu0
    %14195 = vdwg.mxu0
    %14196 = vmatpush.bf16.msra.mxu0 %v9946
    %14197 = vmatpush.bf16.msra.mxu0 %v9938
    %14198 = vmatpush.bf16.msra.mxu0 %v9930
    %14199 = vmatpush.bf16.msra.mxu0 %v9922
    %14200 = vmatpush.bf16.msra.mxu0 %v9914
    %14201 = vmatpush.bf16.msra.mxu0 %v9906
    %14202 = vmatpush.bf16.msra.mxu0 %v9898
    %14203 = vmatpush.bf16.msra.mxu0 %v9890
    %14204 = vmatmul.bf16.gmra.mxu0 %v330
    %v14205 = vpop.f32.mrf.mxu0
    %v14206 = vadd.f32 %v14193, %v14205
    %v14207 = vpop.f32.mrf.mxu0
    %14208 = vdwg.mxu0
    %14209 = vmatpush.bf16.msra.mxu0 %v8091
    %14210 = vmatpush.bf16.msra.mxu0 %v8083
    %14211 = vmatpush.bf16.msra.mxu0 %v8075
    %14212 = vmatpush.bf16.msra.mxu0 %v8067
    %14213 = vmatpush.bf16.msra.mxu0 %v8059
    %14214 = vmatpush.bf16.msra.mxu0 %v8051
    %14215 = vmatpush.bf16.msra.mxu0 %v8043
    %14216 = vmatpush.bf16.msra.mxu0 %v8035
    %14217 = vmatmul.bf16.gmra.mxu0 %v301
    %v14218 = vpop.f32.mrf.mxu0
    %v14219 = vadd.f32 %v2259, %v14218
    %v14220 = vpop.f32.mrf.mxu0
    %14221 = vdwg.mxu0
    %14222 = vmatpush.bf16.msra.mxu0 %v8155
    %14223 = vmatpush.bf16.msra.mxu0 %v8147
    %14224 = vmatpush.bf16.msra.mxu0 %v8139
    %14225 = vmatpush.bf16.msra.mxu0 %v8131
    %14226 = vmatpush.bf16.msra.mxu0 %v8123
    %14227 = vmatpush.bf16.msra.mxu0 %v8115
    %14228 = vmatpush.bf16.msra.mxu0 %v8107
    %14229 = vmatpush.bf16.msra.mxu0 %v8099
    %14230 = vmatmul.bf16.gmra.mxu0 %v302
    %v14231 = vpop.f32.mrf.mxu0
    %v14232 = vadd.f32 %v14219, %v14231
    %v14233 = vpop.f32.mrf.mxu0
    %14234 = vdwg.mxu0
    %14235 = vmatpush.bf16.msra.mxu0 %v8219
    %14236 = vmatpush.bf16.msra.mxu0 %v8211
    %14237 = vmatpush.bf16.msra.mxu0 %v8203
    %14238 = vmatpush.bf16.msra.mxu0 %v8195
    %14239 = vmatpush.bf16.msra.mxu0 %v8187
    %14240 = vmatpush.bf16.msra.mxu0 %v8179
    %14241 = vmatpush.bf16.msra.mxu0 %v8171
    %14242 = vmatpush.bf16.msra.mxu0 %v8163
    %14243 = vmatmul.bf16.gmra.mxu0 %v303
    %v14244 = vpop.f32.mrf.mxu0
    %v14245 = vadd.f32 %v14232, %v14244
    %v14246 = vpop.f32.mrf.mxu0
    %14247 = vdwg.mxu0
    %14248 = vmatpush.bf16.msra.mxu0 %v8283
    %14249 = vmatpush.bf16.msra.mxu0 %v8275
    %14250 = vmatpush.bf16.msra.mxu0 %v8267
    %14251 = vmatpush.bf16.msra.mxu0 %v8259
    %14252 = vmatpush.bf16.msra.mxu0 %v8251
    %14253 = vmatpush.bf16.msra.mxu0 %v8243
    %14254 = vmatpush.bf16.msra.mxu0 %v8235
    %14255 = vmatpush.bf16.msra.mxu0 %v8227
    %14256 = vmatmul.bf16.gmra.mxu0 %v304
    %v14257 = vpop.f32.mrf.mxu0
    %v14258 = vadd.f32 %v14245, %v14257
    %v14259 = vpop.f32.mrf.mxu0
    %14260 = vdwg.mxu0
    %14261 = vmatpush.bf16.msra.mxu0 %v8347
    %14262 = vmatpush.bf16.msra.mxu0 %v8339
    %14263 = vmatpush.bf16.msra.mxu0 %v8331
    %14264 = vmatpush.bf16.msra.mxu0 %v8323
    %14265 = vmatpush.bf16.msra.mxu0 %v8315
    %14266 = vmatpush.bf16.msra.mxu0 %v8307
    %14267 = vmatpush.bf16.msra.mxu0 %v8299
    %14268 = vmatpush.bf16.msra.mxu0 %v8291
    %14269 = vmatmul.bf16.gmra.mxu0 %v305
    %v14270 = vpop.f32.mrf.mxu0
    %v14271 = vadd.f32 %v14258, %v14270
    %v14272 = vpop.f32.mrf.mxu0
    %14273 = vdwg.mxu0
    %14274 = vmatpush.bf16.msra.mxu0 %v8411
    %14275 = vmatpush.bf16.msra.mxu0 %v8403
    %14276 = vmatpush.bf16.msra.mxu0 %v8395
    %14277 = vmatpush.bf16.msra.mxu0 %v8387
    %14278 = vmatpush.bf16.msra.mxu0 %v8379
    %14279 = vmatpush.bf16.msra.mxu0 %v8371
    %14280 = vmatpush.bf16.msra.mxu0 %v8363
    %14281 = vmatpush.bf16.msra.mxu0 %v8355
    %14282 = vmatmul.bf16.gmra.mxu0 %v306
    %v14283 = vpop.f32.mrf.mxu0
    %v14284 = vadd.f32 %v14271, %v14283
    %v14285 = vpop.f32.mrf.mxu0
    %14286 = vdwg.mxu0
    %14287 = vmatpush.bf16.msra.mxu0 %v8475
    %14288 = vmatpush.bf16.msra.mxu0 %v8467
    %14289 = vmatpush.bf16.msra.mxu0 %v8459
    %14290 = vmatpush.bf16.msra.mxu0 %v8451
    %14291 = vmatpush.bf16.msra.mxu0 %v8443
    %14292 = vmatpush.bf16.msra.mxu0 %v8435
    %14293 = vmatpush.bf16.msra.mxu0 %v8427
    %14294 = vmatpush.bf16.msra.mxu0 %v8419
    %14295 = vmatmul.bf16.gmra.mxu0 %v307
    %v14296 = vpop.f32.mrf.mxu0
    %v14297 = vadd.f32 %v14284, %v14296
    %v14298 = vpop.f32.mrf.mxu0
    %14299 = vdwg.mxu0
    %14300 = vmatpush.bf16.msra.mxu0 %v8539
    %14301 = vmatpush.bf16.msra.mxu0 %v8531
    %14302 = vmatpush.bf16.msra.mxu0 %v8523
    %14303 = vmatpush.bf16.msra.mxu0 %v8515
    %14304 = vmatpush.bf16.msra.mxu0 %v8507
    %14305 = vmatpush.bf16.msra.mxu0 %v8499
    %14306 = vmatpush.bf16.msra.mxu0 %v8491
    %14307 = vmatpush.bf16.msra.mxu0 %v8483
    %14308 = vmatmul.bf16.gmra.mxu0 %v308
    %v14309 = vpop.f32.mrf.mxu0
    %v14310 = vadd.f32 %v14297, %v14309
    %v14311 = vpop.f32.mrf.mxu0
    %14312 = vdwg.mxu0
    %14313 = vmatpush.bf16.msra.mxu0 %v8603
    %14314 = vmatpush.bf16.msra.mxu0 %v8595
    %14315 = vmatpush.bf16.msra.mxu0 %v8587
    %14316 = vmatpush.bf16.msra.mxu0 %v8579
    %14317 = vmatpush.bf16.msra.mxu0 %v8571
    %14318 = vmatpush.bf16.msra.mxu0 %v8563
    %14319 = vmatpush.bf16.msra.mxu0 %v8555
    %14320 = vmatpush.bf16.msra.mxu0 %v8547
    %14321 = vmatmul.bf16.gmra.mxu0 %v309
    %v14322 = vpop.f32.mrf.mxu0
    %v14323 = vadd.f32 %v14310, %v14322
    %v14324 = vpop.f32.mrf.mxu0
    %14325 = vdwg.mxu0
    %14326 = vmatpush.bf16.msra.mxu0 %v8667
    %14327 = vmatpush.bf16.msra.mxu0 %v8659
    %14328 = vmatpush.bf16.msra.mxu0 %v8651
    %14329 = vmatpush.bf16.msra.mxu0 %v8643
    %14330 = vmatpush.bf16.msra.mxu0 %v8635
    %14331 = vmatpush.bf16.msra.mxu0 %v8627
    %14332 = vmatpush.bf16.msra.mxu0 %v8619
    %14333 = vmatpush.bf16.msra.mxu0 %v8611
    %14334 = vmatmul.bf16.gmra.mxu0 %v310
    %v14335 = vpop.f32.mrf.mxu0
    %v14336 = vadd.f32 %v14323, %v14335
    %v14337 = vpop.f32.mrf.mxu0
    %14338 = vdwg.mxu0
    %14339 = vmatpush.bf16.msra.mxu0 %v8731
    %14340 = vmatpush.bf16.msra.mxu0 %v8723
    %14341 = vmatpush.bf16.msra.mxu0 %v8715
    %14342 = vmatpush.bf16.msra.mxu0 %v8707
    %14343 = vmatpush.bf16.msra.mxu0 %v8699
    %14344 = vmatpush.bf16.msra.mxu0 %v8691
    %14345 = vmatpush.bf16.msra.mxu0 %v8683
    %14346 = vmatpush.bf16.msra.mxu0 %v8675
    %14347 = vmatmul.bf16.gmra.mxu0 %v311
    %v14348 = vpop.f32.mrf.mxu0
    %v14349 = vadd.f32 %v14336, %v14348
    %v14350 = vpop.f32.mrf.mxu0
    %14351 = vdwg.mxu0
    %14352 = vmatpush.bf16.msra.mxu0 %v8795
    %14353 = vmatpush.bf16.msra.mxu0 %v8787
    %14354 = vmatpush.bf16.msra.mxu0 %v8779
    %14355 = vmatpush.bf16.msra.mxu0 %v8771
    %14356 = vmatpush.bf16.msra.mxu0 %v8763
    %14357 = vmatpush.bf16.msra.mxu0 %v8755
    %14358 = vmatpush.bf16.msra.mxu0 %v8747
    %14359 = vmatpush.bf16.msra.mxu0 %v8739
    %14360 = vmatmul.bf16.gmra.mxu0 %v312
    %v14361 = vpop.f32.mrf.mxu0
    %v14362 = vadd.f32 %v14349, %v14361
    %v14363 = vpop.f32.mrf.mxu0
    %14364 = vdwg.mxu0
    %14365 = vmatpush.bf16.msra.mxu0 %v8859
    %14366 = vmatpush.bf16.msra.mxu0 %v8851
    %14367 = vmatpush.bf16.msra.mxu0 %v8843
    %14368 = vmatpush.bf16.msra.mxu0 %v8835
    %14369 = vmatpush.bf16.msra.mxu0 %v8827
    %14370 = vmatpush.bf16.msra.mxu0 %v8819
    %14371 = vmatpush.bf16.msra.mxu0 %v8811
    %14372 = vmatpush.bf16.msra.mxu0 %v8803
    %14373 = vmatmul.bf16.gmra.mxu0 %v313
    %v14374 = vpop.f32.mrf.mxu0
    %v14375 = vadd.f32 %v14362, %v14374
    %v14376 = vpop.f32.mrf.mxu0
    %14377 = vdwg.mxu0
    %14378 = vmatpush.bf16.msra.mxu0 %v8923
    %14379 = vmatpush.bf16.msra.mxu0 %v8915
    %14380 = vmatpush.bf16.msra.mxu0 %v8907
    %14381 = vmatpush.bf16.msra.mxu0 %v8899
    %14382 = vmatpush.bf16.msra.mxu0 %v8891
    %14383 = vmatpush.bf16.msra.mxu0 %v8883
    %14384 = vmatpush.bf16.msra.mxu0 %v8875
    %14385 = vmatpush.bf16.msra.mxu0 %v8867
    %14386 = vmatmul.bf16.gmra.mxu0 %v314
    %v14387 = vpop.f32.mrf.mxu0
    %v14388 = vadd.f32 %v14375, %v14387
    %v14389 = vpop.f32.mrf.mxu0
    %14390 = vdwg.mxu0
    %14391 = vmatpush.bf16.msra.mxu0 %v8987
    %14392 = vmatpush.bf16.msra.mxu0 %v8979
    %14393 = vmatpush.bf16.msra.mxu0 %v8971
    %14394 = vmatpush.bf16.msra.mxu0 %v8963
    %14395 = vmatpush.bf16.msra.mxu0 %v8955
    %14396 = vmatpush.bf16.msra.mxu0 %v8947
    %14397 = vmatpush.bf16.msra.mxu0 %v8939
    %14398 = vmatpush.bf16.msra.mxu0 %v8931
    %14399 = vmatmul.bf16.gmra.mxu0 %v315
    %v14400 = vpop.f32.mrf.mxu0
    %v14401 = vadd.f32 %v14388, %v14400
    %v14402 = vpop.f32.mrf.mxu0
    %14403 = vdwg.mxu0
    %14404 = vmatpush.bf16.msra.mxu0 %v9051
    %14405 = vmatpush.bf16.msra.mxu0 %v9043
    %14406 = vmatpush.bf16.msra.mxu0 %v9035
    %14407 = vmatpush.bf16.msra.mxu0 %v9027
    %14408 = vmatpush.bf16.msra.mxu0 %v9019
    %14409 = vmatpush.bf16.msra.mxu0 %v9011
    %14410 = vmatpush.bf16.msra.mxu0 %v9003
    %14411 = vmatpush.bf16.msra.mxu0 %v8995
    %14412 = vmatmul.bf16.gmra.mxu0 %v316
    %v14413 = vpop.f32.mrf.mxu0
    %v14414 = vadd.f32 %v14401, %v14413
    %v14415 = vpop.f32.mrf.mxu0
    %14416 = vdwg.mxu0
    %14417 = vmatpush.bf16.msra.mxu0 %v9115
    %14418 = vmatpush.bf16.msra.mxu0 %v9107
    %14419 = vmatpush.bf16.msra.mxu0 %v9099
    %14420 = vmatpush.bf16.msra.mxu0 %v9091
    %14421 = vmatpush.bf16.msra.mxu0 %v9083
    %14422 = vmatpush.bf16.msra.mxu0 %v9075
    %14423 = vmatpush.bf16.msra.mxu0 %v9067
    %14424 = vmatpush.bf16.msra.mxu0 %v9059
    %14425 = vmatmul.bf16.gmra.mxu0 %v317
    %v14426 = vpop.f32.mrf.mxu0
    %v14427 = vadd.f32 %v14414, %v14426
    %v14428 = vpop.f32.mrf.mxu0
    %14429 = vdwg.mxu0
    %14430 = vmatpush.bf16.msra.mxu0 %v9179
    %14431 = vmatpush.bf16.msra.mxu0 %v9171
    %14432 = vmatpush.bf16.msra.mxu0 %v9163
    %14433 = vmatpush.bf16.msra.mxu0 %v9155
    %14434 = vmatpush.bf16.msra.mxu0 %v9147
    %14435 = vmatpush.bf16.msra.mxu0 %v9139
    %14436 = vmatpush.bf16.msra.mxu0 %v9131
    %14437 = vmatpush.bf16.msra.mxu0 %v9123
    %14438 = vmatmul.bf16.gmra.mxu0 %v318
    %v14439 = vpop.f32.mrf.mxu0
    %v14440 = vadd.f32 %v14427, %v14439
    %v14441 = vpop.f32.mrf.mxu0
    %14442 = vdwg.mxu0
    %14443 = vmatpush.bf16.msra.mxu0 %v9243
    %14444 = vmatpush.bf16.msra.mxu0 %v9235
    %14445 = vmatpush.bf16.msra.mxu0 %v9227
    %14446 = vmatpush.bf16.msra.mxu0 %v9219
    %14447 = vmatpush.bf16.msra.mxu0 %v9211
    %14448 = vmatpush.bf16.msra.mxu0 %v9203
    %14449 = vmatpush.bf16.msra.mxu0 %v9195
    %14450 = vmatpush.bf16.msra.mxu0 %v9187
    %14451 = vmatmul.bf16.gmra.mxu0 %v319
    %v14452 = vpop.f32.mrf.mxu0
    %v14453 = vadd.f32 %v14440, %v14452
    %v14454 = vpop.f32.mrf.mxu0
    %14455 = vdwg.mxu0
    %14456 = vmatpush.bf16.msra.mxu0 %v9307
    %14457 = vmatpush.bf16.msra.mxu0 %v9299
    %14458 = vmatpush.bf16.msra.mxu0 %v9291
    %14459 = vmatpush.bf16.msra.mxu0 %v9283
    %14460 = vmatpush.bf16.msra.mxu0 %v9275
    %14461 = vmatpush.bf16.msra.mxu0 %v9267
    %14462 = vmatpush.bf16.msra.mxu0 %v9259
    %14463 = vmatpush.bf16.msra.mxu0 %v9251
    %14464 = vmatmul.bf16.gmra.mxu0 %v320
    %v14465 = vpop.f32.mrf.mxu0
    %v14466 = vadd.f32 %v14453, %v14465
    %v14467 = vpop.f32.mrf.mxu0
    %14468 = vdwg.mxu0
    %14469 = vmatpush.bf16.msra.mxu0 %v9371
    %14470 = vmatpush.bf16.msra.mxu0 %v9363
    %14471 = vmatpush.bf16.msra.mxu0 %v9355
    %14472 = vmatpush.bf16.msra.mxu0 %v9347
    %14473 = vmatpush.bf16.msra.mxu0 %v9339
    %14474 = vmatpush.bf16.msra.mxu0 %v9331
    %14475 = vmatpush.bf16.msra.mxu0 %v9323
    %14476 = vmatpush.bf16.msra.mxu0 %v9315
    %14477 = vmatmul.bf16.gmra.mxu0 %v321
    %v14478 = vpop.f32.mrf.mxu0
    %v14479 = vadd.f32 %v14466, %v14478
    %v14480 = vpop.f32.mrf.mxu0
    %14481 = vdwg.mxu0
    %14482 = vmatpush.bf16.msra.mxu0 %v9435
    %14483 = vmatpush.bf16.msra.mxu0 %v9427
    %14484 = vmatpush.bf16.msra.mxu0 %v9419
    %14485 = vmatpush.bf16.msra.mxu0 %v9411
    %14486 = vmatpush.bf16.msra.mxu0 %v9403
    %14487 = vmatpush.bf16.msra.mxu0 %v9395
    %14488 = vmatpush.bf16.msra.mxu0 %v9387
    %14489 = vmatpush.bf16.msra.mxu0 %v9379
    %14490 = vmatmul.bf16.gmra.mxu0 %v322
    %v14491 = vpop.f32.mrf.mxu0
    %v14492 = vadd.f32 %v14479, %v14491
    %v14493 = vpop.f32.mrf.mxu0
    %14494 = vdwg.mxu0
    %14495 = vmatpush.bf16.msra.mxu0 %v9499
    %14496 = vmatpush.bf16.msra.mxu0 %v9491
    %14497 = vmatpush.bf16.msra.mxu0 %v9483
    %14498 = vmatpush.bf16.msra.mxu0 %v9475
    %14499 = vmatpush.bf16.msra.mxu0 %v9467
    %14500 = vmatpush.bf16.msra.mxu0 %v9459
    %14501 = vmatpush.bf16.msra.mxu0 %v9451
    %14502 = vmatpush.bf16.msra.mxu0 %v9443
    %14503 = vmatmul.bf16.gmra.mxu0 %v323
    %v14504 = vpop.f32.mrf.mxu0
    %v14505 = vadd.f32 %v14492, %v14504
    %v14506 = vpop.f32.mrf.mxu0
    %14507 = vdwg.mxu0
    %14508 = vmatpush.bf16.msra.mxu0 %v9563
    %14509 = vmatpush.bf16.msra.mxu0 %v9555
    %14510 = vmatpush.bf16.msra.mxu0 %v9547
    %14511 = vmatpush.bf16.msra.mxu0 %v9539
    %14512 = vmatpush.bf16.msra.mxu0 %v9531
    %14513 = vmatpush.bf16.msra.mxu0 %v9523
    %14514 = vmatpush.bf16.msra.mxu0 %v9515
    %14515 = vmatpush.bf16.msra.mxu0 %v9507
    %14516 = vmatmul.bf16.gmra.mxu0 %v324
    %v14517 = vpop.f32.mrf.mxu0
    %v14518 = vadd.f32 %v14505, %v14517
    %v14519 = vpop.f32.mrf.mxu0
    %14520 = vdwg.mxu0
    %14521 = vmatpush.bf16.msra.mxu0 %v9627
    %14522 = vmatpush.bf16.msra.mxu0 %v9619
    %14523 = vmatpush.bf16.msra.mxu0 %v9611
    %14524 = vmatpush.bf16.msra.mxu0 %v9603
    %14525 = vmatpush.bf16.msra.mxu0 %v9595
    %14526 = vmatpush.bf16.msra.mxu0 %v9587
    %14527 = vmatpush.bf16.msra.mxu0 %v9579
    %14528 = vmatpush.bf16.msra.mxu0 %v9571
    %14529 = vmatmul.bf16.gmra.mxu0 %v325
    %v14530 = vpop.f32.mrf.mxu0
    %v14531 = vadd.f32 %v14518, %v14530
    %v14532 = vpop.f32.mrf.mxu0
    %14533 = vdwg.mxu0
    %14534 = vmatpush.bf16.msra.mxu0 %v9691
    %14535 = vmatpush.bf16.msra.mxu0 %v9683
    %14536 = vmatpush.bf16.msra.mxu0 %v9675
    %14537 = vmatpush.bf16.msra.mxu0 %v9667
    %14538 = vmatpush.bf16.msra.mxu0 %v9659
    %14539 = vmatpush.bf16.msra.mxu0 %v9651
    %14540 = vmatpush.bf16.msra.mxu0 %v9643
    %14541 = vmatpush.bf16.msra.mxu0 %v9635
    %14542 = vmatmul.bf16.gmra.mxu0 %v326
    %v14543 = vpop.f32.mrf.mxu0
    %v14544 = vadd.f32 %v14531, %v14543
    %v14545 = vpop.f32.mrf.mxu0
    %14546 = vdwg.mxu0
    %14547 = vmatpush.bf16.msra.mxu0 %v9755
    %14548 = vmatpush.bf16.msra.mxu0 %v9747
    %14549 = vmatpush.bf16.msra.mxu0 %v9739
    %14550 = vmatpush.bf16.msra.mxu0 %v9731
    %14551 = vmatpush.bf16.msra.mxu0 %v9723
    %14552 = vmatpush.bf16.msra.mxu0 %v9715
    %14553 = vmatpush.bf16.msra.mxu0 %v9707
    %14554 = vmatpush.bf16.msra.mxu0 %v9699
    %14555 = vmatmul.bf16.gmra.mxu0 %v327
    %v14556 = vpop.f32.mrf.mxu0
    %v14557 = vadd.f32 %v14544, %v14556
    %v14558 = vpop.f32.mrf.mxu0
    %14559 = vdwg.mxu0
    %14560 = vmatpush.bf16.msra.mxu0 %v9819
    %14561 = vmatpush.bf16.msra.mxu0 %v9811
    %14562 = vmatpush.bf16.msra.mxu0 %v9803
    %14563 = vmatpush.bf16.msra.mxu0 %v9795
    %14564 = vmatpush.bf16.msra.mxu0 %v9787
    %14565 = vmatpush.bf16.msra.mxu0 %v9779
    %14566 = vmatpush.bf16.msra.mxu0 %v9771
    %14567 = vmatpush.bf16.msra.mxu0 %v9763
    %14568 = vmatmul.bf16.gmra.mxu0 %v328
    %v14569 = vpop.f32.mrf.mxu0
    %v14570 = vadd.f32 %v14557, %v14569
    %v14571 = vpop.f32.mrf.mxu0
    %14572 = vdwg.mxu0
    %14573 = vmatpush.bf16.msra.mxu0 %v9883
    %14574 = vmatpush.bf16.msra.mxu0 %v9875
    %14575 = vmatpush.bf16.msra.mxu0 %v9867
    %14576 = vmatpush.bf16.msra.mxu0 %v9859
    %14577 = vmatpush.bf16.msra.mxu0 %v9851
    %14578 = vmatpush.bf16.msra.mxu0 %v9843
    %14579 = vmatpush.bf16.msra.mxu0 %v9835
    %14580 = vmatpush.bf16.msra.mxu0 %v9827
    %14581 = vmatmul.bf16.gmra.mxu0 %v329
    %v14582 = vpop.f32.mrf.mxu0
    %v14583 = vadd.f32 %v14570, %v14582
    %v14584 = vpop.f32.mrf.mxu0
    %14585 = vdwg.mxu0
    %14586 = vmatpush.bf16.msra.mxu0 %v9947
    %14587 = vmatpush.bf16.msra.mxu0 %v9939
    %14588 = vmatpush.bf16.msra.mxu0 %v9931
    %14589 = vmatpush.bf16.msra.mxu0 %v9923
    %14590 = vmatpush.bf16.msra.mxu0 %v9915
    %14591 = vmatpush.bf16.msra.mxu0 %v9907
    %14592 = vmatpush.bf16.msra.mxu0 %v9899
    %14593 = vmatpush.bf16.msra.mxu0 %v9891
    %14594 = vmatmul.bf16.gmra.mxu0 %v330
    %v14595 = vpop.f32.mrf.mxu0
    %v14596 = vadd.f32 %v14583, %v14595
    %v14597 = vpop.f32.mrf.mxu0
    %14598 = vdwg.mxu0
    %14599 = vmatpush.bf16.msra.mxu0 %v8092
    %14600 = vmatpush.bf16.msra.mxu0 %v8084
    %14601 = vmatpush.bf16.msra.mxu0 %v8076
    %14602 = vmatpush.bf16.msra.mxu0 %v8068
    %14603 = vmatpush.bf16.msra.mxu0 %v8060
    %14604 = vmatpush.bf16.msra.mxu0 %v8052
    %14605 = vmatpush.bf16.msra.mxu0 %v8044
    %14606 = vmatpush.bf16.msra.mxu0 %v8036
    %14607 = vmatmul.bf16.gmra.mxu0 %v301
    %v14608 = vpop.f32.mrf.mxu0
    %v14609 = vadd.f32 %v2260, %v14608
    %v14610 = vpop.f32.mrf.mxu0
    %14611 = vdwg.mxu0
    %14612 = vmatpush.bf16.msra.mxu0 %v8156
    %14613 = vmatpush.bf16.msra.mxu0 %v8148
    %14614 = vmatpush.bf16.msra.mxu0 %v8140
    %14615 = vmatpush.bf16.msra.mxu0 %v8132
    %14616 = vmatpush.bf16.msra.mxu0 %v8124
    %14617 = vmatpush.bf16.msra.mxu0 %v8116
    %14618 = vmatpush.bf16.msra.mxu0 %v8108
    %14619 = vmatpush.bf16.msra.mxu0 %v8100
    %14620 = vmatmul.bf16.gmra.mxu0 %v302
    %v14621 = vpop.f32.mrf.mxu0
    %v14622 = vadd.f32 %v14609, %v14621
    %v14623 = vpop.f32.mrf.mxu0
    %14624 = vdwg.mxu0
    %14625 = vmatpush.bf16.msra.mxu0 %v8220
    %14626 = vmatpush.bf16.msra.mxu0 %v8212
    %14627 = vmatpush.bf16.msra.mxu0 %v8204
    %14628 = vmatpush.bf16.msra.mxu0 %v8196
    %14629 = vmatpush.bf16.msra.mxu0 %v8188
    %14630 = vmatpush.bf16.msra.mxu0 %v8180
    %14631 = vmatpush.bf16.msra.mxu0 %v8172
    %14632 = vmatpush.bf16.msra.mxu0 %v8164
    %14633 = vmatmul.bf16.gmra.mxu0 %v303
    %v14634 = vpop.f32.mrf.mxu0
    %v14635 = vadd.f32 %v14622, %v14634
    %v14636 = vpop.f32.mrf.mxu0
    %14637 = vdwg.mxu0
    %14638 = vmatpush.bf16.msra.mxu0 %v8284
    %14639 = vmatpush.bf16.msra.mxu0 %v8276
    %14640 = vmatpush.bf16.msra.mxu0 %v8268
    %14641 = vmatpush.bf16.msra.mxu0 %v8260
    %14642 = vmatpush.bf16.msra.mxu0 %v8252
    %14643 = vmatpush.bf16.msra.mxu0 %v8244
    %14644 = vmatpush.bf16.msra.mxu0 %v8236
    %14645 = vmatpush.bf16.msra.mxu0 %v8228
    %14646 = vmatmul.bf16.gmra.mxu0 %v304
    %v14647 = vpop.f32.mrf.mxu0
    %v14648 = vadd.f32 %v14635, %v14647
    %v14649 = vpop.f32.mrf.mxu0
    %14650 = vdwg.mxu0
    %14651 = vmatpush.bf16.msra.mxu0 %v8348
    %14652 = vmatpush.bf16.msra.mxu0 %v8340
    %14653 = vmatpush.bf16.msra.mxu0 %v8332
    %14654 = vmatpush.bf16.msra.mxu0 %v8324
    %14655 = vmatpush.bf16.msra.mxu0 %v8316
    %14656 = vmatpush.bf16.msra.mxu0 %v8308
    %14657 = vmatpush.bf16.msra.mxu0 %v8300
    %14658 = vmatpush.bf16.msra.mxu0 %v8292
    %14659 = vmatmul.bf16.gmra.mxu0 %v305
    %v14660 = vpop.f32.mrf.mxu0
    %v14661 = vadd.f32 %v14648, %v14660
    %v14662 = vpop.f32.mrf.mxu0
    %14663 = vdwg.mxu0
    %14664 = vmatpush.bf16.msra.mxu0 %v8412
    %14665 = vmatpush.bf16.msra.mxu0 %v8404
    %14666 = vmatpush.bf16.msra.mxu0 %v8396
    %14667 = vmatpush.bf16.msra.mxu0 %v8388
    %14668 = vmatpush.bf16.msra.mxu0 %v8380
    %14669 = vmatpush.bf16.msra.mxu0 %v8372
    %14670 = vmatpush.bf16.msra.mxu0 %v8364
    %14671 = vmatpush.bf16.msra.mxu0 %v8356
    %14672 = vmatmul.bf16.gmra.mxu0 %v306
    %v14673 = vpop.f32.mrf.mxu0
    %v14674 = vadd.f32 %v14661, %v14673
    %v14675 = vpop.f32.mrf.mxu0
    %14676 = vdwg.mxu0
    %14677 = vmatpush.bf16.msra.mxu0 %v8476
    %14678 = vmatpush.bf16.msra.mxu0 %v8468
    %14679 = vmatpush.bf16.msra.mxu0 %v8460
    %14680 = vmatpush.bf16.msra.mxu0 %v8452
    %14681 = vmatpush.bf16.msra.mxu0 %v8444
    %14682 = vmatpush.bf16.msra.mxu0 %v8436
    %14683 = vmatpush.bf16.msra.mxu0 %v8428
    %14684 = vmatpush.bf16.msra.mxu0 %v8420
    %14685 = vmatmul.bf16.gmra.mxu0 %v307
    %v14686 = vpop.f32.mrf.mxu0
    %v14687 = vadd.f32 %v14674, %v14686
    %v14688 = vpop.f32.mrf.mxu0
    %14689 = vdwg.mxu0
    %14690 = vmatpush.bf16.msra.mxu0 %v8540
    %14691 = vmatpush.bf16.msra.mxu0 %v8532
    %14692 = vmatpush.bf16.msra.mxu0 %v8524
    %14693 = vmatpush.bf16.msra.mxu0 %v8516
    %14694 = vmatpush.bf16.msra.mxu0 %v8508
    %14695 = vmatpush.bf16.msra.mxu0 %v8500
    %14696 = vmatpush.bf16.msra.mxu0 %v8492
    %14697 = vmatpush.bf16.msra.mxu0 %v8484
    %14698 = vmatmul.bf16.gmra.mxu0 %v308
    %v14699 = vpop.f32.mrf.mxu0
    %v14700 = vadd.f32 %v14687, %v14699
    %v14701 = vpop.f32.mrf.mxu0
    %14702 = vdwg.mxu0
    %14703 = vmatpush.bf16.msra.mxu0 %v8604
    %14704 = vmatpush.bf16.msra.mxu0 %v8596
    %14705 = vmatpush.bf16.msra.mxu0 %v8588
    %14706 = vmatpush.bf16.msra.mxu0 %v8580
    %14707 = vmatpush.bf16.msra.mxu0 %v8572
    %14708 = vmatpush.bf16.msra.mxu0 %v8564
    %14709 = vmatpush.bf16.msra.mxu0 %v8556
    %14710 = vmatpush.bf16.msra.mxu0 %v8548
    %14711 = vmatmul.bf16.gmra.mxu0 %v309
    %v14712 = vpop.f32.mrf.mxu0
    %v14713 = vadd.f32 %v14700, %v14712
    %v14714 = vpop.f32.mrf.mxu0
    %14715 = vdwg.mxu0
    %14716 = vmatpush.bf16.msra.mxu0 %v8668
    %14717 = vmatpush.bf16.msra.mxu0 %v8660
    %14718 = vmatpush.bf16.msra.mxu0 %v8652
    %14719 = vmatpush.bf16.msra.mxu0 %v8644
    %14720 = vmatpush.bf16.msra.mxu0 %v8636
    %14721 = vmatpush.bf16.msra.mxu0 %v8628
    %14722 = vmatpush.bf16.msra.mxu0 %v8620
    %14723 = vmatpush.bf16.msra.mxu0 %v8612
    %14724 = vmatmul.bf16.gmra.mxu0 %v310
    %v14725 = vpop.f32.mrf.mxu0
    %v14726 = vadd.f32 %v14713, %v14725
    %v14727 = vpop.f32.mrf.mxu0
    %14728 = vdwg.mxu0
    %14729 = vmatpush.bf16.msra.mxu0 %v8732
    %14730 = vmatpush.bf16.msra.mxu0 %v8724
    %14731 = vmatpush.bf16.msra.mxu0 %v8716
    %14732 = vmatpush.bf16.msra.mxu0 %v8708
    %14733 = vmatpush.bf16.msra.mxu0 %v8700
    %14734 = vmatpush.bf16.msra.mxu0 %v8692
    %14735 = vmatpush.bf16.msra.mxu0 %v8684
    %14736 = vmatpush.bf16.msra.mxu0 %v8676
    %14737 = vmatmul.bf16.gmra.mxu0 %v311
    %v14738 = vpop.f32.mrf.mxu0
    %v14739 = vadd.f32 %v14726, %v14738
    %v14740 = vpop.f32.mrf.mxu0
    %14741 = vdwg.mxu0
    %14742 = vmatpush.bf16.msra.mxu0 %v8796
    %14743 = vmatpush.bf16.msra.mxu0 %v8788
    %14744 = vmatpush.bf16.msra.mxu0 %v8780
    %14745 = vmatpush.bf16.msra.mxu0 %v8772
    %14746 = vmatpush.bf16.msra.mxu0 %v8764
    %14747 = vmatpush.bf16.msra.mxu0 %v8756
    %14748 = vmatpush.bf16.msra.mxu0 %v8748
    %14749 = vmatpush.bf16.msra.mxu0 %v8740
    %14750 = vmatmul.bf16.gmra.mxu0 %v312
    %v14751 = vpop.f32.mrf.mxu0
    %v14752 = vadd.f32 %v14739, %v14751
    %v14753 = vpop.f32.mrf.mxu0
    %14754 = vdwg.mxu0
    %14755 = vmatpush.bf16.msra.mxu0 %v8860
    %14756 = vmatpush.bf16.msra.mxu0 %v8852
    %14757 = vmatpush.bf16.msra.mxu0 %v8844
    %14758 = vmatpush.bf16.msra.mxu0 %v8836
    %14759 = vmatpush.bf16.msra.mxu0 %v8828
    %14760 = vmatpush.bf16.msra.mxu0 %v8820
    %14761 = vmatpush.bf16.msra.mxu0 %v8812
    %14762 = vmatpush.bf16.msra.mxu0 %v8804
    %14763 = vmatmul.bf16.gmra.mxu0 %v313
    %v14764 = vpop.f32.mrf.mxu0
    %v14765 = vadd.f32 %v14752, %v14764
    %v14766 = vpop.f32.mrf.mxu0
    %14767 = vdwg.mxu0
    %14768 = vmatpush.bf16.msra.mxu0 %v8924
    %14769 = vmatpush.bf16.msra.mxu0 %v8916
    %14770 = vmatpush.bf16.msra.mxu0 %v8908
    %14771 = vmatpush.bf16.msra.mxu0 %v8900
    %14772 = vmatpush.bf16.msra.mxu0 %v8892
    %14773 = vmatpush.bf16.msra.mxu0 %v8884
    %14774 = vmatpush.bf16.msra.mxu0 %v8876
    %14775 = vmatpush.bf16.msra.mxu0 %v8868
    %14776 = vmatmul.bf16.gmra.mxu0 %v314
    %v14777 = vpop.f32.mrf.mxu0
    %v14778 = vadd.f32 %v14765, %v14777
    %v14779 = vpop.f32.mrf.mxu0
    %14780 = vdwg.mxu0
    %14781 = vmatpush.bf16.msra.mxu0 %v8988
    %14782 = vmatpush.bf16.msra.mxu0 %v8980
    %14783 = vmatpush.bf16.msra.mxu0 %v8972
    %14784 = vmatpush.bf16.msra.mxu0 %v8964
    %14785 = vmatpush.bf16.msra.mxu0 %v8956
    %14786 = vmatpush.bf16.msra.mxu0 %v8948
    %14787 = vmatpush.bf16.msra.mxu0 %v8940
    %14788 = vmatpush.bf16.msra.mxu0 %v8932
    %14789 = vmatmul.bf16.gmra.mxu0 %v315
    %v14790 = vpop.f32.mrf.mxu0
    %v14791 = vadd.f32 %v14778, %v14790
    %v14792 = vpop.f32.mrf.mxu0
    %14793 = vdwg.mxu0
    %14794 = vmatpush.bf16.msra.mxu0 %v9052
    %14795 = vmatpush.bf16.msra.mxu0 %v9044
    %14796 = vmatpush.bf16.msra.mxu0 %v9036
    %14797 = vmatpush.bf16.msra.mxu0 %v9028
    %14798 = vmatpush.bf16.msra.mxu0 %v9020
    %14799 = vmatpush.bf16.msra.mxu0 %v9012
    %14800 = vmatpush.bf16.msra.mxu0 %v9004
    %14801 = vmatpush.bf16.msra.mxu0 %v8996
    %14802 = vmatmul.bf16.gmra.mxu0 %v316
    %v14803 = vpop.f32.mrf.mxu0
    %v14804 = vadd.f32 %v14791, %v14803
    %v14805 = vpop.f32.mrf.mxu0
    %14806 = vdwg.mxu0
    %14807 = vmatpush.bf16.msra.mxu0 %v9116
    %14808 = vmatpush.bf16.msra.mxu0 %v9108
    %14809 = vmatpush.bf16.msra.mxu0 %v9100
    %14810 = vmatpush.bf16.msra.mxu0 %v9092
    %14811 = vmatpush.bf16.msra.mxu0 %v9084
    %14812 = vmatpush.bf16.msra.mxu0 %v9076
    %14813 = vmatpush.bf16.msra.mxu0 %v9068
    %14814 = vmatpush.bf16.msra.mxu0 %v9060
    %14815 = vmatmul.bf16.gmra.mxu0 %v317
    %v14816 = vpop.f32.mrf.mxu0
    %v14817 = vadd.f32 %v14804, %v14816
    %v14818 = vpop.f32.mrf.mxu0
    %14819 = vdwg.mxu0
    %14820 = vmatpush.bf16.msra.mxu0 %v9180
    %14821 = vmatpush.bf16.msra.mxu0 %v9172
    %14822 = vmatpush.bf16.msra.mxu0 %v9164
    %14823 = vmatpush.bf16.msra.mxu0 %v9156
    %14824 = vmatpush.bf16.msra.mxu0 %v9148
    %14825 = vmatpush.bf16.msra.mxu0 %v9140
    %14826 = vmatpush.bf16.msra.mxu0 %v9132
    %14827 = vmatpush.bf16.msra.mxu0 %v9124
    %14828 = vmatmul.bf16.gmra.mxu0 %v318
    %v14829 = vpop.f32.mrf.mxu0
    %v14830 = vadd.f32 %v14817, %v14829
    %v14831 = vpop.f32.mrf.mxu0
    %14832 = vdwg.mxu0
    %14833 = vmatpush.bf16.msra.mxu0 %v9244
    %14834 = vmatpush.bf16.msra.mxu0 %v9236
    %14835 = vmatpush.bf16.msra.mxu0 %v9228
    %14836 = vmatpush.bf16.msra.mxu0 %v9220
    %14837 = vmatpush.bf16.msra.mxu0 %v9212
    %14838 = vmatpush.bf16.msra.mxu0 %v9204
    %14839 = vmatpush.bf16.msra.mxu0 %v9196
    %14840 = vmatpush.bf16.msra.mxu0 %v9188
    %14841 = vmatmul.bf16.gmra.mxu0 %v319
    %v14842 = vpop.f32.mrf.mxu0
    %v14843 = vadd.f32 %v14830, %v14842
    %v14844 = vpop.f32.mrf.mxu0
    %14845 = vdwg.mxu0
    %14846 = vmatpush.bf16.msra.mxu0 %v9308
    %14847 = vmatpush.bf16.msra.mxu0 %v9300
    %14848 = vmatpush.bf16.msra.mxu0 %v9292
    %14849 = vmatpush.bf16.msra.mxu0 %v9284
    %14850 = vmatpush.bf16.msra.mxu0 %v9276
    %14851 = vmatpush.bf16.msra.mxu0 %v9268
    %14852 = vmatpush.bf16.msra.mxu0 %v9260
    %14853 = vmatpush.bf16.msra.mxu0 %v9252
    %14854 = vmatmul.bf16.gmra.mxu0 %v320
    %v14855 = vpop.f32.mrf.mxu0
    %v14856 = vadd.f32 %v14843, %v14855
    %v14857 = vpop.f32.mrf.mxu0
    %14858 = vdwg.mxu0
    %14859 = vmatpush.bf16.msra.mxu0 %v9372
    %14860 = vmatpush.bf16.msra.mxu0 %v9364
    %14861 = vmatpush.bf16.msra.mxu0 %v9356
    %14862 = vmatpush.bf16.msra.mxu0 %v9348
    %14863 = vmatpush.bf16.msra.mxu0 %v9340
    %14864 = vmatpush.bf16.msra.mxu0 %v9332
    %14865 = vmatpush.bf16.msra.mxu0 %v9324
    %14866 = vmatpush.bf16.msra.mxu0 %v9316
    %14867 = vmatmul.bf16.gmra.mxu0 %v321
    %v14868 = vpop.f32.mrf.mxu0
    %v14869 = vadd.f32 %v14856, %v14868
    %v14870 = vpop.f32.mrf.mxu0
    %14871 = vdwg.mxu0
    %14872 = vmatpush.bf16.msra.mxu0 %v9436
    %14873 = vmatpush.bf16.msra.mxu0 %v9428
    %14874 = vmatpush.bf16.msra.mxu0 %v9420
    %14875 = vmatpush.bf16.msra.mxu0 %v9412
    %14876 = vmatpush.bf16.msra.mxu0 %v9404
    %14877 = vmatpush.bf16.msra.mxu0 %v9396
    %14878 = vmatpush.bf16.msra.mxu0 %v9388
    %14879 = vmatpush.bf16.msra.mxu0 %v9380
    %14880 = vmatmul.bf16.gmra.mxu0 %v322
    %v14881 = vpop.f32.mrf.mxu0
    %v14882 = vadd.f32 %v14869, %v14881
    %v14883 = vpop.f32.mrf.mxu0
    %14884 = vdwg.mxu0
    %14885 = vmatpush.bf16.msra.mxu0 %v9500
    %14886 = vmatpush.bf16.msra.mxu0 %v9492
    %14887 = vmatpush.bf16.msra.mxu0 %v9484
    %14888 = vmatpush.bf16.msra.mxu0 %v9476
    %14889 = vmatpush.bf16.msra.mxu0 %v9468
    %14890 = vmatpush.bf16.msra.mxu0 %v9460
    %14891 = vmatpush.bf16.msra.mxu0 %v9452
    %14892 = vmatpush.bf16.msra.mxu0 %v9444
    %14893 = vmatmul.bf16.gmra.mxu0 %v323
    %v14894 = vpop.f32.mrf.mxu0
    %v14895 = vadd.f32 %v14882, %v14894
    %v14896 = vpop.f32.mrf.mxu0
    %14897 = vdwg.mxu0
    %14898 = vmatpush.bf16.msra.mxu0 %v9564
    %14899 = vmatpush.bf16.msra.mxu0 %v9556
    %14900 = vmatpush.bf16.msra.mxu0 %v9548
    %14901 = vmatpush.bf16.msra.mxu0 %v9540
    %14902 = vmatpush.bf16.msra.mxu0 %v9532
    %14903 = vmatpush.bf16.msra.mxu0 %v9524
    %14904 = vmatpush.bf16.msra.mxu0 %v9516
    %14905 = vmatpush.bf16.msra.mxu0 %v9508
    %14906 = vmatmul.bf16.gmra.mxu0 %v324
    %v14907 = vpop.f32.mrf.mxu0
    %v14908 = vadd.f32 %v14895, %v14907
    %v14909 = vpop.f32.mrf.mxu0
    %14910 = vdwg.mxu0
    %14911 = vmatpush.bf16.msra.mxu0 %v9628
    %14912 = vmatpush.bf16.msra.mxu0 %v9620
    %14913 = vmatpush.bf16.msra.mxu0 %v9612
    %14914 = vmatpush.bf16.msra.mxu0 %v9604
    %14915 = vmatpush.bf16.msra.mxu0 %v9596
    %14916 = vmatpush.bf16.msra.mxu0 %v9588
    %14917 = vmatpush.bf16.msra.mxu0 %v9580
    %14918 = vmatpush.bf16.msra.mxu0 %v9572
    %14919 = vmatmul.bf16.gmra.mxu0 %v325
    %v14920 = vpop.f32.mrf.mxu0
    %v14921 = vadd.f32 %v14908, %v14920
    %v14922 = vpop.f32.mrf.mxu0
    %14923 = vdwg.mxu0
    %14924 = vmatpush.bf16.msra.mxu0 %v9692
    %14925 = vmatpush.bf16.msra.mxu0 %v9684
    %14926 = vmatpush.bf16.msra.mxu0 %v9676
    %14927 = vmatpush.bf16.msra.mxu0 %v9668
    %14928 = vmatpush.bf16.msra.mxu0 %v9660
    %14929 = vmatpush.bf16.msra.mxu0 %v9652
    %14930 = vmatpush.bf16.msra.mxu0 %v9644
    %14931 = vmatpush.bf16.msra.mxu0 %v9636
    %14932 = vmatmul.bf16.gmra.mxu0 %v326
    %v14933 = vpop.f32.mrf.mxu0
    %v14934 = vadd.f32 %v14921, %v14933
    %v14935 = vpop.f32.mrf.mxu0
    %14936 = vdwg.mxu0
    %14937 = vmatpush.bf16.msra.mxu0 %v9756
    %14938 = vmatpush.bf16.msra.mxu0 %v9748
    %14939 = vmatpush.bf16.msra.mxu0 %v9740
    %14940 = vmatpush.bf16.msra.mxu0 %v9732
    %14941 = vmatpush.bf16.msra.mxu0 %v9724
    %14942 = vmatpush.bf16.msra.mxu0 %v9716
    %14943 = vmatpush.bf16.msra.mxu0 %v9708
    %14944 = vmatpush.bf16.msra.mxu0 %v9700
    %14945 = vmatmul.bf16.gmra.mxu0 %v327
    %v14946 = vpop.f32.mrf.mxu0
    %v14947 = vadd.f32 %v14934, %v14946
    %v14948 = vpop.f32.mrf.mxu0
    %14949 = vdwg.mxu0
    %14950 = vmatpush.bf16.msra.mxu0 %v9820
    %14951 = vmatpush.bf16.msra.mxu0 %v9812
    %14952 = vmatpush.bf16.msra.mxu0 %v9804
    %14953 = vmatpush.bf16.msra.mxu0 %v9796
    %14954 = vmatpush.bf16.msra.mxu0 %v9788
    %14955 = vmatpush.bf16.msra.mxu0 %v9780
    %14956 = vmatpush.bf16.msra.mxu0 %v9772
    %14957 = vmatpush.bf16.msra.mxu0 %v9764
    %14958 = vmatmul.bf16.gmra.mxu0 %v328
    %v14959 = vpop.f32.mrf.mxu0
    %v14960 = vadd.f32 %v14947, %v14959
    %v14961 = vpop.f32.mrf.mxu0
    %14962 = vdwg.mxu0
    %14963 = vmatpush.bf16.msra.mxu0 %v9884
    %14964 = vmatpush.bf16.msra.mxu0 %v9876
    %14965 = vmatpush.bf16.msra.mxu0 %v9868
    %14966 = vmatpush.bf16.msra.mxu0 %v9860
    %14967 = vmatpush.bf16.msra.mxu0 %v9852
    %14968 = vmatpush.bf16.msra.mxu0 %v9844
    %14969 = vmatpush.bf16.msra.mxu0 %v9836
    %14970 = vmatpush.bf16.msra.mxu0 %v9828
    %14971 = vmatmul.bf16.gmra.mxu0 %v329
    %v14972 = vpop.f32.mrf.mxu0
    %v14973 = vadd.f32 %v14960, %v14972
    %v14974 = vpop.f32.mrf.mxu0
    %14975 = vdwg.mxu0
    %14976 = vmatpush.bf16.msra.mxu0 %v9948
    %14977 = vmatpush.bf16.msra.mxu0 %v9940
    %14978 = vmatpush.bf16.msra.mxu0 %v9932
    %14979 = vmatpush.bf16.msra.mxu0 %v9924
    %14980 = vmatpush.bf16.msra.mxu0 %v9916
    %14981 = vmatpush.bf16.msra.mxu0 %v9908
    %14982 = vmatpush.bf16.msra.mxu0 %v9900
    %14983 = vmatpush.bf16.msra.mxu0 %v9892
    %14984 = vmatmul.bf16.gmra.mxu0 %v330
    %v14985 = vpop.f32.mrf.mxu0
    %v14986 = vadd.f32 %v14973, %v14985
    %v14987 = vpop.f32.mrf.mxu0
    %14988 = vdwg.mxu0
    %v14989 = vmax.f32 %v12256, 0.0
    %v14990 = vmax.f32 %v12646, 0.0
    %v14991 = vmax.f32 %v13036, 0.0
    %v14992 = vmax.f32 %v13426, 0.0
    %v14993 = vmax.f32 %v13816, 0.0
    %v14994 = vmax.f32 %v14206, 0.0
    %v14995 = vmax.f32 %v14596, 0.0
    %v14996 = vmax.f32 %v14986, 0.0
    %v14997 = vld [vmem:[%s5] sm:$0xff]
    %v14998 = vld [vmem:[%s5 + $0x8] sm:$0xff]
    %v14999 = vld [vmem:[%s5 + $0x10] sm:$0xff]
    %v15000 = vld [vmem:[%s5 + $0x18] sm:$0xff]
    %v15001 = vld [vmem:[%s5 + $0x20] sm:$0xff]
    %v15002 = vld [vmem:[%s5 + $0x28] sm:$0xff]
    %v15003 = vld [vmem:[%s5 + $0x30] sm:$0xff]
    %v15004 = vld [vmem:[%s5 + $0x38] sm:$0xff]
    %v15005 = vld [vmem:[%s5 + $0x40] sm:$0xff]
    %v15006 = vld [vmem:[%s5 + $0x48] sm:$0xff]
    %v15007 = vld [vmem:[%s5 + $0x50] sm:$0xff]
    %v15008 = vld [vmem:[%s5 + $0x58] sm:$0xff]
    %v15009 = vld [vmem:[%s5 + $0x60] sm:$0xff]
    %v15010 = vld [vmem:[%s5 + $0x68] sm:$0xff]
    %v15011 = vld [vmem:[%s5 + $0x70] sm:$0xff]
    %v15012 = vld [vmem:[%s5 + $0x78] sm:$0xff]
    %v15013 = vld [vmem:[%s5 + $0x80] sm:$0xff]
    %v15014 = vld [vmem:[%s5 + $0x88] sm:$0xff]
    %v15015 = vld [vmem:[%s5 + $0x90] sm:$0xff]
    %v15016 = vld [vmem:[%s5 + $0x98] sm:$0xff]
    %v15017 = vld [vmem:[%s5 + $0xa0] sm:$0xff]
    %v15018 = vld [vmem:[%s5 + $0xa8] sm:$0xff]
    %v15019 = vld [vmem:[%s5 + $0xb0] sm:$0xff]
    %v15020 = vld [vmem:[%s5 + $0xb8] sm:$0xff]
    %v15021 = vld [vmem:[%s5 + $0xc0] sm:$0xff]
    %v15022 = vld [vmem:[%s5 + $0xc8] sm:$0xff]
    %v15023 = vld [vmem:[%s5 + $0xd0] sm:$0xff]
    %v15024 = vld [vmem:[%s5 + $0xd8] sm:$0xff]
    %v15025 = vld [vmem:[%s5 + $0xe0] sm:$0xff]
    %v15026 = vld [vmem:[%s5 + $0xe8] sm:$0xff]
    %v15027 = vld [vmem:[%s5 + $0xf0] sm:$0xff]
    %v15028 = vld [vmem:[%s5 + $0xf8] sm:$0xff]
    %v15029 = vld [vmem:[%s5 + $0x100] sm:$0xff]
    %v15030 = vld [vmem:[%s5 + $0x108] sm:$0xff]
    %v15031 = vld [vmem:[%s5 + $0x110] sm:$0xff]
    %v15032 = vld [vmem:[%s5 + $0x118] sm:$0xff]
    %v15033 = vld [vmem:[%s5 + $0x120] sm:$0xff]
    %v15034 = vld [vmem:[%s5 + $0x128] sm:$0xff]
    %v15035 = vld [vmem:[%s5 + $0x130] sm:$0xff]
    %v15036 = vld [vmem:[%s5 + $0x138] sm:$0xff]
    %v15037 = vld [vmem:[%s5 + $0x140] sm:$0xff]
    %v15038 = vld [vmem:[%s5 + $0x148] sm:$0xff]
    %v15039 = vld [vmem:[%s5 + $0x150] sm:$0xff]
    %v15040 = vld [vmem:[%s5 + $0x158] sm:$0xff]
    %v15041 = vld [vmem:[%s5 + $0x160] sm:$0xff]
    %v15042 = vld [vmem:[%s5 + $0x168] sm:$0xff]
    %v15043 = vld [vmem:[%s5 + $0x170] sm:$0xff]
    %v15044 = vld [vmem:[%s5 + $0x178] sm:$0xff]
    %v15045 = vld [vmem:[%s5 + $0x180] sm:$0xff]
    %v15046 = vld [vmem:[%s5 + $0x188] sm:$0xff]
    %v15047 = vld [vmem:[%s5 + $0x190] sm:$0xff]
    %v15048 = vld [vmem:[%s5 + $0x198] sm:$0xff]
    %v15049 = vld [vmem:[%s5 + $0x1a0] sm:$0xff]
    %v15050 = vld [vmem:[%s5 + $0x1a8] sm:$0xff]
    %v15051 = vld [vmem:[%s5 + $0x1b0] sm:$0xff]
    %v15052 = vld [vmem:[%s5 + $0x1b8] sm:$0xff]
    %v15053 = vld [vmem:[%s5 + $0x1c0] sm:$0xff]
    %v15054 = vld [vmem:[%s5 + $0x1c8] sm:$0xff]
    %v15055 = vld [vmem:[%s5 + $0x1d0] sm:$0xff]
    %v15056 = vld [vmem:[%s5 + $0x1d8] sm:$0xff]
    %v15057 = vld [vmem:[%s5 + $0x1e0] sm:$0xff]
    %v15058 = vld [vmem:[%s5 + $0x1e8] sm:$0xff]
    %v15059 = vld [vmem:[%s5 + $0x1f0] sm:$0xff]
    %v15060 = vld [vmem:[%s5 + $0x1f8] sm:$0xff]
    %v15061 = vld [vmem:[%s5 + $0x200] sm:$0xff]
    %v15062 = vld [vmem:[%s5 + $0x208] sm:$0xff]
    %v15063 = vld [vmem:[%s5 + $0x210] sm:$0xff]
    %v15064 = vld [vmem:[%s5 + $0x218] sm:$0xff]
    %v15065 = vld [vmem:[%s5 + $0x220] sm:$0xff]
    %v15066 = vld [vmem:[%s5 + $0x228] sm:$0xff]
    %v15067 = vld [vmem:[%s5 + $0x230] sm:$0xff]
    %v15068 = vld [vmem:[%s5 + $0x238] sm:$0xff]
    %v15069 = vld [vmem:[%s5 + $0x240] sm:$0xff]
    %v15070 = vld [vmem:[%s5 + $0x248] sm:$0xff]
    %v15071 = vld [vmem:[%s5 + $0x250] sm:$0xff]
    %v15072 = vld [vmem:[%s5 + $0x258] sm:$0xff]
    %v15073 = vld [vmem:[%s5 + $0x260] sm:$0xff]
    %v15074 = vld [vmem:[%s5 + $0x268] sm:$0xff]
    %v15075 = vld [vmem:[%s5 + $0x270] sm:$0xff]
    %v15076 = vld [vmem:[%s5 + $0x278] sm:$0xff]
    %v15077 = vld [vmem:[%s5 + $0x280] sm:$0xff]
    %v15078 = vld [vmem:[%s5 + $0x288] sm:$0xff]
    %v15079 = vld [vmem:[%s5 + $0x290] sm:$0xff]
    %v15080 = vld [vmem:[%s5 + $0x298] sm:$0xff]
    %v15081 = vld [vmem:[%s5 + $0x2a0] sm:$0xff]
    %v15082 = vld [vmem:[%s5 + $0x2a8] sm:$0xff]
    %v15083 = vld [vmem:[%s5 + $0x2b0] sm:$0xff]
    %v15084 = vld [vmem:[%s5 + $0x2b8] sm:$0xff]
    %v15085 = vld [vmem:[%s5 + $0x2c0] sm:$0xff]
    %v15086 = vld [vmem:[%s5 + $0x2c8] sm:$0xff]
    %v15087 = vld [vmem:[%s5 + $0x2d0] sm:$0xff]
    %v15088 = vld [vmem:[%s5 + $0x2d8] sm:$0xff]
    %v15089 = vld [vmem:[%s5 + $0x2e0] sm:$0xff]
    %v15090 = vld [vmem:[%s5 + $0x2e8] sm:$0xff]
    %v15091 = vld [vmem:[%s5 + $0x2f0] sm:$0xff]
    %v15092 = vld [vmem:[%s5 + $0x2f8] sm:$0xff]
    %v15093 = vld [vmem:[%s5 + $0x300] sm:$0xff]
    %v15094 = vld [vmem:[%s5 + $0x308] sm:$0xff]
    %v15095 = vld [vmem:[%s5 + $0x310] sm:$0xff]
    %v15096 = vld [vmem:[%s5 + $0x318] sm:$0xff]
    %v15097 = vld [vmem:[%s5 + $0x320] sm:$0xff]
    %v15098 = vld [vmem:[%s5 + $0x328] sm:$0xff]
    %v15099 = vld [vmem:[%s5 + $0x330] sm:$0xff]
    %v15100 = vld [vmem:[%s5 + $0x338] sm:$0xff]
    %v15101 = vld [vmem:[%s5 + $0x340] sm:$0xff]
    %v15102 = vld [vmem:[%s5 + $0x348] sm:$0xff]
    %v15103 = vld [vmem:[%s5 + $0x350] sm:$0xff]
    %v15104 = vld [vmem:[%s5 + $0x358] sm:$0xff]
    %v15105 = vld [vmem:[%s5 + $0x360] sm:$0xff]
    %v15106 = vld [vmem:[%s5 + $0x368] sm:$0xff]
    %v15107 = vld [vmem:[%s5 + $0x370] sm:$0xff]
    %v15108 = vld [vmem:[%s5 + $0x378] sm:$0xff]
    %v15109 = vld [vmem:[%s5 + $0x380] sm:$0xff]
    %v15110 = vld [vmem:[%s5 + $0x388] sm:$0xff]
    %v15111 = vld [vmem:[%s5 + $0x390] sm:$0xff]
    %v15112 = vld [vmem:[%s5 + $0x398] sm:$0xff]
    %v15113 = vld [vmem:[%s5 + $0x3a0] sm:$0xff]
    %v15114 = vld [vmem:[%s5 + $0x3a8] sm:$0xff]
    %v15115 = vld [vmem:[%s5 + $0x3b0] sm:$0xff]
    %v15116 = vld [vmem:[%s5 + $0x3b8] sm:$0xff]
    %v15117 = vld [vmem:[%s5 + $0x3c0] sm:$0xff]
    %v15118 = vld [vmem:[%s5 + $0x3c8] sm:$0xff]
    %v15119 = vld [vmem:[%s5 + $0x3d0] sm:$0xff]
    %v15120 = vld [vmem:[%s5 + $0x3d8] sm:$0xff]
    %v15121 = vld [vmem:[%s5 + $0x3e0] sm:$0xff]
    %v15122 = vld [vmem:[%s5 + $0x3e8] sm:$0xff]
    %v15123 = vld [vmem:[%s5 + $0x3f0] sm:$0xff]
    %v15124 = vld [vmem:[%s5 + $0x3f8] sm:$0xff]
    %v15125 = vld [vmem:[#allocation10] sm:$0x1]
    %v15127 = vperm.slane %v15125, 0
    %15129 = vmatpush.msra.mxu0 %v15012
    %15130 = vmatpush.msra.mxu0 %v15011
    %15131 = vmatpush.msra.mxu0 %v15010
    %15132 = vmatpush.msra.mxu0 %v15009
    %15133 = vmatpush.msra.mxu0 %v15008
    %15134 = vmatpush.msra.mxu0 %v15007
    %15135 = vmatpush.msra.mxu0 %v15006
    %15136 = vmatpush.msra.mxu0 %v15005
    %15137 = vmatpush.msra.mxu0 %v15004
    %15138 = vmatpush.msra.mxu0 %v15003
    %15139 = vmatpush.msra.mxu0 %v15002
    %15140 = vmatpush.msra.mxu0 %v15001
    %15141 = vmatpush.msra.mxu0 %v15000
    %15142 = vmatpush.msra.mxu0 %v14999
    %15143 = vmatpush.msra.mxu0 %v14998
    %15144 = vmatpush.msra.mxu0 %v14997
    %15145 = vmatmul.f32.gmra.mxu0 %v14989
    %v15146 = vpop.f32.mrf.mxu0
    %v15147 = vadd.f32 %v15127, %v15146
    %15148 = vdwg.mxu0
    %15149 = vmatpush.msra.mxu0 %v15028
    %15150 = vmatpush.msra.mxu0 %v15027
    %15151 = vmatpush.msra.mxu0 %v15026
    %15152 = vmatpush.msra.mxu0 %v15025
    %15153 = vmatpush.msra.mxu0 %v15024
    %15154 = vmatpush.msra.mxu0 %v15023
    %15155 = vmatpush.msra.mxu0 %v15022
    %15156 = vmatpush.msra.mxu0 %v15021
    %15157 = vmatpush.msra.mxu0 %v15020
    %15158 = vmatpush.msra.mxu0 %v15019
    %15159 = vmatpush.msra.mxu0 %v15018
    %15160 = vmatpush.msra.mxu0 %v15017
    %15161 = vmatpush.msra.mxu0 %v15016
    %15162 = vmatpush.msra.mxu0 %v15015
    %15163 = vmatpush.msra.mxu0 %v15014
    %15164 = vmatpush.msra.mxu0 %v15013
    %15165 = vmatmul.f32.gmra.mxu0 %v14990
    %v15166 = vpop.f32.mrf.mxu0
    %v15167 = vadd.f32 %v15147, %v15166
    %15168 = vdwg.mxu0
    %15169 = vmatpush.msra.mxu0 %v15044
    %15170 = vmatpush.msra.mxu0 %v15043
    %15171 = vmatpush.msra.mxu0 %v15042
    %15172 = vmatpush.msra.mxu0 %v15041
    %15173 = vmatpush.msra.mxu0 %v15040
    %15174 = vmatpush.msra.mxu0 %v15039
    %15175 = vmatpush.msra.mxu0 %v15038
    %15176 = vmatpush.msra.mxu0 %v15037
    %15177 = vmatpush.msra.mxu0 %v15036
    %15178 = vmatpush.msra.mxu0 %v15035
    %15179 = vmatpush.msra.mxu0 %v15034
    %15180 = vmatpush.msra.mxu0 %v15033
    %15181 = vmatpush.msra.mxu0 %v15032
    %15182 = vmatpush.msra.mxu0 %v15031
    %15183 = vmatpush.msra.mxu0 %v15030
    %15184 = vmatpush.msra.mxu0 %v15029
    %15185 = vmatmul.f32.gmra.mxu0 %v14991
    %v15186 = vpop.f32.mrf.mxu0
    %v15187 = vadd.f32 %v15167, %v15186
    %15188 = vdwg.mxu0
    %15189 = vmatpush.msra.mxu0 %v15060
    %15190 = vmatpush.msra.mxu0 %v15059
    %15191 = vmatpush.msra.mxu0 %v15058
    %15192 = vmatpush.msra.mxu0 %v15057
    %15193 = vmatpush.msra.mxu0 %v15056
    %15194 = vmatpush.msra.mxu0 %v15055
    %15195 = vmatpush.msra.mxu0 %v15054
    %15196 = vmatpush.msra.mxu0 %v15053
    %15197 = vmatpush.msra.mxu0 %v15052
    %15198 = vmatpush.msra.mxu0 %v15051
    %15199 = vmatpush.msra.mxu0 %v15050
    %15200 = vmatpush.msra.mxu0 %v15049
    %15201 = vmatpush.msra.mxu0 %v15048
    %15202 = vmatpush.msra.mxu0 %v15047
    %15203 = vmatpush.msra.mxu0 %v15046
    %15204 = vmatpush.msra.mxu0 %v15045
    %15205 = vmatmul.f32.gmra.mxu0 %v14992
    %v15206 = vpop.f32.mrf.mxu0
    %v15207 = vadd.f32 %v15187, %v15206
    %15208 = vdwg.mxu0
    %15209 = vmatpush.msra.mxu0 %v15076
    %15210 = vmatpush.msra.mxu0 %v15075
    %15211 = vmatpush.msra.mxu0 %v15074
    %15212 = vmatpush.msra.mxu0 %v15073
    %15213 = vmatpush.msra.mxu0 %v15072
    %15214 = vmatpush.msra.mxu0 %v15071
    %15215 = vmatpush.msra.mxu0 %v15070
    %15216 = vmatpush.msra.mxu0 %v15069
    %15217 = vmatpush.msra.mxu0 %v15068
    %15218 = vmatpush.msra.mxu0 %v15067
    %15219 = vmatpush.msra.mxu0 %v15066
    %15220 = vmatpush.msra.mxu0 %v15065
    %15221 = vmatpush.msra.mxu0 %v15064
    %15222 = vmatpush.msra.mxu0 %v15063
    %15223 = vmatpush.msra.mxu0 %v15062
    %15224 = vmatpush.msra.mxu0 %v15061
    %15225 = vmatmul.f32.gmra.mxu0 %v14993
    %v15226 = vpop.f32.mrf.mxu0
    %v15227 = vadd.f32 %v15207, %v15226
    %15228 = vdwg.mxu0
    %15229 = vmatpush.msra.mxu0 %v15092
    %15230 = vmatpush.msra.mxu0 %v15091
    %15231 = vmatpush.msra.mxu0 %v15090
    %15232 = vmatpush.msra.mxu0 %v15089
    %15233 = vmatpush.msra.mxu0 %v15088
    %15234 = vmatpush.msra.mxu0 %v15087
    %15235 = vmatpush.msra.mxu0 %v15086
    %15236 = vmatpush.msra.mxu0 %v15085
    %15237 = vmatpush.msra.mxu0 %v15084
    %15238 = vmatpush.msra.mxu0 %v15083
    %15239 = vmatpush.msra.mxu0 %v15082
    %15240 = vmatpush.msra.mxu0 %v15081
    %15241 = vmatpush.msra.mxu0 %v15080
    %15242 = vmatpush.msra.mxu0 %v15079
    %15243 = vmatpush.msra.mxu0 %v15078
    %15244 = vmatpush.msra.mxu0 %v15077
    %15245 = vmatmul.f32.gmra.mxu0 %v14994
    %v15246 = vpop.f32.mrf.mxu0
    %v15247 = vadd.f32 %v15227, %v15246
    %15248 = vdwg.mxu0
    %15249 = vmatpush.msra.mxu0 %v15108
    %15250 = vmatpush.msra.mxu0 %v15107
    %15251 = vmatpush.msra.mxu0 %v15106
    %15252 = vmatpush.msra.mxu0 %v15105
    %15253 = vmatpush.msra.mxu0 %v15104
    %15254 = vmatpush.msra.mxu0 %v15103
    %15255 = vmatpush.msra.mxu0 %v15102
    %15256 = vmatpush.msra.mxu0 %v15101
    %15257 = vmatpush.msra.mxu0 %v15100
    %15258 = vmatpush.msra.mxu0 %v15099
    %15259 = vmatpush.msra.mxu0 %v15098
    %15260 = vmatpush.msra.mxu0 %v15097
    %15261 = vmatpush.msra.mxu0 %v15096
    %15262 = vmatpush.msra.mxu0 %v15095
    %15263 = vmatpush.msra.mxu0 %v15094
    %15264 = vmatpush.msra.mxu0 %v15093
    %15265 = vmatmul.f32.gmra.mxu0 %v14995
    %v15266 = vpop.f32.mrf.mxu0
    %v15267 = vadd.f32 %v15247, %v15266
    %15268 = vdwg.mxu0
    %15269 = vmatpush.msra.mxu0 %v15124
    %15270 = vmatpush.msra.mxu0 %v15123
    %15271 = vmatpush.msra.mxu0 %v15122
    %15272 = vmatpush.msra.mxu0 %v15121
    %15273 = vmatpush.msra.mxu0 %v15120
    %15274 = vmatpush.msra.mxu0 %v15119
    %15275 = vmatpush.msra.mxu0 %v15118
    %15276 = vmatpush.msra.mxu0 %v15117
    %15277 = vmatpush.msra.mxu0 %v15116
    %15278 = vmatpush.msra.mxu0 %v15115
    %15279 = vmatpush.msra.mxu0 %v15114
    %15280 = vmatpush.msra.mxu0 %v15113
    %15281 = vmatpush.msra.mxu0 %v15112
    %15282 = vmatpush.msra.mxu0 %v15111
    %15283 = vmatpush.msra.mxu0 %v15110
    %15284 = vmatpush.msra.mxu0 %v15109
    %15285 = vmatmul.f32.gmra.mxu0 %v14996
    %v15286 = vpop.f32.mrf.mxu0
    %v15287 = vadd.f32 %v15267, %v15286
    %15288 = vdwg.mxu0
    %vm15289 = vcmask 74752
    %15290 = vst.msk [vmem:[#allocation11] sm:$0x3] %vm15289, %v15287
    // Predicated region
    $region50: #{tpu_custom_call.1} parent=1 // pred_check
      _
    $region51: #{tpu_custom_call.1} parent=1 // pred_check_branch
      %15292 = sbr.rel (0) target = $region53
    $region52: #{tpu_custom_call.1} parent=1 // pred_region
      %15294 = vsyncadd [#allocation4], 0
      %s15296 = sshll.u32 [#allocation11], 4
      %s15297 = int_to_ptr.vmem [resolvable:$true] %s15296
      %s15298 = sshll.u32 %s7, 4
      %s15299 = int_to_ptr.hbm [resolvable:$true] %s15298
      %15301 = dma.vmem_to_hbm [thread:$0]  %s15297, 32, %s15299, [#allocation4]
    $region53: #{tpu_custom_call.1} parent=1 // pred_fallthru
      _
    // Predicated region
    $region54: #{tpu_custom_call.1} parent=1 // pred_check
      _
    $region55: #{tpu_custom_call.1} parent=1 // pred_check_branch
      %15303 = sbr.rel (0) target = $region57
    $region56: #{tpu_custom_call.1} parent=1 // pred_region
      %15305 = dma.done [#allocation4], 32
    $region57: #{tpu_custom_call.1} parent=1 // pred_fallthru
      _
    %15306 = vsyncpa [#allocation3], 1
    %15307 = vsyncpa [#allocation6], 1
    %15308 = vsyncpa [#allocation9], 1
    %15309 = vsyncpa [#allocation4], 1

</llo_original>
